<compile_context>
chip_gen: v5e
topology: v5e:2x2
jax: 0.10.0
libtpu: 0.0.40
codegen_flags: <defaults>
</compile_context>

<pallas_src>
import numpy as np
import jax
import jax.numpy as jnp
from jax.experimental import pallas as pl
from jax.experimental.pallas import tpu as pltpu

EPS = 1e-5

# Model hyper-parameters (consistent with the module structure):
IMG_H = 16
IMG_W = 16
RANGE_LEN = 10
PIC_NAME_LEN = 4
CHANNELS = [3, 16, 64, 512]                            # input1->out1->out2->out3
LINEAR = CHANNELS[-1] * (IMG_H // 8) * (IMG_W // 8)    # 512 * 2 * 2 = 2048
FC_OUT = RANGE_LEN * PIC_NAME_LEN                      # 40


# ---------------------------------------------------------------------------
# Geometry helpers (padded row-major layout: row = n*Hp*Wp + h_pad*Wp + w_pad)
# ---------------------------------------------------------------------------
def _layer_dims(n, h, w):
    hp, wp = h + 2, w + 2
    m_pad = n * hp * wp                 # rows of the padded activation
    l_conv = m_pad - 2 * wp - 2         # rows of the conv accumulator
    l_pool = l_conv - wp - 1            # rows of the pooled-full matrix
    return hp, wp, m_pad, l_conv, l_pool


def _pool_scatter_matrix(n, hp_in, wp_in, ho, wo, hp_out, wp_out, l_pool):
    """0/1 matrix: pooled+activated rows of layer i -> padded rows of layer i+1."""
    m = np.zeros((n * hp_out * wp_out, l_pool), np.float32)
    for b in range(n):
        for i in range(ho):
            for j in range(wo):
                r = b * hp_out * wp_out + (i + 1) * wp_out + (j + 1)
                c = b * hp_in * wp_in + (2 * i) * wp_in + (2 * j)
                m[r, c] = 1.0
    return m


def _fc_select_matrix(n, hp_in, wp_in, ho, wo, l_pool):
    """0/1 matrix gathering the final pooled outputs into rows ordered (s, n)."""
    m = np.zeros((ho * wo * n, l_pool), np.float32)
    for i in range(ho):
        for j in range(wo):
            s = i * wo + j
            for b in range(n):
                c = b * hp_in * wp_in + (2 * i) * wp_in + (2 * j)
                m[s * n + b, c] = 1.0
    return m


# ---------------------------------------------------------------------------
# In-kernel building blocks
# ---------------------------------------------------------------------------
def _conv_taps(a_ref, w_ref, cin, wp, l_conv):
    """3x3 conv (padding already materialized) as 9 shifted bf16 matmuls."""
    acc = None
    for kh in range(3):
        for kw in range(3):
            t = kh * 3 + kw
            off = kh * wp + kw
            lhs = a_ref[off:off + l_conv, :].astype(jnp.bfloat16)
            rhs = w_ref[t * cin:(t + 1) * cin, :]
            part = jnp.dot(lhs, rhs, preferred_element_type=jnp.float32)
            acc = part if acc is None else acc + part
    return acc


def _pool_bn_relu(acc_ref, scale_ref, shift_ref, wp, l_pool):
    """2x2/stride-2 maxpool (max of 4 shifted windows) + folded-BN + ReLU."""
    p00 = acc_ref[0:l_pool, :]
    p01 = acc_ref[1:1 + l_pool, :]
    p10 = acc_ref[wp:wp + l_pool, :]
    p11 = acc_ref[wp + 1:wp + 1 + l_pool, :]
    pooled = jnp.maximum(jnp.maximum(p00, p01), jnp.maximum(p10, p11))
    return jnp.maximum(pooled * scale_ref[...] + shift_ref[...], 0.0)


def _make_kernel(n_batch, dims):
    (_, wp1, _, lc1, lp1), (_, wp2, _, lc2, lp2), (_, wp3, _, lc3, lp3) = dims
    c1, c2, c3, c4 = CHANNELS
    n_spatial = (IMG_H // 8) * (IMG_W // 8)   # 2*2 = 4 spatial positions for FC

    def kernel(a0_ref, w1_ref, s1_ref, t1_ref, g1_ref,
               w2_ref, s2_ref, t2_ref, g2_ref,
               w3_ref, s3_ref, t3_ref, sfc_ref,
               wfc_ref, bfc_ref,
               out_ref,
               acc1_ref, a1_ref, acc2_ref, a2_ref, acc3_ref, acts_ref):
        # ---- block 1: conv(3->16) + pool + BN + ReLU ---------------------
        acc1_ref[...] = _conv_taps(a0_ref, w1_ref, c1, wp1, lc1)
        act1 = _pool_bn_relu(acc1_ref, s1_ref, t1_ref, wp1, lp1)
        # scatter valid pool outputs into the padded layer-2 layout (zero ring)
        a1_ref[...] = jnp.dot(g1_ref[...], act1.astype(jnp.bfloat16),
                              preferred_element_type=jnp.float32)

        # ---- block 2: conv(16->64) ---------------------------------------
        acc2_ref[...] = _conv_taps(a1_ref, w2_ref, c2, wp2, lc2)
        act2 = _pool_bn_relu(acc2_ref, s2_ref, t2_ref, wp2, lp2)
        a2_ref[...] = jnp.dot(g2_ref[...], act2.astype(jnp.bfloat16),
                              preferred_element_type=jnp.float32)

        # ---- block 3: conv(64->512) --------------------------------------
        acc3_ref[...] = _conv_taps(a2_ref, w3_ref, c3, wp3, lc3)
        act3 = _pool_bn_relu(acc3_ref, s3_ref, t3_ref, wp3, lp3)
        # rows of acts_ref ordered (spatial s = ho*2 + wo, batch n)
        acts_ref[...] = jnp.dot(sfc_ref[...], act3.astype(jnp.bfloat16),
                                preferred_element_type=jnp.float32)

        # ---- FC (NCHW flatten folded into the permuted weight) -----------
        res = None
        for s in range(n_spatial):
            xs = acts_ref[s * n_batch:(s + 1) * n_batch, :].astype(jnp.bfloat16)
            ws = wfc_ref[s * c4:(s + 1) * c4, :]
            part = jnp.dot(xs, ws, preferred_element_type=jnp.float32)
            res = part if res is None else res + part
        out_ref[...] = res + bfc_ref[...]

    return kernel


def _fs(shape):
    """Full-array BlockSpec for a 1-point grid."""
    return pl.BlockSpec(shape, lambda i: (0,) * len(shape))


# ---------------------------------------------------------------------------
# Wrapper: one fused pallas_call for the whole forward pass
# ---------------------------------------------------------------------------
def cnn_forward(x_nchw, params):
    n = x_nchw.shape[0]
    d1 = _layer_dims(n, IMG_H, IMG_W)
    d2 = _layer_dims(n, IMG_H // 2, IMG_W // 2)
    d3 = _layer_dims(n, IMG_H // 4, IMG_W // 4)
    hp1, wp1, mp1, lc1, lp1 = d1
    hp2, wp2, mp2, lc2, lp2 = d2
    hp3, wp3, mp3, lc3, lp3 = d3
    c1, c2, c3, c4 = CHANNELS
    ho3, wo3 = IMG_H // 8, IMG_W // 8

    # --- minimal wrapper glue: NCHW->NHWC + zero-pad the raw (3-ch) input ----
    x = jnp.transpose(x_nchw, (0, 2, 3, 1)).astype(jnp.float32)
    a0 = jnp.pad(x, ((0, 0), (1, 1), (1, 1), (0, 0))).reshape(mp1, c1)

    # --- one-time weight prep (bf16 matmul operands, bias folded into BN) ----
    conv_in = []
    for (w, b, gamma, beta, mean, var) in params["conv"]:
        cout, cin = w.shape[0], w.shape[1]
        w_mat = jnp.transpose(w, (2, 3, 1, 0)).reshape(9 * cin, cout)
        scale = gamma / jnp.sqrt(var + EPS)
        shift = beta - mean * scale + b * scale        # conv bias folded in
        conv_in.append((w_mat.astype(jnp.bfloat16),
                        scale.reshape(1, cout).astype(jnp.float32),
                        shift.reshape(1, cout).astype(jnp.float32)))
    (w1, s1, t1), (w2, s2, t2), (w3, s3, t3) = conv_in

    # constant 0/1 gather/scatter matrices (shape-only, baked at trace time)
    g1 = jnp.asarray(_pool_scatter_matrix(n, hp1, wp1, IMG_H // 2, IMG_W // 2,
                                          hp2, wp2, lp1), jnp.bfloat16)
    g2 = jnp.asarray(_pool_scatter_matrix(n, hp2, wp2, IMG_H // 4, IMG_W // 4,
                                          hp3, wp3, lp2), jnp.bfloat16)
    sfc = jnp.asarray(_fc_select_matrix(n, hp3, wp3, ho3, wo3, lp3), jnp.bfloat16)

    # FC weight permuted so the kernel consumes NHWC-ordered rows directly:
    # torch flat index = c*(Ho*Wo) + h*Wo + w  ->  stacked rows (s, c)
    w_fc, b_fc = params["fc"]                          # torch layout (40, 2048)
    wfc = jnp.transpose(w_fc.reshape(FC_OUT, c4, ho3 * wo3), (2, 1, 0))
    wfc = wfc.reshape(ho3 * wo3 * c4, FC_OUT).astype(jnp.bfloat16)
    bfc = b_fc.reshape(1, FC_OUT).astype(jnp.float32)

    kernel = _make_kernel(n, (d1, d2, d3))

    return pl.pallas_call(
        kernel,
        out_shape=jax.ShapeDtypeStruct((n, FC_OUT), jnp.float32),
        grid=(1,),
        in_specs=[
            _fs((mp1, c1)),
            _fs((9 * c1, c2)), _fs((1, c2)), _fs((1, c2)), _fs((mp2, lp1)),
            _fs((9 * c2, c3)), _fs((1, c3)), _fs((1, c3)), _fs((mp3, lp2)),
            _fs((9 * c3, c4)), _fs((1, c4)), _fs((1, c4)), _fs((ho3 * wo3 * n, lp3)),
            _fs((ho3 * wo3 * c4, FC_OUT)), _fs((1, FC_OUT)),
        ],
        out_specs=_fs((n, FC_OUT)),
        scratch_shapes=[
            pltpu.VMEM((lc1, c2), jnp.float32),            # conv-1 accumulator
            pltpu.VMEM((mp2, c2), jnp.float32),            # padded layer-2 act
            pltpu.VMEM((lc2, c3), jnp.float32),            # conv-2 accumulator
            pltpu.VMEM((mp3, c3), jnp.float32),            # padded layer-3 act
            pltpu.VMEM((lc3, c4), jnp.float32),            # conv-3 accumulator
            pltpu.VMEM((ho3 * wo3 * n, c4), jnp.float32),  # FC input, rows (s, n)
        ],
    )(a0, w1, s1, t1, g1, w2, s2, t2, g2, w3, s3, t3, sfc, wfc, bfc)


# ---------------------------------------------------------------------------
# Pure-JAX reference for the correctness check
# ---------------------------------------------------------------------------
def cnn_reference(x_nchw, params):
    x = x_nchw.astype(jnp.float32)
    for (w, b, gamma, beta, mean, var) in params["conv"]:
        y = jax.lax.conv_general_dilated(
            x, w, window_strides=(1, 1), padding=((1, 1), (1, 1)),
            dimension_numbers=("NCHW", "OIHW", "NCHW"),
        ) + b[None, :, None, None]
        Nb, C, H, W = y.shape
        y = y.reshape(Nb, C, H // 2, 2, W // 2, 2).max(axis=(3, 5))
        y = (y - mean[None, :, None, None]) / jnp.sqrt(var + EPS)[None, :, None, None]
        y = y * gamma[None, :, None, None] + beta[None, :, None, None]
        x = jnp.maximum(y, 0.0)
    flat = x.reshape(x.shape[0], -1)
    w_fc, b_fc = params["fc"]
    return flat @ w_fc.T + b_fc[None, :]


# ---------------------------------------------------------------------------
# Deterministic parameter init
# ---------------------------------------------------------------------------
def init_params(key):
    params = {"conv": []}
    for i in range(3):
        cin, cout = CHANNELS[i], CHANNELS[i + 1]
        key, kw_, kb_ = jax.random.split(key, 3)
        w = jax.random.normal(kw_, (cout, cin, 3, 3), jnp.float32) * 0.05
        b = jax.random.normal(kb_, (cout,), jnp.float32) * 0.05
        gamma = jnp.ones((cout,), jnp.float32)
        beta = jnp.zeros((cout,), jnp.float32)
        mean = jnp.zeros((cout,), jnp.float32)
        var = jnp.ones((cout,), jnp.float32)
        params["conv"].append((w, b, gamma, beta, mean, var))
    key, kw_, kb_ = jax.random.split(key, 3)
    w_fc = jax.random.normal(kw_, (FC_OUT, LINEAR), jnp.float32) * 0.02
    b_fc = jax.random.normal(kb_, (FC_OUT,), jnp.float32) * 0.02
    params["fc"] = (w_fc, b_fc)
    return params


if __name__ == "__main__":
    key = jax.random.PRNGKey(0)
    key, kx = jax.random.split(key)
    x = jax.random.normal(kx, (2, 3, IMG_H, IMG_W), jnp.float32)   # NCHW input

    params = init_params(key)

    out = jax.block_until_ready(jax.jit(cnn_forward)(x, params))
    assert out.shape == (2, FC_OUT), out.shape

    ref = jax.block_until_ready(cnn_reference(x, params))
    max_err = float(jnp.max(jnp.abs(out - ref)))
    # bf16 matmul operands (f32 accumulation) -> loose but meaningful tolerance
    assert jnp.allclose(out, ref, atol=5e-2, rtol=5e-2), max_err

    print("KERNEL_OK")
</pallas_src>

<mosaic_0001>
module attributes {stable_mosaic.version = 11 : i64} {
  func.func @kernel(%arg0: i32, %arg1: memref<648x3xf32, #tpu.memory_space<vmem>>, %arg2: memref<27x16xbf16, #tpu.memory_space<vmem>>, %arg3: memref<1x16xf32, #tpu.memory_space<vmem>>, %arg4: memref<1x16xf32, #tpu.memory_space<vmem>>, %arg5: memref<200x591xbf16, #tpu.memory_space<vmem>>, %arg6: memref<144x64xbf16, #tpu.memory_space<vmem>>, %arg7: memref<1x64xf32, #tpu.memory_space<vmem>>, %arg8: memref<1x64xf32, #tpu.memory_space<vmem>>, %arg9: memref<72x167xbf16, #tpu.memory_space<vmem>>, %arg10: memref<576x512xbf16, #tpu.memory_space<vmem>>, %arg11: memref<1x512xf32, #tpu.memory_space<vmem>>, %arg12: memref<1x512xf32, #tpu.memory_space<vmem>>, %arg13: memref<8x51xbf16, #tpu.memory_space<vmem>>, %arg14: memref<2048x40xbf16, #tpu.memory_space<vmem>>, %arg15: memref<1x40xf32, #tpu.memory_space<vmem>>, %arg16: memref<2x40xf32, #tpu.memory_space<vmem>>, %arg17: memref<610x16xf32, #tpu.memory_space<vmem>>, %arg18: memref<200x16xf32, #tpu.memory_space<vmem>>, %arg19: memref<178x64xf32, #tpu.memory_space<vmem>>, %arg20: memref<72x64xf32, #tpu.memory_space<vmem>>, %arg21: memref<58x512xf32, #tpu.memory_space<vmem>>, %arg22: memref<8x512xf32, #tpu.memory_space<vmem>>) attributes {dimension_semantics = [#tpu.dimension_semantics<arbitrary>], iteration_bounds = array<i64: 1>, scalar_prefetch = 0 : i64, scratch_operands = 6 : i64, tpu.core_type = #tpu.core_type<tc>, window_params = [{pipeline_mode = #tpu.pipeline_mode<synchronous>, transform_indices = @transform_0, window_bounds = array<i64: 648, 3>}, {pipeline_mode = #tpu.pipeline_mode<synchronous>, transform_indices = @transform_1, window_bounds = array<i64: 27, 16>}, {pipeline_mode = #tpu.pipeline_mode<synchronous>, transform_indices = @transform_2, window_bounds = array<i64: 1, 16>}, {pipeline_mode = #tpu.pipeline_mode<synchronous>, transform_indices = @transform_3, window_bounds = array<i64: 1, 16>}, {pipeline_mode = #tpu.pipeline_mode<synchronous>, transform_indices = @transform_4, window_bounds = array<i64: 200, 591>}, {pipeline_mode = #tpu.pipeline_mode<synchronous>, transform_indices = @transform_5, window_bounds = array<i64: 144, 64>}, {pipeline_mode = #tpu.pipeline_mode<synchronous>, transform_indices = @transform_6, window_bounds = array<i64: 1, 64>}, {pipeline_mode = #tpu.pipeline_mode<synchronous>, transform_indices = @transform_7, window_bounds = array<i64: 1, 64>}, {pipeline_mode = #tpu.pipeline_mode<synchronous>, transform_indices = @transform_8, window_bounds = array<i64: 72, 167>}, {pipeline_mode = #tpu.pipeline_mode<synchronous>, transform_indices = @transform_9, window_bounds = array<i64: 576, 512>}, {pipeline_mode = #tpu.pipeline_mode<synchronous>, transform_indices = @transform_10, window_bounds = array<i64: 1, 512>}, {pipeline_mode = #tpu.pipeline_mode<synchronous>, transform_indices = @transform_11, window_bounds = array<i64: 1, 512>}, {pipeline_mode = #tpu.pipeline_mode<synchronous>, transform_indices = @transform_12, window_bounds = array<i64: 8, 51>}, {pipeline_mode = #tpu.pipeline_mode<synchronous>, transform_indices = @transform_13, window_bounds = array<i64: 2048, 40>}, {pipeline_mode = #tpu.pipeline_mode<synchronous>, transform_indices = @transform_14, window_bounds = array<i64: 1, 40>}, {pipeline_mode = #tpu.pipeline_mode<synchronous>, transform_indices = @transform_15, window_bounds = array<i64: 2, 40>}]} {
    %c0 = arith.constant 0 : index
    %c0_0 = arith.constant 0 : index
    %0 = vector.load %arg1[%c0, %c0_0] : memref<648x3xf32, #tpu.memory_space<vmem>>, vector<610x3xf32>
    %1 = arith.truncf %0 : vector<610x3xf32> to vector<610x3xbf16>
    %c0_1 = arith.constant 0 : index
    %c0_2 = arith.constant 0 : index
    %2 = vector.load %arg2[%c0_1, %c0_2] : memref<27x16xbf16, #tpu.memory_space<vmem>>, vector<3x16xbf16>
    %cst = arith.constant dense<0.000000e+00> : vector<610x16xf32>
    %3 = tpu.matmul %1, %2, %cst {dimension_numbers = #tpu.dot_dimension_numbers<[1], [0], [0], [1], [0, 0, 1, 1], [], []>} : vector<610x3xbf16>, vector<3x16xbf16>, vector<610x16xf32> -> vector<610x16xf32>
    %c1 = arith.constant 1 : index
    %c0_3 = arith.constant 0 : index
    %4 = vector.load %arg1[%c1, %c0_3] : memref<648x3xf32, #tpu.memory_space<vmem>>, vector<610x3xf32>
    %5 = arith.truncf %4 : vector<610x3xf32> to vector<610x3xbf16>
    %c3 = arith.constant 3 : index
    %c0_4 = arith.constant 0 : index
    %6 = vector.load %arg2[%c3, %c0_4] : memref<27x16xbf16, #tpu.memory_space<vmem>>, vector<3x16xbf16>
    %cst_5 = arith.constant dense<0.000000e+00> : vector<610x16xf32>
    %7 = tpu.matmul %5, %6, %cst_5 {dimension_numbers = #tpu.dot_dimension_numbers<[1], [0], [0], [1], [0, 0, 1, 1], [], []>} : vector<610x3xbf16>, vector<3x16xbf16>, vector<610x16xf32> -> vector<610x16xf32>
    %8 = arith.addf %3, %7 : vector<610x16xf32>
    %c2 = arith.constant 2 : index
    %c0_6 = arith.constant 0 : index
    %9 = vector.load %arg1[%c2, %c0_6] : memref<648x3xf32, #tpu.memory_space<vmem>>, vector<610x3xf32>
    %10 = arith.truncf %9 : vector<610x3xf32> to vector<610x3xbf16>
    %c6 = arith.constant 6 : index
    %c0_7 = arith.constant 0 : index
    %11 = vector.load %arg2[%c6, %c0_7] : memref<27x16xbf16, #tpu.memory_space<vmem>>, vector<3x16xbf16>
    %cst_8 = arith.constant dense<0.000000e+00> : vector<610x16xf32>
    %12 = tpu.matmul %10, %11, %cst_8 {dimension_numbers = #tpu.dot_dimension_numbers<[1], [0], [0], [1], [0, 0, 1, 1], [], []>} : vector<610x3xbf16>, vector<3x16xbf16>, vector<610x16xf32> -> vector<610x16xf32>
    %13 = arith.addf %8, %12 : vector<610x16xf32>
    %c18 = arith.constant 18 : index
    %c0_9 = arith.constant 0 : index
    %14 = vector.load %arg1[%c18, %c0_9] : memref<648x3xf32, #tpu.memory_space<vmem>>, vector<610x3xf32>
    %15 = arith.truncf %14 : vector<610x3xf32> to vector<610x3xbf16>
    %c9 = arith.constant 9 : index
    %c0_10 = arith.constant 0 : index
    %16 = vector.load %arg2[%c9, %c0_10] : memref<27x16xbf16, #tpu.memory_space<vmem>>, vector<3x16xbf16>
    %cst_11 = arith.constant dense<0.000000e+00> : vector<610x16xf32>
    %17 = tpu.matmul %15, %16, %cst_11 {dimension_numbers = #tpu.dot_dimension_numbers<[1], [0], [0], [1], [0, 0, 1, 1], [], []>} : vector<610x3xbf16>, vector<3x16xbf16>, vector<610x16xf32> -> vector<610x16xf32>
    %18 = arith.addf %13, %17 : vector<610x16xf32>
    %c19 = arith.constant 19 : index
    %c0_12 = arith.constant 0 : index
    %19 = vector.load %arg1[%c19, %c0_12] : memref<648x3xf32, #tpu.memory_space<vmem>>, vector<610x3xf32>
    %20 = arith.truncf %19 : vector<610x3xf32> to vector<610x3xbf16>
    %c12 = arith.constant 12 : index
    %c0_13 = arith.constant 0 : index
    %21 = vector.load %arg2[%c12, %c0_13] : memref<27x16xbf16, #tpu.memory_space<vmem>>, vector<3x16xbf16>
    %cst_14 = arith.constant dense<0.000000e+00> : vector<610x16xf32>
    %22 = tpu.matmul %20, %21, %cst_14 {dimension_numbers = #tpu.dot_dimension_numbers<[1], [0], [0], [1], [0, 0, 1, 1], [], []>} : vector<610x3xbf16>, vector<3x16xbf16>, vector<610x16xf32> -> vector<610x16xf32>
    %23 = arith.addf %18, %22 : vector<610x16xf32>
    %c20 = arith.constant 20 : index
    %c0_15 = arith.constant 0 : index
    %24 = vector.load %arg1[%c20, %c0_15] : memref<648x3xf32, #tpu.memory_space<vmem>>, vector<610x3xf32>
    %25 = arith.truncf %24 : vector<610x3xf32> to vector<610x3xbf16>
    %c15 = arith.constant 15 : index
    %c0_16 = arith.constant 0 : index
    %26 = vector.load %arg2[%c15, %c0_16] : memref<27x16xbf16, #tpu.memory_space<vmem>>, vector<3x16xbf16>
    %cst_17 = arith.constant dense<0.000000e+00> : vector<610x16xf32>
    %27 = tpu.matmul %25, %26, %cst_17 {dimension_numbers = #tpu.dot_dimension_numbers<[1], [0], [0], [1], [0, 0, 1, 1], [], []>} : vector<610x3xbf16>, vector<3x16xbf16>, vector<610x16xf32> -> vector<610x16xf32>
    %28 = arith.addf %23, %27 : vector<610x16xf32>
    %c36 = arith.constant 36 : index
    %c0_18 = arith.constant 0 : index
    %29 = vector.load %arg1[%c36, %c0_18] : memref<648x3xf32, #tpu.memory_space<vmem>>, vector<610x3xf32>
    %30 = arith.truncf %29 : vector<610x3xf32> to vector<610x3xbf16>
    %c18_19 = arith.constant 18 : index
    %c0_20 = arith.constant 0 : index
    %31 = vector.load %arg2[%c18_19, %c0_20] : memref<27x16xbf16, #tpu.memory_space<vmem>>, vector<3x16xbf16>
    %cst_21 = arith.constant dense<0.000000e+00> : vector<610x16xf32>
    %32 = tpu.matmul %30, %31, %cst_21 {dimension_numbers = #tpu.dot_dimension_numbers<[1], [0], [0], [1], [0, 0, 1, 1], [], []>} : vector<610x3xbf16>, vector<3x16xbf16>, vector<610x16xf32> -> vector<610x16xf32>
    %33 = arith.addf %28, %32 : vector<610x16xf32>
    %c37 = arith.constant 37 : index
    %c0_22 = arith.constant 0 : index
    %34 = vector.load %arg1[%c37, %c0_22] : memref<648x3xf32, #tpu.memory_space<vmem>>, vector<610x3xf32>
    %35 = arith.truncf %34 : vector<610x3xf32> to vector<610x3xbf16>
    %c21 = arith.constant 21 : index
    %c0_23 = arith.constant 0 : index
    %36 = vector.load %arg2[%c21, %c0_23] : memref<27x16xbf16, #tpu.memory_space<vmem>>, vector<3x16xbf16>
    %cst_24 = arith.constant dense<0.000000e+00> : vector<610x16xf32>
    %37 = tpu.matmul %35, %36, %cst_24 {dimension_numbers = #tpu.dot_dimension_numbers<[1], [0], [0], [1], [0, 0, 1, 1], [], []>} : vector<610x3xbf16>, vector<3x16xbf16>, vector<610x16xf32> -> vector<610x16xf32>
    %38 = arith.addf %33, %37 : vector<610x16xf32>
    %c38 = arith.constant 38 : index
    %c0_25 = arith.constant 0 : index
    %39 = vector.load %arg1[%c38, %c0_25] : memref<648x3xf32, #tpu.memory_space<vmem>>, vector<610x3xf32>
    %40 = arith.truncf %39 : vector<610x3xf32> to vector<610x3xbf16>
    %c24 = arith.constant 24 : index
    %c0_26 = arith.constant 0 : index
    %41 = vector.load %arg2[%c24, %c0_26] : memref<27x16xbf16, #tpu.memory_space<vmem>>, vector<3x16xbf16>
    %cst_27 = arith.constant dense<0.000000e+00> : vector<610x16xf32>
    %42 = tpu.matmul %40, %41, %cst_27 {dimension_numbers = #tpu.dot_dimension_numbers<[1], [0], [0], [1], [0, 0, 1, 1], [], []>} : vector<610x3xbf16>, vector<3x16xbf16>, vector<610x16xf32> -> vector<610x16xf32>
    %43 = arith.addf %38, %42 : vector<610x16xf32>
    %c0_28 = arith.constant 0 : index
    %c0_29 = arith.constant 0 : index
    %44 = vector.load %arg17[%c0_28, %c0_29] : memref<610x16xf32, #tpu.memory_space<vmem>>, vector<610x16xf32>
    tpu.vector_store %arg17[%c0_28, %c0_29], %43 {strides = array<i32>} : memref<610x16xf32, #tpu.memory_space<vmem>>, vector<610x16xf32>,
    %c0_30 = arith.constant 0 : index
    %c0_31 = arith.constant 0 : index
    %45 = vector.load %arg17[%c0_30, %c0_31] : memref<610x16xf32, #tpu.memory_space<vmem>>, vector<591x16xf32>
    %c1_32 = arith.constant 1 : index
    %c0_33 = arith.constant 0 : index
    %46 = vector.load %arg17[%c1_32, %c0_33] : memref<610x16xf32, #tpu.memory_space<vmem>>, vector<591x16xf32>
    %c18_34 = arith.constant 18 : index
    %c0_35 = arith.constant 0 : index
    %47 = vector.load %arg17[%c18_34, %c0_35] : memref<610x16xf32, #tpu.memory_space<vmem>>, vector<591x16xf32>
    %c19_36 = arith.constant 19 : index
    %c0_37 = arith.constant 0 : index
    %48 = vector.load %arg17[%c19_36, %c0_37] : memref<610x16xf32, #tpu.memory_space<vmem>>, vector<591x16xf32>
    %49 = arith.maximumf %45, %46 : vector<591x16xf32>
    %50 = arith.maximumf %47, %48 : vector<591x16xf32>
    %51 = arith.maximumf %49, %50 : vector<591x16xf32>
    %c0_38 = arith.constant 0 : index
    %c0_39 = arith.constant 0 : index
    %52 = vector.load %arg3[%c0_38, %c0_39] : memref<1x16xf32, #tpu.memory_space<vmem>>, vector<1x16xf32>
    %53 = vector.broadcast %52 : vector<1x16xf32> to vector<591x16xf32>
    %54 = arith.mulf %51, %53 : vector<591x16xf32>
    %c0_40 = arith.constant 0 : index
    %c0_41 = arith.constant 0 : index
    %55 = vector.load %arg4[%c0_40, %c0_41] : memref<1x16xf32, #tpu.memory_space<vmem>>, vector<1x16xf32>
    %56 = vector.broadcast %55 : vector<1x16xf32> to vector<591x16xf32>
    %57 = arith.addf %54, %56 : vector<591x16xf32>
    %cst_42 = arith.constant 0.000000e+00 : f32
    %58 = vector.broadcast %cst_42 : f32 to vector<591x16xf32>
    %59 = arith.maximumf %57, %58 : vector<591x16xf32>
    %c0_43 = arith.constant 0 : index
    %c0_44 = arith.constant 0 : index
    %60 = vector.load %arg5[%c0_43, %c0_44] : memref<200x591xbf16, #tpu.memory_space<vmem>>, vector<200x591xbf16>
    %61 = arith.truncf %59 : vector<591x16xf32> to vector<591x16xbf16>
    %cst_45 = arith.constant dense<0.000000e+00> : vector<200x16xf32>
    %62 = tpu.matmul %60, %61, %cst_45 {dimension_numbers = #tpu.dot_dimension_numbers<[1], [0], [0], [1], [0, 0, 1, 1], [], []>} : vector<200x591xbf16>, vector<591x16xbf16>, vector<200x16xf32> -> vector<200x16xf32>
    %c0_46 = arith.constant 0 : index
    %c0_47 = arith.constant 0 : index
    %63 = vector.load %arg18[%c0_46, %c0_47] : memref<200x16xf32, #tpu.memory_space<vmem>>, vector<200x16xf32>
    tpu.vector_store %arg18[%c0_46, %c0_47], %62 {strides = array<i32>} : memref<200x16xf32, #tpu.memory_space<vmem>>, vector<200x16xf32>,
    %c0_48 = arith.constant 0 : index
    %c0_49 = arith.constant 0 : index
    %64 = vector.load %arg18[%c0_48, %c0_49] : memref<200x16xf32, #tpu.memory_space<vmem>>, vector<178x16xf32>
    %65 = arith.truncf %64 : vector<178x16xf32> to vector<178x16xbf16>
    %c0_50 = arith.constant 0 : index
    %c0_51 = arith.constant 0 : index
    %66 = vector.load %arg6[%c0_50, %c0_51] : memref<144x64xbf16, #tpu.memory_space<vmem>>, vector<16x64xbf16>
    %cst_52 = arith.constant dense<0.000000e+00> : vector<178x64xf32>
    %67 = tpu.matmul %65, %66, %cst_52 {dimension_numbers = #tpu.dot_dimension_numbers<[1], [0], [0], [1], [0, 0, 1, 1], [], []>} : vector<178x16xbf16>, vector<16x64xbf16>, vector<178x64xf32> -> vector<178x64xf32>
    %c1_53 = arith.constant 1 : index
    %c0_54 = arith.constant 0 : index
    %68 = vector.load %arg18[%c1_53, %c0_54] : memref<200x16xf32, #tpu.memory_space<vmem>>, vector<178x16xf32>
    %69 = arith.truncf %68 : vector<178x16xf32> to vector<178x16xbf16>
    %c16 = arith.constant 16 : index
    %c0_55 = arith.constant 0 : index
    %70 = vector.load %arg6[%c16, %c0_55] : memref<144x64xbf16, #tpu.memory_space<vmem>>, vector<16x64xbf16>
    %cst_56 = arith.constant dense<0.000000e+00> : vector<178x64xf32>
    %71 = tpu.matmul %69, %70, %cst_56 {dimension_numbers = #tpu.dot_dimension_numbers<[1], [0], [0], [1], [0, 0, 1, 1], [], []>} : vector<178x16xbf16>, vector<16x64xbf16>, vector<178x64xf32> -> vector<178x64xf32>
    %72 = arith.addf %67, %71 : vector<178x64xf32>
    %c2_57 = arith.constant 2 : index
    %c0_58 = arith.constant 0 : index
    %73 = vector.load %arg18[%c2_57, %c0_58] : memref<200x16xf32, #tpu.memory_space<vmem>>, vector<178x16xf32>
    %74 = arith.truncf %73 : vector<178x16xf32> to vector<178x16xbf16>
    %c32 = arith.constant 32 : index
    %c0_59 = arith.constant 0 : index
    %75 = vector.load %arg6[%c32, %c0_59] : memref<144x64xbf16, #tpu.memory_space<vmem>>, vector<16x64xbf16>
    %cst_60 = arith.constant dense<0.000000e+00> : vector<178x64xf32>
    %76 = tpu.matmul %74, %75, %cst_60 {dimension_numbers = #tpu.dot_dimension_numbers<[1], [0], [0], [1], [0, 0, 1, 1], [], []>} : vector<178x16xbf16>, vector<16x64xbf16>, vector<178x64xf32> -> vector<178x64xf32>
    %77 = arith.addf %72, %76 : vector<178x64xf32>
    %c10 = arith.constant 10 : index
    %c0_61 = arith.constant 0 : index
    %78 = vector.load %arg18[%c10, %c0_61] : memref<200x16xf32, #tpu.memory_space<vmem>>, vector<178x16xf32>
    %79 = arith.truncf %78 : vector<178x16xf32> to vector<178x16xbf16>
    %c48 = arith.constant 48 : index
    %c0_62 = arith.constant 0 : index
    %80 = vector.load %arg6[%c48, %c0_62] : memref<144x64xbf16, #tpu.memory_space<vmem>>, vector<16x64xbf16>
    %cst_63 = arith.constant dense<0.000000e+00> : vector<178x64xf32>
    %81 = tpu.matmul %79, %80, %cst_63 {dimension_numbers = #tpu.dot_dimension_numbers<[1], [0], [0], [1], [0, 0, 1, 1], [], []>} : vector<178x16xbf16>, vector<16x64xbf16>, vector<178x64xf32> -> vector<178x64xf32>
    %82 = arith.addf %77, %81 : vector<178x64xf32>
    %c11 = arith.constant 11 : index
    %c0_64 = arith.constant 0 : index
    %83 = vector.load %arg18[%c11, %c0_64] : memref<200x16xf32, #tpu.memory_space<vmem>>, vector<178x16xf32>
    %84 = arith.truncf %83 : vector<178x16xf32> to vector<178x16xbf16>
    %c64 = arith.constant 64 : index
    %c0_65 = arith.constant 0 : index
    %85 = vector.load %arg6[%c64, %c0_65] : memref<144x64xbf16, #tpu.memory_space<vmem>>, vector<16x64xbf16>
    %cst_66 = arith.constant dense<0.000000e+00> : vector<178x64xf32>
    %86 = tpu.matmul %84, %85, %cst_66 {dimension_numbers = #tpu.dot_dimension_numbers<[1], [0], [0], [1], [0, 0, 1, 1], [], []>} : vector<178x16xbf16>, vector<16x64xbf16>, vector<178x64xf32> -> vector<178x64xf32>
    %87 = arith.addf %82, %86 : vector<178x64xf32>
    %c12_67 = arith.constant 12 : index
    %c0_68 = arith.constant 0 : index
    %88 = vector.load %arg18[%c12_67, %c0_68] : memref<200x16xf32, #tpu.memory_space<vmem>>, vector<178x16xf32>
    %89 = arith.truncf %88 : vector<178x16xf32> to vector<178x16xbf16>
    %c80 = arith.constant 80 : index
    %c0_69 = arith.constant 0 : index
    %90 = vector.load %arg6[%c80, %c0_69] : memref<144x64xbf16, #tpu.memory_space<vmem>>, vector<16x64xbf16>
    %cst_70 = arith.constant dense<0.000000e+00> : vector<178x64xf32>
    %91 = tpu.matmul %89, %90, %cst_70 {dimension_numbers = #tpu.dot_dimension_numbers<[1], [0], [0], [1], [0, 0, 1, 1], [], []>} : vector<178x16xbf16>, vector<16x64xbf16>, vector<178x64xf32> -> vector<178x64xf32>
    %92 = arith.addf %87, %91 : vector<178x64xf32>
    %c20_71 = arith.constant 20 : index
    %c0_72 = arith.constant 0 : index
    %93 = vector.load %arg18[%c20_71, %c0_72] : memref<200x16xf32, #tpu.memory_space<vmem>>, vector<178x16xf32>
    %94 = arith.truncf %93 : vector<178x16xf32> to vector<178x16xbf16>
    %c96 = arith.constant 96 : index
    %c0_73 = arith.constant 0 : index
    %95 = vector.load %arg6[%c96, %c0_73] : memref<144x64xbf16, #tpu.memory_space<vmem>>, vector<16x64xbf16>
    %cst_74 = arith.constant dense<0.000000e+00> : vector<178x64xf32>
    %96 = tpu.matmul %94, %95, %cst_74 {dimension_numbers = #tpu.dot_dimension_numbers<[1], [0], [0], [1], [0, 0, 1, 1], [], []>} : vector<178x16xbf16>, vector<16x64xbf16>, vector<178x64xf32> -> vector<178x64xf32>
    %97 = arith.addf %92, %96 : vector<178x64xf32>
    %c21_75 = arith.constant 21 : index
    %c0_76 = arith.constant 0 : index
    %98 = vector.load %arg18[%c21_75, %c0_76] : memref<200x16xf32, #tpu.memory_space<vmem>>, vector<178x16xf32>
    %99 = arith.truncf %98 : vector<178x16xf32> to vector<178x16xbf16>
    %c112 = arith.constant 112 : index
    %c0_77 = arith.constant 0 : index
    %100 = vector.load %arg6[%c112, %c0_77] : memref<144x64xbf16, #tpu.memory_space<vmem>>, vector<16x64xbf16>
    %cst_78 = arith.constant dense<0.000000e+00> : vector<178x64xf32>
    %101 = tpu.matmul %99, %100, %cst_78 {dimension_numbers = #tpu.dot_dimension_numbers<[1], [0], [0], [1], [0, 0, 1, 1], [], []>} : vector<178x16xbf16>, vector<16x64xbf16>, vector<178x64xf32> -> vector<178x64xf32>
    %102 = arith.addf %97, %101 : vector<178x64xf32>
    %c22 = arith.constant 22 : index
    %c0_79 = arith.constant 0 : index
    %103 = vector.load %arg18[%c22, %c0_79] : memref<200x16xf32, #tpu.memory_space<vmem>>, vector<178x16xf32>
    %104 = arith.truncf %103 : vector<178x16xf32> to vector<178x16xbf16>
    %c128 = arith.constant 128 : index
    %c0_80 = arith.constant 0 : index
    %105 = vector.load %arg6[%c128, %c0_80] : memref<144x64xbf16, #tpu.memory_space<vmem>>, vector<16x64xbf16>
    %cst_81 = arith.constant dense<0.000000e+00> : vector<178x64xf32>
    %106 = tpu.matmul %104, %105, %cst_81 {dimension_numbers = #tpu.dot_dimension_numbers<[1], [0], [0], [1], [0, 0, 1, 1], [], []>} : vector<178x16xbf16>, vector<16x64xbf16>, vector<178x64xf32> -> vector<178x64xf32>
    %107 = arith.addf %102, %106 : vector<178x64xf32>
    %c0_82 = arith.constant 0 : index
    %c0_83 = arith.constant 0 : index
    %108 = vector.load %arg19[%c0_82, %c0_83] : memref<178x64xf32, #tpu.memory_space<vmem>>, vector<178x64xf32>
    tpu.vector_store %arg19[%c0_82, %c0_83], %107 {strides = array<i32>} : memref<178x64xf32, #tpu.memory_space<vmem>>, vector<178x64xf32>,
    %c0_84 = arith.constant 0 : index
    %c0_85 = arith.constant 0 : index
    %109 = vector.load %arg19[%c0_84, %c0_85] : memref<178x64xf32, #tpu.memory_space<vmem>>, vector<167x64xf32>
    %c1_86 = arith.constant 1 : index
    %c0_87 = arith.constant 0 : index
    %110 = vector.load %arg19[%c1_86, %c0_87] : memref<178x64xf32, #tpu.memory_space<vmem>>, vector<167x64xf32>
    %c10_88 = arith.constant 10 : index
    %c0_89 = arith.constant 0 : index
    %111 = vector.load %arg19[%c10_88, %c0_89] : memref<178x64xf32, #tpu.memory_space<vmem>>, vector<167x64xf32>
    %c11_90 = arith.constant 11 : index
    %c0_91 = arith.constant 0 : index
    %112 = vector.load %arg19[%c11_90, %c0_91] : memref<178x64xf32, #tpu.memory_space<vmem>>, vector<167x64xf32>
    %113 = arith.maximumf %109, %110 : vector<167x64xf32>
    %114 = arith.maximumf %111, %112 : vector<167x64xf32>
    %115 = arith.maximumf %113, %114 : vector<167x64xf32>
    %c0_92 = arith.constant 0 : index
    %c0_93 = arith.constant 0 : index
    %116 = vector.load %arg7[%c0_92, %c0_93] : memref<1x64xf32, #tpu.memory_space<vmem>>, vector<1x64xf32>
    %117 = vector.broadcast %116 : vector<1x64xf32> to vector<167x64xf32>
    %118 = arith.mulf %115, %117 : vector<167x64xf32>
    %c0_94 = arith.constant 0 : index
    %c0_95 = arith.constant 0 : index
    %119 = vector.load %arg8[%c0_94, %c0_95] : memref<1x64xf32, #tpu.memory_space<vmem>>, vector<1x64xf32>
    %120 = vector.broadcast %119 : vector<1x64xf32> to vector<167x64xf32>
    %121 = arith.addf %118, %120 : vector<167x64xf32>
    %cst_96 = arith.constant 0.000000e+00 : f32
    %122 = vector.broadcast %cst_96 : f32 to vector<167x64xf32>
    %123 = arith.maximumf %121, %122 : vector<167x64xf32>
    %c0_97 = arith.constant 0 : index
    %c0_98 = arith.constant 0 : index
    %124 = vector.load %arg9[%c0_97, %c0_98] : memref<72x167xbf16, #tpu.memory_space<vmem>>, vector<72x167xbf16>
    %125 = arith.truncf %123 : vector<167x64xf32> to vector<167x64xbf16>
    %cst_99 = arith.constant dense<0.000000e+00> : vector<72x64xf32>
    %126 = tpu.matmul %124, %125, %cst_99 {dimension_numbers = #tpu.dot_dimension_numbers<[1], [0], [0], [1], [0, 0, 1, 1], [], []>} : vector<72x167xbf16>, vector<167x64xbf16>, vector<72x64xf32> -> vector<72x64xf32>
    %c0_100 = arith.constant 0 : index
    %c0_101 = arith.constant 0 : index
    %127 = vector.load %arg20[%c0_100, %c0_101] : memref<72x64xf32, #tpu.memory_space<vmem>>, vector<72x64xf32>
    tpu.vector_store %arg20[%c0_100, %c0_101], %126 {strides = array<i32>} : memref<72x64xf32, #tpu.memory_space<vmem>>, vector<72x64xf32>,
    %c0_102 = arith.constant 0 : index
    %c0_103 = arith.constant 0 : index
    %128 = vector.load %arg20[%c0_102, %c0_103] : memref<72x64xf32, #tpu.memory_space<vmem>>, vector<58x64xf32>
    %129 = arith.truncf %128 : vector<58x64xf32> to vector<58x64xbf16>
    %c0_104 = arith.constant 0 : index
    %c0_105 = arith.constant 0 : index
    %130 = vector.load %arg10[%c0_104, %c0_105] : memref<576x512xbf16, #tpu.memory_space<vmem>>, vector<64x512xbf16>
    %cst_106 = arith.constant dense<0.000000e+00> : vector<58x512xf32>
    %131 = tpu.matmul %129, %130, %cst_106 {dimension_numbers = #tpu.dot_dimension_numbers<[1], [0], [0], [1], [0, 0, 1, 1], [], []>} : vector<58x64xbf16>, vector<64x512xbf16>, vector<58x512xf32> -> vector<58x512xf32>
    %c1_107 = arith.constant 1 : index
    %c0_108 = arith.constant 0 : index
    %132 = vector.load %arg20[%c1_107, %c0_108] : memref<72x64xf32, #tpu.memory_space<vmem>>, vector<58x64xf32>
    %133 = arith.truncf %132 : vector<58x64xf32> to vector<58x64xbf16>
    %c64_109 = arith.constant 64 : index
    %c0_110 = arith.constant 0 : index
    %134 = vector.load %arg10[%c64_109, %c0_110] : memref<576x512xbf16, #tpu.memory_space<vmem>>, vector<64x512xbf16>
    %cst_111 = arith.constant dense<0.000000e+00> : vector<58x512xf32>
    %135 = tpu.matmul %133, %134, %cst_111 {dimension_numbers = #tpu.dot_dimension_numbers<[1], [0], [0], [1], [0, 0, 1, 1], [], []>} : vector<58x64xbf16>, vector<64x512xbf16>, vector<58x512xf32> -> vector<58x512xf32>
    %136 = arith.addf %131, %135 : vector<58x512xf32>
    %c2_112 = arith.constant 2 : index
    %c0_113 = arith.constant 0 : index
    %137 = vector.load %arg20[%c2_112, %c0_113] : memref<72x64xf32, #tpu.memory_space<vmem>>, vector<58x64xf32>
    %138 = arith.truncf %137 : vector<58x64xf32> to vector<58x64xbf16>
    %c128_114 = arith.constant 128 : index
    %c0_115 = arith.constant 0 : index
    %139 = vector.load %arg10[%c128_114, %c0_115] : memref<576x512xbf16, #tpu.memory_space<vmem>>, vector<64x512xbf16>
    %cst_116 = arith.constant dense<0.000000e+00> : vector<58x512xf32>
    %140 = tpu.matmul %138, %139, %cst_116 {dimension_numbers = #tpu.dot_dimension_numbers<[1], [0], [0], [1], [0, 0, 1, 1], [], []>} : vector<58x64xbf16>, vector<64x512xbf16>, vector<58x512xf32> -> vector<58x512xf32>
    %141 = arith.addf %136, %140 : vector<58x512xf32>
    %c6_117 = arith.constant 6 : index
    %c0_118 = arith.constant 0 : index
    %142 = vector.load %arg20[%c6_117, %c0_118] : memref<72x64xf32, #tpu.memory_space<vmem>>, vector<58x64xf32>
    %143 = arith.truncf %142 : vector<58x64xf32> to vector<58x64xbf16>
    %c192 = arith.constant 192 : index
    %c0_119 = arith.constant 0 : index
    %144 = vector.load %arg10[%c192, %c0_119] : memref<576x512xbf16, #tpu.memory_space<vmem>>, vector<64x512xbf16>
    %cst_120 = arith.constant dense<0.000000e+00> : vector<58x512xf32>
    %145 = tpu.matmul %143, %144, %cst_120 {dimension_numbers = #tpu.dot_dimension_numbers<[1], [0], [0], [1], [0, 0, 1, 1], [], []>} : vector<58x64xbf16>, vector<64x512xbf16>, vector<58x512xf32> -> vector<58x512xf32>
    %146 = arith.addf %141, %145 : vector<58x512xf32>
    %c7 = arith.constant 7 : index
    %c0_121 = arith.constant 0 : index
    %147 = vector.load %arg20[%c7, %c0_121] : memref<72x64xf32, #tpu.memory_space<vmem>>, vector<58x64xf32>
    %148 = arith.truncf %147 : vector<58x64xf32> to vector<58x64xbf16>
    %c256 = arith.constant 256 : index
    %c0_122 = arith.constant 0 : index
    %149 = vector.load %arg10[%c256, %c0_122] : memref<576x512xbf16, #tpu.memory_space<vmem>>, vector<64x512xbf16>
    %cst_123 = arith.constant dense<0.000000e+00> : vector<58x512xf32>
    %150 = tpu.matmul %148, %149, %cst_123 {dimension_numbers = #tpu.dot_dimension_numbers<[1], [0], [0], [1], [0, 0, 1, 1], [], []>} : vector<58x64xbf16>, vector<64x512xbf16>, vector<58x512xf32> -> vector<58x512xf32>
    %151 = arith.addf %146, %150 : vector<58x512xf32>
    %c8 = arith.constant 8 : index
    %c0_124 = arith.constant 0 : index
    %152 = vector.load %arg20[%c8, %c0_124] : memref<72x64xf32, #tpu.memory_space<vmem>>, vector<58x64xf32>
    %153 = arith.truncf %152 : vector<58x64xf32> to vector<58x64xbf16>
    %c320 = arith.constant 320 : index
    %c0_125 = arith.constant 0 : index
    %154 = vector.load %arg10[%c320, %c0_125] : memref<576x512xbf16, #tpu.memory_space<vmem>>, vector<64x512xbf16>
    %cst_126 = arith.constant dense<0.000000e+00> : vector<58x512xf32>
    %155 = tpu.matmul %153, %154, %cst_126 {dimension_numbers = #tpu.dot_dimension_numbers<[1], [0], [0], [1], [0, 0, 1, 1], [], []>} : vector<58x64xbf16>, vector<64x512xbf16>, vector<58x512xf32> -> vector<58x512xf32>
    %156 = arith.addf %151, %155 : vector<58x512xf32>
    %c12_127 = arith.constant 12 : index
    %c0_128 = arith.constant 0 : index
    %157 = vector.load %arg20[%c12_127, %c0_128] : memref<72x64xf32, #tpu.memory_space<vmem>>, vector<58x64xf32>
    %158 = arith.truncf %157 : vector<58x64xf32> to vector<58x64xbf16>
    %c384 = arith.constant 384 : index
    %c0_129 = arith.constant 0 : index
    %159 = vector.load %arg10[%c384, %c0_129] : memref<576x512xbf16, #tpu.memory_space<vmem>>, vector<64x512xbf16>
    %cst_130 = arith.constant dense<0.000000e+00> : vector<58x512xf32>
    %160 = tpu.matmul %158, %159, %cst_130 {dimension_numbers = #tpu.dot_dimension_numbers<[1], [0], [0], [1], [0, 0, 1, 1], [], []>} : vector<58x64xbf16>, vector<64x512xbf16>, vector<58x512xf32> -> vector<58x512xf32>
    %161 = arith.addf %156, %160 : vector<58x512xf32>
    %c13 = arith.constant 13 : index
    %c0_131 = arith.constant 0 : index
    %162 = vector.load %arg20[%c13, %c0_131] : memref<72x64xf32, #tpu.memory_space<vmem>>, vector<58x64xf32>
    %163 = arith.truncf %162 : vector<58x64xf32> to vector<58x64xbf16>
    %c448 = arith.constant 448 : index
    %c0_132 = arith.constant 0 : index
    %164 = vector.load %arg10[%c448, %c0_132] : memref<576x512xbf16, #tpu.memory_space<vmem>>, vector<64x512xbf16>
    %cst_133 = arith.constant dense<0.000000e+00> : vector<58x512xf32>
    %165 = tpu.matmul %163, %164, %cst_133 {dimension_numbers = #tpu.dot_dimension_numbers<[1], [0], [0], [1], [0, 0, 1, 1], [], []>} : vector<58x64xbf16>, vector<64x512xbf16>, vector<58x512xf32> -> vector<58x512xf32>
    %166 = arith.addf %161, %165 : vector<58x512xf32>
    %c14 = arith.constant 14 : index
    %c0_134 = arith.constant 0 : index
    %167 = vector.load %arg20[%c14, %c0_134] : memref<72x64xf32, #tpu.memory_space<vmem>>, vector<58x64xf32>
    %168 = arith.truncf %167 : vector<58x64xf32> to vector<58x64xbf16>
    %c512 = arith.constant 512 : index
    %c0_135 = arith.constant 0 : index
    %169 = vector.load %arg10[%c512, %c0_135] : memref<576x512xbf16, #tpu.memory_space<vmem>>, vector<64x512xbf16>
    %cst_136 = arith.constant dense<0.000000e+00> : vector<58x512xf32>
    %170 = tpu.matmul %168, %169, %cst_136 {dimension_numbers = #tpu.dot_dimension_numbers<[1], [0], [0], [1], [0, 0, 1, 1], [], []>} : vector<58x64xbf16>, vector<64x512xbf16>, vector<58x512xf32> -> vector<58x512xf32>
    %171 = arith.addf %166, %170 : vector<58x512xf32>
    %c0_137 = arith.constant 0 : index
    %c0_138 = arith.constant 0 : index
    %172 = vector.load %arg21[%c0_137, %c0_138] : memref<58x512xf32, #tpu.memory_space<vmem>>, vector<58x512xf32>
    tpu.vector_store %arg21[%c0_137, %c0_138], %171 {strides = array<i32>} : memref<58x512xf32, #tpu.memory_space<vmem>>, vector<58x512xf32>,
    %c0_139 = arith.constant 0 : index
    %c0_140 = arith.constant 0 : index
    %173 = vector.load %arg21[%c0_139, %c0_140] : memref<58x512xf32, #tpu.memory_space<vmem>>, vector<51x512xf32>
    %c1_141 = arith.constant 1 : index
    %c0_142 = arith.constant 0 : index
    %174 = vector.load %arg21[%c1_141, %c0_142] : memref<58x512xf32, #tpu.memory_space<vmem>>, vector<51x512xf32>
    %c6_143 = arith.constant 6 : index
    %c0_144 = arith.constant 0 : index
    %175 = vector.load %arg21[%c6_143, %c0_144] : memref<58x512xf32, #tpu.memory_space<vmem>>, vector<51x512xf32>
    %c7_145 = arith.constant 7 : index
    %c0_146 = arith.constant 0 : index
    %176 = vector.load %arg21[%c7_145, %c0_146] : memref<58x512xf32, #tpu.memory_space<vmem>>, vector<51x512xf32>
    %177 = arith.maximumf %173, %174 : vector<51x512xf32>
    %178 = arith.maximumf %175, %176 : vector<51x512xf32>
    %179 = arith.maximumf %177, %178 : vector<51x512xf32>
    %c0_147 = arith.constant 0 : index
    %c0_148 = arith.constant 0 : index
    %180 = vector.load %arg11[%c0_147, %c0_148] : memref<1x512xf32, #tpu.memory_space<vmem>>, vector<1x512xf32>
    %181 = vector.broadcast %180 : vector<1x512xf32> to vector<51x512xf32>
    %182 = arith.mulf %179, %181 : vector<51x512xf32>
    %c0_149 = arith.constant 0 : index
    %c0_150 = arith.constant 0 : index
    %183 = vector.load %arg12[%c0_149, %c0_150] : memref<1x512xf32, #tpu.memory_space<vmem>>, vector<1x512xf32>
    %184 = vector.broadcast %183 : vector<1x512xf32> to vector<51x512xf32>
    %185 = arith.addf %182, %184 : vector<51x512xf32>
    %cst_151 = arith.constant 0.000000e+00 : f32
    %186 = vector.broadcast %cst_151 : f32 to vector<51x512xf32>
    %187 = arith.maximumf %185, %186 : vector<51x512xf32>
    %c0_152 = arith.constant 0 : index
    %c0_153 = arith.constant 0 : index
    %188 = vector.load %arg13[%c0_152, %c0_153] : memref<8x51xbf16, #tpu.memory_space<vmem>>, vector<8x51xbf16>
    %189 = arith.truncf %187 : vector<51x512xf32> to vector<51x512xbf16>
    %cst_154 = arith.constant dense<0.000000e+00> : vector<8x512xf32>
    %190 = tpu.matmul %188, %189, %cst_154 {dimension_numbers = #tpu.dot_dimension_numbers<[1], [0], [0], [1], [0, 0, 1, 1], [], []>} : vector<8x51xbf16>, vector<51x512xbf16>, vector<8x512xf32> -> vector<8x512xf32>
    %c0_155 = arith.constant 0 : index
    %c0_156 = arith.constant 0 : index
    %191 = vector.load %arg22[%c0_155, %c0_156] : memref<8x512xf32, #tpu.memory_space<vmem>>, vector<8x512xf32>
    tpu.vector_store %arg22[%c0_155, %c0_156], %190 {strides = array<i32>} : memref<8x512xf32, #tpu.memory_space<vmem>>, vector<8x512xf32>,
    %c0_157 = arith.constant 0 : index
    %c0_158 = arith.constant 0 : index
    %192 = vector.load %arg22[%c0_157, %c0_158] : memref<8x512xf32, #tpu.memory_space<vmem>>, vector<2x512xf32>
    %193 = arith.truncf %192 : vector<2x512xf32> to vector<2x512xbf16>
    %c0_159 = arith.constant 0 : index
    %c0_160 = arith.constant 0 : index
    %194 = vector.load %arg14[%c0_159, %c0_160] : memref<2048x40xbf16, #tpu.memory_space<vmem>>, vector<512x40xbf16>
    %cst_161 = arith.constant dense<0.000000e+00> : vector<2x40xf32>
    %195 = tpu.matmul %193, %194, %cst_161 {dimension_numbers = #tpu.dot_dimension_numbers<[1], [0], [0], [1], [0, 0, 1, 1], [], []>} : vector<2x512xbf16>, vector<512x40xbf16>, vector<2x40xf32> -> vector<2x40xf32>
    %c2_162 = arith.constant 2 : index
    %c0_163 = arith.constant 0 : index
    %196 = vector.load %arg22[%c2_162, %c0_163] : memref<8x512xf32, #tpu.memory_space<vmem>>, vector<2x512xf32>
    %197 = arith.truncf %196 : vector<2x512xf32> to vector<2x512xbf16>
    %c512_164 = arith.constant 512 : index
    %c0_165 = arith.constant 0 : index
    %198 = vector.load %arg14[%c512_164, %c0_165] : memref<2048x40xbf16, #tpu.memory_space<vmem>>, vector<512x40xbf16>
    %cst_166 = arith.constant dense<0.000000e+00> : vector<2x40xf32>
    %199 = tpu.matmul %197, %198, %cst_166 {dimension_numbers = #tpu.dot_dimension_numbers<[1], [0], [0], [1], [0, 0, 1, 1], [], []>} : vector<2x512xbf16>, vector<512x40xbf16>, vector<2x40xf32> -> vector<2x40xf32>
    %200 = arith.addf %195, %199 : vector<2x40xf32>
    %c4 = arith.constant 4 : index
    %c0_167 = arith.constant 0 : index
    %201 = vector.load %arg22[%c4, %c0_167] : memref<8x512xf32, #tpu.memory_space<vmem>>, vector<2x512xf32>
    %202 = arith.truncf %201 : vector<2x512xf32> to vector<2x512xbf16>
    %c1024 = arith.constant 1024 : index
    %c0_168 = arith.constant 0 : index
    %203 = vector.load %arg14[%c1024, %c0_168] : memref<2048x40xbf16, #tpu.memory_space<vmem>>, vector<512x40xbf16>
    %cst_169 = arith.constant dense<0.000000e+00> : vector<2x40xf32>
    %204 = tpu.matmul %202, %203, %cst_169 {dimension_numbers = #tpu.dot_dimension_numbers<[1], [0], [0], [1], [0, 0, 1, 1], [], []>} : vector<2x512xbf16>, vector<512x40xbf16>, vector<2x40xf32> -> vector<2x40xf32>
    %205 = arith.addf %200, %204 : vector<2x40xf32>
    %c6_170 = arith.constant 6 : index
    %c0_171 = arith.constant 0 : index
    %206 = vector.load %arg22[%c6_170, %c0_171] : memref<8x512xf32, #tpu.memory_space<vmem>>, vector<2x512xf32>
    %207 = arith.truncf %206 : vector<2x512xf32> to vector<2x512xbf16>
    %c1536 = arith.constant 1536 : index
    %c0_172 = arith.constant 0 : index
    %208 = vector.load %arg14[%c1536, %c0_172] : memref<2048x40xbf16, #tpu.memory_space<vmem>>, vector<512x40xbf16>
    %cst_173 = arith.constant dense<0.000000e+00> : vector<2x40xf32>
    %209 = tpu.matmul %207, %208, %cst_173 {dimension_numbers = #tpu.dot_dimension_numbers<[1], [0], [0], [1], [0, 0, 1, 1], [], []>} : vector<2x512xbf16>, vector<512x40xbf16>, vector<2x40xf32> -> vector<2x40xf32>
    %210 = arith.addf %205, %209 : vector<2x40xf32>
    %c0_174 = arith.constant 0 : index
    %c0_175 = arith.constant 0 : index
    %211 = vector.load %arg15[%c0_174, %c0_175] : memref<1x40xf32, #tpu.memory_space<vmem>>, vector<1x40xf32>
    %212 = vector.broadcast %211 : vector<1x40xf32> to vector<2x40xf32>
    %213 = arith.addf %210, %212 : vector<2x40xf32>
    %c0_176 = arith.constant 0 : index
    %c0_177 = arith.constant 0 : index
    %214 = vector.load %arg16[%c0_176, %c0_177] : memref<2x40xf32, #tpu.memory_space<vmem>>, vector<2x40xf32>
    tpu.vector_store %arg16[%c0_176, %c0_177], %213 {strides = array<i32>} : memref<2x40xf32, #tpu.memory_space<vmem>>, vector<2x40xf32>,
    return
  }
  func.func @transform_0(%arg0: i32) -> (i32, i32) {
    %c0_i32 = arith.constant 0 : i32
    %c0_i32_0 = arith.constant 0 : i32
    %c0_i32_1 = arith.constant 0 : i32
    return %c0_i32, %c0_i32_0 : i32, i32
  }
  func.func @transform_1(%arg0: i32) -> (i32, i32) {
    %c0_i32 = arith.constant 0 : i32
    %c0_i32_0 = arith.constant 0 : i32
    %c0_i32_1 = arith.constant 0 : i32
    return %c0_i32, %c0_i32_0 : i32, i32
  }
  func.func @transform_2(%arg0: i32) -> (i32, i32) {
    %c0_i32 = arith.constant 0 : i32
    %c0_i32_0 = arith.constant 0 : i32
    %c0_i32_1 = arith.constant 0 : i32
    return %c0_i32, %c0_i32_0 : i32, i32
  }
  func.func @transform_3(%arg0: i32) -> (i32, i32) {
    %c0_i32 = arith.constant 0 : i32
    %c0_i32_0 = arith.constant 0 : i32
    %c0_i32_1 = arith.constant 0 : i32
    return %c0_i32, %c0_i32_0 : i32, i32
  }
  func.func @transform_4(%arg0: i32) -> (i32, i32) {
    %c0_i32 = arith.constant 0 : i32
    %c0_i32_0 = arith.constant 0 : i32
    %c0_i32_1 = arith.constant 0 : i32
    return %c0_i32, %c0_i32_0 : i32, i32
  }
  func.func @transform_5(%arg0: i32) -> (i32, i32) {
    %c0_i32 = arith.constant 0 : i32
    %c0_i32_0 = arith.constant 0 : i32
    %c0_i32_1 = arith.constant 0 : i32
    return %c0_i32, %c0_i32_0 : i32, i32
  }
  func.func @transform_6(%arg0: i32) -> (i32, i32) {
    %c0_i32 = arith.constant 0 : i32
    %c0_i32_0 = arith.constant 0 : i32
    %c0_i32_1 = arith.constant 0 : i32
    return %c0_i32, %c0_i32_0 : i32, i32
  }
  func.func @transform_7(%arg0: i32) -> (i32, i32) {
    %c0_i32 = arith.constant 0 : i32
    %c0_i32_0 = arith.constant 0 : i32
    %c0_i32_1 = arith.constant 0 : i32
    return %c0_i32, %c0_i32_0 : i32, i32
  }
  func.func @transform_8(%arg0: i32) -> (i32, i32) {
    %c0_i32 = arith.constant 0 : i32
    %c0_i32_0 = arith.constant 0 : i32
    %c0_i32_1 = arith.constant 0 : i32
    return %c0_i32, %c0_i32_0 : i32, i32
  }
  func.func @transform_9(%arg0: i32) -> (i32, i32) {
    %c0_i32 = arith.constant 0 : i32
    %c0_i32_0 = arith.constant 0 : i32
    %c0_i32_1 = arith.constant 0 : i32
    return %c0_i32, %c0_i32_0 : i32, i32
  }
  func.func @transform_10(%arg0: i32) -> (i32, i32) {
    %c0_i32 = arith.constant 0 : i32
    %c0_i32_0 = arith.constant 0 : i32
    %c0_i32_1 = arith.constant 0 : i32
    return %c0_i32, %c0_i32_0 : i32, i32
  }
  func.func @transform_11(%arg0: i32) -> (i32, i32) {
    %c0_i32 = arith.constant 0 : i32
    %c0_i32_0 = arith.constant 0 : i32
    %c0_i32_1 = arith.constant 0 : i32
    return %c0_i32, %c0_i32_0 : i32, i32
  }
  func.func @transform_12(%arg0: i32) -> (i32, i32) {
    %c0_i32 = arith.constant 0 : i32
    %c0_i32_0 = arith.constant 0 : i32
    %c0_i32_1 = arith.constant 0 : i32
    return %c0_i32, %c0_i32_0 : i32, i32
  }
  func.func @transform_13(%arg0: i32) -> (i32, i32) {
    %c0_i32 = arith.constant 0 : i32
    %c0_i32_0 = arith.constant 0 : i32
    %c0_i32_1 = arith.constant 0 : i32
    return %c0_i32, %c0_i32_0 : i32, i32
  }
  func.func @transform_14(%arg0: i32) -> (i32, i32) {
    %c0_i32 = arith.constant 0 : i32
    %c0_i32_0 = arith.constant 0 : i32
    %c0_i32_1 = arith.constant 0 : i32
    return %c0_i32, %c0_i32_0 : i32, i32
  }
  func.func @transform_15(%arg0: i32) -> (i32, i32) {
    %c0_i32 = arith.constant 0 : i32
    %c0_i32_0 = arith.constant 0 : i32
    %c0_i32_1 = arith.constant 0 : i32
    return %c0_i32, %c0_i32_0 : i32, i32
  }
}

</mosaic_0001>

<llo_original>
// kernel: cnn_forward.1
$region0: #{cnn_forward.1}
  #allocation0 [shape = 'u32[]', space=smem, size = 0x4, offset = 0x4, fixed_abs, tag = 'smem constant byte address 0x4 - core index']
  #allocation1 [shape = 'u32[72,128]{1,0:T(1,128)}', space=vmem, size = 0x9000, scoped, tag = 'internal scratch']
  #allocation2 [shape = 'f32[610,16]{1,0:T(8,128)}', space=vmem, size = 0x4d000, scoped, tag = 'scratch operand']
  #allocation3 [shape = 'f32[200,16]{1,0:T(8,128)}', space=vmem, size = 0x19000, scoped, tag = 'scratch operand']
  #allocation4 [shape = 'f32[178,64]{1,0:T(8,128)}', space=vmem, size = 0x17000, scoped, tag = 'scratch operand']
  #allocation5 [shape = 'f32[72,64]{1,0:T(8,128)}', space=vmem, size = 0x9000, scoped, tag = 'scratch operand']
  #allocation6 [shape = 'f32[58,512]{1,0:T(8,128)}', space=vmem, size = 0x20000, scoped, tag = 'scratch operand']
  #allocation7 [shape = 'f32[8,512]{1,0:T(8,128)}', space=vmem, size = 0x4000, scoped, tag = 'scratch operand']
  %s0 = inlined_call_operand.vmem [shape: f32[648,3], index: 0, kind: input, shape index: {}]
  %s1 = inlined_call_operand.vmem [shape: bf16[27,16], index: 1, kind: input, shape index: {}]
  %s2 = inlined_call_operand.vmem [shape: f32[1,16], index: 2, kind: input, shape index: {}]
  %s3 = inlined_call_operand.vmem [shape: f32[1,16], index: 3, kind: input, shape index: {}]
  %s4 = inlined_call_operand.vmem [shape: bf16[200,591], index: 4, kind: input, shape index: {}]
  %s5 = inlined_call_operand.vmem [shape: bf16[144,64], index: 5, kind: input, shape index: {}]
  %s6 = inlined_call_operand.vmem [shape: f32[1,64], index: 6, kind: input, shape index: {}]
  %s7 = inlined_call_operand.vmem [shape: f32[1,64], index: 7, kind: input, shape index: {}]
  %s8 = inlined_call_operand.vmem [shape: bf16[72,167], index: 8, kind: input, shape index: {}]
  %s9 = inlined_call_operand.vmem [shape: bf16[576,512], index: 9, kind: input, shape index: {}]
  %s10 = inlined_call_operand.vmem [shape: f32[1,512], index: 10, kind: input, shape index: {}]
  %s11 = inlined_call_operand.vmem [shape: f32[1,512], index: 11, kind: input, shape index: {}]
  %s12 = inlined_call_operand.vmem [shape: bf16[8,51], index: 12, kind: input, shape index: {}]
  %s13 = inlined_call_operand.vmem [shape: bf16[2048,40], index: 13, kind: input, shape index: {}]
  %s14 = inlined_call_operand.vmem [shape: f32[1,40], index: 14, kind: input, shape index: {}]
  %s15 = inlined_call_operand.hbm [shape: f32[2,40], index: 15, kind: output, shape index: {}]
  %s16 = sld [smem:[#allocation0]]
  $region70: #{cnn_forward.1} parent=0
    _
  %s18 = ssub.s32 1, %s16
  %s19 = scalar_select 0, %s18, %s16
  $region1: #{cnn_forward.1} parent=0
    #allocation8 [shape = 'u8[1024]{0}', space=vmem, size = 0x400, scoped, tag = 'output window, operand 0, single buffered']
    #allocation9 [shape = 's32[1]{0}', space=sflag, size = 0x4, scoped, tag = 'scoped memory for cnn_forward.1']
    %20 = vsyncpa [#allocation9], 0
    // Predicated region
    $region2: #{cnn_forward.1} parent=1 // pred_check
      _
    $region3: #{cnn_forward.1} parent=1 // pred_check_branch
      %22 = sbr.rel (0) target = $region5
    $region4: #{cnn_forward.1} parent=1 // pred_region
      _
    $region5: #{cnn_forward.1} parent=1 // pred_fallthru
      _
    // Predicated region
    $region6: #{cnn_forward.1} parent=1 // pred_check
      _
    $region7: #{cnn_forward.1} parent=1 // pred_check_branch
      %24 = sbr.rel (0) target = $region9
    $region8: #{cnn_forward.1} parent=1 // pred_region
      _
    $region9: #{cnn_forward.1} parent=1 // pred_fallthru
      _
    // Predicated region
    $region10: #{cnn_forward.1} parent=1 // pred_check
      _
    $region11: #{cnn_forward.1} parent=1 // pred_check_branch
      %26 = sbr.rel (0) target = $region13
    $region12: #{cnn_forward.1} parent=1 // pred_region
      _
    $region13: #{cnn_forward.1} parent=1 // pred_fallthru
      _
    // Predicated region
    $region14: #{cnn_forward.1} parent=1 // pred_check
      _
    $region15: #{cnn_forward.1} parent=1 // pred_check_branch
      %28 = sbr.rel (0) target = $region17
    $region16: #{cnn_forward.1} parent=1 // pred_region
      _
    $region17: #{cnn_forward.1} parent=1 // pred_fallthru
      _
    // Predicated region
    $region18: #{cnn_forward.1} parent=1 // pred_check
      _
    $region19: #{cnn_forward.1} parent=1 // pred_check_branch
      %30 = sbr.rel (0) target = $region21
    $region20: #{cnn_forward.1} parent=1 // pred_region
      _
    $region21: #{cnn_forward.1} parent=1 // pred_fallthru
      _
    // Predicated region
    $region22: #{cnn_forward.1} parent=1 // pred_check
      _
    $region23: #{cnn_forward.1} parent=1 // pred_check_branch
      %32 = sbr.rel (0) target = $region25
    $region24: #{cnn_forward.1} parent=1 // pred_region
      _
    $region25: #{cnn_forward.1} parent=1 // pred_fallthru
      _
    // Predicated region
    $region26: #{cnn_forward.1} parent=1 // pred_check
      _
    $region27: #{cnn_forward.1} parent=1 // pred_check_branch
      %34 = sbr.rel (0) target = $region29
    $region28: #{cnn_forward.1} parent=1 // pred_region
      _
    $region29: #{cnn_forward.1} parent=1 // pred_fallthru
      _
    // Predicated region
    $region30: #{cnn_forward.1} parent=1 // pred_check
      _
    $region31: #{cnn_forward.1} parent=1 // pred_check_branch
      %36 = sbr.rel (0) target = $region33
    $region32: #{cnn_forward.1} parent=1 // pred_region
      _
    $region33: #{cnn_forward.1} parent=1 // pred_fallthru
      _
    // Predicated region
    $region34: #{cnn_forward.1} parent=1 // pred_check
      _
    $region35: #{cnn_forward.1} parent=1 // pred_check_branch
      %38 = sbr.rel (0) target = $region37
    $region36: #{cnn_forward.1} parent=1 // pred_region
      _
    $region37: #{cnn_forward.1} parent=1 // pred_fallthru
      _
    // Predicated region
    $region38: #{cnn_forward.1} parent=1 // pred_check
      _
    $region39: #{cnn_forward.1} parent=1 // pred_check_branch
      %40 = sbr.rel (0) target = $region41
    $region40: #{cnn_forward.1} parent=1 // pred_region
      _
    $region41: #{cnn_forward.1} parent=1 // pred_fallthru
      _
    // Predicated region
    $region42: #{cnn_forward.1} parent=1 // pred_check
      _
    $region43: #{cnn_forward.1} parent=1 // pred_check_branch
      %42 = sbr.rel (0) target = $region45
    $region44: #{cnn_forward.1} parent=1 // pred_region
      _
    $region45: #{cnn_forward.1} parent=1 // pred_fallthru
      _
    // Predicated region
    $region46: #{cnn_forward.1} parent=1 // pred_check
      _
    $region47: #{cnn_forward.1} parent=1 // pred_check_branch
      %44 = sbr.rel (0) target = $region49
    $region48: #{cnn_forward.1} parent=1 // pred_region
      _
    $region49: #{cnn_forward.1} parent=1 // pred_fallthru
      _
    // Predicated region
    $region50: #{cnn_forward.1} parent=1 // pred_check
      _
    $region51: #{cnn_forward.1} parent=1 // pred_check_branch
      %46 = sbr.rel (0) target = $region53
    $region52: #{cnn_forward.1} parent=1 // pred_region
      _
    $region53: #{cnn_forward.1} parent=1 // pred_fallthru
      _
    // Predicated region
    $region54: #{cnn_forward.1} parent=1 // pred_check
      _
    $region55: #{cnn_forward.1} parent=1 // pred_check_branch
      %48 = sbr.rel (0) target = $region57
    $region56: #{cnn_forward.1} parent=1 // pred_region
      _
    $region57: #{cnn_forward.1} parent=1 // pred_fallthru
      _
    // Predicated region
    $region58: #{cnn_forward.1} parent=1 // pred_check
      _
    $region59: #{cnn_forward.1} parent=1 // pred_check_branch
      %50 = sbr.rel (0) target = $region61
    $region60: #{cnn_forward.1} parent=1 // pred_region
      _
    $region61: #{cnn_forward.1} parent=1 // pred_fallthru
      _
    %v52 = vld [vmem:[%s0] sm:$0xff]
    %v53 = vld [vmem:[%s0 + $0x8] sm:$0xff]
    %v54 = vld [vmem:[%s0 + $0x10] sm:$0xff]
    %v55 = vld [vmem:[%s0 + $0x18] sm:$0xff]
    %v56 = vld [vmem:[%s0 + $0x20] sm:$0xff]
    %v57 = vld [vmem:[%s0 + $0x28] sm:$0xff]
    %v58 = vld [vmem:[%s0 + $0x30] sm:$0xff]
    %v59 = vld [vmem:[%s0 + $0x38] sm:$0xff]
    %v60 = vld [vmem:[%s0 + $0x40] sm:$0xff]
    %v61 = vld [vmem:[%s0 + $0x48] sm:$0xff]
    %v62 = vld [vmem:[%s0 + $0x50] sm:$0xff]
    %v63 = vld [vmem:[%s0 + $0x58] sm:$0xff]
    %v64 = vld [vmem:[%s0 + $0x60] sm:$0xff]
    %v65 = vld [vmem:[%s0 + $0x68] sm:$0xff]
    %v66 = vld [vmem:[%s0 + $0x70] sm:$0xff]
    %v67 = vld [vmem:[%s0 + $0x78] sm:$0xff]
    %v68 = vld [vmem:[%s0 + $0x80] sm:$0xff]
    %v69 = vld [vmem:[%s0 + $0x88] sm:$0xff]
    %v70 = vld [vmem:[%s0 + $0x90] sm:$0xff]
    %v71 = vld [vmem:[%s0 + $0x98] sm:$0xff]
    %v72 = vld [vmem:[%s0 + $0xa0] sm:$0xff]
    %v73 = vld [vmem:[%s0 + $0xa8] sm:$0xff]
    %v74 = vld [vmem:[%s0 + $0xb0] sm:$0xff]
    %v75 = vld [vmem:[%s0 + $0xb8] sm:$0xff]
    %v76 = vld [vmem:[%s0 + $0xc0] sm:$0xff]
    %v77 = vld [vmem:[%s0 + $0xc8] sm:$0xff]
    %v78 = vld [vmem:[%s0 + $0xd0] sm:$0xff]
    %v79 = vld [vmem:[%s0 + $0xd8] sm:$0xff]
    %v80 = vld [vmem:[%s0 + $0xe0] sm:$0xff]
    %v81 = vld [vmem:[%s0 + $0xe8] sm:$0xff]
    %v82 = vld [vmem:[%s0 + $0xf0] sm:$0xff]
    %v83 = vld [vmem:[%s0 + $0xf8] sm:$0xff]
    %v84 = vld [vmem:[%s0 + $0x100] sm:$0xff]
    %v85 = vld [vmem:[%s0 + $0x108] sm:$0xff]
    %v86 = vld [vmem:[%s0 + $0x110] sm:$0xff]
    %v87 = vld [vmem:[%s0 + $0x118] sm:$0xff]
    %v88 = vld [vmem:[%s0 + $0x120] sm:$0xff]
    %v89 = vld [vmem:[%s0 + $0x128] sm:$0xff]
    %v90 = vld [vmem:[%s0 + $0x130] sm:$0xff]
    %v91 = vld [vmem:[%s0 + $0x138] sm:$0xff]
    %v92 = vld [vmem:[%s0 + $0x140] sm:$0xff]
    %v93 = vld [vmem:[%s0 + $0x148] sm:$0xff]
    %v94 = vld [vmem:[%s0 + $0x150] sm:$0xff]
    %v95 = vld [vmem:[%s0 + $0x158] sm:$0xff]
    %v96 = vld [vmem:[%s0 + $0x160] sm:$0xff]
    %v97 = vld [vmem:[%s0 + $0x168] sm:$0xff]
    %v98 = vld [vmem:[%s0 + $0x170] sm:$0xff]
    %v99 = vld [vmem:[%s0 + $0x178] sm:$0xff]
    %v100 = vld [vmem:[%s0 + $0x180] sm:$0xff]
    %v101 = vld [vmem:[%s0 + $0x188] sm:$0xff]
    %v102 = vld [vmem:[%s0 + $0x190] sm:$0xff]
    %v103 = vld [vmem:[%s0 + $0x198] sm:$0xff]
    %v104 = vld [vmem:[%s0 + $0x1a0] sm:$0xff]
    %v105 = vld [vmem:[%s0 + $0x1a8] sm:$0xff]
    %v106 = vld [vmem:[%s0 + $0x1b0] sm:$0xff]
    %v107 = vld [vmem:[%s0 + $0x1b8] sm:$0xff]
    %v108 = vld [vmem:[%s0 + $0x1c0] sm:$0xff]
    %v109 = vld [vmem:[%s0 + $0x1c8] sm:$0xff]
    %v110 = vld [vmem:[%s0 + $0x1d0] sm:$0xff]
    %v111 = vld [vmem:[%s0 + $0x1d8] sm:$0xff]
    %v112 = vld [vmem:[%s0 + $0x1e0] sm:$0xff]
    %v113 = vld [vmem:[%s0 + $0x1e8] sm:$0xff]
    %v114 = vld [vmem:[%s0 + $0x1f0] sm:$0xff]
    %v115 = vld [vmem:[%s0 + $0x1f8] sm:$0xff]
    %v116 = vld [vmem:[%s0 + $0x200] sm:$0xff]
    %v117 = vld [vmem:[%s0 + $0x208] sm:$0xff]
    %v118 = vld [vmem:[%s0 + $0x210] sm:$0xff]
    %v119 = vld [vmem:[%s0 + $0x218] sm:$0xff]
    %v120 = vld [vmem:[%s0 + $0x220] sm:$0xff]
    %v121 = vld [vmem:[%s0 + $0x228] sm:$0xff]
    %v122 = vld [vmem:[%s0 + $0x230] sm:$0xff]
    %v123 = vld [vmem:[%s0 + $0x238] sm:$0xff]
    %v124 = vld [vmem:[%s0 + $0x240] sm:$0xff]
    %v125 = vld [vmem:[%s0 + $0x248] sm:$0xff]
    %v126 = vld [vmem:[%s0 + $0x250] sm:$0xff]
    %v127 = vld [vmem:[%s0 + $0x258] sm:$0xff]
    %v128 = vld [vmem:[%s0 + $0x260] sm:$0x3]
    %v129 = vpack.c.bf16 %v53, %v52
    %v130 = vpack.c.bf16 %v55, %v54
    %v131 = vpack.c.bf16 %v57, %v56
    %v132 = vpack.c.bf16 %v59, %v58
    %v133 = vpack.c.bf16 %v61, %v60
    %v134 = vpack.c.bf16 %v63, %v62
    %v135 = vpack.c.bf16 %v65, %v64
    %v136 = vpack.c.bf16 %v67, %v66
    %v137 = vpack.c.bf16 %v69, %v68
    %v138 = vpack.c.bf16 %v71, %v70
    %v139 = vpack.c.bf16 %v73, %v72
    %v140 = vpack.c.bf16 %v75, %v74
    %v141 = vpack.c.bf16 %v77, %v76
    %v142 = vpack.c.bf16 %v79, %v78
    %v143 = vpack.c.bf16 %v81, %v80
    %v144 = vpack.c.bf16 %v83, %v82
    %v145 = vpack.c.bf16 %v85, %v84
    %v146 = vpack.c.bf16 %v87, %v86
    %v147 = vpack.c.bf16 %v89, %v88
    %v148 = vpack.c.bf16 %v91, %v90
    %v149 = vpack.c.bf16 %v93, %v92
    %v150 = vpack.c.bf16 %v95, %v94
    %v151 = vpack.c.bf16 %v97, %v96
    %v152 = vpack.c.bf16 %v99, %v98
    %v153 = vpack.c.bf16 %v101, %v100
    %v154 = vpack.c.bf16 %v103, %v102
    %v155 = vpack.c.bf16 %v105, %v104
    %v156 = vpack.c.bf16 %v107, %v106
    %v157 = vpack.c.bf16 %v109, %v108
    %v158 = vpack.c.bf16 %v111, %v110
    %v159 = vpack.c.bf16 %v113, %v112
    %v160 = vpack.c.bf16 %v115, %v114
    %v161 = vpack.c.bf16 %v117, %v116
    %v162 = vpack.c.bf16 %v119, %v118
    %v163 = vpack.c.bf16 %v121, %v120
    %v164 = vpack.c.bf16 %v123, %v122
    %v165 = vpack.c.bf16 %v125, %v124
    %v166 = vpack.c.bf16 %v127, %v126
    %v167 = vpack.c.bf16 %v128, %v128
    %v168 = vld [vmem:[%s1] sm:$0x3]
    %v169 = vld [vmem:[%s0 + $0x1] sm:$0xff]
    %v170 = vld [vmem:[%s0 + $0x9] sm:$0xff]
    %v171 = vld [vmem:[%s0 + $0x11] sm:$0xff]
    %v172 = vld [vmem:[%s0 + $0x19] sm:$0xff]
    %v173 = vld [vmem:[%s0 + $0x21] sm:$0xff]
    %v174 = vld [vmem:[%s0 + $0x29] sm:$0xff]
    %v175 = vld [vmem:[%s0 + $0x31] sm:$0xff]
    %v176 = vld [vmem:[%s0 + $0x39] sm:$0xff]
    %v177 = vld [vmem:[%s0 + $0x41] sm:$0xff]
    %v178 = vld [vmem:[%s0 + $0x49] sm:$0xff]
    %v179 = vld [vmem:[%s0 + $0x51] sm:$0xff]
    %v180 = vld [vmem:[%s0 + $0x59] sm:$0xff]
    %v181 = vld [vmem:[%s0 + $0x61] sm:$0xff]
    %v182 = vld [vmem:[%s0 + $0x69] sm:$0xff]
    %v183 = vld [vmem:[%s0 + $0x71] sm:$0xff]
    %v184 = vld [vmem:[%s0 + $0x79] sm:$0xff]
    %v185 = vld [vmem:[%s0 + $0x81] sm:$0xff]
    %v186 = vld [vmem:[%s0 + $0x89] sm:$0xff]
    %v187 = vld [vmem:[%s0 + $0x91] sm:$0xff]
    %v188 = vld [vmem:[%s0 + $0x99] sm:$0xff]
    %v189 = vld [vmem:[%s0 + $0xa1] sm:$0xff]
    %v190 = vld [vmem:[%s0 + $0xa9] sm:$0xff]
    %v191 = vld [vmem:[%s0 + $0xb1] sm:$0xff]
    %v192 = vld [vmem:[%s0 + $0xb9] sm:$0xff]
    %v193 = vld [vmem:[%s0 + $0xc1] sm:$0xff]
    %v194 = vld [vmem:[%s0 + $0xc9] sm:$0xff]
    %v195 = vld [vmem:[%s0 + $0xd1] sm:$0xff]
    %v196 = vld [vmem:[%s0 + $0xd9] sm:$0xff]
    %v197 = vld [vmem:[%s0 + $0xe1] sm:$0xff]
    %v198 = vld [vmem:[%s0 + $0xe9] sm:$0xff]
    %v199 = vld [vmem:[%s0 + $0xf1] sm:$0xff]
    %v200 = vld [vmem:[%s0 + $0xf9] sm:$0xff]
    %v201 = vld [vmem:[%s0 + $0x101] sm:$0xff]
    %v202 = vld [vmem:[%s0 + $0x109] sm:$0xff]
    %v203 = vld [vmem:[%s0 + $0x111] sm:$0xff]
    %v204 = vld [vmem:[%s0 + $0x119] sm:$0xff]
    %v205 = vld [vmem:[%s0 + $0x121] sm:$0xff]
    %v206 = vld [vmem:[%s0 + $0x129] sm:$0xff]
    %v207 = vld [vmem:[%s0 + $0x131] sm:$0xff]
    %v208 = vld [vmem:[%s0 + $0x139] sm:$0xff]
    %v209 = vld [vmem:[%s0 + $0x141] sm:$0xff]
    %v210 = vld [vmem:[%s0 + $0x149] sm:$0xff]
    %v211 = vld [vmem:[%s0 + $0x151] sm:$0xff]
    %v212 = vld [vmem:[%s0 + $0x159] sm:$0xff]
    %v213 = vld [vmem:[%s0 + $0x161] sm:$0xff]
    %v214 = vld [vmem:[%s0 + $0x169] sm:$0xff]
    %v215 = vld [vmem:[%s0 + $0x171] sm:$0xff]
    %v216 = vld [vmem:[%s0 + $0x179] sm:$0xff]
    %v217 = vld [vmem:[%s0 + $0x181] sm:$0xff]
    %v218 = vld [vmem:[%s0 + $0x189] sm:$0xff]
    %v219 = vld [vmem:[%s0 + $0x191] sm:$0xff]
    %v220 = vld [vmem:[%s0 + $0x199] sm:$0xff]
    %v221 = vld [vmem:[%s0 + $0x1a1] sm:$0xff]
    %v222 = vld [vmem:[%s0 + $0x1a9] sm:$0xff]
    %v223 = vld [vmem:[%s0 + $0x1b1] sm:$0xff]
    %v224 = vld [vmem:[%s0 + $0x1b9] sm:$0xff]
    %v225 = vld [vmem:[%s0 + $0x1c1] sm:$0xff]
    %v226 = vld [vmem:[%s0 + $0x1c9] sm:$0xff]
    %v227 = vld [vmem:[%s0 + $0x1d1] sm:$0xff]
    %v228 = vld [vmem:[%s0 + $0x1d9] sm:$0xff]
    %v229 = vld [vmem:[%s0 + $0x1e1] sm:$0xff]
    %v230 = vld [vmem:[%s0 + $0x1e9] sm:$0xff]
    %v231 = vld [vmem:[%s0 + $0x1f1] sm:$0xff]
    %v232 = vld [vmem:[%s0 + $0x1f9] sm:$0xff]
    %v233 = vld [vmem:[%s0 + $0x201] sm:$0xff]
    %v234 = vld [vmem:[%s0 + $0x209] sm:$0xff]
    %v235 = vld [vmem:[%s0 + $0x211] sm:$0xff]
    %v236 = vld [vmem:[%s0 + $0x219] sm:$0xff]
    %v237 = vld [vmem:[%s0 + $0x221] sm:$0xff]
    %v238 = vld [vmem:[%s0 + $0x229] sm:$0xff]
    %v239 = vld [vmem:[%s0 + $0x231] sm:$0xff]
    %v240 = vld [vmem:[%s0 + $0x239] sm:$0xff]
    %v241 = vld [vmem:[%s0 + $0x241] sm:$0xff]
    %v242 = vld [vmem:[%s0 + $0x249] sm:$0xff]
    %v243 = vld [vmem:[%s0 + $0x251] sm:$0xff]
    %v244 = vld [vmem:[%s0 + $0x259] sm:$0xff]
    %v245 = vld [vmem:[%s0 + $0x261] sm:$0x3]
    %v246 = vpack.c.bf16 %v170, %v169
    %v247 = vpack.c.bf16 %v172, %v171
    %v248 = vpack.c.bf16 %v174, %v173
    %v249 = vpack.c.bf16 %v176, %v175
    %v250 = vpack.c.bf16 %v178, %v177
    %v251 = vpack.c.bf16 %v180, %v179
    %v252 = vpack.c.bf16 %v182, %v181
    %v253 = vpack.c.bf16 %v184, %v183
    %v254 = vpack.c.bf16 %v186, %v185
    %v255 = vpack.c.bf16 %v188, %v187
    %v256 = vpack.c.bf16 %v190, %v189
    %v257 = vpack.c.bf16 %v192, %v191
    %v258 = vpack.c.bf16 %v194, %v193
    %v259 = vpack.c.bf16 %v196, %v195
    %v260 = vpack.c.bf16 %v198, %v197
    %v261 = vpack.c.bf16 %v200, %v199
    %v262 = vpack.c.bf16 %v202, %v201
    %v263 = vpack.c.bf16 %v204, %v203
    %v264 = vpack.c.bf16 %v206, %v205
    %v265 = vpack.c.bf16 %v208, %v207
    %v266 = vpack.c.bf16 %v210, %v209
    %v267 = vpack.c.bf16 %v212, %v211
    %v268 = vpack.c.bf16 %v214, %v213
    %v269 = vpack.c.bf16 %v216, %v215
    %v270 = vpack.c.bf16 %v218, %v217
    %v271 = vpack.c.bf16 %v220, %v219
    %v272 = vpack.c.bf16 %v222, %v221
    %v273 = vpack.c.bf16 %v224, %v223
    %v274 = vpack.c.bf16 %v226, %v225
    %v275 = vpack.c.bf16 %v228, %v227
    %v276 = vpack.c.bf16 %v230, %v229
    %v277 = vpack.c.bf16 %v232, %v231
    %v278 = vpack.c.bf16 %v234, %v233
    %v279 = vpack.c.bf16 %v236, %v235
    %v280 = vpack.c.bf16 %v238, %v237
    %v281 = vpack.c.bf16 %v240, %v239
    %v282 = vpack.c.bf16 %v242, %v241
    %v283 = vpack.c.bf16 %v244, %v243
    %v284 = vpack.c.bf16 %v245, %v245
    %v285 = vld [vmem:[%s1] sm:$0x6]
    %v287 = vunpack.c.l.b16 %v285
    %v288 = vpack.c.b16 %v287, %v287
    %v290 = vshrl.u32 %v288, 16
    %v292 = vrot.slane %v290, 1
    %v293 = vshll.u32 %v288, 16
    %v295 = vrot.slane %v293, 2
    %v296 = vor.u32 %v292, %v295
    %vm297 = vcmask 23552
    %v299 = vsel %vm297, %v246, 0
    %v302 = vsel %vm297, %v247, 0
    %v305 = vsel %vm297, %v248, 0
    %v308 = vsel %vm297, %v249, 0
    %v311 = vsel %vm297, %v250, 0
    %v314 = vsel %vm297, %v251, 0
    %v317 = vsel %vm297, %v252, 0
    %v320 = vsel %vm297, %v253, 0
    %v323 = vsel %vm297, %v254, 0
    %v326 = vsel %vm297, %v255, 0
    %v329 = vsel %vm297, %v256, 0
    %v332 = vsel %vm297, %v257, 0
    %v335 = vsel %vm297, %v258, 0
    %v338 = vsel %vm297, %v259, 0
    %v341 = vsel %vm297, %v260, 0
    %v344 = vsel %vm297, %v261, 0
    %v347 = vsel %vm297, %v262, 0
    %v350 = vsel %vm297, %v263, 0
    %v353 = vsel %vm297, %v264, 0
    %v356 = vsel %vm297, %v265, 0
    %v359 = vsel %vm297, %v266, 0
    %v362 = vsel %vm297, %v267, 0
    %v365 = vsel %vm297, %v268, 0
    %v368 = vsel %vm297, %v269, 0
    %v371 = vsel %vm297, %v270, 0
    %v374 = vsel %vm297, %v271, 0
    %v377 = vsel %vm297, %v272, 0
    %v380 = vsel %vm297, %v273, 0
    %v383 = vsel %vm297, %v274, 0
    %v386 = vsel %vm297, %v275, 0
    %v389 = vsel %vm297, %v276, 0
    %v392 = vsel %vm297, %v277, 0
    %v395 = vsel %vm297, %v278, 0
    %v398 = vsel %vm297, %v279, 0
    %v401 = vsel %vm297, %v280, 0
    %v404 = vsel %vm297, %v281, 0
    %v407 = vsel %vm297, %v282, 0
    %v410 = vsel %vm297, %v283, 0
    %v413 = vsel %vm297, %v284, 0
    %vm415 = vcmask 1040384
    %vm416 = vcmask 1041408
    %v417 = vsel %vm415, 4294967295, 65535
    %v418 = vsel %vm416, %v417, 0
    %v420 = vand.u32 %v296, %v418
    %422 = vmatpush.bf16.msra.mxu0 0
    %423 = vmatpush.bf16.msra.mxu0 0
    %424 = vmatpush.bf16.msra.mxu0 0
    %425 = vmatpush.bf16.msra.mxu0 0
    %426 = vmatpush.bf16.msra.mxu0 0
    %427 = vmatpush.bf16.msra.mxu0 0
    %428 = vmatpush.bf16.msra.mxu0 0
    %429 = vmatpush.bf16.msra.mxu0 %v420
    %430 = vmatmul.bf16.gmra.mxu0 %v299
    %v431 = vpop.f32.mrf.mxu0
    %v432 = vadd.f32 0.0, %v431
    %v433 = vpop.f32.mrf.mxu0
    %v434 = vadd.f32 0.0, %v433
    %435 = vmatmul.bf16.gmra.mxu0 %v302
    %v436 = vpop.f32.mrf.mxu0
    %v437 = vadd.f32 0.0, %v436
    %v438 = vpop.f32.mrf.mxu0
    %v439 = vadd.f32 0.0, %v438
    %440 = vmatmul.bf16.gmra.mxu0 %v305
    %v441 = vpop.f32.mrf.mxu0
    %v442 = vadd.f32 0.0, %v441
    %v443 = vpop.f32.mrf.mxu0
    %v444 = vadd.f32 0.0, %v443
    %445 = vmatmul.bf16.gmra.mxu0 %v308
    %v446 = vpop.f32.mrf.mxu0
    %v447 = vadd.f32 0.0, %v446
    %v448 = vpop.f32.mrf.mxu0
    %v449 = vadd.f32 0.0, %v448
    %450 = vmatmul.bf16.gmra.mxu0 %v311
    %v451 = vpop.f32.mrf.mxu0
    %v452 = vadd.f32 0.0, %v451
    %v453 = vpop.f32.mrf.mxu0
    %v454 = vadd.f32 0.0, %v453
    %455 = vmatmul.bf16.gmra.mxu0 %v314
    %v456 = vpop.f32.mrf.mxu0
    %v457 = vadd.f32 0.0, %v456
    %v458 = vpop.f32.mrf.mxu0
    %v459 = vadd.f32 0.0, %v458
    %460 = vmatmul.bf16.gmra.mxu0 %v317
    %v461 = vpop.f32.mrf.mxu0
    %v462 = vadd.f32 0.0, %v461
    %v463 = vpop.f32.mrf.mxu0
    %v464 = vadd.f32 0.0, %v463
    %465 = vmatmul.bf16.gmra.mxu0 %v320
    %v466 = vpop.f32.mrf.mxu0
    %v467 = vadd.f32 0.0, %v466
    %v468 = vpop.f32.mrf.mxu0
    %v469 = vadd.f32 0.0, %v468
    %470 = vmatmul.bf16.gmra.mxu0 %v323
    %v471 = vpop.f32.mrf.mxu0
    %v472 = vadd.f32 0.0, %v471
    %v473 = vpop.f32.mrf.mxu0
    %v474 = vadd.f32 0.0, %v473
    %475 = vmatmul.bf16.gmra.mxu0 %v326
    %v476 = vpop.f32.mrf.mxu0
    %v477 = vadd.f32 0.0, %v476
    %v478 = vpop.f32.mrf.mxu0
    %v479 = vadd.f32 0.0, %v478
    %480 = vmatmul.bf16.gmra.mxu0 %v329
    %v481 = vpop.f32.mrf.mxu0
    %v482 = vadd.f32 0.0, %v481
    %v483 = vpop.f32.mrf.mxu0
    %v484 = vadd.f32 0.0, %v483
    %485 = vmatmul.bf16.gmra.mxu0 %v332
    %v486 = vpop.f32.mrf.mxu0
    %v487 = vadd.f32 0.0, %v486
    %v488 = vpop.f32.mrf.mxu0
    %v489 = vadd.f32 0.0, %v488
    %490 = vmatmul.bf16.gmra.mxu0 %v335
    %v491 = vpop.f32.mrf.mxu0
    %v492 = vadd.f32 0.0, %v491
    %v493 = vpop.f32.mrf.mxu0
    %v494 = vadd.f32 0.0, %v493
    %495 = vmatmul.bf16.gmra.mxu0 %v338
    %v496 = vpop.f32.mrf.mxu0
    %v497 = vadd.f32 0.0, %v496
    %v498 = vpop.f32.mrf.mxu0
    %v499 = vadd.f32 0.0, %v498
    %500 = vmatmul.bf16.gmra.mxu0 %v341
    %v501 = vpop.f32.mrf.mxu0
    %v502 = vadd.f32 0.0, %v501
    %v503 = vpop.f32.mrf.mxu0
    %v504 = vadd.f32 0.0, %v503
    %505 = vmatmul.bf16.gmra.mxu0 %v344
    %v506 = vpop.f32.mrf.mxu0
    %v507 = vadd.f32 0.0, %v506
    %v508 = vpop.f32.mrf.mxu0
    %v509 = vadd.f32 0.0, %v508
    %510 = vmatmul.bf16.gmra.mxu0 %v347
    %v511 = vpop.f32.mrf.mxu0
    %v512 = vadd.f32 0.0, %v511
    %v513 = vpop.f32.mrf.mxu0
    %v514 = vadd.f32 0.0, %v513
    %515 = vmatmul.bf16.gmra.mxu0 %v350
    %v516 = vpop.f32.mrf.mxu0
    %v517 = vadd.f32 0.0, %v516
    %v518 = vpop.f32.mrf.mxu0
    %v519 = vadd.f32 0.0, %v518
    %520 = vmatmul.bf16.gmra.mxu0 %v353
    %v521 = vpop.f32.mrf.mxu0
    %v522 = vadd.f32 0.0, %v521
    %v523 = vpop.f32.mrf.mxu0
    %v524 = vadd.f32 0.0, %v523
    %525 = vmatmul.bf16.gmra.mxu0 %v356
    %v526 = vpop.f32.mrf.mxu0
    %v527 = vadd.f32 0.0, %v526
    %v528 = vpop.f32.mrf.mxu0
    %v529 = vadd.f32 0.0, %v528
    %530 = vmatmul.bf16.gmra.mxu0 %v359
    %v531 = vpop.f32.mrf.mxu0
    %v532 = vadd.f32 0.0, %v531
    %v533 = vpop.f32.mrf.mxu0
    %v534 = vadd.f32 0.0, %v533
    %535 = vmatmul.bf16.gmra.mxu0 %v362
    %v536 = vpop.f32.mrf.mxu0
    %v537 = vadd.f32 0.0, %v536
    %v538 = vpop.f32.mrf.mxu0
    %v539 = vadd.f32 0.0, %v538
    %540 = vmatmul.bf16.gmra.mxu0 %v365
    %v541 = vpop.f32.mrf.mxu0
    %v542 = vadd.f32 0.0, %v541
    %v543 = vpop.f32.mrf.mxu0
    %v544 = vadd.f32 0.0, %v543
    %545 = vmatmul.bf16.gmra.mxu0 %v368
    %v546 = vpop.f32.mrf.mxu0
    %v547 = vadd.f32 0.0, %v546
    %v548 = vpop.f32.mrf.mxu0
    %v549 = vadd.f32 0.0, %v548
    %550 = vmatmul.bf16.gmra.mxu0 %v371
    %v551 = vpop.f32.mrf.mxu0
    %v552 = vadd.f32 0.0, %v551
    %v553 = vpop.f32.mrf.mxu0
    %v554 = vadd.f32 0.0, %v553
    %555 = vmatmul.bf16.gmra.mxu0 %v374
    %v556 = vpop.f32.mrf.mxu0
    %v557 = vadd.f32 0.0, %v556
    %v558 = vpop.f32.mrf.mxu0
    %v559 = vadd.f32 0.0, %v558
    %560 = vmatmul.bf16.gmra.mxu0 %v377
    %v561 = vpop.f32.mrf.mxu0
    %v562 = vadd.f32 0.0, %v561
    %v563 = vpop.f32.mrf.mxu0
    %v564 = vadd.f32 0.0, %v563
    %565 = vmatmul.bf16.gmra.mxu0 %v380
    %v566 = vpop.f32.mrf.mxu0
    %v567 = vadd.f32 0.0, %v566
    %v568 = vpop.f32.mrf.mxu0
    %v569 = vadd.f32 0.0, %v568
    %570 = vmatmul.bf16.gmra.mxu0 %v383
    %v571 = vpop.f32.mrf.mxu0
    %v572 = vadd.f32 0.0, %v571
    %v573 = vpop.f32.mrf.mxu0
    %v574 = vadd.f32 0.0, %v573
    %575 = vmatmul.bf16.gmra.mxu0 %v386
    %v576 = vpop.f32.mrf.mxu0
    %v577 = vadd.f32 0.0, %v576
    %v578 = vpop.f32.mrf.mxu0
    %v579 = vadd.f32 0.0, %v578
    %580 = vmatmul.bf16.gmra.mxu0 %v389
    %v581 = vpop.f32.mrf.mxu0
    %v582 = vadd.f32 0.0, %v581
    %v583 = vpop.f32.mrf.mxu0
    %v584 = vadd.f32 0.0, %v583
    %585 = vmatmul.bf16.gmra.mxu0 %v392
    %v586 = vpop.f32.mrf.mxu0
    %v587 = vadd.f32 0.0, %v586
    %v588 = vpop.f32.mrf.mxu0
    %v589 = vadd.f32 0.0, %v588
    %590 = vmatmul.bf16.gmra.mxu0 %v395
    %v591 = vpop.f32.mrf.mxu0
    %v592 = vadd.f32 0.0, %v591
    %v593 = vpop.f32.mrf.mxu0
    %v594 = vadd.f32 0.0, %v593
    %595 = vmatmul.bf16.gmra.mxu0 %v398
    %v596 = vpop.f32.mrf.mxu0
    %v597 = vadd.f32 0.0, %v596
    %v598 = vpop.f32.mrf.mxu0
    %v599 = vadd.f32 0.0, %v598
    %600 = vmatmul.bf16.gmra.mxu0 %v401
    %v601 = vpop.f32.mrf.mxu0
    %v602 = vadd.f32 0.0, %v601
    %v603 = vpop.f32.mrf.mxu0
    %v604 = vadd.f32 0.0, %v603
    %605 = vmatmul.bf16.gmra.mxu0 %v404
    %v606 = vpop.f32.mrf.mxu0
    %v607 = vadd.f32 0.0, %v606
    %v608 = vpop.f32.mrf.mxu0
    %v609 = vadd.f32 0.0, %v608
    %610 = vmatmul.bf16.gmra.mxu0 %v407
    %v611 = vpop.f32.mrf.mxu0
    %v612 = vadd.f32 0.0, %v611
    %v613 = vpop.f32.mrf.mxu0
    %v614 = vadd.f32 0.0, %v613
    %615 = vmatmul.bf16.gmra.mxu0 %v410
    %v616 = vpop.f32.mrf.mxu0
    %v617 = vadd.f32 0.0, %v616
    %v618 = vpop.f32.mrf.mxu0
    %v619 = vadd.f32 0.0, %v618
    %620 = vmatmul.bf16.gmra.mxu0 %v413
    %v621 = vpop.f32.mrf.mxu0
    %v622 = vadd.f32 0.0, %v621
    %v623 = vpop.f32.mrf.mxu0
    %624 = vdwg.mxu0
    %v626 = vsel %vm297, %v129, 0
    %v629 = vsel %vm297, %v130, 0
    %v632 = vsel %vm297, %v131, 0
    %v635 = vsel %vm297, %v132, 0
    %v638 = vsel %vm297, %v133, 0
    %v641 = vsel %vm297, %v134, 0
    %v644 = vsel %vm297, %v135, 0
    %v647 = vsel %vm297, %v136, 0
    %v650 = vsel %vm297, %v137, 0
    %v653 = vsel %vm297, %v138, 0
    %v656 = vsel %vm297, %v139, 0
    %v659 = vsel %vm297, %v140, 0
    %v662 = vsel %vm297, %v141, 0
    %v665 = vsel %vm297, %v142, 0
    %v668 = vsel %vm297, %v143, 0
    %v671 = vsel %vm297, %v144, 0
    %v674 = vsel %vm297, %v145, 0
    %v677 = vsel %vm297, %v146, 0
    %v680 = vsel %vm297, %v147, 0
    %v683 = vsel %vm297, %v148, 0
    %v686 = vsel %vm297, %v149, 0
    %v689 = vsel %vm297, %v150, 0
    %v692 = vsel %vm297, %v151, 0
    %v695 = vsel %vm297, %v152, 0
    %v698 = vsel %vm297, %v153, 0
    %v701 = vsel %vm297, %v154, 0
    %v704 = vsel %vm297, %v155, 0
    %v707 = vsel %vm297, %v156, 0
    %v710 = vsel %vm297, %v157, 0
    %v713 = vsel %vm297, %v158, 0
    %v716 = vsel %vm297, %v159, 0
    %v719 = vsel %vm297, %v160, 0
    %v722 = vsel %vm297, %v161, 0
    %v725 = vsel %vm297, %v162, 0
    %v728 = vsel %vm297, %v163, 0
    %v731 = vsel %vm297, %v164, 0
    %v734 = vsel %vm297, %v165, 0
    %v737 = vsel %vm297, %v166, 0
    %v740 = vsel %vm297, %v167, 0
    %v743 = vand.u32 %v168, %v418
    %745 = vmatpush.bf16.msra.mxu0 0
    %746 = vmatpush.bf16.msra.mxu0 0
    %747 = vmatpush.bf16.msra.mxu0 0
    %748 = vmatpush.bf16.msra.mxu0 0
    %749 = vmatpush.bf16.msra.mxu0 0
    %750 = vmatpush.bf16.msra.mxu0 0
    %751 = vmatpush.bf16.msra.mxu0 0
    %752 = vmatpush.bf16.msra.mxu0 %v743
    %753 = vmatmul.bf16.gmra.mxu0 %v626
    %v754 = vpop.f32.mrf.mxu0
    %v755 = vadd.f32 %v432, %v754
    %v756 = vpop.f32.mrf.mxu0
    %v757 = vadd.f32 %v434, %v756
    %758 = vmatmul.bf16.gmra.mxu0 %v629
    %v759 = vpop.f32.mrf.mxu0
    %v760 = vadd.f32 %v437, %v759
    %v761 = vpop.f32.mrf.mxu0
    %v762 = vadd.f32 %v439, %v761
    %763 = vmatmul.bf16.gmra.mxu0 %v632
    %v764 = vpop.f32.mrf.mxu0
    %v765 = vadd.f32 %v442, %v764
    %v766 = vpop.f32.mrf.mxu0
    %v767 = vadd.f32 %v444, %v766
    %768 = vmatmul.bf16.gmra.mxu0 %v635
    %v769 = vpop.f32.mrf.mxu0
    %v770 = vadd.f32 %v447, %v769
    %v771 = vpop.f32.mrf.mxu0
    %v772 = vadd.f32 %v449, %v771
    %773 = vmatmul.bf16.gmra.mxu0 %v638
    %v774 = vpop.f32.mrf.mxu0
    %v775 = vadd.f32 %v452, %v774
    %v776 = vpop.f32.mrf.mxu0
    %v777 = vadd.f32 %v454, %v776
    %778 = vmatmul.bf16.gmra.mxu0 %v641
    %v779 = vpop.f32.mrf.mxu0
    %v780 = vadd.f32 %v457, %v779
    %v781 = vpop.f32.mrf.mxu0
    %v782 = vadd.f32 %v459, %v781
    %783 = vmatmul.bf16.gmra.mxu0 %v644
    %v784 = vpop.f32.mrf.mxu0
    %v785 = vadd.f32 %v462, %v784
    %v786 = vpop.f32.mrf.mxu0
    %v787 = vadd.f32 %v464, %v786
    %788 = vmatmul.bf16.gmra.mxu0 %v647
    %v789 = vpop.f32.mrf.mxu0
    %v790 = vadd.f32 %v467, %v789
    %v791 = vpop.f32.mrf.mxu0
    %v792 = vadd.f32 %v469, %v791
    %793 = vmatmul.bf16.gmra.mxu0 %v650
    %v794 = vpop.f32.mrf.mxu0
    %v795 = vadd.f32 %v472, %v794
    %v796 = vpop.f32.mrf.mxu0
    %v797 = vadd.f32 %v474, %v796
    %798 = vmatmul.bf16.gmra.mxu0 %v653
    %v799 = vpop.f32.mrf.mxu0
    %v800 = vadd.f32 %v477, %v799
    %v801 = vpop.f32.mrf.mxu0
    %v802 = vadd.f32 %v479, %v801
    %803 = vmatmul.bf16.gmra.mxu0 %v656
    %v804 = vpop.f32.mrf.mxu0
    %v805 = vadd.f32 %v482, %v804
    %v806 = vpop.f32.mrf.mxu0
    %v807 = vadd.f32 %v484, %v806
    %808 = vmatmul.bf16.gmra.mxu0 %v659
    %v809 = vpop.f32.mrf.mxu0
    %v810 = vadd.f32 %v487, %v809
    %v811 = vpop.f32.mrf.mxu0
    %v812 = vadd.f32 %v489, %v811
    %813 = vmatmul.bf16.gmra.mxu0 %v662
    %v814 = vpop.f32.mrf.mxu0
    %v815 = vadd.f32 %v492, %v814
    %v816 = vpop.f32.mrf.mxu0
    %v817 = vadd.f32 %v494, %v816
    %818 = vmatmul.bf16.gmra.mxu0 %v665
    %v819 = vpop.f32.mrf.mxu0
    %v820 = vadd.f32 %v497, %v819
    %v821 = vpop.f32.mrf.mxu0
    %v822 = vadd.f32 %v499, %v821
    %823 = vmatmul.bf16.gmra.mxu0 %v668
    %v824 = vpop.f32.mrf.mxu0
    %v825 = vadd.f32 %v502, %v824
    %v826 = vpop.f32.mrf.mxu0
    %v827 = vadd.f32 %v504, %v826
    %828 = vmatmul.bf16.gmra.mxu0 %v671
    %v829 = vpop.f32.mrf.mxu0
    %v830 = vadd.f32 %v507, %v829
    %v831 = vpop.f32.mrf.mxu0
    %v832 = vadd.f32 %v509, %v831
    %833 = vmatmul.bf16.gmra.mxu0 %v674
    %v834 = vpop.f32.mrf.mxu0
    %v835 = vadd.f32 %v512, %v834
    %v836 = vpop.f32.mrf.mxu0
    %v837 = vadd.f32 %v514, %v836
    %838 = vmatmul.bf16.gmra.mxu0 %v677
    %v839 = vpop.f32.mrf.mxu0
    %v840 = vadd.f32 %v517, %v839
    %v841 = vpop.f32.mrf.mxu0
    %v842 = vadd.f32 %v519, %v841
    %843 = vmatmul.bf16.gmra.mxu0 %v680
    %v844 = vpop.f32.mrf.mxu0
    %v845 = vadd.f32 %v522, %v844
    %v846 = vpop.f32.mrf.mxu0
    %v847 = vadd.f32 %v524, %v846
    %848 = vmatmul.bf16.gmra.mxu0 %v683
    %v849 = vpop.f32.mrf.mxu0
    %v850 = vadd.f32 %v527, %v849
    %v851 = vpop.f32.mrf.mxu0
    %v852 = vadd.f32 %v529, %v851
    %853 = vmatmul.bf16.gmra.mxu0 %v686
    %v854 = vpop.f32.mrf.mxu0
    %v855 = vadd.f32 %v532, %v854
    %v856 = vpop.f32.mrf.mxu0
    %v857 = vadd.f32 %v534, %v856
    %858 = vmatmul.bf16.gmra.mxu0 %v689
    %v859 = vpop.f32.mrf.mxu0
    %v860 = vadd.f32 %v537, %v859
    %v861 = vpop.f32.mrf.mxu0
    %v862 = vadd.f32 %v539, %v861
    %863 = vmatmul.bf16.gmra.mxu0 %v692
    %v864 = vpop.f32.mrf.mxu0
    %v865 = vadd.f32 %v542, %v864
    %v866 = vpop.f32.mrf.mxu0
    %v867 = vadd.f32 %v544, %v866
    %868 = vmatmul.bf16.gmra.mxu0 %v695
    %v869 = vpop.f32.mrf.mxu0
    %v870 = vadd.f32 %v547, %v869
    %v871 = vpop.f32.mrf.mxu0
    %v872 = vadd.f32 %v549, %v871
    %873 = vmatmul.bf16.gmra.mxu0 %v698
    %v874 = vpop.f32.mrf.mxu0
    %v875 = vadd.f32 %v552, %v874
    %v876 = vpop.f32.mrf.mxu0
    %v877 = vadd.f32 %v554, %v876
    %878 = vmatmul.bf16.gmra.mxu0 %v701
    %v879 = vpop.f32.mrf.mxu0
    %v880 = vadd.f32 %v557, %v879
    %v881 = vpop.f32.mrf.mxu0
    %v882 = vadd.f32 %v559, %v881
    %883 = vmatmul.bf16.gmra.mxu0 %v704
    %v884 = vpop.f32.mrf.mxu0
    %v885 = vadd.f32 %v562, %v884
    %v886 = vpop.f32.mrf.mxu0
    %v887 = vadd.f32 %v564, %v886
    %888 = vmatmul.bf16.gmra.mxu0 %v707
    %v889 = vpop.f32.mrf.mxu0
    %v890 = vadd.f32 %v567, %v889
    %v891 = vpop.f32.mrf.mxu0
    %v892 = vadd.f32 %v569, %v891
    %893 = vmatmul.bf16.gmra.mxu0 %v710
    %v894 = vpop.f32.mrf.mxu0
    %v895 = vadd.f32 %v572, %v894
    %v896 = vpop.f32.mrf.mxu0
    %v897 = vadd.f32 %v574, %v896
    %898 = vmatmul.bf16.gmra.mxu0 %v713
    %v899 = vpop.f32.mrf.mxu0
    %v900 = vadd.f32 %v577, %v899
    %v901 = vpop.f32.mrf.mxu0
    %v902 = vadd.f32 %v579, %v901
    %903 = vmatmul.bf16.gmra.mxu0 %v716
    %v904 = vpop.f32.mrf.mxu0
    %v905 = vadd.f32 %v582, %v904
    %v906 = vpop.f32.mrf.mxu0
    %v907 = vadd.f32 %v584, %v906
    %908 = vmatmul.bf16.gmra.mxu0 %v719
    %v909 = vpop.f32.mrf.mxu0
    %v910 = vadd.f32 %v587, %v909
    %v911 = vpop.f32.mrf.mxu0
    %v912 = vadd.f32 %v589, %v911
    %913 = vmatmul.bf16.gmra.mxu0 %v722
    %v914 = vpop.f32.mrf.mxu0
    %v915 = vadd.f32 %v592, %v914
    %v916 = vpop.f32.mrf.mxu0
    %v917 = vadd.f32 %v594, %v916
    %918 = vmatmul.bf16.gmra.mxu0 %v725
    %v919 = vpop.f32.mrf.mxu0
    %v920 = vadd.f32 %v597, %v919
    %v921 = vpop.f32.mrf.mxu0
    %v922 = vadd.f32 %v599, %v921
    %923 = vmatmul.bf16.gmra.mxu0 %v728
    %v924 = vpop.f32.mrf.mxu0
    %v925 = vadd.f32 %v602, %v924
    %v926 = vpop.f32.mrf.mxu0
    %v927 = vadd.f32 %v604, %v926
    %928 = vmatmul.bf16.gmra.mxu0 %v731
    %v929 = vpop.f32.mrf.mxu0
    %v930 = vadd.f32 %v607, %v929
    %v931 = vpop.f32.mrf.mxu0
    %v932 = vadd.f32 %v609, %v931
    %933 = vmatmul.bf16.gmra.mxu0 %v734
    %v934 = vpop.f32.mrf.mxu0
    %v935 = vadd.f32 %v612, %v934
    %v936 = vpop.f32.mrf.mxu0
    %v937 = vadd.f32 %v614, %v936
    %938 = vmatmul.bf16.gmra.mxu0 %v737
    %v939 = vpop.f32.mrf.mxu0
    %v940 = vadd.f32 %v617, %v939
    %v941 = vpop.f32.mrf.mxu0
    %v942 = vadd.f32 %v619, %v941
    %943 = vmatmul.bf16.gmra.mxu0 %v740
    %v944 = vpop.f32.mrf.mxu0
    %v945 = vadd.f32 %v622, %v944
    %v946 = vpop.f32.mrf.mxu0
    %947 = vdwg.mxu0
    %v948 = vld [vmem:[%s0 + $0x2] sm:$0xff]
    %v949 = vld [vmem:[%s0 + $0xa] sm:$0xff]
    %v950 = vld [vmem:[%s0 + $0x12] sm:$0xff]
    %v951 = vld [vmem:[%s0 + $0x1a] sm:$0xff]
    %v952 = vld [vmem:[%s0 + $0x22] sm:$0xff]
    %v953 = vld [vmem:[%s0 + $0x2a] sm:$0xff]
    %v954 = vld [vmem:[%s0 + $0x32] sm:$0xff]
    %v955 = vld [vmem:[%s0 + $0x3a] sm:$0xff]
    %v956 = vld [vmem:[%s0 + $0x42] sm:$0xff]
    %v957 = vld [vmem:[%s0 + $0x4a] sm:$0xff]
    %v958 = vld [vmem:[%s0 + $0x52] sm:$0xff]
    %v959 = vld [vmem:[%s0 + $0x5a] sm:$0xff]
    %v960 = vld [vmem:[%s0 + $0x62] sm:$0xff]
    %v961 = vld [vmem:[%s0 + $0x6a] sm:$0xff]
    %v962 = vld [vmem:[%s0 + $0x72] sm:$0xff]
    %v963 = vld [vmem:[%s0 + $0x7a] sm:$0xff]
    %v964 = vld [vmem:[%s0 + $0x82] sm:$0xff]
    %v965 = vld [vmem:[%s0 + $0x8a] sm:$0xff]
    %v966 = vld [vmem:[%s0 + $0x92] sm:$0xff]
    %v967 = vld [vmem:[%s0 + $0x9a] sm:$0xff]
    %v968 = vld [vmem:[%s0 + $0xa2] sm:$0xff]
    %v969 = vld [vmem:[%s0 + $0xaa] sm:$0xff]
    %v970 = vld [vmem:[%s0 + $0xb2] sm:$0xff]
    %v971 = vld [vmem:[%s0 + $0xba] sm:$0xff]
    %v972 = vld [vmem:[%s0 + $0xc2] sm:$0xff]
    %v973 = vld [vmem:[%s0 + $0xca] sm:$0xff]
    %v974 = vld [vmem:[%s0 + $0xd2] sm:$0xff]
    %v975 = vld [vmem:[%s0 + $0xda] sm:$0xff]
    %v976 = vld [vmem:[%s0 + $0xe2] sm:$0xff]
    %v977 = vld [vmem:[%s0 + $0xea] sm:$0xff]
    %v978 = vld [vmem:[%s0 + $0xf2] sm:$0xff]
    %v979 = vld [vmem:[%s0 + $0xfa] sm:$0xff]
    %v980 = vld [vmem:[%s0 + $0x102] sm:$0xff]
    %v981 = vld [vmem:[%s0 + $0x10a] sm:$0xff]
    %v982 = vld [vmem:[%s0 + $0x112] sm:$0xff]
    %v983 = vld [vmem:[%s0 + $0x11a] sm:$0xff]
    %v984 = vld [vmem:[%s0 + $0x122] sm:$0xff]
    %v985 = vld [vmem:[%s0 + $0x12a] sm:$0xff]
    %v986 = vld [vmem:[%s0 + $0x132] sm:$0xff]
    %v987 = vld [vmem:[%s0 + $0x13a] sm:$0xff]
    %v988 = vld [vmem:[%s0 + $0x142] sm:$0xff]
    %v989 = vld [vmem:[%s0 + $0x14a] sm:$0xff]
    %v990 = vld [vmem:[%s0 + $0x152] sm:$0xff]
    %v991 = vld [vmem:[%s0 + $0x15a] sm:$0xff]
    %v992 = vld [vmem:[%s0 + $0x162] sm:$0xff]
    %v993 = vld [vmem:[%s0 + $0x16a] sm:$0xff]
    %v994 = vld [vmem:[%s0 + $0x172] sm:$0xff]
    %v995 = vld [vmem:[%s0 + $0x17a] sm:$0xff]
    %v996 = vld [vmem:[%s0 + $0x182] sm:$0xff]
    %v997 = vld [vmem:[%s0 + $0x18a] sm:$0xff]
    %v998 = vld [vmem:[%s0 + $0x192] sm:$0xff]
    %v999 = vld [vmem:[%s0 + $0x19a] sm:$0xff]
    %v1000 = vld [vmem:[%s0 + $0x1a2] sm:$0xff]
    %v1001 = vld [vmem:[%s0 + $0x1aa] sm:$0xff]
    %v1002 = vld [vmem:[%s0 + $0x1b2] sm:$0xff]
    %v1003 = vld [vmem:[%s0 + $0x1ba] sm:$0xff]
    %v1004 = vld [vmem:[%s0 + $0x1c2] sm:$0xff]
    %v1005 = vld [vmem:[%s0 + $0x1ca] sm:$0xff]
    %v1006 = vld [vmem:[%s0 + $0x1d2] sm:$0xff]
    %v1007 = vld [vmem:[%s0 + $0x1da] sm:$0xff]
    %v1008 = vld [vmem:[%s0 + $0x1e2] sm:$0xff]
    %v1009 = vld [vmem:[%s0 + $0x1ea] sm:$0xff]
    %v1010 = vld [vmem:[%s0 + $0x1f2] sm:$0xff]
    %v1011 = vld [vmem:[%s0 + $0x1fa] sm:$0xff]
    %v1012 = vld [vmem:[%s0 + $0x202] sm:$0xff]
    %v1013 = vld [vmem:[%s0 + $0x20a] sm:$0xff]
    %v1014 = vld [vmem:[%s0 + $0x212] sm:$0xff]
    %v1015 = vld [vmem:[%s0 + $0x21a] sm:$0xff]
    %v1016 = vld [vmem:[%s0 + $0x222] sm:$0xff]
    %v1017 = vld [vmem:[%s0 + $0x22a] sm:$0xff]
    %v1018 = vld [vmem:[%s0 + $0x232] sm:$0xff]
    %v1019 = vld [vmem:[%s0 + $0x23a] sm:$0xff]
    %v1020 = vld [vmem:[%s0 + $0x242] sm:$0xff]
    %v1021 = vld [vmem:[%s0 + $0x24a] sm:$0xff]
    %v1022 = vld [vmem:[%s0 + $0x252] sm:$0xff]
    %v1023 = vld [vmem:[%s0 + $0x25a] sm:$0xff]
    %v1024 = vld [vmem:[%s0 + $0x262] sm:$0x3]
    %v1025 = vpack.c.bf16 %v949, %v948
    %v1026 = vpack.c.bf16 %v951, %v950
    %v1027 = vpack.c.bf16 %v953, %v952
    %v1028 = vpack.c.bf16 %v955, %v954
    %v1029 = vpack.c.bf16 %v957, %v956
    %v1030 = vpack.c.bf16 %v959, %v958
    %v1031 = vpack.c.bf16 %v961, %v960
    %v1032 = vpack.c.bf16 %v963, %v962
    %v1033 = vpack.c.bf16 %v965, %v964
    %v1034 = vpack.c.bf16 %v967, %v966
    %v1035 = vpack.c.bf16 %v969, %v968
    %v1036 = vpack.c.bf16 %v971, %v970
    %v1037 = vpack.c.bf16 %v973, %v972
    %v1038 = vpack.c.bf16 %v975, %v974
    %v1039 = vpack.c.bf16 %v977, %v976
    %v1040 = vpack.c.bf16 %v979, %v978
    %v1041 = vpack.c.bf16 %v981, %v980
    %v1042 = vpack.c.bf16 %v983, %v982
    %v1043 = vpack.c.bf16 %v985, %v984
    %v1044 = vpack.c.bf16 %v987, %v986
    %v1045 = vpack.c.bf16 %v989, %v988
    %v1046 = vpack.c.bf16 %v991, %v990
    %v1047 = vpack.c.bf16 %v993, %v992
    %v1048 = vpack.c.bf16 %v995, %v994
    %v1049 = vpack.c.bf16 %v997, %v996
    %v1050 = vpack.c.bf16 %v999, %v998
    %v1051 = vpack.c.bf16 %v1001, %v1000
    %v1052 = vpack.c.bf16 %v1003, %v1002
    %v1053 = vpack.c.bf16 %v1005, %v1004
    %v1054 = vpack.c.bf16 %v1007, %v1006
    %v1055 = vpack.c.bf16 %v1009, %v1008
    %v1056 = vpack.c.bf16 %v1011, %v1010
    %v1057 = vpack.c.bf16 %v1013, %v1012
    %v1058 = vpack.c.bf16 %v1015, %v1014
    %v1059 = vpack.c.bf16 %v1017, %v1016
    %v1060 = vpack.c.bf16 %v1019, %v1018
    %v1061 = vpack.c.bf16 %v1021, %v1020
    %v1062 = vpack.c.bf16 %v1023, %v1022
    %v1063 = vpack.c.bf16 %v1024, %v1024
    %v1064 = vld [vmem:[%s1] sm:$0x8]
    %v1065 = vld [vmem:[%s1 + $0x4] sm:$0x1]
    %v1068 = vunpack.c.l.b16 %v1064
    %v1069 = vunpack.c.l.b16 %v1065
    %v1070 = vpack.c.b16 %v1069, %v1068
    %v1071 = vrot.slane %v1070, 3
    %v1073 = vsel %vm297, %v1025, 0
    %v1076 = vsel %vm297, %v1026, 0
    %v1079 = vsel %vm297, %v1027, 0
    %v1082 = vsel %vm297, %v1028, 0
    %v1085 = vsel %vm297, %v1029, 0
    %v1088 = vsel %vm297, %v1030, 0
    %v1091 = vsel %vm297, %v1031, 0
    %v1094 = vsel %vm297, %v1032, 0
    %v1097 = vsel %vm297, %v1033, 0
    %v1100 = vsel %vm297, %v1034, 0
    %v1103 = vsel %vm297, %v1035, 0
    %v1106 = vsel %vm297, %v1036, 0
    %v1109 = vsel %vm297, %v1037, 0
    %v1112 = vsel %vm297, %v1038, 0
    %v1115 = vsel %vm297, %v1039, 0
    %v1118 = vsel %vm297, %v1040, 0
    %v1121 = vsel %vm297, %v1041, 0
    %v1124 = vsel %vm297, %v1042, 0
    %v1127 = vsel %vm297, %v1043, 0
    %v1130 = vsel %vm297, %v1044, 0
    %v1133 = vsel %vm297, %v1045, 0
    %v1136 = vsel %vm297, %v1046, 0
    %v1139 = vsel %vm297, %v1047, 0
    %v1142 = vsel %vm297, %v1048, 0
    %v1145 = vsel %vm297, %v1049, 0
    %v1148 = vsel %vm297, %v1050, 0
    %v1151 = vsel %vm297, %v1051, 0
    %v1154 = vsel %vm297, %v1052, 0
    %v1157 = vsel %vm297, %v1053, 0
    %v1160 = vsel %vm297, %v1054, 0
    %v1163 = vsel %vm297, %v1055, 0
    %v1166 = vsel %vm297, %v1056, 0
    %v1169 = vsel %vm297, %v1057, 0
    %v1172 = vsel %vm297, %v1058, 0
    %v1175 = vsel %vm297, %v1059, 0
    %v1178 = vsel %vm297, %v1060, 0
    %v1181 = vsel %vm297, %v1061, 0
    %v1184 = vsel %vm297, %v1062, 0
    %v1187 = vsel %vm297, %v1063, 0
    %v1190 = vand.u32 %v1071, %v418
    %1192 = vmatpush.bf16.msra.mxu0 0
    %1193 = vmatpush.bf16.msra.mxu0 0
    %1194 = vmatpush.bf16.msra.mxu0 0
    %1195 = vmatpush.bf16.msra.mxu0 0
    %1196 = vmatpush.bf16.msra.mxu0 0
    %1197 = vmatpush.bf16.msra.mxu0 0
    %1198 = vmatpush.bf16.msra.mxu0 0
    %1199 = vmatpush.bf16.msra.mxu0 %v1190
    %1200 = vmatmul.bf16.gmra.mxu0 %v1073
    %v1201 = vpop.f32.mrf.mxu0
    %v1202 = vadd.f32 0.0, %v1201
    %v1203 = vpop.f32.mrf.mxu0
    %v1204 = vadd.f32 0.0, %v1203
    %1205 = vmatmul.bf16.gmra.mxu0 %v1076
    %v1206 = vpop.f32.mrf.mxu0
    %v1207 = vadd.f32 0.0, %v1206
    %v1208 = vpop.f32.mrf.mxu0
    %v1209 = vadd.f32 0.0, %v1208
    %1210 = vmatmul.bf16.gmra.mxu0 %v1079
    %v1211 = vpop.f32.mrf.mxu0
    %v1212 = vadd.f32 0.0, %v1211
    %v1213 = vpop.f32.mrf.mxu0
    %v1214 = vadd.f32 0.0, %v1213
    %1215 = vmatmul.bf16.gmra.mxu0 %v1082
    %v1216 = vpop.f32.mrf.mxu0
    %v1217 = vadd.f32 0.0, %v1216
    %v1218 = vpop.f32.mrf.mxu0
    %v1219 = vadd.f32 0.0, %v1218
    %1220 = vmatmul.bf16.gmra.mxu0 %v1085
    %v1221 = vpop.f32.mrf.mxu0
    %v1222 = vadd.f32 0.0, %v1221
    %v1223 = vpop.f32.mrf.mxu0
    %v1224 = vadd.f32 0.0, %v1223
    %1225 = vmatmul.bf16.gmra.mxu0 %v1088
    %v1226 = vpop.f32.mrf.mxu0
    %v1227 = vadd.f32 0.0, %v1226
    %v1228 = vpop.f32.mrf.mxu0
    %v1229 = vadd.f32 0.0, %v1228
    %1230 = vmatmul.bf16.gmra.mxu0 %v1091
    %v1231 = vpop.f32.mrf.mxu0
    %v1232 = vadd.f32 0.0, %v1231
    %v1233 = vpop.f32.mrf.mxu0
    %v1234 = vadd.f32 0.0, %v1233
    %1235 = vmatmul.bf16.gmra.mxu0 %v1094
    %v1236 = vpop.f32.mrf.mxu0
    %v1237 = vadd.f32 0.0, %v1236
    %v1238 = vpop.f32.mrf.mxu0
    %v1239 = vadd.f32 0.0, %v1238
    %1240 = vmatmul.bf16.gmra.mxu0 %v1097
    %v1241 = vpop.f32.mrf.mxu0
    %v1242 = vadd.f32 0.0, %v1241
    %v1243 = vpop.f32.mrf.mxu0
    %v1244 = vadd.f32 0.0, %v1243
    %1245 = vmatmul.bf16.gmra.mxu0 %v1100
    %v1246 = vpop.f32.mrf.mxu0
    %v1247 = vadd.f32 0.0, %v1246
    %v1248 = vpop.f32.mrf.mxu0
    %v1249 = vadd.f32 0.0, %v1248
    %1250 = vmatmul.bf16.gmra.mxu0 %v1103
    %v1251 = vpop.f32.mrf.mxu0
    %v1252 = vadd.f32 0.0, %v1251
    %v1253 = vpop.f32.mrf.mxu0
    %v1254 = vadd.f32 0.0, %v1253
    %1255 = vmatmul.bf16.gmra.mxu0 %v1106
    %v1256 = vpop.f32.mrf.mxu0
    %v1257 = vadd.f32 0.0, %v1256
    %v1258 = vpop.f32.mrf.mxu0
    %v1259 = vadd.f32 0.0, %v1258
    %1260 = vmatmul.bf16.gmra.mxu0 %v1109
    %v1261 = vpop.f32.mrf.mxu0
    %v1262 = vadd.f32 0.0, %v1261
    %v1263 = vpop.f32.mrf.mxu0
    %v1264 = vadd.f32 0.0, %v1263
    %1265 = vmatmul.bf16.gmra.mxu0 %v1112
    %v1266 = vpop.f32.mrf.mxu0
    %v1267 = vadd.f32 0.0, %v1266
    %v1268 = vpop.f32.mrf.mxu0
    %v1269 = vadd.f32 0.0, %v1268
    %1270 = vmatmul.bf16.gmra.mxu0 %v1115
    %v1271 = vpop.f32.mrf.mxu0
    %v1272 = vadd.f32 0.0, %v1271
    %v1273 = vpop.f32.mrf.mxu0
    %v1274 = vadd.f32 0.0, %v1273
    %1275 = vmatmul.bf16.gmra.mxu0 %v1118
    %v1276 = vpop.f32.mrf.mxu0
    %v1277 = vadd.f32 0.0, %v1276
    %v1278 = vpop.f32.mrf.mxu0
    %v1279 = vadd.f32 0.0, %v1278
    %1280 = vmatmul.bf16.gmra.mxu0 %v1121
    %v1281 = vpop.f32.mrf.mxu0
    %v1282 = vadd.f32 0.0, %v1281
    %v1283 = vpop.f32.mrf.mxu0
    %v1284 = vadd.f32 0.0, %v1283
    %1285 = vmatmul.bf16.gmra.mxu0 %v1124
    %v1286 = vpop.f32.mrf.mxu0
    %v1287 = vadd.f32 0.0, %v1286
    %v1288 = vpop.f32.mrf.mxu0
    %v1289 = vadd.f32 0.0, %v1288
    %1290 = vmatmul.bf16.gmra.mxu0 %v1127
    %v1291 = vpop.f32.mrf.mxu0
    %v1292 = vadd.f32 0.0, %v1291
    %v1293 = vpop.f32.mrf.mxu0
    %v1294 = vadd.f32 0.0, %v1293
    %1295 = vmatmul.bf16.gmra.mxu0 %v1130
    %v1296 = vpop.f32.mrf.mxu0
    %v1297 = vadd.f32 0.0, %v1296
    %v1298 = vpop.f32.mrf.mxu0
    %v1299 = vadd.f32 0.0, %v1298
    %1300 = vmatmul.bf16.gmra.mxu0 %v1133
    %v1301 = vpop.f32.mrf.mxu0
    %v1302 = vadd.f32 0.0, %v1301
    %v1303 = vpop.f32.mrf.mxu0
    %v1304 = vadd.f32 0.0, %v1303
    %1305 = vmatmul.bf16.gmra.mxu0 %v1136
    %v1306 = vpop.f32.mrf.mxu0
    %v1307 = vadd.f32 0.0, %v1306
    %v1308 = vpop.f32.mrf.mxu0
    %v1309 = vadd.f32 0.0, %v1308
    %1310 = vmatmul.bf16.gmra.mxu0 %v1139
    %v1311 = vpop.f32.mrf.mxu0
    %v1312 = vadd.f32 0.0, %v1311
    %v1313 = vpop.f32.mrf.mxu0
    %v1314 = vadd.f32 0.0, %v1313
    %1315 = vmatmul.bf16.gmra.mxu0 %v1142
    %v1316 = vpop.f32.mrf.mxu0
    %v1317 = vadd.f32 0.0, %v1316
    %v1318 = vpop.f32.mrf.mxu0
    %v1319 = vadd.f32 0.0, %v1318
    %1320 = vmatmul.bf16.gmra.mxu0 %v1145
    %v1321 = vpop.f32.mrf.mxu0
    %v1322 = vadd.f32 0.0, %v1321
    %v1323 = vpop.f32.mrf.mxu0
    %v1324 = vadd.f32 0.0, %v1323
    %1325 = vmatmul.bf16.gmra.mxu0 %v1148
    %v1326 = vpop.f32.mrf.mxu0
    %v1327 = vadd.f32 0.0, %v1326
    %v1328 = vpop.f32.mrf.mxu0
    %v1329 = vadd.f32 0.0, %v1328
    %1330 = vmatmul.bf16.gmra.mxu0 %v1151
    %v1331 = vpop.f32.mrf.mxu0
    %v1332 = vadd.f32 0.0, %v1331
    %v1333 = vpop.f32.mrf.mxu0
    %v1334 = vadd.f32 0.0, %v1333
    %1335 = vmatmul.bf16.gmra.mxu0 %v1154
    %v1336 = vpop.f32.mrf.mxu0
    %v1337 = vadd.f32 0.0, %v1336
    %v1338 = vpop.f32.mrf.mxu0
    %v1339 = vadd.f32 0.0, %v1338
    %1340 = vmatmul.bf16.gmra.mxu0 %v1157
    %v1341 = vpop.f32.mrf.mxu0
    %v1342 = vadd.f32 0.0, %v1341
    %v1343 = vpop.f32.mrf.mxu0
    %v1344 = vadd.f32 0.0, %v1343
    %1345 = vmatmul.bf16.gmra.mxu0 %v1160
    %v1346 = vpop.f32.mrf.mxu0
    %v1347 = vadd.f32 0.0, %v1346
    %v1348 = vpop.f32.mrf.mxu0
    %v1349 = vadd.f32 0.0, %v1348
    %1350 = vmatmul.bf16.gmra.mxu0 %v1163
    %v1351 = vpop.f32.mrf.mxu0
    %v1352 = vadd.f32 0.0, %v1351
    %v1353 = vpop.f32.mrf.mxu0
    %v1354 = vadd.f32 0.0, %v1353
    %1355 = vmatmul.bf16.gmra.mxu0 %v1166
    %v1356 = vpop.f32.mrf.mxu0
    %v1357 = vadd.f32 0.0, %v1356
    %v1358 = vpop.f32.mrf.mxu0
    %v1359 = vadd.f32 0.0, %v1358
    %1360 = vmatmul.bf16.gmra.mxu0 %v1169
    %v1361 = vpop.f32.mrf.mxu0
    %v1362 = vadd.f32 0.0, %v1361
    %v1363 = vpop.f32.mrf.mxu0
    %v1364 = vadd.f32 0.0, %v1363
    %1365 = vmatmul.bf16.gmra.mxu0 %v1172
    %v1366 = vpop.f32.mrf.mxu0
    %v1367 = vadd.f32 0.0, %v1366
    %v1368 = vpop.f32.mrf.mxu0
    %v1369 = vadd.f32 0.0, %v1368
    %1370 = vmatmul.bf16.gmra.mxu0 %v1175
    %v1371 = vpop.f32.mrf.mxu0
    %v1372 = vadd.f32 0.0, %v1371
    %v1373 = vpop.f32.mrf.mxu0
    %v1374 = vadd.f32 0.0, %v1373
    %1375 = vmatmul.bf16.gmra.mxu0 %v1178
    %v1376 = vpop.f32.mrf.mxu0
    %v1377 = vadd.f32 0.0, %v1376
    %v1378 = vpop.f32.mrf.mxu0
    %v1379 = vadd.f32 0.0, %v1378
    %1380 = vmatmul.bf16.gmra.mxu0 %v1181
    %v1381 = vpop.f32.mrf.mxu0
    %v1382 = vadd.f32 0.0, %v1381
    %v1383 = vpop.f32.mrf.mxu0
    %v1384 = vadd.f32 0.0, %v1383
    %1385 = vmatmul.bf16.gmra.mxu0 %v1184
    %v1386 = vpop.f32.mrf.mxu0
    %v1387 = vadd.f32 0.0, %v1386
    %v1388 = vpop.f32.mrf.mxu0
    %v1389 = vadd.f32 0.0, %v1388
    %1390 = vmatmul.bf16.gmra.mxu0 %v1187
    %v1391 = vpop.f32.mrf.mxu0
    %v1392 = vadd.f32 0.0, %v1391
    %v1393 = vpop.f32.mrf.mxu0
    %1394 = vdwg.mxu0
    %v1395 = vadd.f32 %v755, %v1202
    %v1396 = vadd.f32 %v757, %v1204
    %v1397 = vadd.f32 %v760, %v1207
    %v1398 = vadd.f32 %v762, %v1209
    %v1399 = vadd.f32 %v765, %v1212
    %v1400 = vadd.f32 %v767, %v1214
    %v1401 = vadd.f32 %v770, %v1217
    %v1402 = vadd.f32 %v772, %v1219
    %v1403 = vadd.f32 %v775, %v1222
    %v1404 = vadd.f32 %v777, %v1224
    %v1405 = vadd.f32 %v780, %v1227
    %v1406 = vadd.f32 %v782, %v1229
    %v1407 = vadd.f32 %v785, %v1232
    %v1408 = vadd.f32 %v787, %v1234
    %v1409 = vadd.f32 %v790, %v1237
    %v1410 = vadd.f32 %v792, %v1239
    %v1411 = vadd.f32 %v795, %v1242
    %v1412 = vadd.f32 %v797, %v1244
    %v1413 = vadd.f32 %v800, %v1247
    %v1414 = vadd.f32 %v802, %v1249
    %v1415 = vadd.f32 %v805, %v1252
    %v1416 = vadd.f32 %v807, %v1254
    %v1417 = vadd.f32 %v810, %v1257
    %v1418 = vadd.f32 %v812, %v1259
    %v1419 = vadd.f32 %v815, %v1262
    %v1420 = vadd.f32 %v817, %v1264
    %v1421 = vadd.f32 %v820, %v1267
    %v1422 = vadd.f32 %v822, %v1269
    %v1423 = vadd.f32 %v825, %v1272
    %v1424 = vadd.f32 %v827, %v1274
    %v1425 = vadd.f32 %v830, %v1277
    %v1426 = vadd.f32 %v832, %v1279
    %v1427 = vadd.f32 %v835, %v1282
    %v1428 = vadd.f32 %v837, %v1284
    %v1429 = vadd.f32 %v840, %v1287
    %v1430 = vadd.f32 %v842, %v1289
    %v1431 = vadd.f32 %v845, %v1292
    %v1432 = vadd.f32 %v847, %v1294
    %v1433 = vadd.f32 %v850, %v1297
    %v1434 = vadd.f32 %v852, %v1299
    %v1435 = vadd.f32 %v855, %v1302
    %v1436 = vadd.f32 %v857, %v1304
    %v1437 = vadd.f32 %v860, %v1307
    %v1438 = vadd.f32 %v862, %v1309
    %v1439 = vadd.f32 %v865, %v1312
    %v1440 = vadd.f32 %v867, %v1314
    %v1441 = vadd.f32 %v870, %v1317
    %v1442 = vadd.f32 %v872, %v1319
    %v1443 = vadd.f32 %v875, %v1322
    %v1444 = vadd.f32 %v877, %v1324
    %v1445 = vadd.f32 %v880, %v1327
    %v1446 = vadd.f32 %v882, %v1329
    %v1447 = vadd.f32 %v885, %v1332
    %v1448 = vadd.f32 %v887, %v1334
    %v1449 = vadd.f32 %v890, %v1337
    %v1450 = vadd.f32 %v892, %v1339
    %v1451 = vadd.f32 %v895, %v1342
    %v1452 = vadd.f32 %v897, %v1344
    %v1453 = vadd.f32 %v900, %v1347
    %v1454 = vadd.f32 %v902, %v1349
    %v1455 = vadd.f32 %v905, %v1352
    %v1456 = vadd.f32 %v907, %v1354
    %v1457 = vadd.f32 %v910, %v1357
    %v1458 = vadd.f32 %v912, %v1359
    %v1459 = vadd.f32 %v915, %v1362
    %v1460 = vadd.f32 %v917, %v1364
    %v1461 = vadd.f32 %v920, %v1367
    %v1462 = vadd.f32 %v922, %v1369
    %v1463 = vadd.f32 %v925, %v1372
    %v1464 = vadd.f32 %v927, %v1374
    %v1465 = vadd.f32 %v930, %v1377
    %v1466 = vadd.f32 %v932, %v1379
    %v1467 = vadd.f32 %v935, %v1382
    %v1468 = vadd.f32 %v937, %v1384
    %v1469 = vadd.f32 %v940, %v1387
    %v1470 = vadd.f32 %v942, %v1389
    %v1471 = vadd.f32 %v945, %v1392
    %v1472 = vld [vmem:[%s0 + $0x12] sm:$0xff]
    %v1473 = vld [vmem:[%s0 + $0x1a] sm:$0xff]
    %v1474 = vld [vmem:[%s0 + $0x22] sm:$0xff]
    %v1475 = vld [vmem:[%s0 + $0x2a] sm:$0xff]
    %v1476 = vld [vmem:[%s0 + $0x32] sm:$0xff]
    %v1477 = vld [vmem:[%s0 + $0x3a] sm:$0xff]
    %v1478 = vld [vmem:[%s0 + $0x42] sm:$0xff]
    %v1479 = vld [vmem:[%s0 + $0x4a] sm:$0xff]
    %v1480 = vld [vmem:[%s0 + $0x52] sm:$0xff]
    %v1481 = vld [vmem:[%s0 + $0x5a] sm:$0xff]
    %v1482 = vld [vmem:[%s0 + $0x62] sm:$0xff]
    %v1483 = vld [vmem:[%s0 + $0x6a] sm:$0xff]
    %v1484 = vld [vmem:[%s0 + $0x72] sm:$0xff]
    %v1485 = vld [vmem:[%s0 + $0x7a] sm:$0xff]
    %v1486 = vld [vmem:[%s0 + $0x82] sm:$0xff]
    %v1487 = vld [vmem:[%s0 + $0x8a] sm:$0xff]
    %v1488 = vld [vmem:[%s0 + $0x92] sm:$0xff]
    %v1489 = vld [vmem:[%s0 + $0x9a] sm:$0xff]
    %v1490 = vld [vmem:[%s0 + $0xa2] sm:$0xff]
    %v1491 = vld [vmem:[%s0 + $0xaa] sm:$0xff]
    %v1492 = vld [vmem:[%s0 + $0xb2] sm:$0xff]
    %v1493 = vld [vmem:[%s0 + $0xba] sm:$0xff]
    %v1494 = vld [vmem:[%s0 + $0xc2] sm:$0xff]
    %v1495 = vld [vmem:[%s0 + $0xca] sm:$0xff]
    %v1496 = vld [vmem:[%s0 + $0xd2] sm:$0xff]
    %v1497 = vld [vmem:[%s0 + $0xda] sm:$0xff]
    %v1498 = vld [vmem:[%s0 + $0xe2] sm:$0xff]
    %v1499 = vld [vmem:[%s0 + $0xea] sm:$0xff]
    %v1500 = vld [vmem:[%s0 + $0xf2] sm:$0xff]
    %v1501 = vld [vmem:[%s0 + $0xfa] sm:$0xff]
    %v1502 = vld [vmem:[%s0 + $0x102] sm:$0xff]
    %v1503 = vld [vmem:[%s0 + $0x10a] sm:$0xff]
    %v1504 = vld [vmem:[%s0 + $0x112] sm:$0xff]
    %v1505 = vld [vmem:[%s0 + $0x11a] sm:$0xff]
    %v1506 = vld [vmem:[%s0 + $0x122] sm:$0xff]
    %v1507 = vld [vmem:[%s0 + $0x12a] sm:$0xff]
    %v1508 = vld [vmem:[%s0 + $0x132] sm:$0xff]
    %v1509 = vld [vmem:[%s0 + $0x13a] sm:$0xff]
    %v1510 = vld [vmem:[%s0 + $0x142] sm:$0xff]
    %v1511 = vld [vmem:[%s0 + $0x14a] sm:$0xff]
    %v1512 = vld [vmem:[%s0 + $0x152] sm:$0xff]
    %v1513 = vld [vmem:[%s0 + $0x15a] sm:$0xff]
    %v1514 = vld [vmem:[%s0 + $0x162] sm:$0xff]
    %v1515 = vld [vmem:[%s0 + $0x16a] sm:$0xff]
    %v1516 = vld [vmem:[%s0 + $0x172] sm:$0xff]
    %v1517 = vld [vmem:[%s0 + $0x17a] sm:$0xff]
    %v1518 = vld [vmem:[%s0 + $0x182] sm:$0xff]
    %v1519 = vld [vmem:[%s0 + $0x18a] sm:$0xff]
    %v1520 = vld [vmem:[%s0 + $0x192] sm:$0xff]
    %v1521 = vld [vmem:[%s0 + $0x19a] sm:$0xff]
    %v1522 = vld [vmem:[%s0 + $0x1a2] sm:$0xff]
    %v1523 = vld [vmem:[%s0 + $0x1aa] sm:$0xff]
    %v1524 = vld [vmem:[%s0 + $0x1b2] sm:$0xff]
    %v1525 = vld [vmem:[%s0 + $0x1ba] sm:$0xff]
    %v1526 = vld [vmem:[%s0 + $0x1c2] sm:$0xff]
    %v1527 = vld [vmem:[%s0 + $0x1ca] sm:$0xff]
    %v1528 = vld [vmem:[%s0 + $0x1d2] sm:$0xff]
    %v1529 = vld [vmem:[%s0 + $0x1da] sm:$0xff]
    %v1530 = vld [vmem:[%s0 + $0x1e2] sm:$0xff]
    %v1531 = vld [vmem:[%s0 + $0x1ea] sm:$0xff]
    %v1532 = vld [vmem:[%s0 + $0x1f2] sm:$0xff]
    %v1533 = vld [vmem:[%s0 + $0x1fa] sm:$0xff]
    %v1534 = vld [vmem:[%s0 + $0x202] sm:$0xff]
    %v1535 = vld [vmem:[%s0 + $0x20a] sm:$0xff]
    %v1536 = vld [vmem:[%s0 + $0x212] sm:$0xff]
    %v1537 = vld [vmem:[%s0 + $0x21a] sm:$0xff]
    %v1538 = vld [vmem:[%s0 + $0x222] sm:$0xff]
    %v1539 = vld [vmem:[%s0 + $0x22a] sm:$0xff]
    %v1540 = vld [vmem:[%s0 + $0x232] sm:$0xff]
    %v1541 = vld [vmem:[%s0 + $0x23a] sm:$0xff]
    %v1542 = vld [vmem:[%s0 + $0x242] sm:$0xff]
    %v1543 = vld [vmem:[%s0 + $0x24a] sm:$0xff]
    %v1544 = vld [vmem:[%s0 + $0x252] sm:$0xff]
    %v1545 = vld [vmem:[%s0 + $0x25a] sm:$0xff]
    %v1546 = vld [vmem:[%s0 + $0x262] sm:$0xff]
    %v1547 = vld [vmem:[%s0 + $0x26a] sm:$0xff]
    %v1548 = vld [vmem:[%s0 + $0x272] sm:$0x3]
    %v1549 = vpack.c.bf16 %v1473, %v1472
    %v1550 = vpack.c.bf16 %v1475, %v1474
    %v1551 = vpack.c.bf16 %v1477, %v1476
    %v1552 = vpack.c.bf16 %v1479, %v1478
    %v1553 = vpack.c.bf16 %v1481, %v1480
    %v1554 = vpack.c.bf16 %v1483, %v1482
    %v1555 = vpack.c.bf16 %v1485, %v1484
    %v1556 = vpack.c.bf16 %v1487, %v1486
    %v1557 = vpack.c.bf16 %v1489, %v1488
    %v1558 = vpack.c.bf16 %v1491, %v1490
    %v1559 = vpack.c.bf16 %v1493, %v1492
    %v1560 = vpack.c.bf16 %v1495, %v1494
    %v1561 = vpack.c.bf16 %v1497, %v1496
    %v1562 = vpack.c.bf16 %v1499, %v1498
    %v1563 = vpack.c.bf16 %v1501, %v1500
    %v1564 = vpack.c.bf16 %v1503, %v1502
    %v1565 = vpack.c.bf16 %v1505, %v1504
    %v1566 = vpack.c.bf16 %v1507, %v1506
    %v1567 = vpack.c.bf16 %v1509, %v1508
    %v1568 = vpack.c.bf16 %v1511, %v1510
    %v1569 = vpack.c.bf16 %v1513, %v1512
    %v1570 = vpack.c.bf16 %v1515, %v1514
    %v1571 = vpack.c.bf16 %v1517, %v1516
    %v1572 = vpack.c.bf16 %v1519, %v1518
    %v1573 = vpack.c.bf16 %v1521, %v1520
    %v1574 = vpack.c.bf16 %v1523, %v1522
    %v1575 = vpack.c.bf16 %v1525, %v1524
    %v1576 = vpack.c.bf16 %v1527, %v1526
    %v1577 = vpack.c.bf16 %v1529, %v1528
    %v1578 = vpack.c.bf16 %v1531, %v1530
    %v1579 = vpack.c.bf16 %v1533, %v1532
    %v1580 = vpack.c.bf16 %v1535, %v1534
    %v1581 = vpack.c.bf16 %v1537, %v1536
    %v1582 = vpack.c.bf16 %v1539, %v1538
    %v1583 = vpack.c.bf16 %v1541, %v1540
    %v1584 = vpack.c.bf16 %v1543, %v1542
    %v1585 = vpack.c.bf16 %v1545, %v1544
    %v1586 = vpack.c.bf16 %v1547, %v1546
    %v1587 = vpack.c.bf16 %v1548, %v1548
    %v1588 = vld [vmem:[%s1 + $0x4] sm:$0x3]
    %v1590 = vunpack.c.l.b16 %v1588
    %v1591 = vpack.c.b16 %v1590, %v1590
    %v1593 = vshrl.u32 %v1591, 16
    %v1595 = vshll.u32 %v1591, 16
    %v1597 = vrot.slane %v1595, 1
    %v1598 = vor.u32 %v1593, %v1597
    %v1600 = vsel %vm297, %v1549, 0
    %v1603 = vsel %vm297, %v1550, 0
    %v1606 = vsel %vm297, %v1551, 0
    %v1609 = vsel %vm297, %v1552, 0
    %v1612 = vsel %vm297, %v1553, 0
    %v1615 = vsel %vm297, %v1554, 0
    %v1618 = vsel %vm297, %v1555, 0
    %v1621 = vsel %vm297, %v1556, 0
    %v1624 = vsel %vm297, %v1557, 0
    %v1627 = vsel %vm297, %v1558, 0
    %v1630 = vsel %vm297, %v1559, 0
    %v1633 = vsel %vm297, %v1560, 0
    %v1636 = vsel %vm297, %v1561, 0
    %v1639 = vsel %vm297, %v1562, 0
    %v1642 = vsel %vm297, %v1563, 0
    %v1645 = vsel %vm297, %v1564, 0
    %v1648 = vsel %vm297, %v1565, 0
    %v1651 = vsel %vm297, %v1566, 0
    %v1654 = vsel %vm297, %v1567, 0
    %v1657 = vsel %vm297, %v1568, 0
    %v1660 = vsel %vm297, %v1569, 0
    %v1663 = vsel %vm297, %v1570, 0
    %v1666 = vsel %vm297, %v1571, 0
    %v1669 = vsel %vm297, %v1572, 0
    %v1672 = vsel %vm297, %v1573, 0
    %v1675 = vsel %vm297, %v1574, 0
    %v1678 = vsel %vm297, %v1575, 0
    %v1681 = vsel %vm297, %v1576, 0
    %v1684 = vsel %vm297, %v1577, 0
    %v1687 = vsel %vm297, %v1578, 0
    %v1690 = vsel %vm297, %v1579, 0
    %v1693 = vsel %vm297, %v1580, 0
    %v1696 = vsel %vm297, %v1581, 0
    %v1699 = vsel %vm297, %v1582, 0
    %v1702 = vsel %vm297, %v1583, 0
    %v1705 = vsel %vm297, %v1584, 0
    %v1708 = vsel %vm297, %v1585, 0
    %v1711 = vsel %vm297, %v1586, 0
    %v1714 = vsel %vm297, %v1587, 0
    %v1717 = vand.u32 %v1598, %v418
    %1719 = vmatpush.bf16.msra.mxu0 0
    %1720 = vmatpush.bf16.msra.mxu0 0
    %1721 = vmatpush.bf16.msra.mxu0 0
    %1722 = vmatpush.bf16.msra.mxu0 0
    %1723 = vmatpush.bf16.msra.mxu0 0
    %1724 = vmatpush.bf16.msra.mxu0 0
    %1725 = vmatpush.bf16.msra.mxu0 0
    %1726 = vmatpush.bf16.msra.mxu0 %v1717
    %1727 = vmatmul.bf16.gmra.mxu0 %v1600
    %v1728 = vpop.f32.mrf.mxu0
    %v1729 = vadd.f32 0.0, %v1728
    %v1730 = vpop.f32.mrf.mxu0
    %v1731 = vadd.f32 0.0, %v1730
    %1732 = vmatmul.bf16.gmra.mxu0 %v1603
    %v1733 = vpop.f32.mrf.mxu0
    %v1734 = vadd.f32 0.0, %v1733
    %v1735 = vpop.f32.mrf.mxu0
    %v1736 = vadd.f32 0.0, %v1735
    %1737 = vmatmul.bf16.gmra.mxu0 %v1606
    %v1738 = vpop.f32.mrf.mxu0
    %v1739 = vadd.f32 0.0, %v1738
    %v1740 = vpop.f32.mrf.mxu0
    %v1741 = vadd.f32 0.0, %v1740
    %1742 = vmatmul.bf16.gmra.mxu0 %v1609
    %v1743 = vpop.f32.mrf.mxu0
    %v1744 = vadd.f32 0.0, %v1743
    %v1745 = vpop.f32.mrf.mxu0
    %v1746 = vadd.f32 0.0, %v1745
    %1747 = vmatmul.bf16.gmra.mxu0 %v1612
    %v1748 = vpop.f32.mrf.mxu0
    %v1749 = vadd.f32 0.0, %v1748
    %v1750 = vpop.f32.mrf.mxu0
    %v1751 = vadd.f32 0.0, %v1750
    %1752 = vmatmul.bf16.gmra.mxu0 %v1615
    %v1753 = vpop.f32.mrf.mxu0
    %v1754 = vadd.f32 0.0, %v1753
    %v1755 = vpop.f32.mrf.mxu0
    %v1756 = vadd.f32 0.0, %v1755
    %1757 = vmatmul.bf16.gmra.mxu0 %v1618
    %v1758 = vpop.f32.mrf.mxu0
    %v1759 = vadd.f32 0.0, %v1758
    %v1760 = vpop.f32.mrf.mxu0
    %v1761 = vadd.f32 0.0, %v1760
    %1762 = vmatmul.bf16.gmra.mxu0 %v1621
    %v1763 = vpop.f32.mrf.mxu0
    %v1764 = vadd.f32 0.0, %v1763
    %v1765 = vpop.f32.mrf.mxu0
    %v1766 = vadd.f32 0.0, %v1765
    %1767 = vmatmul.bf16.gmra.mxu0 %v1624
    %v1768 = vpop.f32.mrf.mxu0
    %v1769 = vadd.f32 0.0, %v1768
    %v1770 = vpop.f32.mrf.mxu0
    %v1771 = vadd.f32 0.0, %v1770
    %1772 = vmatmul.bf16.gmra.mxu0 %v1627
    %v1773 = vpop.f32.mrf.mxu0
    %v1774 = vadd.f32 0.0, %v1773
    %v1775 = vpop.f32.mrf.mxu0
    %v1776 = vadd.f32 0.0, %v1775
    %1777 = vmatmul.bf16.gmra.mxu0 %v1630
    %v1778 = vpop.f32.mrf.mxu0
    %v1779 = vadd.f32 0.0, %v1778
    %v1780 = vpop.f32.mrf.mxu0
    %v1781 = vadd.f32 0.0, %v1780
    %1782 = vmatmul.bf16.gmra.mxu0 %v1633
    %v1783 = vpop.f32.mrf.mxu0
    %v1784 = vadd.f32 0.0, %v1783
    %v1785 = vpop.f32.mrf.mxu0
    %v1786 = vadd.f32 0.0, %v1785
    %1787 = vmatmul.bf16.gmra.mxu0 %v1636
    %v1788 = vpop.f32.mrf.mxu0
    %v1789 = vadd.f32 0.0, %v1788
    %v1790 = vpop.f32.mrf.mxu0
    %v1791 = vadd.f32 0.0, %v1790
    %1792 = vmatmul.bf16.gmra.mxu0 %v1639
    %v1793 = vpop.f32.mrf.mxu0
    %v1794 = vadd.f32 0.0, %v1793
    %v1795 = vpop.f32.mrf.mxu0
    %v1796 = vadd.f32 0.0, %v1795
    %1797 = vmatmul.bf16.gmra.mxu0 %v1642
    %v1798 = vpop.f32.mrf.mxu0
    %v1799 = vadd.f32 0.0, %v1798
    %v1800 = vpop.f32.mrf.mxu0
    %v1801 = vadd.f32 0.0, %v1800
    %1802 = vmatmul.bf16.gmra.mxu0 %v1645
    %v1803 = vpop.f32.mrf.mxu0
    %v1804 = vadd.f32 0.0, %v1803
    %v1805 = vpop.f32.mrf.mxu0
    %v1806 = vadd.f32 0.0, %v1805
    %1807 = vmatmul.bf16.gmra.mxu0 %v1648
    %v1808 = vpop.f32.mrf.mxu0
    %v1809 = vadd.f32 0.0, %v1808
    %v1810 = vpop.f32.mrf.mxu0
    %v1811 = vadd.f32 0.0, %v1810
    %1812 = vmatmul.bf16.gmra.mxu0 %v1651
    %v1813 = vpop.f32.mrf.mxu0
    %v1814 = vadd.f32 0.0, %v1813
    %v1815 = vpop.f32.mrf.mxu0
    %v1816 = vadd.f32 0.0, %v1815
    %1817 = vmatmul.bf16.gmra.mxu0 %v1654
    %v1818 = vpop.f32.mrf.mxu0
    %v1819 = vadd.f32 0.0, %v1818
    %v1820 = vpop.f32.mrf.mxu0
    %v1821 = vadd.f32 0.0, %v1820
    %1822 = vmatmul.bf16.gmra.mxu0 %v1657
    %v1823 = vpop.f32.mrf.mxu0
    %v1824 = vadd.f32 0.0, %v1823
    %v1825 = vpop.f32.mrf.mxu0
    %v1826 = vadd.f32 0.0, %v1825
    %1827 = vmatmul.bf16.gmra.mxu0 %v1660
    %v1828 = vpop.f32.mrf.mxu0
    %v1829 = vadd.f32 0.0, %v1828
    %v1830 = vpop.f32.mrf.mxu0
    %v1831 = vadd.f32 0.0, %v1830
    %1832 = vmatmul.bf16.gmra.mxu0 %v1663
    %v1833 = vpop.f32.mrf.mxu0
    %v1834 = vadd.f32 0.0, %v1833
    %v1835 = vpop.f32.mrf.mxu0
    %v1836 = vadd.f32 0.0, %v1835
    %1837 = vmatmul.bf16.gmra.mxu0 %v1666
    %v1838 = vpop.f32.mrf.mxu0
    %v1839 = vadd.f32 0.0, %v1838
    %v1840 = vpop.f32.mrf.mxu0
    %v1841 = vadd.f32 0.0, %v1840
    %1842 = vmatmul.bf16.gmra.mxu0 %v1669
    %v1843 = vpop.f32.mrf.mxu0
    %v1844 = vadd.f32 0.0, %v1843
    %v1845 = vpop.f32.mrf.mxu0
    %v1846 = vadd.f32 0.0, %v1845
    %1847 = vmatmul.bf16.gmra.mxu0 %v1672
    %v1848 = vpop.f32.mrf.mxu0
    %v1849 = vadd.f32 0.0, %v1848
    %v1850 = vpop.f32.mrf.mxu0
    %v1851 = vadd.f32 0.0, %v1850
    %1852 = vmatmul.bf16.gmra.mxu0 %v1675
    %v1853 = vpop.f32.mrf.mxu0
    %v1854 = vadd.f32 0.0, %v1853
    %v1855 = vpop.f32.mrf.mxu0
    %v1856 = vadd.f32 0.0, %v1855
    %1857 = vmatmul.bf16.gmra.mxu0 %v1678
    %v1858 = vpop.f32.mrf.mxu0
    %v1859 = vadd.f32 0.0, %v1858
    %v1860 = vpop.f32.mrf.mxu0
    %v1861 = vadd.f32 0.0, %v1860
    %1862 = vmatmul.bf16.gmra.mxu0 %v1681
    %v1863 = vpop.f32.mrf.mxu0
    %v1864 = vadd.f32 0.0, %v1863
    %v1865 = vpop.f32.mrf.mxu0
    %v1866 = vadd.f32 0.0, %v1865
    %1867 = vmatmul.bf16.gmra.mxu0 %v1684
    %v1868 = vpop.f32.mrf.mxu0
    %v1869 = vadd.f32 0.0, %v1868
    %v1870 = vpop.f32.mrf.mxu0
    %v1871 = vadd.f32 0.0, %v1870
    %1872 = vmatmul.bf16.gmra.mxu0 %v1687
    %v1873 = vpop.f32.mrf.mxu0
    %v1874 = vadd.f32 0.0, %v1873
    %v1875 = vpop.f32.mrf.mxu0
    %v1876 = vadd.f32 0.0, %v1875
    %1877 = vmatmul.bf16.gmra.mxu0 %v1690
    %v1878 = vpop.f32.mrf.mxu0
    %v1879 = vadd.f32 0.0, %v1878
    %v1880 = vpop.f32.mrf.mxu0
    %v1881 = vadd.f32 0.0, %v1880
    %1882 = vmatmul.bf16.gmra.mxu0 %v1693
    %v1883 = vpop.f32.mrf.mxu0
    %v1884 = vadd.f32 0.0, %v1883
    %v1885 = vpop.f32.mrf.mxu0
    %v1886 = vadd.f32 0.0, %v1885
    %1887 = vmatmul.bf16.gmra.mxu0 %v1696
    %v1888 = vpop.f32.mrf.mxu0
    %v1889 = vadd.f32 0.0, %v1888
    %v1890 = vpop.f32.mrf.mxu0
    %v1891 = vadd.f32 0.0, %v1890
    %1892 = vmatmul.bf16.gmra.mxu0 %v1699
    %v1893 = vpop.f32.mrf.mxu0
    %v1894 = vadd.f32 0.0, %v1893
    %v1895 = vpop.f32.mrf.mxu0
    %v1896 = vadd.f32 0.0, %v1895
    %1897 = vmatmul.bf16.gmra.mxu0 %v1702
    %v1898 = vpop.f32.mrf.mxu0
    %v1899 = vadd.f32 0.0, %v1898
    %v1900 = vpop.f32.mrf.mxu0
    %v1901 = vadd.f32 0.0, %v1900
    %1902 = vmatmul.bf16.gmra.mxu0 %v1705
    %v1903 = vpop.f32.mrf.mxu0
    %v1904 = vadd.f32 0.0, %v1903
    %v1905 = vpop.f32.mrf.mxu0
    %v1906 = vadd.f32 0.0, %v1905
    %1907 = vmatmul.bf16.gmra.mxu0 %v1708
    %v1908 = vpop.f32.mrf.mxu0
    %v1909 = vadd.f32 0.0, %v1908
    %v1910 = vpop.f32.mrf.mxu0
    %v1911 = vadd.f32 0.0, %v1910
    %1912 = vmatmul.bf16.gmra.mxu0 %v1711
    %v1913 = vpop.f32.mrf.mxu0
    %v1914 = vadd.f32 0.0, %v1913
    %v1915 = vpop.f32.mrf.mxu0
    %v1916 = vadd.f32 0.0, %v1915
    %1917 = vmatmul.bf16.gmra.mxu0 %v1714
    %v1918 = vpop.f32.mrf.mxu0
    %v1919 = vadd.f32 0.0, %v1918
    %v1920 = vpop.f32.mrf.mxu0
    %1921 = vdwg.mxu0
    %v1922 = vadd.f32 %v1395, %v1729
    %v1923 = vadd.f32 %v1396, %v1731
    %v1924 = vadd.f32 %v1397, %v1734
    %v1925 = vadd.f32 %v1398, %v1736
    %v1926 = vadd.f32 %v1399, %v1739
    %v1927 = vadd.f32 %v1400, %v1741
    %v1928 = vadd.f32 %v1401, %v1744
    %v1929 = vadd.f32 %v1402, %v1746
    %v1930 = vadd.f32 %v1403, %v1749
    %v1931 = vadd.f32 %v1404, %v1751
    %v1932 = vadd.f32 %v1405, %v1754
    %v1933 = vadd.f32 %v1406, %v1756
    %v1934 = vadd.f32 %v1407, %v1759
    %v1935 = vadd.f32 %v1408, %v1761
    %v1936 = vadd.f32 %v1409, %v1764
    %v1937 = vadd.f32 %v1410, %v1766
    %v1938 = vadd.f32 %v1411, %v1769
    %v1939 = vadd.f32 %v1412, %v1771
    %v1940 = vadd.f32 %v1413, %v1774
    %v1941 = vadd.f32 %v1414, %v1776
    %v1942 = vadd.f32 %v1415, %v1779
    %v1943 = vadd.f32 %v1416, %v1781
    %v1944 = vadd.f32 %v1417, %v1784
    %v1945 = vadd.f32 %v1418, %v1786
    %v1946 = vadd.f32 %v1419, %v1789
    %v1947 = vadd.f32 %v1420, %v1791
    %v1948 = vadd.f32 %v1421, %v1794
    %v1949 = vadd.f32 %v1422, %v1796
    %v1950 = vadd.f32 %v1423, %v1799
    %v1951 = vadd.f32 %v1424, %v1801
    %v1952 = vadd.f32 %v1425, %v1804
    %v1953 = vadd.f32 %v1426, %v1806
    %v1954 = vadd.f32 %v1427, %v1809
    %v1955 = vadd.f32 %v1428, %v1811
    %v1956 = vadd.f32 %v1429, %v1814
    %v1957 = vadd.f32 %v1430, %v1816
    %v1958 = vadd.f32 %v1431, %v1819
    %v1959 = vadd.f32 %v1432, %v1821
    %v1960 = vadd.f32 %v1433, %v1824
    %v1961 = vadd.f32 %v1434, %v1826
    %v1962 = vadd.f32 %v1435, %v1829
    %v1963 = vadd.f32 %v1436, %v1831
    %v1964 = vadd.f32 %v1437, %v1834
    %v1965 = vadd.f32 %v1438, %v1836
    %v1966 = vadd.f32 %v1439, %v1839
    %v1967 = vadd.f32 %v1440, %v1841
    %v1968 = vadd.f32 %v1441, %v1844
    %v1969 = vadd.f32 %v1442, %v1846
    %v1970 = vadd.f32 %v1443, %v1849
    %v1971 = vadd.f32 %v1444, %v1851
    %v1972 = vadd.f32 %v1445, %v1854
    %v1973 = vadd.f32 %v1446, %v1856
    %v1974 = vadd.f32 %v1447, %v1859
    %v1975 = vadd.f32 %v1448, %v1861
    %v1976 = vadd.f32 %v1449, %v1864
    %v1977 = vadd.f32 %v1450, %v1866
    %v1978 = vadd.f32 %v1451, %v1869
    %v1979 = vadd.f32 %v1452, %v1871
    %v1980 = vadd.f32 %v1453, %v1874
    %v1981 = vadd.f32 %v1454, %v1876
    %v1982 = vadd.f32 %v1455, %v1879
    %v1983 = vadd.f32 %v1456, %v1881
    %v1984 = vadd.f32 %v1457, %v1884
    %v1985 = vadd.f32 %v1458, %v1886
    %v1986 = vadd.f32 %v1459, %v1889
    %v1987 = vadd.f32 %v1460, %v1891
    %v1988 = vadd.f32 %v1461, %v1894
    %v1989 = vadd.f32 %v1462, %v1896
    %v1990 = vadd.f32 %v1463, %v1899
    %v1991 = vadd.f32 %v1464, %v1901
    %v1992 = vadd.f32 %v1465, %v1904
    %v1993 = vadd.f32 %v1466, %v1906
    %v1994 = vadd.f32 %v1467, %v1909
    %v1995 = vadd.f32 %v1468, %v1911
    %v1996 = vadd.f32 %v1469, %v1914
    %v1997 = vadd.f32 %v1470, %v1916
    %v1998 = vadd.f32 %v1471, %v1919
    %v1999 = vld [vmem:[%s0 + $0x13] sm:$0xff]
    %v2000 = vld [vmem:[%s0 + $0x1b] sm:$0xff]
    %v2001 = vld [vmem:[%s0 + $0x23] sm:$0xff]
    %v2002 = vld [vmem:[%s0 + $0x2b] sm:$0xff]
    %v2003 = vld [vmem:[%s0 + $0x33] sm:$0xff]
    %v2004 = vld [vmem:[%s0 + $0x3b] sm:$0xff]
    %v2005 = vld [vmem:[%s0 + $0x43] sm:$0xff]
    %v2006 = vld [vmem:[%s0 + $0x4b] sm:$0xff]
    %v2007 = vld [vmem:[%s0 + $0x53] sm:$0xff]
    %v2008 = vld [vmem:[%s0 + $0x5b] sm:$0xff]
    %v2009 = vld [vmem:[%s0 + $0x63] sm:$0xff]
    %v2010 = vld [vmem:[%s0 + $0x6b] sm:$0xff]
    %v2011 = vld [vmem:[%s0 + $0x73] sm:$0xff]
    %v2012 = vld [vmem:[%s0 + $0x7b] sm:$0xff]
    %v2013 = vld [vmem:[%s0 + $0x83] sm:$0xff]
    %v2014 = vld [vmem:[%s0 + $0x8b] sm:$0xff]
    %v2015 = vld [vmem:[%s0 + $0x93] sm:$0xff]
    %v2016 = vld [vmem:[%s0 + $0x9b] sm:$0xff]
    %v2017 = vld [vmem:[%s0 + $0xa3] sm:$0xff]
    %v2018 = vld [vmem:[%s0 + $0xab] sm:$0xff]
    %v2019 = vld [vmem:[%s0 + $0xb3] sm:$0xff]
    %v2020 = vld [vmem:[%s0 + $0xbb] sm:$0xff]
    %v2021 = vld [vmem:[%s0 + $0xc3] sm:$0xff]
    %v2022 = vld [vmem:[%s0 + $0xcb] sm:$0xff]
    %v2023 = vld [vmem:[%s0 + $0xd3] sm:$0xff]
    %v2024 = vld [vmem:[%s0 + $0xdb] sm:$0xff]
    %v2025 = vld [vmem:[%s0 + $0xe3] sm:$0xff]
    %v2026 = vld [vmem:[%s0 + $0xeb] sm:$0xff]
    %v2027 = vld [vmem:[%s0 + $0xf3] sm:$0xff]
    %v2028 = vld [vmem:[%s0 + $0xfb] sm:$0xff]
    %v2029 = vld [vmem:[%s0 + $0x103] sm:$0xff]
    %v2030 = vld [vmem:[%s0 + $0x10b] sm:$0xff]
    %v2031 = vld [vmem:[%s0 + $0x113] sm:$0xff]
    %v2032 = vld [vmem:[%s0 + $0x11b] sm:$0xff]
    %v2033 = vld [vmem:[%s0 + $0x123] sm:$0xff]
    %v2034 = vld [vmem:[%s0 + $0x12b] sm:$0xff]
    %v2035 = vld [vmem:[%s0 + $0x133] sm:$0xff]
    %v2036 = vld [vmem:[%s0 + $0x13b] sm:$0xff]
    %v2037 = vld [vmem:[%s0 + $0x143] sm:$0xff]
    %v2038 = vld [vmem:[%s0 + $0x14b] sm:$0xff]
    %v2039 = vld [vmem:[%s0 + $0x153] sm:$0xff]
    %v2040 = vld [vmem:[%s0 + $0x15b] sm:$0xff]
    %v2041 = vld [vmem:[%s0 + $0x163] sm:$0xff]
    %v2042 = vld [vmem:[%s0 + $0x16b] sm:$0xff]
    %v2043 = vld [vmem:[%s0 + $0x173] sm:$0xff]
    %v2044 = vld [vmem:[%s0 + $0x17b] sm:$0xff]
    %v2045 = vld [vmem:[%s0 + $0x183] sm:$0xff]
    %v2046 = vld [vmem:[%s0 + $0x18b] sm:$0xff]
    %v2047 = vld [vmem:[%s0 + $0x193] sm:$0xff]
    %v2048 = vld [vmem:[%s0 + $0x19b] sm:$0xff]
    %v2049 = vld [vmem:[%s0 + $0x1a3] sm:$0xff]
    %v2050 = vld [vmem:[%s0 + $0x1ab] sm:$0xff]
    %v2051 = vld [vmem:[%s0 + $0x1b3] sm:$0xff]
    %v2052 = vld [vmem:[%s0 + $0x1bb] sm:$0xff]
    %v2053 = vld [vmem:[%s0 + $0x1c3] sm:$0xff]
    %v2054 = vld [vmem:[%s0 + $0x1cb] sm:$0xff]
    %v2055 = vld [vmem:[%s0 + $0x1d3] sm:$0xff]
    %v2056 = vld [vmem:[%s0 + $0x1db] sm:$0xff]
    %v2057 = vld [vmem:[%s0 + $0x1e3] sm:$0xff]
    %v2058 = vld [vmem:[%s0 + $0x1eb] sm:$0xff]
    %v2059 = vld [vmem:[%s0 + $0x1f3] sm:$0xff]
    %v2060 = vld [vmem:[%s0 + $0x1fb] sm:$0xff]
    %v2061 = vld [vmem:[%s0 + $0x203] sm:$0xff]
    %v2062 = vld [vmem:[%s0 + $0x20b] sm:$0xff]
    %v2063 = vld [vmem:[%s0 + $0x213] sm:$0xff]
    %v2064 = vld [vmem:[%s0 + $0x21b] sm:$0xff]
    %v2065 = vld [vmem:[%s0 + $0x223] sm:$0xff]
    %v2066 = vld [vmem:[%s0 + $0x22b] sm:$0xff]
    %v2067 = vld [vmem:[%s0 + $0x233] sm:$0xff]
    %v2068 = vld [vmem:[%s0 + $0x23b] sm:$0xff]
    %v2069 = vld [vmem:[%s0 + $0x243] sm:$0xff]
    %v2070 = vld [vmem:[%s0 + $0x24b] sm:$0xff]
    %v2071 = vld [vmem:[%s0 + $0x253] sm:$0xff]
    %v2072 = vld [vmem:[%s0 + $0x25b] sm:$0xff]
    %v2073 = vld [vmem:[%s0 + $0x263] sm:$0xff]
    %v2074 = vld [vmem:[%s0 + $0x26b] sm:$0xff]
    %v2075 = vld [vmem:[%s0 + $0x273] sm:$0x3]
    %v2076 = vpack.c.bf16 %v2000, %v1999
    %v2077 = vpack.c.bf16 %v2002, %v2001
    %v2078 = vpack.c.bf16 %v2004, %v2003
    %v2079 = vpack.c.bf16 %v2006, %v2005
    %v2080 = vpack.c.bf16 %v2008, %v2007
    %v2081 = vpack.c.bf16 %v2010, %v2009
    %v2082 = vpack.c.bf16 %v2012, %v2011
    %v2083 = vpack.c.bf16 %v2014, %v2013
    %v2084 = vpack.c.bf16 %v2016, %v2015
    %v2085 = vpack.c.bf16 %v2018, %v2017
    %v2086 = vpack.c.bf16 %v2020, %v2019
    %v2087 = vpack.c.bf16 %v2022, %v2021
    %v2088 = vpack.c.bf16 %v2024, %v2023
    %v2089 = vpack.c.bf16 %v2026, %v2025
    %v2090 = vpack.c.bf16 %v2028, %v2027
    %v2091 = vpack.c.bf16 %v2030, %v2029
    %v2092 = vpack.c.bf16 %v2032, %v2031
    %v2093 = vpack.c.bf16 %v2034, %v2033
    %v2094 = vpack.c.bf16 %v2036, %v2035
    %v2095 = vpack.c.bf16 %v2038, %v2037
    %v2096 = vpack.c.bf16 %v2040, %v2039
    %v2097 = vpack.c.bf16 %v2042, %v2041
    %v2098 = vpack.c.bf16 %v2044, %v2043
    %v2099 = vpack.c.bf16 %v2046, %v2045
    %v2100 = vpack.c.bf16 %v2048, %v2047
    %v2101 = vpack.c.bf16 %v2050, %v2049
    %v2102 = vpack.c.bf16 %v2052, %v2051
    %v2103 = vpack.c.bf16 %v2054, %v2053
    %v2104 = vpack.c.bf16 %v2056, %v2055
    %v2105 = vpack.c.bf16 %v2058, %v2057
    %v2106 = vpack.c.bf16 %v2060, %v2059
    %v2107 = vpack.c.bf16 %v2062, %v2061
    %v2108 = vpack.c.bf16 %v2064, %v2063
    %v2109 = vpack.c.bf16 %v2066, %v2065
    %v2110 = vpack.c.bf16 %v2068, %v2067
    %v2111 = vpack.c.bf16 %v2070, %v2069
    %v2112 = vpack.c.bf16 %v2072, %v2071
    %v2113 = vpack.c.bf16 %v2074, %v2073
    %v2114 = vpack.c.bf16 %v2075, %v2075
    %v2115 = vld [vmem:[%s1 + $0x4] sm:$0xc]
    %v2117 = vunpack.c.l.b16 %v2115
    %v2118 = vpack.c.b16 %v2117, %v2117
    %v2119 = vrot.slane %v2118, 2
    %v2121 = vsel %vm297, %v2076, 0
    %v2124 = vsel %vm297, %v2077, 0
    %v2127 = vsel %vm297, %v2078, 0
    %v2130 = vsel %vm297, %v2079, 0
    %v2133 = vsel %vm297, %v2080, 0
    %v2136 = vsel %vm297, %v2081, 0
    %v2139 = vsel %vm297, %v2082, 0
    %v2142 = vsel %vm297, %v2083, 0
    %v2145 = vsel %vm297, %v2084, 0
    %v2148 = vsel %vm297, %v2085, 0
    %v2151 = vsel %vm297, %v2086, 0
    %v2154 = vsel %vm297, %v2087, 0
    %v2157 = vsel %vm297, %v2088, 0
    %v2160 = vsel %vm297, %v2089, 0
    %v2163 = vsel %vm297, %v2090, 0
    %v2166 = vsel %vm297, %v2091, 0
    %v2169 = vsel %vm297, %v2092, 0
    %v2172 = vsel %vm297, %v2093, 0
    %v2175 = vsel %vm297, %v2094, 0
    %v2178 = vsel %vm297, %v2095, 0
    %v2181 = vsel %vm297, %v2096, 0
    %v2184 = vsel %vm297, %v2097, 0
    %v2187 = vsel %vm297, %v2098, 0
    %v2190 = vsel %vm297, %v2099, 0
    %v2193 = vsel %vm297, %v2100, 0
    %v2196 = vsel %vm297, %v2101, 0
    %v2199 = vsel %vm297, %v2102, 0
    %v2202 = vsel %vm297, %v2103, 0
    %v2205 = vsel %vm297, %v2104, 0
    %v2208 = vsel %vm297, %v2105, 0
    %v2211 = vsel %vm297, %v2106, 0
    %v2214 = vsel %vm297, %v2107, 0
    %v2217 = vsel %vm297, %v2108, 0
    %v2220 = vsel %vm297, %v2109, 0
    %v2223 = vsel %vm297, %v2110, 0
    %v2226 = vsel %vm297, %v2111, 0
    %v2229 = vsel %vm297, %v2112, 0
    %v2232 = vsel %vm297, %v2113, 0
    %v2235 = vsel %vm297, %v2114, 0
    %v2238 = vand.u32 %v2119, %v418
    %2240 = vmatpush.bf16.msra.mxu0 0
    %2241 = vmatpush.bf16.msra.mxu0 0
    %2242 = vmatpush.bf16.msra.mxu0 0
    %2243 = vmatpush.bf16.msra.mxu0 0
    %2244 = vmatpush.bf16.msra.mxu0 0
    %2245 = vmatpush.bf16.msra.mxu0 0
    %2246 = vmatpush.bf16.msra.mxu0 0
    %2247 = vmatpush.bf16.msra.mxu0 %v2238
    %2248 = vmatmul.bf16.gmra.mxu0 %v2121
    %v2249 = vpop.f32.mrf.mxu0
    %v2250 = vadd.f32 0.0, %v2249
    %v2251 = vpop.f32.mrf.mxu0
    %v2252 = vadd.f32 0.0, %v2251
    %2253 = vmatmul.bf16.gmra.mxu0 %v2124
    %v2254 = vpop.f32.mrf.mxu0
    %v2255 = vadd.f32 0.0, %v2254
    %v2256 = vpop.f32.mrf.mxu0
    %v2257 = vadd.f32 0.0, %v2256
    %2258 = vmatmul.bf16.gmra.mxu0 %v2127
    %v2259 = vpop.f32.mrf.mxu0
    %v2260 = vadd.f32 0.0, %v2259
    %v2261 = vpop.f32.mrf.mxu0
    %v2262 = vadd.f32 0.0, %v2261
    %2263 = vmatmul.bf16.gmra.mxu0 %v2130
    %v2264 = vpop.f32.mrf.mxu0
    %v2265 = vadd.f32 0.0, %v2264
    %v2266 = vpop.f32.mrf.mxu0
    %v2267 = vadd.f32 0.0, %v2266
    %2268 = vmatmul.bf16.gmra.mxu0 %v2133
    %v2269 = vpop.f32.mrf.mxu0
    %v2270 = vadd.f32 0.0, %v2269
    %v2271 = vpop.f32.mrf.mxu0
    %v2272 = vadd.f32 0.0, %v2271
    %2273 = vmatmul.bf16.gmra.mxu0 %v2136
    %v2274 = vpop.f32.mrf.mxu0
    %v2275 = vadd.f32 0.0, %v2274
    %v2276 = vpop.f32.mrf.mxu0
    %v2277 = vadd.f32 0.0, %v2276
    %2278 = vmatmul.bf16.gmra.mxu0 %v2139
    %v2279 = vpop.f32.mrf.mxu0
    %v2280 = vadd.f32 0.0, %v2279
    %v2281 = vpop.f32.mrf.mxu0
    %v2282 = vadd.f32 0.0, %v2281
    %2283 = vmatmul.bf16.gmra.mxu0 %v2142
    %v2284 = vpop.f32.mrf.mxu0
    %v2285 = vadd.f32 0.0, %v2284
    %v2286 = vpop.f32.mrf.mxu0
    %v2287 = vadd.f32 0.0, %v2286
    %2288 = vmatmul.bf16.gmra.mxu0 %v2145
    %v2289 = vpop.f32.mrf.mxu0
    %v2290 = vadd.f32 0.0, %v2289
    %v2291 = vpop.f32.mrf.mxu0
    %v2292 = vadd.f32 0.0, %v2291
    %2293 = vmatmul.bf16.gmra.mxu0 %v2148
    %v2294 = vpop.f32.mrf.mxu0
    %v2295 = vadd.f32 0.0, %v2294
    %v2296 = vpop.f32.mrf.mxu0
    %v2297 = vadd.f32 0.0, %v2296
    %2298 = vmatmul.bf16.gmra.mxu0 %v2151
    %v2299 = vpop.f32.mrf.mxu0
    %v2300 = vadd.f32 0.0, %v2299
    %v2301 = vpop.f32.mrf.mxu0
    %v2302 = vadd.f32 0.0, %v2301
    %2303 = vmatmul.bf16.gmra.mxu0 %v2154
    %v2304 = vpop.f32.mrf.mxu0
    %v2305 = vadd.f32 0.0, %v2304
    %v2306 = vpop.f32.mrf.mxu0
    %v2307 = vadd.f32 0.0, %v2306
    %2308 = vmatmul.bf16.gmra.mxu0 %v2157
    %v2309 = vpop.f32.mrf.mxu0
    %v2310 = vadd.f32 0.0, %v2309
    %v2311 = vpop.f32.mrf.mxu0
    %v2312 = vadd.f32 0.0, %v2311
    %2313 = vmatmul.bf16.gmra.mxu0 %v2160
    %v2314 = vpop.f32.mrf.mxu0
    %v2315 = vadd.f32 0.0, %v2314
    %v2316 = vpop.f32.mrf.mxu0
    %v2317 = vadd.f32 0.0, %v2316
    %2318 = vmatmul.bf16.gmra.mxu0 %v2163
    %v2319 = vpop.f32.mrf.mxu0
    %v2320 = vadd.f32 0.0, %v2319
    %v2321 = vpop.f32.mrf.mxu0
    %v2322 = vadd.f32 0.0, %v2321
    %2323 = vmatmul.bf16.gmra.mxu0 %v2166
    %v2324 = vpop.f32.mrf.mxu0
    %v2325 = vadd.f32 0.0, %v2324
    %v2326 = vpop.f32.mrf.mxu0
    %v2327 = vadd.f32 0.0, %v2326
    %2328 = vmatmul.bf16.gmra.mxu0 %v2169
    %v2329 = vpop.f32.mrf.mxu0
    %v2330 = vadd.f32 0.0, %v2329
    %v2331 = vpop.f32.mrf.mxu0
    %v2332 = vadd.f32 0.0, %v2331
    %2333 = vmatmul.bf16.gmra.mxu0 %v2172
    %v2334 = vpop.f32.mrf.mxu0
    %v2335 = vadd.f32 0.0, %v2334
    %v2336 = vpop.f32.mrf.mxu0
    %v2337 = vadd.f32 0.0, %v2336
    %2338 = vmatmul.bf16.gmra.mxu0 %v2175
    %v2339 = vpop.f32.mrf.mxu0
    %v2340 = vadd.f32 0.0, %v2339
    %v2341 = vpop.f32.mrf.mxu0
    %v2342 = vadd.f32 0.0, %v2341
    %2343 = vmatmul.bf16.gmra.mxu0 %v2178
    %v2344 = vpop.f32.mrf.mxu0
    %v2345 = vadd.f32 0.0, %v2344
    %v2346 = vpop.f32.mrf.mxu0
    %v2347 = vadd.f32 0.0, %v2346
    %2348 = vmatmul.bf16.gmra.mxu0 %v2181
    %v2349 = vpop.f32.mrf.mxu0
    %v2350 = vadd.f32 0.0, %v2349
    %v2351 = vpop.f32.mrf.mxu0
    %v2352 = vadd.f32 0.0, %v2351
    %2353 = vmatmul.bf16.gmra.mxu0 %v2184
    %v2354 = vpop.f32.mrf.mxu0
    %v2355 = vadd.f32 0.0, %v2354
    %v2356 = vpop.f32.mrf.mxu0
    %v2357 = vadd.f32 0.0, %v2356
    %2358 = vmatmul.bf16.gmra.mxu0 %v2187
    %v2359 = vpop.f32.mrf.mxu0
    %v2360 = vadd.f32 0.0, %v2359
    %v2361 = vpop.f32.mrf.mxu0
    %v2362 = vadd.f32 0.0, %v2361
    %2363 = vmatmul.bf16.gmra.mxu0 %v2190
    %v2364 = vpop.f32.mrf.mxu0
    %v2365 = vadd.f32 0.0, %v2364
    %v2366 = vpop.f32.mrf.mxu0
    %v2367 = vadd.f32 0.0, %v2366
    %2368 = vmatmul.bf16.gmra.mxu0 %v2193
    %v2369 = vpop.f32.mrf.mxu0
    %v2370 = vadd.f32 0.0, %v2369
    %v2371 = vpop.f32.mrf.mxu0
    %v2372 = vadd.f32 0.0, %v2371
    %2373 = vmatmul.bf16.gmra.mxu0 %v2196
    %v2374 = vpop.f32.mrf.mxu0
    %v2375 = vadd.f32 0.0, %v2374
    %v2376 = vpop.f32.mrf.mxu0
    %v2377 = vadd.f32 0.0, %v2376
    %2378 = vmatmul.bf16.gmra.mxu0 %v2199
    %v2379 = vpop.f32.mrf.mxu0
    %v2380 = vadd.f32 0.0, %v2379
    %v2381 = vpop.f32.mrf.mxu0
    %v2382 = vadd.f32 0.0, %v2381
    %2383 = vmatmul.bf16.gmra.mxu0 %v2202
    %v2384 = vpop.f32.mrf.mxu0
    %v2385 = vadd.f32 0.0, %v2384
    %v2386 = vpop.f32.mrf.mxu0
    %v2387 = vadd.f32 0.0, %v2386
    %2388 = vmatmul.bf16.gmra.mxu0 %v2205
    %v2389 = vpop.f32.mrf.mxu0
    %v2390 = vadd.f32 0.0, %v2389
    %v2391 = vpop.f32.mrf.mxu0
    %v2392 = vadd.f32 0.0, %v2391
    %2393 = vmatmul.bf16.gmra.mxu0 %v2208
    %v2394 = vpop.f32.mrf.mxu0
    %v2395 = vadd.f32 0.0, %v2394
    %v2396 = vpop.f32.mrf.mxu0
    %v2397 = vadd.f32 0.0, %v2396
    %2398 = vmatmul.bf16.gmra.mxu0 %v2211
    %v2399 = vpop.f32.mrf.mxu0
    %v2400 = vadd.f32 0.0, %v2399
    %v2401 = vpop.f32.mrf.mxu0
    %v2402 = vadd.f32 0.0, %v2401
    %2403 = vmatmul.bf16.gmra.mxu0 %v2214
    %v2404 = vpop.f32.mrf.mxu0
    %v2405 = vadd.f32 0.0, %v2404
    %v2406 = vpop.f32.mrf.mxu0
    %v2407 = vadd.f32 0.0, %v2406
    %2408 = vmatmul.bf16.gmra.mxu0 %v2217
    %v2409 = vpop.f32.mrf.mxu0
    %v2410 = vadd.f32 0.0, %v2409
    %v2411 = vpop.f32.mrf.mxu0
    %v2412 = vadd.f32 0.0, %v2411
    %2413 = vmatmul.bf16.gmra.mxu0 %v2220
    %v2414 = vpop.f32.mrf.mxu0
    %v2415 = vadd.f32 0.0, %v2414
    %v2416 = vpop.f32.mrf.mxu0
    %v2417 = vadd.f32 0.0, %v2416
    %2418 = vmatmul.bf16.gmra.mxu0 %v2223
    %v2419 = vpop.f32.mrf.mxu0
    %v2420 = vadd.f32 0.0, %v2419
    %v2421 = vpop.f32.mrf.mxu0
    %v2422 = vadd.f32 0.0, %v2421
    %2423 = vmatmul.bf16.gmra.mxu0 %v2226
    %v2424 = vpop.f32.mrf.mxu0
    %v2425 = vadd.f32 0.0, %v2424
    %v2426 = vpop.f32.mrf.mxu0
    %v2427 = vadd.f32 0.0, %v2426
    %2428 = vmatmul.bf16.gmra.mxu0 %v2229
    %v2429 = vpop.f32.mrf.mxu0
    %v2430 = vadd.f32 0.0, %v2429
    %v2431 = vpop.f32.mrf.mxu0
    %v2432 = vadd.f32 0.0, %v2431
    %2433 = vmatmul.bf16.gmra.mxu0 %v2232
    %v2434 = vpop.f32.mrf.mxu0
    %v2435 = vadd.f32 0.0, %v2434
    %v2436 = vpop.f32.mrf.mxu0
    %v2437 = vadd.f32 0.0, %v2436
    %2438 = vmatmul.bf16.gmra.mxu0 %v2235
    %v2439 = vpop.f32.mrf.mxu0
    %v2440 = vadd.f32 0.0, %v2439
    %v2441 = vpop.f32.mrf.mxu0
    %2442 = vdwg.mxu0
    %v2443 = vadd.f32 %v1922, %v2250
    %v2444 = vadd.f32 %v1923, %v2252
    %v2445 = vadd.f32 %v1924, %v2255
    %v2446 = vadd.f32 %v1925, %v2257
    %v2447 = vadd.f32 %v1926, %v2260
    %v2448 = vadd.f32 %v1927, %v2262
    %v2449 = vadd.f32 %v1928, %v2265
    %v2450 = vadd.f32 %v1929, %v2267
    %v2451 = vadd.f32 %v1930, %v2270
    %v2452 = vadd.f32 %v1931, %v2272
    %v2453 = vadd.f32 %v1932, %v2275
    %v2454 = vadd.f32 %v1933, %v2277
    %v2455 = vadd.f32 %v1934, %v2280
    %v2456 = vadd.f32 %v1935, %v2282
    %v2457 = vadd.f32 %v1936, %v2285
    %v2458 = vadd.f32 %v1937, %v2287
    %v2459 = vadd.f32 %v1938, %v2290
    %v2460 = vadd.f32 %v1939, %v2292
    %v2461 = vadd.f32 %v1940, %v2295
    %v2462 = vadd.f32 %v1941, %v2297
    %v2463 = vadd.f32 %v1942, %v2300
    %v2464 = vadd.f32 %v1943, %v2302
    %v2465 = vadd.f32 %v1944, %v2305
    %v2466 = vadd.f32 %v1945, %v2307
    %v2467 = vadd.f32 %v1946, %v2310
    %v2468 = vadd.f32 %v1947, %v2312
    %v2469 = vadd.f32 %v1948, %v2315
    %v2470 = vadd.f32 %v1949, %v2317
    %v2471 = vadd.f32 %v1950, %v2320
    %v2472 = vadd.f32 %v1951, %v2322
    %v2473 = vadd.f32 %v1952, %v2325
    %v2474 = vadd.f32 %v1953, %v2327
    %v2475 = vadd.f32 %v1954, %v2330
    %v2476 = vadd.f32 %v1955, %v2332
    %v2477 = vadd.f32 %v1956, %v2335
    %v2478 = vadd.f32 %v1957, %v2337
    %v2479 = vadd.f32 %v1958, %v2340
    %v2480 = vadd.f32 %v1959, %v2342
    %v2481 = vadd.f32 %v1960, %v2345
    %v2482 = vadd.f32 %v1961, %v2347
    %v2483 = vadd.f32 %v1962, %v2350
    %v2484 = vadd.f32 %v1963, %v2352
    %v2485 = vadd.f32 %v1964, %v2355
    %v2486 = vadd.f32 %v1965, %v2357
    %v2487 = vadd.f32 %v1966, %v2360
    %v2488 = vadd.f32 %v1967, %v2362
    %v2489 = vadd.f32 %v1968, %v2365
    %v2490 = vadd.f32 %v1969, %v2367
    %v2491 = vadd.f32 %v1970, %v2370
    %v2492 = vadd.f32 %v1971, %v2372
    %v2493 = vadd.f32 %v1972, %v2375
    %v2494 = vadd.f32 %v1973, %v2377
    %v2495 = vadd.f32 %v1974, %v2380
    %v2496 = vadd.f32 %v1975, %v2382
    %v2497 = vadd.f32 %v1976, %v2385
    %v2498 = vadd.f32 %v1977, %v2387
    %v2499 = vadd.f32 %v1978, %v2390
    %v2500 = vadd.f32 %v1979, %v2392
    %v2501 = vadd.f32 %v1980, %v2395
    %v2502 = vadd.f32 %v1981, %v2397
    %v2503 = vadd.f32 %v1982, %v2400
    %v2504 = vadd.f32 %v1983, %v2402
    %v2505 = vadd.f32 %v1984, %v2405
    %v2506 = vadd.f32 %v1985, %v2407
    %v2507 = vadd.f32 %v1986, %v2410
    %v2508 = vadd.f32 %v1987, %v2412
    %v2509 = vadd.f32 %v1988, %v2415
    %v2510 = vadd.f32 %v1989, %v2417
    %v2511 = vadd.f32 %v1990, %v2420
    %v2512 = vadd.f32 %v1991, %v2422
    %v2513 = vadd.f32 %v1992, %v2425
    %v2514 = vadd.f32 %v1993, %v2427
    %v2515 = vadd.f32 %v1994, %v2430
    %v2516 = vadd.f32 %v1995, %v2432
    %v2517 = vadd.f32 %v1996, %v2435
    %v2518 = vadd.f32 %v1997, %v2437
    %v2519 = vadd.f32 %v1998, %v2440
    %v2520 = vld [vmem:[%s0 + $0x14] sm:$0xff]
    %v2521 = vld [vmem:[%s0 + $0x1c] sm:$0xff]
    %v2522 = vld [vmem:[%s0 + $0x24] sm:$0xff]
    %v2523 = vld [vmem:[%s0 + $0x2c] sm:$0xff]
    %v2524 = vld [vmem:[%s0 + $0x34] sm:$0xff]
    %v2525 = vld [vmem:[%s0 + $0x3c] sm:$0xff]
    %v2526 = vld [vmem:[%s0 + $0x44] sm:$0xff]
    %v2527 = vld [vmem:[%s0 + $0x4c] sm:$0xff]
    %v2528 = vld [vmem:[%s0 + $0x54] sm:$0xff]
    %v2529 = vld [vmem:[%s0 + $0x5c] sm:$0xff]
    %v2530 = vld [vmem:[%s0 + $0x64] sm:$0xff]
    %v2531 = vld [vmem:[%s0 + $0x6c] sm:$0xff]
    %v2532 = vld [vmem:[%s0 + $0x74] sm:$0xff]
    %v2533 = vld [vmem:[%s0 + $0x7c] sm:$0xff]
    %v2534 = vld [vmem:[%s0 + $0x84] sm:$0xff]
    %v2535 = vld [vmem:[%s0 + $0x8c] sm:$0xff]
    %v2536 = vld [vmem:[%s0 + $0x94] sm:$0xff]
    %v2537 = vld [vmem:[%s0 + $0x9c] sm:$0xff]
    %v2538 = vld [vmem:[%s0 + $0xa4] sm:$0xff]
    %v2539 = vld [vmem:[%s0 + $0xac] sm:$0xff]
    %v2540 = vld [vmem:[%s0 + $0xb4] sm:$0xff]
    %v2541 = vld [vmem:[%s0 + $0xbc] sm:$0xff]
    %v2542 = vld [vmem:[%s0 + $0xc4] sm:$0xff]
    %v2543 = vld [vmem:[%s0 + $0xcc] sm:$0xff]
    %v2544 = vld [vmem:[%s0 + $0xd4] sm:$0xff]
    %v2545 = vld [vmem:[%s0 + $0xdc] sm:$0xff]
    %v2546 = vld [vmem:[%s0 + $0xe4] sm:$0xff]
    %v2547 = vld [vmem:[%s0 + $0xec] sm:$0xff]
    %v2548 = vld [vmem:[%s0 + $0xf4] sm:$0xff]
    %v2549 = vld [vmem:[%s0 + $0xfc] sm:$0xff]
    %v2550 = vld [vmem:[%s0 + $0x104] sm:$0xff]
    %v2551 = vld [vmem:[%s0 + $0x10c] sm:$0xff]
    %v2552 = vld [vmem:[%s0 + $0x114] sm:$0xff]
    %v2553 = vld [vmem:[%s0 + $0x11c] sm:$0xff]
    %v2554 = vld [vmem:[%s0 + $0x124] sm:$0xff]
    %v2555 = vld [vmem:[%s0 + $0x12c] sm:$0xff]
    %v2556 = vld [vmem:[%s0 + $0x134] sm:$0xff]
    %v2557 = vld [vmem:[%s0 + $0x13c] sm:$0xff]
    %v2558 = vld [vmem:[%s0 + $0x144] sm:$0xff]
    %v2559 = vld [vmem:[%s0 + $0x14c] sm:$0xff]
    %v2560 = vld [vmem:[%s0 + $0x154] sm:$0xff]
    %v2561 = vld [vmem:[%s0 + $0x15c] sm:$0xff]
    %v2562 = vld [vmem:[%s0 + $0x164] sm:$0xff]
    %v2563 = vld [vmem:[%s0 + $0x16c] sm:$0xff]
    %v2564 = vld [vmem:[%s0 + $0x174] sm:$0xff]
    %v2565 = vld [vmem:[%s0 + $0x17c] sm:$0xff]
    %v2566 = vld [vmem:[%s0 + $0x184] sm:$0xff]
    %v2567 = vld [vmem:[%s0 + $0x18c] sm:$0xff]
    %v2568 = vld [vmem:[%s0 + $0x194] sm:$0xff]
    %v2569 = vld [vmem:[%s0 + $0x19c] sm:$0xff]
    %v2570 = vld [vmem:[%s0 + $0x1a4] sm:$0xff]
    %v2571 = vld [vmem:[%s0 + $0x1ac] sm:$0xff]
    %v2572 = vld [vmem:[%s0 + $0x1b4] sm:$0xff]
    %v2573 = vld [vmem:[%s0 + $0x1bc] sm:$0xff]
    %v2574 = vld [vmem:[%s0 + $0x1c4] sm:$0xff]
    %v2575 = vld [vmem:[%s0 + $0x1cc] sm:$0xff]
    %v2576 = vld [vmem:[%s0 + $0x1d4] sm:$0xff]
    %v2577 = vld [vmem:[%s0 + $0x1dc] sm:$0xff]
    %v2578 = vld [vmem:[%s0 + $0x1e4] sm:$0xff]
    %v2579 = vld [vmem:[%s0 + $0x1ec] sm:$0xff]
    %v2580 = vld [vmem:[%s0 + $0x1f4] sm:$0xff]
    %v2581 = vld [vmem:[%s0 + $0x1fc] sm:$0xff]
    %v2582 = vld [vmem:[%s0 + $0x204] sm:$0xff]
    %v2583 = vld [vmem:[%s0 + $0x20c] sm:$0xff]
    %v2584 = vld [vmem:[%s0 + $0x214] sm:$0xff]
    %v2585 = vld [vmem:[%s0 + $0x21c] sm:$0xff]
    %v2586 = vld [vmem:[%s0 + $0x224] sm:$0xff]
    %v2587 = vld [vmem:[%s0 + $0x22c] sm:$0xff]
    %v2588 = vld [vmem:[%s0 + $0x234] sm:$0xff]
    %v2589 = vld [vmem:[%s0 + $0x23c] sm:$0xff]
    %v2590 = vld [vmem:[%s0 + $0x244] sm:$0xff]
    %v2591 = vld [vmem:[%s0 + $0x24c] sm:$0xff]
    %v2592 = vld [vmem:[%s0 + $0x254] sm:$0xff]
    %v2593 = vld [vmem:[%s0 + $0x25c] sm:$0xff]
    %v2594 = vld [vmem:[%s0 + $0x264] sm:$0xff]
    %v2595 = vld [vmem:[%s0 + $0x26c] sm:$0xff]
    %v2596 = vld [vmem:[%s0 + $0x274] sm:$0x3]
    %v2597 = vpack.c.bf16 %v2521, %v2520
    %v2598 = vpack.c.bf16 %v2523, %v2522
    %v2599 = vpack.c.bf16 %v2525, %v2524
    %v2600 = vpack.c.bf16 %v2527, %v2526
    %v2601 = vpack.c.bf16 %v2529, %v2528
    %v2602 = vpack.c.bf16 %v2531, %v2530
    %v2603 = vpack.c.bf16 %v2533, %v2532
    %v2604 = vpack.c.bf16 %v2535, %v2534
    %v2605 = vpack.c.bf16 %v2537, %v2536
    %v2606 = vpack.c.bf16 %v2539, %v2538
    %v2607 = vpack.c.bf16 %v2541, %v2540
    %v2608 = vpack.c.bf16 %v2543, %v2542
    %v2609 = vpack.c.bf16 %v2545, %v2544
    %v2610 = vpack.c.bf16 %v2547, %v2546
    %v2611 = vpack.c.bf16 %v2549, %v2548
    %v2612 = vpack.c.bf16 %v2551, %v2550
    %v2613 = vpack.c.bf16 %v2553, %v2552
    %v2614 = vpack.c.bf16 %v2555, %v2554
    %v2615 = vpack.c.bf16 %v2557, %v2556
    %v2616 = vpack.c.bf16 %v2559, %v2558
    %v2617 = vpack.c.bf16 %v2561, %v2560
    %v2618 = vpack.c.bf16 %v2563, %v2562
    %v2619 = vpack.c.bf16 %v2565, %v2564
    %v2620 = vpack.c.bf16 %v2567, %v2566
    %v2621 = vpack.c.bf16 %v2569, %v2568
    %v2622 = vpack.c.bf16 %v2571, %v2570
    %v2623 = vpack.c.bf16 %v2573, %v2572
    %v2624 = vpack.c.bf16 %v2575, %v2574
    %v2625 = vpack.c.bf16 %v2577, %v2576
    %v2626 = vpack.c.bf16 %v2579, %v2578
    %v2627 = vpack.c.bf16 %v2581, %v2580
    %v2628 = vpack.c.bf16 %v2583, %v2582
    %v2629 = vpack.c.bf16 %v2585, %v2584
    %v2630 = vpack.c.bf16 %v2587, %v2586
    %v2631 = vpack.c.bf16 %v2589, %v2588
    %v2632 = vpack.c.bf16 %v2591, %v2590
    %v2633 = vpack.c.bf16 %v2593, %v2592
    %v2634 = vpack.c.bf16 %v2595, %v2594
    %v2635 = vpack.c.bf16 %v2596, %v2596
    %v2636 = vld [vmem:[%s1 + $0x4] sm:$0x8]
    %v2637 = vld [vmem:[%s1 + $0x8] sm:$0x1]
    %v2640 = vunpack.c.l.b16 %v2636
    %v2641 = vunpack.c.l.b16 %v2637
    %v2642 = vpack.c.b16 %v2641, %v2640
    %v2644 = vshrl.u32 %v2642, 16
    %v2646 = vrot.slane %v2644, 3
    %v2647 = vshll.u32 %v2642, 16
    %v2649 = vrot.slane %v2647, 4
    %v2650 = vor.u32 %v2646, %v2649
    %v2652 = vsel %vm297, %v2597, 0
    %v2655 = vsel %vm297, %v2598, 0
    %v2658 = vsel %vm297, %v2599, 0
    %v2661 = vsel %vm297, %v2600, 0
    %v2664 = vsel %vm297, %v2601, 0
    %v2667 = vsel %vm297, %v2602, 0
    %v2670 = vsel %vm297, %v2603, 0
    %v2673 = vsel %vm297, %v2604, 0
    %v2676 = vsel %vm297, %v2605, 0
    %v2679 = vsel %vm297, %v2606, 0
    %v2682 = vsel %vm297, %v2607, 0
    %v2685 = vsel %vm297, %v2608, 0
    %v2688 = vsel %vm297, %v2609, 0
    %v2691 = vsel %vm297, %v2610, 0
    %v2694 = vsel %vm297, %v2611, 0
    %v2697 = vsel %vm297, %v2612, 0
    %v2700 = vsel %vm297, %v2613, 0
    %v2703 = vsel %vm297, %v2614, 0
    %v2706 = vsel %vm297, %v2615, 0
    %v2709 = vsel %vm297, %v2616, 0
    %v2712 = vsel %vm297, %v2617, 0
    %v2715 = vsel %vm297, %v2618, 0
    %v2718 = vsel %vm297, %v2619, 0
    %v2721 = vsel %vm297, %v2620, 0
    %v2724 = vsel %vm297, %v2621, 0
    %v2727 = vsel %vm297, %v2622, 0
    %v2730 = vsel %vm297, %v2623, 0
    %v2733 = vsel %vm297, %v2624, 0
    %v2736 = vsel %vm297, %v2625, 0
    %v2739 = vsel %vm297, %v2626, 0
    %v2742 = vsel %vm297, %v2627, 0
    %v2745 = vsel %vm297, %v2628, 0
    %v2748 = vsel %vm297, %v2629, 0
    %v2751 = vsel %vm297, %v2630, 0
    %v2754 = vsel %vm297, %v2631, 0
    %v2757 = vsel %vm297, %v2632, 0
    %v2760 = vsel %vm297, %v2633, 0
    %v2763 = vsel %vm297, %v2634, 0
    %v2766 = vsel %vm297, %v2635, 0
    %v2769 = vand.u32 %v2650, %v418
    %2771 = vmatpush.bf16.msra.mxu0 0
    %2772 = vmatpush.bf16.msra.mxu0 0
    %2773 = vmatpush.bf16.msra.mxu0 0
    %2774 = vmatpush.bf16.msra.mxu0 0
    %2775 = vmatpush.bf16.msra.mxu0 0
    %2776 = vmatpush.bf16.msra.mxu0 0
    %2777 = vmatpush.bf16.msra.mxu0 0
    %2778 = vmatpush.bf16.msra.mxu0 %v2769
    %2779 = vmatmul.bf16.gmra.mxu0 %v2652
    %v2780 = vpop.f32.mrf.mxu0
    %v2781 = vadd.f32 0.0, %v2780
    %v2782 = vpop.f32.mrf.mxu0
    %v2783 = vadd.f32 0.0, %v2782
    %2784 = vmatmul.bf16.gmra.mxu0 %v2655
    %v2785 = vpop.f32.mrf.mxu0
    %v2786 = vadd.f32 0.0, %v2785
    %v2787 = vpop.f32.mrf.mxu0
    %v2788 = vadd.f32 0.0, %v2787
    %2789 = vmatmul.bf16.gmra.mxu0 %v2658
    %v2790 = vpop.f32.mrf.mxu0
    %v2791 = vadd.f32 0.0, %v2790
    %v2792 = vpop.f32.mrf.mxu0
    %v2793 = vadd.f32 0.0, %v2792
    %2794 = vmatmul.bf16.gmra.mxu0 %v2661
    %v2795 = vpop.f32.mrf.mxu0
    %v2796 = vadd.f32 0.0, %v2795
    %v2797 = vpop.f32.mrf.mxu0
    %v2798 = vadd.f32 0.0, %v2797
    %2799 = vmatmul.bf16.gmra.mxu0 %v2664
    %v2800 = vpop.f32.mrf.mxu0
    %v2801 = vadd.f32 0.0, %v2800
    %v2802 = vpop.f32.mrf.mxu0
    %v2803 = vadd.f32 0.0, %v2802
    %2804 = vmatmul.bf16.gmra.mxu0 %v2667
    %v2805 = vpop.f32.mrf.mxu0
    %v2806 = vadd.f32 0.0, %v2805
    %v2807 = vpop.f32.mrf.mxu0
    %v2808 = vadd.f32 0.0, %v2807
    %2809 = vmatmul.bf16.gmra.mxu0 %v2670
    %v2810 = vpop.f32.mrf.mxu0
    %v2811 = vadd.f32 0.0, %v2810
    %v2812 = vpop.f32.mrf.mxu0
    %v2813 = vadd.f32 0.0, %v2812
    %2814 = vmatmul.bf16.gmra.mxu0 %v2673
    %v2815 = vpop.f32.mrf.mxu0
    %v2816 = vadd.f32 0.0, %v2815
    %v2817 = vpop.f32.mrf.mxu0
    %v2818 = vadd.f32 0.0, %v2817
    %2819 = vmatmul.bf16.gmra.mxu0 %v2676
    %v2820 = vpop.f32.mrf.mxu0
    %v2821 = vadd.f32 0.0, %v2820
    %v2822 = vpop.f32.mrf.mxu0
    %v2823 = vadd.f32 0.0, %v2822
    %2824 = vmatmul.bf16.gmra.mxu0 %v2679
    %v2825 = vpop.f32.mrf.mxu0
    %v2826 = vadd.f32 0.0, %v2825
    %v2827 = vpop.f32.mrf.mxu0
    %v2828 = vadd.f32 0.0, %v2827
    %2829 = vmatmul.bf16.gmra.mxu0 %v2682
    %v2830 = vpop.f32.mrf.mxu0
    %v2831 = vadd.f32 0.0, %v2830
    %v2832 = vpop.f32.mrf.mxu0
    %v2833 = vadd.f32 0.0, %v2832
    %2834 = vmatmul.bf16.gmra.mxu0 %v2685
    %v2835 = vpop.f32.mrf.mxu0
    %v2836 = vadd.f32 0.0, %v2835
    %v2837 = vpop.f32.mrf.mxu0
    %v2838 = vadd.f32 0.0, %v2837
    %2839 = vmatmul.bf16.gmra.mxu0 %v2688
    %v2840 = vpop.f32.mrf.mxu0
    %v2841 = vadd.f32 0.0, %v2840
    %v2842 = vpop.f32.mrf.mxu0
    %v2843 = vadd.f32 0.0, %v2842
    %2844 = vmatmul.bf16.gmra.mxu0 %v2691
    %v2845 = vpop.f32.mrf.mxu0
    %v2846 = vadd.f32 0.0, %v2845
    %v2847 = vpop.f32.mrf.mxu0
    %v2848 = vadd.f32 0.0, %v2847
    %2849 = vmatmul.bf16.gmra.mxu0 %v2694
    %v2850 = vpop.f32.mrf.mxu0
    %v2851 = vadd.f32 0.0, %v2850
    %v2852 = vpop.f32.mrf.mxu0
    %v2853 = vadd.f32 0.0, %v2852
    %2854 = vmatmul.bf16.gmra.mxu0 %v2697
    %v2855 = vpop.f32.mrf.mxu0
    %v2856 = vadd.f32 0.0, %v2855
    %v2857 = vpop.f32.mrf.mxu0
    %v2858 = vadd.f32 0.0, %v2857
    %2859 = vmatmul.bf16.gmra.mxu0 %v2700
    %v2860 = vpop.f32.mrf.mxu0
    %v2861 = vadd.f32 0.0, %v2860
    %v2862 = vpop.f32.mrf.mxu0
    %v2863 = vadd.f32 0.0, %v2862
    %2864 = vmatmul.bf16.gmra.mxu0 %v2703
    %v2865 = vpop.f32.mrf.mxu0
    %v2866 = vadd.f32 0.0, %v2865
    %v2867 = vpop.f32.mrf.mxu0
    %v2868 = vadd.f32 0.0, %v2867
    %2869 = vmatmul.bf16.gmra.mxu0 %v2706
    %v2870 = vpop.f32.mrf.mxu0
    %v2871 = vadd.f32 0.0, %v2870
    %v2872 = vpop.f32.mrf.mxu0
    %v2873 = vadd.f32 0.0, %v2872
    %2874 = vmatmul.bf16.gmra.mxu0 %v2709
    %v2875 = vpop.f32.mrf.mxu0
    %v2876 = vadd.f32 0.0, %v2875
    %v2877 = vpop.f32.mrf.mxu0
    %v2878 = vadd.f32 0.0, %v2877
    %2879 = vmatmul.bf16.gmra.mxu0 %v2712
    %v2880 = vpop.f32.mrf.mxu0
    %v2881 = vadd.f32 0.0, %v2880
    %v2882 = vpop.f32.mrf.mxu0
    %v2883 = vadd.f32 0.0, %v2882
    %2884 = vmatmul.bf16.gmra.mxu0 %v2715
    %v2885 = vpop.f32.mrf.mxu0
    %v2886 = vadd.f32 0.0, %v2885
    %v2887 = vpop.f32.mrf.mxu0
    %v2888 = vadd.f32 0.0, %v2887
    %2889 = vmatmul.bf16.gmra.mxu0 %v2718
    %v2890 = vpop.f32.mrf.mxu0
    %v2891 = vadd.f32 0.0, %v2890
    %v2892 = vpop.f32.mrf.mxu0
    %v2893 = vadd.f32 0.0, %v2892
    %2894 = vmatmul.bf16.gmra.mxu0 %v2721
    %v2895 = vpop.f32.mrf.mxu0
    %v2896 = vadd.f32 0.0, %v2895
    %v2897 = vpop.f32.mrf.mxu0
    %v2898 = vadd.f32 0.0, %v2897
    %2899 = vmatmul.bf16.gmra.mxu0 %v2724
    %v2900 = vpop.f32.mrf.mxu0
    %v2901 = vadd.f32 0.0, %v2900
    %v2902 = vpop.f32.mrf.mxu0
    %v2903 = vadd.f32 0.0, %v2902
    %2904 = vmatmul.bf16.gmra.mxu0 %v2727
    %v2905 = vpop.f32.mrf.mxu0
    %v2906 = vadd.f32 0.0, %v2905
    %v2907 = vpop.f32.mrf.mxu0
    %v2908 = vadd.f32 0.0, %v2907
    %2909 = vmatmul.bf16.gmra.mxu0 %v2730
    %v2910 = vpop.f32.mrf.mxu0
    %v2911 = vadd.f32 0.0, %v2910
    %v2912 = vpop.f32.mrf.mxu0
    %v2913 = vadd.f32 0.0, %v2912
    %2914 = vmatmul.bf16.gmra.mxu0 %v2733
    %v2915 = vpop.f32.mrf.mxu0
    %v2916 = vadd.f32 0.0, %v2915
    %v2917 = vpop.f32.mrf.mxu0
    %v2918 = vadd.f32 0.0, %v2917
    %2919 = vmatmul.bf16.gmra.mxu0 %v2736
    %v2920 = vpop.f32.mrf.mxu0
    %v2921 = vadd.f32 0.0, %v2920
    %v2922 = vpop.f32.mrf.mxu0
    %v2923 = vadd.f32 0.0, %v2922
    %2924 = vmatmul.bf16.gmra.mxu0 %v2739
    %v2925 = vpop.f32.mrf.mxu0
    %v2926 = vadd.f32 0.0, %v2925
    %v2927 = vpop.f32.mrf.mxu0
    %v2928 = vadd.f32 0.0, %v2927
    %2929 = vmatmul.bf16.gmra.mxu0 %v2742
    %v2930 = vpop.f32.mrf.mxu0
    %v2931 = vadd.f32 0.0, %v2930
    %v2932 = vpop.f32.mrf.mxu0
    %v2933 = vadd.f32 0.0, %v2932
    %2934 = vmatmul.bf16.gmra.mxu0 %v2745
    %v2935 = vpop.f32.mrf.mxu0
    %v2936 = vadd.f32 0.0, %v2935
    %v2937 = vpop.f32.mrf.mxu0
    %v2938 = vadd.f32 0.0, %v2937
    %2939 = vmatmul.bf16.gmra.mxu0 %v2748
    %v2940 = vpop.f32.mrf.mxu0
    %v2941 = vadd.f32 0.0, %v2940
    %v2942 = vpop.f32.mrf.mxu0
    %v2943 = vadd.f32 0.0, %v2942
    %2944 = vmatmul.bf16.gmra.mxu0 %v2751
    %v2945 = vpop.f32.mrf.mxu0
    %v2946 = vadd.f32 0.0, %v2945
    %v2947 = vpop.f32.mrf.mxu0
    %v2948 = vadd.f32 0.0, %v2947
    %2949 = vmatmul.bf16.gmra.mxu0 %v2754
    %v2950 = vpop.f32.mrf.mxu0
    %v2951 = vadd.f32 0.0, %v2950
    %v2952 = vpop.f32.mrf.mxu0
    %v2953 = vadd.f32 0.0, %v2952
    %2954 = vmatmul.bf16.gmra.mxu0 %v2757
    %v2955 = vpop.f32.mrf.mxu0
    %v2956 = vadd.f32 0.0, %v2955
    %v2957 = vpop.f32.mrf.mxu0
    %v2958 = vadd.f32 0.0, %v2957
    %2959 = vmatmul.bf16.gmra.mxu0 %v2760
    %v2960 = vpop.f32.mrf.mxu0
    %v2961 = vadd.f32 0.0, %v2960
    %v2962 = vpop.f32.mrf.mxu0
    %v2963 = vadd.f32 0.0, %v2962
    %2964 = vmatmul.bf16.gmra.mxu0 %v2763
    %v2965 = vpop.f32.mrf.mxu0
    %v2966 = vadd.f32 0.0, %v2965
    %v2967 = vpop.f32.mrf.mxu0
    %v2968 = vadd.f32 0.0, %v2967
    %2969 = vmatmul.bf16.gmra.mxu0 %v2766
    %v2970 = vpop.f32.mrf.mxu0
    %v2971 = vadd.f32 0.0, %v2970
    %v2972 = vpop.f32.mrf.mxu0
    %2973 = vdwg.mxu0
    %v2974 = vadd.f32 %v2443, %v2781
    %v2975 = vadd.f32 %v2444, %v2783
    %v2976 = vadd.f32 %v2445, %v2786
    %v2977 = vadd.f32 %v2446, %v2788
    %v2978 = vadd.f32 %v2447, %v2791
    %v2979 = vadd.f32 %v2448, %v2793
    %v2980 = vadd.f32 %v2449, %v2796
    %v2981 = vadd.f32 %v2450, %v2798
    %v2982 = vadd.f32 %v2451, %v2801
    %v2983 = vadd.f32 %v2452, %v2803
    %v2984 = vadd.f32 %v2453, %v2806
    %v2985 = vadd.f32 %v2454, %v2808
    %v2986 = vadd.f32 %v2455, %v2811
    %v2987 = vadd.f32 %v2456, %v2813
    %v2988 = vadd.f32 %v2457, %v2816
    %v2989 = vadd.f32 %v2458, %v2818
    %v2990 = vadd.f32 %v2459, %v2821
    %v2991 = vadd.f32 %v2460, %v2823
    %v2992 = vadd.f32 %v2461, %v2826
    %v2993 = vadd.f32 %v2462, %v2828
    %v2994 = vadd.f32 %v2463, %v2831
    %v2995 = vadd.f32 %v2464, %v2833
    %v2996 = vadd.f32 %v2465, %v2836
    %v2997 = vadd.f32 %v2466, %v2838
    %v2998 = vadd.f32 %v2467, %v2841
    %v2999 = vadd.f32 %v2468, %v2843
    %v3000 = vadd.f32 %v2469, %v2846
    %v3001 = vadd.f32 %v2470, %v2848
    %v3002 = vadd.f32 %v2471, %v2851
    %v3003 = vadd.f32 %v2472, %v2853
    %v3004 = vadd.f32 %v2473, %v2856
    %v3005 = vadd.f32 %v2474, %v2858
    %v3006 = vadd.f32 %v2475, %v2861
    %v3007 = vadd.f32 %v2476, %v2863
    %v3008 = vadd.f32 %v2477, %v2866
    %v3009 = vadd.f32 %v2478, %v2868
    %v3010 = vadd.f32 %v2479, %v2871
    %v3011 = vadd.f32 %v2480, %v2873
    %v3012 = vadd.f32 %v2481, %v2876
    %v3013 = vadd.f32 %v2482, %v2878
    %v3014 = vadd.f32 %v2483, %v2881
    %v3015 = vadd.f32 %v2484, %v2883
    %v3016 = vadd.f32 %v2485, %v2886
    %v3017 = vadd.f32 %v2486, %v2888
    %v3018 = vadd.f32 %v2487, %v2891
    %v3019 = vadd.f32 %v2488, %v2893
    %v3020 = vadd.f32 %v2489, %v2896
    %v3021 = vadd.f32 %v2490, %v2898
    %v3022 = vadd.f32 %v2491, %v2901
    %v3023 = vadd.f32 %v2492, %v2903
    %v3024 = vadd.f32 %v2493, %v2906
    %v3025 = vadd.f32 %v2494, %v2908
    %v3026 = vadd.f32 %v2495, %v2911
    %v3027 = vadd.f32 %v2496, %v2913
    %v3028 = vadd.f32 %v2497, %v2916
    %v3029 = vadd.f32 %v2498, %v2918
    %v3030 = vadd.f32 %v2499, %v2921
    %v3031 = vadd.f32 %v2500, %v2923
    %v3032 = vadd.f32 %v2501, %v2926
    %v3033 = vadd.f32 %v2502, %v2928
    %v3034 = vadd.f32 %v2503, %v2931
    %v3035 = vadd.f32 %v2504, %v2933
    %v3036 = vadd.f32 %v2505, %v2936
    %v3037 = vadd.f32 %v2506, %v2938
    %v3038 = vadd.f32 %v2507, %v2941
    %v3039 = vadd.f32 %v2508, %v2943
    %v3040 = vadd.f32 %v2509, %v2946
    %v3041 = vadd.f32 %v2510, %v2948
    %v3042 = vadd.f32 %v2511, %v2951
    %v3043 = vadd.f32 %v2512, %v2953
    %v3044 = vadd.f32 %v2513, %v2956
    %v3045 = vadd.f32 %v2514, %v2958
    %v3046 = vadd.f32 %v2515, %v2961
    %v3047 = vadd.f32 %v2516, %v2963
    %v3048 = vadd.f32 %v2517, %v2966
    %v3049 = vadd.f32 %v2518, %v2968
    %v3050 = vadd.f32 %v2519, %v2971
    %v3051 = vld [vmem:[%s0 + $0x24] sm:$0xff]
    %v3052 = vld [vmem:[%s0 + $0x2c] sm:$0xff]
    %v3053 = vld [vmem:[%s0 + $0x34] sm:$0xff]
    %v3054 = vld [vmem:[%s0 + $0x3c] sm:$0xff]
    %v3055 = vld [vmem:[%s0 + $0x44] sm:$0xff]
    %v3056 = vld [vmem:[%s0 + $0x4c] sm:$0xff]
    %v3057 = vld [vmem:[%s0 + $0x54] sm:$0xff]
    %v3058 = vld [vmem:[%s0 + $0x5c] sm:$0xff]
    %v3059 = vld [vmem:[%s0 + $0x64] sm:$0xff]
    %v3060 = vld [vmem:[%s0 + $0x6c] sm:$0xff]
    %v3061 = vld [vmem:[%s0 + $0x74] sm:$0xff]
    %v3062 = vld [vmem:[%s0 + $0x7c] sm:$0xff]
    %v3063 = vld [vmem:[%s0 + $0x84] sm:$0xff]
    %v3064 = vld [vmem:[%s0 + $0x8c] sm:$0xff]
    %v3065 = vld [vmem:[%s0 + $0x94] sm:$0xff]
    %v3066 = vld [vmem:[%s0 + $0x9c] sm:$0xff]
    %v3067 = vld [vmem:[%s0 + $0xa4] sm:$0xff]
    %v3068 = vld [vmem:[%s0 + $0xac] sm:$0xff]
    %v3069 = vld [vmem:[%s0 + $0xb4] sm:$0xff]
    %v3070 = vld [vmem:[%s0 + $0xbc] sm:$0xff]
    %v3071 = vld [vmem:[%s0 + $0xc4] sm:$0xff]
    %v3072 = vld [vmem:[%s0 + $0xcc] sm:$0xff]
    %v3073 = vld [vmem:[%s0 + $0xd4] sm:$0xff]
    %v3074 = vld [vmem:[%s0 + $0xdc] sm:$0xff]
    %v3075 = vld [vmem:[%s0 + $0xe4] sm:$0xff]
    %v3076 = vld [vmem:[%s0 + $0xec] sm:$0xff]
    %v3077 = vld [vmem:[%s0 + $0xf4] sm:$0xff]
    %v3078 = vld [vmem:[%s0 + $0xfc] sm:$0xff]
    %v3079 = vld [vmem:[%s0 + $0x104] sm:$0xff]
    %v3080 = vld [vmem:[%s0 + $0x10c] sm:$0xff]
    %v3081 = vld [vmem:[%s0 + $0x114] sm:$0xff]
    %v3082 = vld [vmem:[%s0 + $0x11c] sm:$0xff]
    %v3083 = vld [vmem:[%s0 + $0x124] sm:$0xff]
    %v3084 = vld [vmem:[%s0 + $0x12c] sm:$0xff]
    %v3085 = vld [vmem:[%s0 + $0x134] sm:$0xff]
    %v3086 = vld [vmem:[%s0 + $0x13c] sm:$0xff]
    %v3087 = vld [vmem:[%s0 + $0x144] sm:$0xff]
    %v3088 = vld [vmem:[%s0 + $0x14c] sm:$0xff]
    %v3089 = vld [vmem:[%s0 + $0x154] sm:$0xff]
    %v3090 = vld [vmem:[%s0 + $0x15c] sm:$0xff]
    %v3091 = vld [vmem:[%s0 + $0x164] sm:$0xff]
    %v3092 = vld [vmem:[%s0 + $0x16c] sm:$0xff]
    %v3093 = vld [vmem:[%s0 + $0x174] sm:$0xff]
    %v3094 = vld [vmem:[%s0 + $0x17c] sm:$0xff]
    %v3095 = vld [vmem:[%s0 + $0x184] sm:$0xff]
    %v3096 = vld [vmem:[%s0 + $0x18c] sm:$0xff]
    %v3097 = vld [vmem:[%s0 + $0x194] sm:$0xff]
    %v3098 = vld [vmem:[%s0 + $0x19c] sm:$0xff]
    %v3099 = vld [vmem:[%s0 + $0x1a4] sm:$0xff]
    %v3100 = vld [vmem:[%s0 + $0x1ac] sm:$0xff]
    %v3101 = vld [vmem:[%s0 + $0x1b4] sm:$0xff]
    %v3102 = vld [vmem:[%s0 + $0x1bc] sm:$0xff]
    %v3103 = vld [vmem:[%s0 + $0x1c4] sm:$0xff]
    %v3104 = vld [vmem:[%s0 + $0x1cc] sm:$0xff]
    %v3105 = vld [vmem:[%s0 + $0x1d4] sm:$0xff]
    %v3106 = vld [vmem:[%s0 + $0x1dc] sm:$0xff]
    %v3107 = vld [vmem:[%s0 + $0x1e4] sm:$0xff]
    %v3108 = vld [vmem:[%s0 + $0x1ec] sm:$0xff]
    %v3109 = vld [vmem:[%s0 + $0x1f4] sm:$0xff]
    %v3110 = vld [vmem:[%s0 + $0x1fc] sm:$0xff]
    %v3111 = vld [vmem:[%s0 + $0x204] sm:$0xff]
    %v3112 = vld [vmem:[%s0 + $0x20c] sm:$0xff]
    %v3113 = vld [vmem:[%s0 + $0x214] sm:$0xff]
    %v3114 = vld [vmem:[%s0 + $0x21c] sm:$0xff]
    %v3115 = vld [vmem:[%s0 + $0x224] sm:$0xff]
    %v3116 = vld [vmem:[%s0 + $0x22c] sm:$0xff]
    %v3117 = vld [vmem:[%s0 + $0x234] sm:$0xff]
    %v3118 = vld [vmem:[%s0 + $0x23c] sm:$0xff]
    %v3119 = vld [vmem:[%s0 + $0x244] sm:$0xff]
    %v3120 = vld [vmem:[%s0 + $0x24c] sm:$0xff]
    %v3121 = vld [vmem:[%s0 + $0x254] sm:$0xff]
    %v3122 = vld [vmem:[%s0 + $0x25c] sm:$0xff]
    %v3123 = vld [vmem:[%s0 + $0x264] sm:$0xff]
    %v3124 = vld [vmem:[%s0 + $0x26c] sm:$0xff]
    %v3125 = vld [vmem:[%s0 + $0x274] sm:$0xff]
    %v3126 = vld [vmem:[%s0 + $0x27c] sm:$0xff]
    %v3127 = vld [vmem:[%s0 + $0x284] sm:$0x3]
    %v3128 = vpack.c.bf16 %v3052, %v3051
    %v3129 = vpack.c.bf16 %v3054, %v3053
    %v3130 = vpack.c.bf16 %v3056, %v3055
    %v3131 = vpack.c.bf16 %v3058, %v3057
    %v3132 = vpack.c.bf16 %v3060, %v3059
    %v3133 = vpack.c.bf16 %v3062, %v3061
    %v3134 = vpack.c.bf16 %v3064, %v3063
    %v3135 = vpack.c.bf16 %v3066, %v3065
    %v3136 = vpack.c.bf16 %v3068, %v3067
    %v3137 = vpack.c.bf16 %v3070, %v3069
    %v3138 = vpack.c.bf16 %v3072, %v3071
    %v3139 = vpack.c.bf16 %v3074, %v3073
    %v3140 = vpack.c.bf16 %v3076, %v3075
    %v3141 = vpack.c.bf16 %v3078, %v3077
    %v3142 = vpack.c.bf16 %v3080, %v3079
    %v3143 = vpack.c.bf16 %v3082, %v3081
    %v3144 = vpack.c.bf16 %v3084, %v3083
    %v3145 = vpack.c.bf16 %v3086, %v3085
    %v3146 = vpack.c.bf16 %v3088, %v3087
    %v3147 = vpack.c.bf16 %v3090, %v3089
    %v3148 = vpack.c.bf16 %v3092, %v3091
    %v3149 = vpack.c.bf16 %v3094, %v3093
    %v3150 = vpack.c.bf16 %v3096, %v3095
    %v3151 = vpack.c.bf16 %v3098, %v3097
    %v3152 = vpack.c.bf16 %v3100, %v3099
    %v3153 = vpack.c.bf16 %v3102, %v3101
    %v3154 = vpack.c.bf16 %v3104, %v3103
    %v3155 = vpack.c.bf16 %v3106, %v3105
    %v3156 = vpack.c.bf16 %v3108, %v3107
    %v3157 = vpack.c.bf16 %v3110, %v3109
    %v3158 = vpack.c.bf16 %v3112, %v3111
    %v3159 = vpack.c.bf16 %v3114, %v3113
    %v3160 = vpack.c.bf16 %v3116, %v3115
    %v3161 = vpack.c.bf16 %v3118, %v3117
    %v3162 = vpack.c.bf16 %v3120, %v3119
    %v3163 = vpack.c.bf16 %v3122, %v3121
    %v3164 = vpack.c.bf16 %v3124, %v3123
    %v3165 = vpack.c.bf16 %v3126, %v3125
    %v3166 = vpack.c.bf16 %v3127, %v3127
    %v3167 = vld [vmem:[%s1 + $0x8] sm:$0x6]
    %v3169 = vunpack.c.l.b16 %v3167
    %v3170 = vpack.c.b16 %v3169, %v3169
    %v3171 = vrot.slane %v3170, 1
    %v3173 = vsel %vm297, %v3128, 0
    %v3176 = vsel %vm297, %v3129, 0
    %v3179 = vsel %vm297, %v3130, 0
    %v3182 = vsel %vm297, %v3131, 0
    %v3185 = vsel %vm297, %v3132, 0
    %v3188 = vsel %vm297, %v3133, 0
    %v3191 = vsel %vm297, %v3134, 0
    %v3194 = vsel %vm297, %v3135, 0
    %v3197 = vsel %vm297, %v3136, 0
    %v3200 = vsel %vm297, %v3137, 0
    %v3203 = vsel %vm297, %v3138, 0
    %v3206 = vsel %vm297, %v3139, 0
    %v3209 = vsel %vm297, %v3140, 0
    %v3212 = vsel %vm297, %v3141, 0
    %v3215 = vsel %vm297, %v3142, 0
    %v3218 = vsel %vm297, %v3143, 0
    %v3221 = vsel %vm297, %v3144, 0
    %v3224 = vsel %vm297, %v3145, 0
    %v3227 = vsel %vm297, %v3146, 0
    %v3230 = vsel %vm297, %v3147, 0
    %v3233 = vsel %vm297, %v3148, 0
    %v3236 = vsel %vm297, %v3149, 0
    %v3239 = vsel %vm297, %v3150, 0
    %v3242 = vsel %vm297, %v3151, 0
    %v3245 = vsel %vm297, %v3152, 0
    %v3248 = vsel %vm297, %v3153, 0
    %v3251 = vsel %vm297, %v3154, 0
    %v3254 = vsel %vm297, %v3155, 0
    %v3257 = vsel %vm297, %v3156, 0
    %v3260 = vsel %vm297, %v3157, 0
    %v3263 = vsel %vm297, %v3158, 0
    %v3266 = vsel %vm297, %v3159, 0
    %v3269 = vsel %vm297, %v3160, 0
    %v3272 = vsel %vm297, %v3161, 0
    %v3275 = vsel %vm297, %v3162, 0
    %v3278 = vsel %vm297, %v3163, 0
    %v3281 = vsel %vm297, %v3164, 0
    %v3284 = vsel %vm297, %v3165, 0
    %v3287 = vsel %vm297, %v3166, 0
    %v3290 = vand.u32 %v3171, %v418
    %3292 = vmatpush.bf16.msra.mxu0 0
    %3293 = vmatpush.bf16.msra.mxu0 0
    %3294 = vmatpush.bf16.msra.mxu0 0
    %3295 = vmatpush.bf16.msra.mxu0 0
    %3296 = vmatpush.bf16.msra.mxu0 0
    %3297 = vmatpush.bf16.msra.mxu0 0
    %3298 = vmatpush.bf16.msra.mxu0 0
    %3299 = vmatpush.bf16.msra.mxu0 %v3290
    %3300 = vmatmul.bf16.gmra.mxu0 %v3173
    %v3301 = vpop.f32.mrf.mxu0
    %v3302 = vadd.f32 0.0, %v3301
    %v3303 = vpop.f32.mrf.mxu0
    %v3304 = vadd.f32 0.0, %v3303
    %3305 = vmatmul.bf16.gmra.mxu0 %v3176
    %v3306 = vpop.f32.mrf.mxu0
    %v3307 = vadd.f32 0.0, %v3306
    %v3308 = vpop.f32.mrf.mxu0
    %v3309 = vadd.f32 0.0, %v3308
    %3310 = vmatmul.bf16.gmra.mxu0 %v3179
    %v3311 = vpop.f32.mrf.mxu0
    %v3312 = vadd.f32 0.0, %v3311
    %v3313 = vpop.f32.mrf.mxu0
    %v3314 = vadd.f32 0.0, %v3313
    %3315 = vmatmul.bf16.gmra.mxu0 %v3182
    %v3316 = vpop.f32.mrf.mxu0
    %v3317 = vadd.f32 0.0, %v3316
    %v3318 = vpop.f32.mrf.mxu0
    %v3319 = vadd.f32 0.0, %v3318
    %3320 = vmatmul.bf16.gmra.mxu0 %v3185
    %v3321 = vpop.f32.mrf.mxu0
    %v3322 = vadd.f32 0.0, %v3321
    %v3323 = vpop.f32.mrf.mxu0
    %v3324 = vadd.f32 0.0, %v3323
    %3325 = vmatmul.bf16.gmra.mxu0 %v3188
    %v3326 = vpop.f32.mrf.mxu0
    %v3327 = vadd.f32 0.0, %v3326
    %v3328 = vpop.f32.mrf.mxu0
    %v3329 = vadd.f32 0.0, %v3328
    %3330 = vmatmul.bf16.gmra.mxu0 %v3191
    %v3331 = vpop.f32.mrf.mxu0
    %v3332 = vadd.f32 0.0, %v3331
    %v3333 = vpop.f32.mrf.mxu0
    %v3334 = vadd.f32 0.0, %v3333
    %3335 = vmatmul.bf16.gmra.mxu0 %v3194
    %v3336 = vpop.f32.mrf.mxu0
    %v3337 = vadd.f32 0.0, %v3336
    %v3338 = vpop.f32.mrf.mxu0
    %v3339 = vadd.f32 0.0, %v3338
    %3340 = vmatmul.bf16.gmra.mxu0 %v3197
    %v3341 = vpop.f32.mrf.mxu0
    %v3342 = vadd.f32 0.0, %v3341
    %v3343 = vpop.f32.mrf.mxu0
    %v3344 = vadd.f32 0.0, %v3343
    %3345 = vmatmul.bf16.gmra.mxu0 %v3200
    %v3346 = vpop.f32.mrf.mxu0
    %v3347 = vadd.f32 0.0, %v3346
    %v3348 = vpop.f32.mrf.mxu0
    %v3349 = vadd.f32 0.0, %v3348
    %3350 = vmatmul.bf16.gmra.mxu0 %v3203
    %v3351 = vpop.f32.mrf.mxu0
    %v3352 = vadd.f32 0.0, %v3351
    %v3353 = vpop.f32.mrf.mxu0
    %v3354 = vadd.f32 0.0, %v3353
    %3355 = vmatmul.bf16.gmra.mxu0 %v3206
    %v3356 = vpop.f32.mrf.mxu0
    %v3357 = vadd.f32 0.0, %v3356
    %v3358 = vpop.f32.mrf.mxu0
    %v3359 = vadd.f32 0.0, %v3358
    %3360 = vmatmul.bf16.gmra.mxu0 %v3209
    %v3361 = vpop.f32.mrf.mxu0
    %v3362 = vadd.f32 0.0, %v3361
    %v3363 = vpop.f32.mrf.mxu0
    %v3364 = vadd.f32 0.0, %v3363
    %3365 = vmatmul.bf16.gmra.mxu0 %v3212
    %v3366 = vpop.f32.mrf.mxu0
    %v3367 = vadd.f32 0.0, %v3366
    %v3368 = vpop.f32.mrf.mxu0
    %v3369 = vadd.f32 0.0, %v3368
    %3370 = vmatmul.bf16.gmra.mxu0 %v3215
    %v3371 = vpop.f32.mrf.mxu0
    %v3372 = vadd.f32 0.0, %v3371
    %v3373 = vpop.f32.mrf.mxu0
    %v3374 = vadd.f32 0.0, %v3373
    %3375 = vmatmul.bf16.gmra.mxu0 %v3218
    %v3376 = vpop.f32.mrf.mxu0
    %v3377 = vadd.f32 0.0, %v3376
    %v3378 = vpop.f32.mrf.mxu0
    %v3379 = vadd.f32 0.0, %v3378
    %3380 = vmatmul.bf16.gmra.mxu0 %v3221
    %v3381 = vpop.f32.mrf.mxu0
    %v3382 = vadd.f32 0.0, %v3381
    %v3383 = vpop.f32.mrf.mxu0
    %v3384 = vadd.f32 0.0, %v3383
    %3385 = vmatmul.bf16.gmra.mxu0 %v3224
    %v3386 = vpop.f32.mrf.mxu0
    %v3387 = vadd.f32 0.0, %v3386
    %v3388 = vpop.f32.mrf.mxu0
    %v3389 = vadd.f32 0.0, %v3388
    %3390 = vmatmul.bf16.gmra.mxu0 %v3227
    %v3391 = vpop.f32.mrf.mxu0
    %v3392 = vadd.f32 0.0, %v3391
    %v3393 = vpop.f32.mrf.mxu0
    %v3394 = vadd.f32 0.0, %v3393
    %3395 = vmatmul.bf16.gmra.mxu0 %v3230
    %v3396 = vpop.f32.mrf.mxu0
    %v3397 = vadd.f32 0.0, %v3396
    %v3398 = vpop.f32.mrf.mxu0
    %v3399 = vadd.f32 0.0, %v3398
    %3400 = vmatmul.bf16.gmra.mxu0 %v3233
    %v3401 = vpop.f32.mrf.mxu0
    %v3402 = vadd.f32 0.0, %v3401
    %v3403 = vpop.f32.mrf.mxu0
    %v3404 = vadd.f32 0.0, %v3403
    %3405 = vmatmul.bf16.gmra.mxu0 %v3236
    %v3406 = vpop.f32.mrf.mxu0
    %v3407 = vadd.f32 0.0, %v3406
    %v3408 = vpop.f32.mrf.mxu0
    %v3409 = vadd.f32 0.0, %v3408
    %3410 = vmatmul.bf16.gmra.mxu0 %v3239
    %v3411 = vpop.f32.mrf.mxu0
    %v3412 = vadd.f32 0.0, %v3411
    %v3413 = vpop.f32.mrf.mxu0
    %v3414 = vadd.f32 0.0, %v3413
    %3415 = vmatmul.bf16.gmra.mxu0 %v3242
    %v3416 = vpop.f32.mrf.mxu0
    %v3417 = vadd.f32 0.0, %v3416
    %v3418 = vpop.f32.mrf.mxu0
    %v3419 = vadd.f32 0.0, %v3418
    %3420 = vmatmul.bf16.gmra.mxu0 %v3245
    %v3421 = vpop.f32.mrf.mxu0
    %v3422 = vadd.f32 0.0, %v3421
    %v3423 = vpop.f32.mrf.mxu0
    %v3424 = vadd.f32 0.0, %v3423
    %3425 = vmatmul.bf16.gmra.mxu0 %v3248
    %v3426 = vpop.f32.mrf.mxu0
    %v3427 = vadd.f32 0.0, %v3426
    %v3428 = vpop.f32.mrf.mxu0
    %v3429 = vadd.f32 0.0, %v3428
    %3430 = vmatmul.bf16.gmra.mxu0 %v3251
    %v3431 = vpop.f32.mrf.mxu0
    %v3432 = vadd.f32 0.0, %v3431
    %v3433 = vpop.f32.mrf.mxu0
    %v3434 = vadd.f32 0.0, %v3433
    %3435 = vmatmul.bf16.gmra.mxu0 %v3254
    %v3436 = vpop.f32.mrf.mxu0
    %v3437 = vadd.f32 0.0, %v3436
    %v3438 = vpop.f32.mrf.mxu0
    %v3439 = vadd.f32 0.0, %v3438
    %3440 = vmatmul.bf16.gmra.mxu0 %v3257
    %v3441 = vpop.f32.mrf.mxu0
    %v3442 = vadd.f32 0.0, %v3441
    %v3443 = vpop.f32.mrf.mxu0
    %v3444 = vadd.f32 0.0, %v3443
    %3445 = vmatmul.bf16.gmra.mxu0 %v3260
    %v3446 = vpop.f32.mrf.mxu0
    %v3447 = vadd.f32 0.0, %v3446
    %v3448 = vpop.f32.mrf.mxu0
    %v3449 = vadd.f32 0.0, %v3448
    %3450 = vmatmul.bf16.gmra.mxu0 %v3263
    %v3451 = vpop.f32.mrf.mxu0
    %v3452 = vadd.f32 0.0, %v3451
    %v3453 = vpop.f32.mrf.mxu0
    %v3454 = vadd.f32 0.0, %v3453
    %3455 = vmatmul.bf16.gmra.mxu0 %v3266
    %v3456 = vpop.f32.mrf.mxu0
    %v3457 = vadd.f32 0.0, %v3456
    %v3458 = vpop.f32.mrf.mxu0
    %v3459 = vadd.f32 0.0, %v3458
    %3460 = vmatmul.bf16.gmra.mxu0 %v3269
    %v3461 = vpop.f32.mrf.mxu0
    %v3462 = vadd.f32 0.0, %v3461
    %v3463 = vpop.f32.mrf.mxu0
    %v3464 = vadd.f32 0.0, %v3463
    %3465 = vmatmul.bf16.gmra.mxu0 %v3272
    %v3466 = vpop.f32.mrf.mxu0
    %v3467 = vadd.f32 0.0, %v3466
    %v3468 = vpop.f32.mrf.mxu0
    %v3469 = vadd.f32 0.0, %v3468
    %3470 = vmatmul.bf16.gmra.mxu0 %v3275
    %v3471 = vpop.f32.mrf.mxu0
    %v3472 = vadd.f32 0.0, %v3471
    %v3473 = vpop.f32.mrf.mxu0
    %v3474 = vadd.f32 0.0, %v3473
    %3475 = vmatmul.bf16.gmra.mxu0 %v3278
    %v3476 = vpop.f32.mrf.mxu0
    %v3477 = vadd.f32 0.0, %v3476
    %v3478 = vpop.f32.mrf.mxu0
    %v3479 = vadd.f32 0.0, %v3478
    %3480 = vmatmul.bf16.gmra.mxu0 %v3281
    %v3481 = vpop.f32.mrf.mxu0
    %v3482 = vadd.f32 0.0, %v3481
    %v3483 = vpop.f32.mrf.mxu0
    %v3484 = vadd.f32 0.0, %v3483
    %3485 = vmatmul.bf16.gmra.mxu0 %v3284
    %v3486 = vpop.f32.mrf.mxu0
    %v3487 = vadd.f32 0.0, %v3486
    %v3488 = vpop.f32.mrf.mxu0
    %v3489 = vadd.f32 0.0, %v3488
    %3490 = vmatmul.bf16.gmra.mxu0 %v3287
    %v3491 = vpop.f32.mrf.mxu0
    %v3492 = vadd.f32 0.0, %v3491
    %v3493 = vpop.f32.mrf.mxu0
    %3494 = vdwg.mxu0
    %v3495 = vadd.f32 %v2974, %v3302
    %v3496 = vadd.f32 %v2975, %v3304
    %v3497 = vadd.f32 %v2976, %v3307
    %v3498 = vadd.f32 %v2977, %v3309
    %v3499 = vadd.f32 %v2978, %v3312
    %v3500 = vadd.f32 %v2979, %v3314
    %v3501 = vadd.f32 %v2980, %v3317
    %v3502 = vadd.f32 %v2981, %v3319
    %v3503 = vadd.f32 %v2982, %v3322
    %v3504 = vadd.f32 %v2983, %v3324
    %v3505 = vadd.f32 %v2984, %v3327
    %v3506 = vadd.f32 %v2985, %v3329
    %v3507 = vadd.f32 %v2986, %v3332
    %v3508 = vadd.f32 %v2987, %v3334
    %v3509 = vadd.f32 %v2988, %v3337
    %v3510 = vadd.f32 %v2989, %v3339
    %v3511 = vadd.f32 %v2990, %v3342
    %v3512 = vadd.f32 %v2991, %v3344
    %v3513 = vadd.f32 %v2992, %v3347
    %v3514 = vadd.f32 %v2993, %v3349
    %v3515 = vadd.f32 %v2994, %v3352
    %v3516 = vadd.f32 %v2995, %v3354
    %v3517 = vadd.f32 %v2996, %v3357
    %v3518 = vadd.f32 %v2997, %v3359
    %v3519 = vadd.f32 %v2998, %v3362
    %v3520 = vadd.f32 %v2999, %v3364
    %v3521 = vadd.f32 %v3000, %v3367
    %v3522 = vadd.f32 %v3001, %v3369
    %v3523 = vadd.f32 %v3002, %v3372
    %v3524 = vadd.f32 %v3003, %v3374
    %v3525 = vadd.f32 %v3004, %v3377
    %v3526 = vadd.f32 %v3005, %v3379
    %v3527 = vadd.f32 %v3006, %v3382
    %v3528 = vadd.f32 %v3007, %v3384
    %v3529 = vadd.f32 %v3008, %v3387
    %v3530 = vadd.f32 %v3009, %v3389
    %v3531 = vadd.f32 %v3010, %v3392
    %v3532 = vadd.f32 %v3011, %v3394
    %v3533 = vadd.f32 %v3012, %v3397
    %v3534 = vadd.f32 %v3013, %v3399
    %v3535 = vadd.f32 %v3014, %v3402
    %v3536 = vadd.f32 %v3015, %v3404
    %v3537 = vadd.f32 %v3016, %v3407
    %v3538 = vadd.f32 %v3017, %v3409
    %v3539 = vadd.f32 %v3018, %v3412
    %v3540 = vadd.f32 %v3019, %v3414
    %v3541 = vadd.f32 %v3020, %v3417
    %v3542 = vadd.f32 %v3021, %v3419
    %v3543 = vadd.f32 %v3022, %v3422
    %v3544 = vadd.f32 %v3023, %v3424
    %v3545 = vadd.f32 %v3024, %v3427
    %v3546 = vadd.f32 %v3025, %v3429
    %v3547 = vadd.f32 %v3026, %v3432
    %v3548 = vadd.f32 %v3027, %v3434
    %v3549 = vadd.f32 %v3028, %v3437
    %v3550 = vadd.f32 %v3029, %v3439
    %v3551 = vadd.f32 %v3030, %v3442
    %v3552 = vadd.f32 %v3031, %v3444
    %v3553 = vadd.f32 %v3032, %v3447
    %v3554 = vadd.f32 %v3033, %v3449
    %v3555 = vadd.f32 %v3034, %v3452
    %v3556 = vadd.f32 %v3035, %v3454
    %v3557 = vadd.f32 %v3036, %v3457
    %v3558 = vadd.f32 %v3037, %v3459
    %v3559 = vadd.f32 %v3038, %v3462
    %v3560 = vadd.f32 %v3039, %v3464
    %v3561 = vadd.f32 %v3040, %v3467
    %v3562 = vadd.f32 %v3041, %v3469
    %v3563 = vadd.f32 %v3042, %v3472
    %v3564 = vadd.f32 %v3043, %v3474
    %v3565 = vadd.f32 %v3044, %v3477
    %v3566 = vadd.f32 %v3045, %v3479
    %v3567 = vadd.f32 %v3046, %v3482
    %v3568 = vadd.f32 %v3047, %v3484
    %v3569 = vadd.f32 %v3048, %v3487
    %v3570 = vadd.f32 %v3049, %v3489
    %v3571 = vadd.f32 %v3050, %v3492
    %v3572 = vld [vmem:[%s0 + $0x25] sm:$0xff]
    %v3573 = vld [vmem:[%s0 + $0x2d] sm:$0xff]
    %v3574 = vld [vmem:[%s0 + $0x35] sm:$0xff]
    %v3575 = vld [vmem:[%s0 + $0x3d] sm:$0xff]
    %v3576 = vld [vmem:[%s0 + $0x45] sm:$0xff]
    %v3577 = vld [vmem:[%s0 + $0x4d] sm:$0xff]
    %v3578 = vld [vmem:[%s0 + $0x55] sm:$0xff]
    %v3579 = vld [vmem:[%s0 + $0x5d] sm:$0xff]
    %v3580 = vld [vmem:[%s0 + $0x65] sm:$0xff]
    %v3581 = vld [vmem:[%s0 + $0x6d] sm:$0xff]
    %v3582 = vld [vmem:[%s0 + $0x75] sm:$0xff]
    %v3583 = vld [vmem:[%s0 + $0x7d] sm:$0xff]
    %v3584 = vld [vmem:[%s0 + $0x85] sm:$0xff]
    %v3585 = vld [vmem:[%s0 + $0x8d] sm:$0xff]
    %v3586 = vld [vmem:[%s0 + $0x95] sm:$0xff]
    %v3587 = vld [vmem:[%s0 + $0x9d] sm:$0xff]
    %v3588 = vld [vmem:[%s0 + $0xa5] sm:$0xff]
    %v3589 = vld [vmem:[%s0 + $0xad] sm:$0xff]
    %v3590 = vld [vmem:[%s0 + $0xb5] sm:$0xff]
    %v3591 = vld [vmem:[%s0 + $0xbd] sm:$0xff]
    %v3592 = vld [vmem:[%s0 + $0xc5] sm:$0xff]
    %v3593 = vld [vmem:[%s0 + $0xcd] sm:$0xff]
    %v3594 = vld [vmem:[%s0 + $0xd5] sm:$0xff]
    %v3595 = vld [vmem:[%s0 + $0xdd] sm:$0xff]
    %v3596 = vld [vmem:[%s0 + $0xe5] sm:$0xff]
    %v3597 = vld [vmem:[%s0 + $0xed] sm:$0xff]
    %v3598 = vld [vmem:[%s0 + $0xf5] sm:$0xff]
    %v3599 = vld [vmem:[%s0 + $0xfd] sm:$0xff]
    %v3600 = vld [vmem:[%s0 + $0x105] sm:$0xff]
    %v3601 = vld [vmem:[%s0 + $0x10d] sm:$0xff]
    %v3602 = vld [vmem:[%s0 + $0x115] sm:$0xff]
    %v3603 = vld [vmem:[%s0 + $0x11d] sm:$0xff]
    %v3604 = vld [vmem:[%s0 + $0x125] sm:$0xff]
    %v3605 = vld [vmem:[%s0 + $0x12d] sm:$0xff]
    %v3606 = vld [vmem:[%s0 + $0x135] sm:$0xff]
    %v3607 = vld [vmem:[%s0 + $0x13d] sm:$0xff]
    %v3608 = vld [vmem:[%s0 + $0x145] sm:$0xff]
    %v3609 = vld [vmem:[%s0 + $0x14d] sm:$0xff]
    %v3610 = vld [vmem:[%s0 + $0x155] sm:$0xff]
    %v3611 = vld [vmem:[%s0 + $0x15d] sm:$0xff]
    %v3612 = vld [vmem:[%s0 + $0x165] sm:$0xff]
    %v3613 = vld [vmem:[%s0 + $0x16d] sm:$0xff]
    %v3614 = vld [vmem:[%s0 + $0x175] sm:$0xff]
    %v3615 = vld [vmem:[%s0 + $0x17d] sm:$0xff]
    %v3616 = vld [vmem:[%s0 + $0x185] sm:$0xff]
    %v3617 = vld [vmem:[%s0 + $0x18d] sm:$0xff]
    %v3618 = vld [vmem:[%s0 + $0x195] sm:$0xff]
    %v3619 = vld [vmem:[%s0 + $0x19d] sm:$0xff]
    %v3620 = vld [vmem:[%s0 + $0x1a5] sm:$0xff]
    %v3621 = vld [vmem:[%s0 + $0x1ad] sm:$0xff]
    %v3622 = vld [vmem:[%s0 + $0x1b5] sm:$0xff]
    %v3623 = vld [vmem:[%s0 + $0x1bd] sm:$0xff]
    %v3624 = vld [vmem:[%s0 + $0x1c5] sm:$0xff]
    %v3625 = vld [vmem:[%s0 + $0x1cd] sm:$0xff]
    %v3626 = vld [vmem:[%s0 + $0x1d5] sm:$0xff]
    %v3627 = vld [vmem:[%s0 + $0x1dd] sm:$0xff]
    %v3628 = vld [vmem:[%s0 + $0x1e5] sm:$0xff]
    %v3629 = vld [vmem:[%s0 + $0x1ed] sm:$0xff]
    %v3630 = vld [vmem:[%s0 + $0x1f5] sm:$0xff]
    %v3631 = vld [vmem:[%s0 + $0x1fd] sm:$0xff]
    %v3632 = vld [vmem:[%s0 + $0x205] sm:$0xff]
    %v3633 = vld [vmem:[%s0 + $0x20d] sm:$0xff]
    %v3634 = vld [vmem:[%s0 + $0x215] sm:$0xff]
    %v3635 = vld [vmem:[%s0 + $0x21d] sm:$0xff]
    %v3636 = vld [vmem:[%s0 + $0x225] sm:$0xff]
    %v3637 = vld [vmem:[%s0 + $0x22d] sm:$0xff]
    %v3638 = vld [vmem:[%s0 + $0x235] sm:$0xff]
    %v3639 = vld [vmem:[%s0 + $0x23d] sm:$0xff]
    %v3640 = vld [vmem:[%s0 + $0x245] sm:$0xff]
    %v3641 = vld [vmem:[%s0 + $0x24d] sm:$0xff]
    %v3642 = vld [vmem:[%s0 + $0x255] sm:$0xff]
    %v3643 = vld [vmem:[%s0 + $0x25d] sm:$0xff]
    %v3644 = vld [vmem:[%s0 + $0x265] sm:$0xff]
    %v3645 = vld [vmem:[%s0 + $0x26d] sm:$0xff]
    %v3646 = vld [vmem:[%s0 + $0x275] sm:$0xff]
    %v3647 = vld [vmem:[%s0 + $0x27d] sm:$0xff]
    %v3648 = vld [vmem:[%s0 + $0x285] sm:$0x3]
    %v3649 = vpack.c.bf16 %v3573, %v3572
    %v3650 = vpack.c.bf16 %v3575, %v3574
    %v3651 = vpack.c.bf16 %v3577, %v3576
    %v3652 = vpack.c.bf16 %v3579, %v3578
    %v3653 = vpack.c.bf16 %v3581, %v3580
    %v3654 = vpack.c.bf16 %v3583, %v3582
    %v3655 = vpack.c.bf16 %v3585, %v3584
    %v3656 = vpack.c.bf16 %v3587, %v3586
    %v3657 = vpack.c.bf16 %v3589, %v3588
    %v3658 = vpack.c.bf16 %v3591, %v3590
    %v3659 = vpack.c.bf16 %v3593, %v3592
    %v3660 = vpack.c.bf16 %v3595, %v3594
    %v3661 = vpack.c.bf16 %v3597, %v3596
    %v3662 = vpack.c.bf16 %v3599, %v3598
    %v3663 = vpack.c.bf16 %v3601, %v3600
    %v3664 = vpack.c.bf16 %v3603, %v3602
    %v3665 = vpack.c.bf16 %v3605, %v3604
    %v3666 = vpack.c.bf16 %v3607, %v3606
    %v3667 = vpack.c.bf16 %v3609, %v3608
    %v3668 = vpack.c.bf16 %v3611, %v3610
    %v3669 = vpack.c.bf16 %v3613, %v3612
    %v3670 = vpack.c.bf16 %v3615, %v3614
    %v3671 = vpack.c.bf16 %v3617, %v3616
    %v3672 = vpack.c.bf16 %v3619, %v3618
    %v3673 = vpack.c.bf16 %v3621, %v3620
    %v3674 = vpack.c.bf16 %v3623, %v3622
    %v3675 = vpack.c.bf16 %v3625, %v3624
    %v3676 = vpack.c.bf16 %v3627, %v3626
    %v3677 = vpack.c.bf16 %v3629, %v3628
    %v3678 = vpack.c.bf16 %v3631, %v3630
    %v3679 = vpack.c.bf16 %v3633, %v3632
    %v3680 = vpack.c.bf16 %v3635, %v3634
    %v3681 = vpack.c.bf16 %v3637, %v3636
    %v3682 = vpack.c.bf16 %v3639, %v3638
    %v3683 = vpack.c.bf16 %v3641, %v3640
    %v3684 = vpack.c.bf16 %v3643, %v3642
    %v3685 = vpack.c.bf16 %v3645, %v3644
    %v3686 = vpack.c.bf16 %v3647, %v3646
    %v3687 = vpack.c.bf16 %v3648, %v3648
    %v3688 = vld [vmem:[%s1 + $0x8] sm:$0xc]
    %v3690 = vunpack.c.l.b16 %v3688
    %v3691 = vpack.c.b16 %v3690, %v3690
    %v3693 = vshrl.u32 %v3691, 16
    %v3695 = vrot.slane %v3693, 2
    %v3696 = vshll.u32 %v3691, 16
    %v3698 = vrot.slane %v3696, 3
    %v3699 = vor.u32 %v3695, %v3698
    %v3701 = vsel %vm297, %v3649, 0
    %v3704 = vsel %vm297, %v3650, 0
    %v3707 = vsel %vm297, %v3651, 0
    %v3710 = vsel %vm297, %v3652, 0
    %v3713 = vsel %vm297, %v3653, 0
    %v3716 = vsel %vm297, %v3654, 0
    %v3719 = vsel %vm297, %v3655, 0
    %v3722 = vsel %vm297, %v3656, 0
    %v3725 = vsel %vm297, %v3657, 0
    %v3728 = vsel %vm297, %v3658, 0
    %v3731 = vsel %vm297, %v3659, 0
    %v3734 = vsel %vm297, %v3660, 0
    %v3737 = vsel %vm297, %v3661, 0
    %v3740 = vsel %vm297, %v3662, 0
    %v3743 = vsel %vm297, %v3663, 0
    %v3746 = vsel %vm297, %v3664, 0
    %v3749 = vsel %vm297, %v3665, 0
    %v3752 = vsel %vm297, %v3666, 0
    %v3755 = vsel %vm297, %v3667, 0
    %v3758 = vsel %vm297, %v3668, 0
    %v3761 = vsel %vm297, %v3669, 0
    %v3764 = vsel %vm297, %v3670, 0
    %v3767 = vsel %vm297, %v3671, 0
    %v3770 = vsel %vm297, %v3672, 0
    %v3773 = vsel %vm297, %v3673, 0
    %v3776 = vsel %vm297, %v3674, 0
    %v3779 = vsel %vm297, %v3675, 0
    %v3782 = vsel %vm297, %v3676, 0
    %v3785 = vsel %vm297, %v3677, 0
    %v3788 = vsel %vm297, %v3678, 0
    %v3791 = vsel %vm297, %v3679, 0
    %v3794 = vsel %vm297, %v3680, 0
    %v3797 = vsel %vm297, %v3681, 0
    %v3800 = vsel %vm297, %v3682, 0
    %v3803 = vsel %vm297, %v3683, 0
    %v3806 = vsel %vm297, %v3684, 0
    %v3809 = vsel %vm297, %v3685, 0
    %v3812 = vsel %vm297, %v3686, 0
    %v3815 = vsel %vm297, %v3687, 0
    %v3818 = vand.u32 %v3699, %v418
    %3820 = vmatpush.bf16.msra.mxu0 0
    %3821 = vmatpush.bf16.msra.mxu0 0
    %3822 = vmatpush.bf16.msra.mxu0 0
    %3823 = vmatpush.bf16.msra.mxu0 0
    %3824 = vmatpush.bf16.msra.mxu0 0
    %3825 = vmatpush.bf16.msra.mxu0 0
    %3826 = vmatpush.bf16.msra.mxu0 0
    %3827 = vmatpush.bf16.msra.mxu0 %v3818
    %3828 = vmatmul.bf16.gmra.mxu0 %v3701
    %v3829 = vpop.f32.mrf.mxu0
    %v3830 = vadd.f32 0.0, %v3829
    %v3831 = vpop.f32.mrf.mxu0
    %v3832 = vadd.f32 0.0, %v3831
    %3833 = vmatmul.bf16.gmra.mxu0 %v3704
    %v3834 = vpop.f32.mrf.mxu0
    %v3835 = vadd.f32 0.0, %v3834
    %v3836 = vpop.f32.mrf.mxu0
    %v3837 = vadd.f32 0.0, %v3836
    %3838 = vmatmul.bf16.gmra.mxu0 %v3707
    %v3839 = vpop.f32.mrf.mxu0
    %v3840 = vadd.f32 0.0, %v3839
    %v3841 = vpop.f32.mrf.mxu0
    %v3842 = vadd.f32 0.0, %v3841
    %3843 = vmatmul.bf16.gmra.mxu0 %v3710
    %v3844 = vpop.f32.mrf.mxu0
    %v3845 = vadd.f32 0.0, %v3844
    %v3846 = vpop.f32.mrf.mxu0
    %v3847 = vadd.f32 0.0, %v3846
    %3848 = vmatmul.bf16.gmra.mxu0 %v3713
    %v3849 = vpop.f32.mrf.mxu0
    %v3850 = vadd.f32 0.0, %v3849
    %v3851 = vpop.f32.mrf.mxu0
    %v3852 = vadd.f32 0.0, %v3851
    %3853 = vmatmul.bf16.gmra.mxu0 %v3716
    %v3854 = vpop.f32.mrf.mxu0
    %v3855 = vadd.f32 0.0, %v3854
    %v3856 = vpop.f32.mrf.mxu0
    %v3857 = vadd.f32 0.0, %v3856
    %3858 = vmatmul.bf16.gmra.mxu0 %v3719
    %v3859 = vpop.f32.mrf.mxu0
    %v3860 = vadd.f32 0.0, %v3859
    %v3861 = vpop.f32.mrf.mxu0
    %v3862 = vadd.f32 0.0, %v3861
    %3863 = vmatmul.bf16.gmra.mxu0 %v3722
    %v3864 = vpop.f32.mrf.mxu0
    %v3865 = vadd.f32 0.0, %v3864
    %v3866 = vpop.f32.mrf.mxu0
    %v3867 = vadd.f32 0.0, %v3866
    %3868 = vmatmul.bf16.gmra.mxu0 %v3725
    %v3869 = vpop.f32.mrf.mxu0
    %v3870 = vadd.f32 0.0, %v3869
    %v3871 = vpop.f32.mrf.mxu0
    %v3872 = vadd.f32 0.0, %v3871
    %3873 = vmatmul.bf16.gmra.mxu0 %v3728
    %v3874 = vpop.f32.mrf.mxu0
    %v3875 = vadd.f32 0.0, %v3874
    %v3876 = vpop.f32.mrf.mxu0
    %v3877 = vadd.f32 0.0, %v3876
    %3878 = vmatmul.bf16.gmra.mxu0 %v3731
    %v3879 = vpop.f32.mrf.mxu0
    %v3880 = vadd.f32 0.0, %v3879
    %v3881 = vpop.f32.mrf.mxu0
    %v3882 = vadd.f32 0.0, %v3881
    %3883 = vmatmul.bf16.gmra.mxu0 %v3734
    %v3884 = vpop.f32.mrf.mxu0
    %v3885 = vadd.f32 0.0, %v3884
    %v3886 = vpop.f32.mrf.mxu0
    %v3887 = vadd.f32 0.0, %v3886
    %3888 = vmatmul.bf16.gmra.mxu0 %v3737
    %v3889 = vpop.f32.mrf.mxu0
    %v3890 = vadd.f32 0.0, %v3889
    %v3891 = vpop.f32.mrf.mxu0
    %v3892 = vadd.f32 0.0, %v3891
    %3893 = vmatmul.bf16.gmra.mxu0 %v3740
    %v3894 = vpop.f32.mrf.mxu0
    %v3895 = vadd.f32 0.0, %v3894
    %v3896 = vpop.f32.mrf.mxu0
    %v3897 = vadd.f32 0.0, %v3896
    %3898 = vmatmul.bf16.gmra.mxu0 %v3743
    %v3899 = vpop.f32.mrf.mxu0
    %v3900 = vadd.f32 0.0, %v3899
    %v3901 = vpop.f32.mrf.mxu0
    %v3902 = vadd.f32 0.0, %v3901
    %3903 = vmatmul.bf16.gmra.mxu0 %v3746
    %v3904 = vpop.f32.mrf.mxu0
    %v3905 = vadd.f32 0.0, %v3904
    %v3906 = vpop.f32.mrf.mxu0
    %v3907 = vadd.f32 0.0, %v3906
    %3908 = vmatmul.bf16.gmra.mxu0 %v3749
    %v3909 = vpop.f32.mrf.mxu0
    %v3910 = vadd.f32 0.0, %v3909
    %v3911 = vpop.f32.mrf.mxu0
    %v3912 = vadd.f32 0.0, %v3911
    %3913 = vmatmul.bf16.gmra.mxu0 %v3752
    %v3914 = vpop.f32.mrf.mxu0
    %v3915 = vadd.f32 0.0, %v3914
    %v3916 = vpop.f32.mrf.mxu0
    %v3917 = vadd.f32 0.0, %v3916
    %3918 = vmatmul.bf16.gmra.mxu0 %v3755
    %v3919 = vpop.f32.mrf.mxu0
    %v3920 = vadd.f32 0.0, %v3919
    %v3921 = vpop.f32.mrf.mxu0
    %v3922 = vadd.f32 0.0, %v3921
    %3923 = vmatmul.bf16.gmra.mxu0 %v3758
    %v3924 = vpop.f32.mrf.mxu0
    %v3925 = vadd.f32 0.0, %v3924
    %v3926 = vpop.f32.mrf.mxu0
    %v3927 = vadd.f32 0.0, %v3926
    %3928 = vmatmul.bf16.gmra.mxu0 %v3761
    %v3929 = vpop.f32.mrf.mxu0
    %v3930 = vadd.f32 0.0, %v3929
    %v3931 = vpop.f32.mrf.mxu0
    %v3932 = vadd.f32 0.0, %v3931
    %3933 = vmatmul.bf16.gmra.mxu0 %v3764
    %v3934 = vpop.f32.mrf.mxu0
    %v3935 = vadd.f32 0.0, %v3934
    %v3936 = vpop.f32.mrf.mxu0
    %v3937 = vadd.f32 0.0, %v3936
    %3938 = vmatmul.bf16.gmra.mxu0 %v3767
    %v3939 = vpop.f32.mrf.mxu0
    %v3940 = vadd.f32 0.0, %v3939
    %v3941 = vpop.f32.mrf.mxu0
    %v3942 = vadd.f32 0.0, %v3941
    %3943 = vmatmul.bf16.gmra.mxu0 %v3770
    %v3944 = vpop.f32.mrf.mxu0
    %v3945 = vadd.f32 0.0, %v3944
    %v3946 = vpop.f32.mrf.mxu0
    %v3947 = vadd.f32 0.0, %v3946
    %3948 = vmatmul.bf16.gmra.mxu0 %v3773
    %v3949 = vpop.f32.mrf.mxu0
    %v3950 = vadd.f32 0.0, %v3949
    %v3951 = vpop.f32.mrf.mxu0
    %v3952 = vadd.f32 0.0, %v3951
    %3953 = vmatmul.bf16.gmra.mxu0 %v3776
    %v3954 = vpop.f32.mrf.mxu0
    %v3955 = vadd.f32 0.0, %v3954
    %v3956 = vpop.f32.mrf.mxu0
    %v3957 = vadd.f32 0.0, %v3956
    %3958 = vmatmul.bf16.gmra.mxu0 %v3779
    %v3959 = vpop.f32.mrf.mxu0
    %v3960 = vadd.f32 0.0, %v3959
    %v3961 = vpop.f32.mrf.mxu0
    %v3962 = vadd.f32 0.0, %v3961
    %3963 = vmatmul.bf16.gmra.mxu0 %v3782
    %v3964 = vpop.f32.mrf.mxu0
    %v3965 = vadd.f32 0.0, %v3964
    %v3966 = vpop.f32.mrf.mxu0
    %v3967 = vadd.f32 0.0, %v3966
    %3968 = vmatmul.bf16.gmra.mxu0 %v3785
    %v3969 = vpop.f32.mrf.mxu0
    %v3970 = vadd.f32 0.0, %v3969
    %v3971 = vpop.f32.mrf.mxu0
    %v3972 = vadd.f32 0.0, %v3971
    %3973 = vmatmul.bf16.gmra.mxu0 %v3788
    %v3974 = vpop.f32.mrf.mxu0
    %v3975 = vadd.f32 0.0, %v3974
    %v3976 = vpop.f32.mrf.mxu0
    %v3977 = vadd.f32 0.0, %v3976
    %3978 = vmatmul.bf16.gmra.mxu0 %v3791
    %v3979 = vpop.f32.mrf.mxu0
    %v3980 = vadd.f32 0.0, %v3979
    %v3981 = vpop.f32.mrf.mxu0
    %v3982 = vadd.f32 0.0, %v3981
    %3983 = vmatmul.bf16.gmra.mxu0 %v3794
    %v3984 = vpop.f32.mrf.mxu0
    %v3985 = vadd.f32 0.0, %v3984
    %v3986 = vpop.f32.mrf.mxu0
    %v3987 = vadd.f32 0.0, %v3986
    %3988 = vmatmul.bf16.gmra.mxu0 %v3797
    %v3989 = vpop.f32.mrf.mxu0
    %v3990 = vadd.f32 0.0, %v3989
    %v3991 = vpop.f32.mrf.mxu0
    %v3992 = vadd.f32 0.0, %v3991
    %3993 = vmatmul.bf16.gmra.mxu0 %v3800
    %v3994 = vpop.f32.mrf.mxu0
    %v3995 = vadd.f32 0.0, %v3994
    %v3996 = vpop.f32.mrf.mxu0
    %v3997 = vadd.f32 0.0, %v3996
    %3998 = vmatmul.bf16.gmra.mxu0 %v3803
    %v3999 = vpop.f32.mrf.mxu0
    %v4000 = vadd.f32 0.0, %v3999
    %v4001 = vpop.f32.mrf.mxu0
    %v4002 = vadd.f32 0.0, %v4001
    %4003 = vmatmul.bf16.gmra.mxu0 %v3806
    %v4004 = vpop.f32.mrf.mxu0
    %v4005 = vadd.f32 0.0, %v4004
    %v4006 = vpop.f32.mrf.mxu0
    %v4007 = vadd.f32 0.0, %v4006
    %4008 = vmatmul.bf16.gmra.mxu0 %v3809
    %v4009 = vpop.f32.mrf.mxu0
    %v4010 = vadd.f32 0.0, %v4009
    %v4011 = vpop.f32.mrf.mxu0
    %v4012 = vadd.f32 0.0, %v4011
    %4013 = vmatmul.bf16.gmra.mxu0 %v3812
    %v4014 = vpop.f32.mrf.mxu0
    %v4015 = vadd.f32 0.0, %v4014
    %v4016 = vpop.f32.mrf.mxu0
    %v4017 = vadd.f32 0.0, %v4016
    %4018 = vmatmul.bf16.gmra.mxu0 %v3815
    %v4019 = vpop.f32.mrf.mxu0
    %v4020 = vadd.f32 0.0, %v4019
    %v4021 = vpop.f32.mrf.mxu0
    %4022 = vdwg.mxu0
    %v4023 = vadd.f32 %v3495, %v3830
    %v4024 = vadd.f32 %v3496, %v3832
    %v4025 = vadd.f32 %v3497, %v3835
    %v4026 = vadd.f32 %v3498, %v3837
    %v4027 = vadd.f32 %v3499, %v3840
    %v4028 = vadd.f32 %v3500, %v3842
    %v4029 = vadd.f32 %v3501, %v3845
    %v4030 = vadd.f32 %v3502, %v3847
    %v4031 = vadd.f32 %v3503, %v3850
    %v4032 = vadd.f32 %v3504, %v3852
    %v4033 = vadd.f32 %v3505, %v3855
    %v4034 = vadd.f32 %v3506, %v3857
    %v4035 = vadd.f32 %v3507, %v3860
    %v4036 = vadd.f32 %v3508, %v3862
    %v4037 = vadd.f32 %v3509, %v3865
    %v4038 = vadd.f32 %v3510, %v3867
    %v4039 = vadd.f32 %v3511, %v3870
    %v4040 = vadd.f32 %v3512, %v3872
    %v4041 = vadd.f32 %v3513, %v3875
    %v4042 = vadd.f32 %v3514, %v3877
    %v4043 = vadd.f32 %v3515, %v3880
    %v4044 = vadd.f32 %v3516, %v3882
    %v4045 = vadd.f32 %v3517, %v3885
    %v4046 = vadd.f32 %v3518, %v3887
    %v4047 = vadd.f32 %v3519, %v3890
    %v4048 = vadd.f32 %v3520, %v3892
    %v4049 = vadd.f32 %v3521, %v3895
    %v4050 = vadd.f32 %v3522, %v3897
    %v4051 = vadd.f32 %v3523, %v3900
    %v4052 = vadd.f32 %v3524, %v3902
    %v4053 = vadd.f32 %v3525, %v3905
    %v4054 = vadd.f32 %v3526, %v3907
    %v4055 = vadd.f32 %v3527, %v3910
    %v4056 = vadd.f32 %v3528, %v3912
    %v4057 = vadd.f32 %v3529, %v3915
    %v4058 = vadd.f32 %v3530, %v3917
    %v4059 = vadd.f32 %v3531, %v3920
    %v4060 = vadd.f32 %v3532, %v3922
    %v4061 = vadd.f32 %v3533, %v3925
    %v4062 = vadd.f32 %v3534, %v3927
    %v4063 = vadd.f32 %v3535, %v3930
    %v4064 = vadd.f32 %v3536, %v3932
    %v4065 = vadd.f32 %v3537, %v3935
    %v4066 = vadd.f32 %v3538, %v3937
    %v4067 = vadd.f32 %v3539, %v3940
    %v4068 = vadd.f32 %v3540, %v3942
    %v4069 = vadd.f32 %v3541, %v3945
    %v4070 = vadd.f32 %v3542, %v3947
    %v4071 = vadd.f32 %v3543, %v3950
    %v4072 = vadd.f32 %v3544, %v3952
    %v4073 = vadd.f32 %v3545, %v3955
    %v4074 = vadd.f32 %v3546, %v3957
    %v4075 = vadd.f32 %v3547, %v3960
    %v4076 = vadd.f32 %v3548, %v3962
    %v4077 = vadd.f32 %v3549, %v3965
    %v4078 = vadd.f32 %v3550, %v3967
    %v4079 = vadd.f32 %v3551, %v3970
    %v4080 = vadd.f32 %v3552, %v3972
    %v4081 = vadd.f32 %v3553, %v3975
    %v4082 = vadd.f32 %v3554, %v3977
    %v4083 = vadd.f32 %v3555, %v3980
    %v4084 = vadd.f32 %v3556, %v3982
    %v4085 = vadd.f32 %v3557, %v3985
    %v4086 = vadd.f32 %v3558, %v3987
    %v4087 = vadd.f32 %v3559, %v3990
    %v4088 = vadd.f32 %v3560, %v3992
    %v4089 = vadd.f32 %v3561, %v3995
    %v4090 = vadd.f32 %v3562, %v3997
    %v4091 = vadd.f32 %v3563, %v4000
    %v4092 = vadd.f32 %v3564, %v4002
    %v4093 = vadd.f32 %v3565, %v4005
    %v4094 = vadd.f32 %v3566, %v4007
    %v4095 = vadd.f32 %v3567, %v4010
    %v4096 = vadd.f32 %v3568, %v4012
    %v4097 = vadd.f32 %v3569, %v4015
    %v4098 = vadd.f32 %v3570, %v4017
    %v4099 = vadd.f32 %v3571, %v4020
    %v4100 = vld [vmem:[%s0 + $0x26] sm:$0xff]
    %v4101 = vld [vmem:[%s0 + $0x2e] sm:$0xff]
    %v4102 = vld [vmem:[%s0 + $0x36] sm:$0xff]
    %v4103 = vld [vmem:[%s0 + $0x3e] sm:$0xff]
    %v4104 = vld [vmem:[%s0 + $0x46] sm:$0xff]
    %v4105 = vld [vmem:[%s0 + $0x4e] sm:$0xff]
    %v4106 = vld [vmem:[%s0 + $0x56] sm:$0xff]
    %v4107 = vld [vmem:[%s0 + $0x5e] sm:$0xff]
    %v4108 = vld [vmem:[%s0 + $0x66] sm:$0xff]
    %v4109 = vld [vmem:[%s0 + $0x6e] sm:$0xff]
    %v4110 = vld [vmem:[%s0 + $0x76] sm:$0xff]
    %v4111 = vld [vmem:[%s0 + $0x7e] sm:$0xff]
    %v4112 = vld [vmem:[%s0 + $0x86] sm:$0xff]
    %v4113 = vld [vmem:[%s0 + $0x8e] sm:$0xff]
    %v4114 = vld [vmem:[%s0 + $0x96] sm:$0xff]
    %v4115 = vld [vmem:[%s0 + $0x9e] sm:$0xff]
    %v4116 = vld [vmem:[%s0 + $0xa6] sm:$0xff]
    %v4117 = vld [vmem:[%s0 + $0xae] sm:$0xff]
    %v4118 = vld [vmem:[%s0 + $0xb6] sm:$0xff]
    %v4119 = vld [vmem:[%s0 + $0xbe] sm:$0xff]
    %v4120 = vld [vmem:[%s0 + $0xc6] sm:$0xff]
    %v4121 = vld [vmem:[%s0 + $0xce] sm:$0xff]
    %v4122 = vld [vmem:[%s0 + $0xd6] sm:$0xff]
    %v4123 = vld [vmem:[%s0 + $0xde] sm:$0xff]
    %v4124 = vld [vmem:[%s0 + $0xe6] sm:$0xff]
    %v4125 = vld [vmem:[%s0 + $0xee] sm:$0xff]
    %v4126 = vld [vmem:[%s0 + $0xf6] sm:$0xff]
    %v4127 = vld [vmem:[%s0 + $0xfe] sm:$0xff]
    %v4128 = vld [vmem:[%s0 + $0x106] sm:$0xff]
    %v4129 = vld [vmem:[%s0 + $0x10e] sm:$0xff]
    %v4130 = vld [vmem:[%s0 + $0x116] sm:$0xff]
    %v4131 = vld [vmem:[%s0 + $0x11e] sm:$0xff]
    %v4132 = vld [vmem:[%s0 + $0x126] sm:$0xff]
    %v4133 = vld [vmem:[%s0 + $0x12e] sm:$0xff]
    %v4134 = vld [vmem:[%s0 + $0x136] sm:$0xff]
    %v4135 = vld [vmem:[%s0 + $0x13e] sm:$0xff]
    %v4136 = vld [vmem:[%s0 + $0x146] sm:$0xff]
    %v4137 = vld [vmem:[%s0 + $0x14e] sm:$0xff]
    %v4138 = vld [vmem:[%s0 + $0x156] sm:$0xff]
    %v4139 = vld [vmem:[%s0 + $0x15e] sm:$0xff]
    %v4140 = vld [vmem:[%s0 + $0x166] sm:$0xff]
    %v4141 = vld [vmem:[%s0 + $0x16e] sm:$0xff]
    %v4142 = vld [vmem:[%s0 + $0x176] sm:$0xff]
    %v4143 = vld [vmem:[%s0 + $0x17e] sm:$0xff]
    %v4144 = vld [vmem:[%s0 + $0x186] sm:$0xff]
    %v4145 = vld [vmem:[%s0 + $0x18e] sm:$0xff]
    %v4146 = vld [vmem:[%s0 + $0x196] sm:$0xff]
    %v4147 = vld [vmem:[%s0 + $0x19e] sm:$0xff]
    %v4148 = vld [vmem:[%s0 + $0x1a6] sm:$0xff]
    %v4149 = vld [vmem:[%s0 + $0x1ae] sm:$0xff]
    %v4150 = vld [vmem:[%s0 + $0x1b6] sm:$0xff]
    %v4151 = vld [vmem:[%s0 + $0x1be] sm:$0xff]
    %v4152 = vld [vmem:[%s0 + $0x1c6] sm:$0xff]
    %v4153 = vld [vmem:[%s0 + $0x1ce] sm:$0xff]
    %v4154 = vld [vmem:[%s0 + $0x1d6] sm:$0xff]
    %v4155 = vld [vmem:[%s0 + $0x1de] sm:$0xff]
    %v4156 = vld [vmem:[%s0 + $0x1e6] sm:$0xff]
    %v4157 = vld [vmem:[%s0 + $0x1ee] sm:$0xff]
    %v4158 = vld [vmem:[%s0 + $0x1f6] sm:$0xff]
    %v4159 = vld [vmem:[%s0 + $0x1fe] sm:$0xff]
    %v4160 = vld [vmem:[%s0 + $0x206] sm:$0xff]
    %v4161 = vld [vmem:[%s0 + $0x20e] sm:$0xff]
    %v4162 = vld [vmem:[%s0 + $0x216] sm:$0xff]
    %v4163 = vld [vmem:[%s0 + $0x21e] sm:$0xff]
    %v4164 = vld [vmem:[%s0 + $0x226] sm:$0xff]
    %v4165 = vld [vmem:[%s0 + $0x22e] sm:$0xff]
    %v4166 = vld [vmem:[%s0 + $0x236] sm:$0xff]
    %v4167 = vld [vmem:[%s0 + $0x23e] sm:$0xff]
    %v4168 = vld [vmem:[%s0 + $0x246] sm:$0xff]
    %v4169 = vld [vmem:[%s0 + $0x24e] sm:$0xff]
    %v4170 = vld [vmem:[%s0 + $0x256] sm:$0xff]
    %v4171 = vld [vmem:[%s0 + $0x25e] sm:$0xff]
    %v4172 = vld [vmem:[%s0 + $0x266] sm:$0xff]
    %v4173 = vld [vmem:[%s0 + $0x26e] sm:$0xff]
    %v4174 = vld [vmem:[%s0 + $0x276] sm:$0xff]
    %v4175 = vld [vmem:[%s0 + $0x27e] sm:$0xff]
    %v4176 = vld [vmem:[%s0 + $0x286] sm:$0x3]
    %v4177 = vpack.c.bf16 %v4101, %v4100
    %v4178 = vpack.c.bf16 %v4103, %v4102
    %v4179 = vpack.c.bf16 %v4105, %v4104
    %v4180 = vpack.c.bf16 %v4107, %v4106
    %v4181 = vpack.c.bf16 %v4109, %v4108
    %v4182 = vpack.c.bf16 %v4111, %v4110
    %v4183 = vpack.c.bf16 %v4113, %v4112
    %v4184 = vpack.c.bf16 %v4115, %v4114
    %v4185 = vpack.c.bf16 %v4117, %v4116
    %v4186 = vpack.c.bf16 %v4119, %v4118
    %v4187 = vpack.c.bf16 %v4121, %v4120
    %v4188 = vpack.c.bf16 %v4123, %v4122
    %v4189 = vpack.c.bf16 %v4125, %v4124
    %v4190 = vpack.c.bf16 %v4127, %v4126
    %v4191 = vpack.c.bf16 %v4129, %v4128
    %v4192 = vpack.c.bf16 %v4131, %v4130
    %v4193 = vpack.c.bf16 %v4133, %v4132
    %v4194 = vpack.c.bf16 %v4135, %v4134
    %v4195 = vpack.c.bf16 %v4137, %v4136
    %v4196 = vpack.c.bf16 %v4139, %v4138
    %v4197 = vpack.c.bf16 %v4141, %v4140
    %v4198 = vpack.c.bf16 %v4143, %v4142
    %v4199 = vpack.c.bf16 %v4145, %v4144
    %v4200 = vpack.c.bf16 %v4147, %v4146
    %v4201 = vpack.c.bf16 %v4149, %v4148
    %v4202 = vpack.c.bf16 %v4151, %v4150
    %v4203 = vpack.c.bf16 %v4153, %v4152
    %v4204 = vpack.c.bf16 %v4155, %v4154
    %v4205 = vpack.c.bf16 %v4157, %v4156
    %v4206 = vpack.c.bf16 %v4159, %v4158
    %v4207 = vpack.c.bf16 %v4161, %v4160
    %v4208 = vpack.c.bf16 %v4163, %v4162
    %v4209 = vpack.c.bf16 %v4165, %v4164
    %v4210 = vpack.c.bf16 %v4167, %v4166
    %v4211 = vpack.c.bf16 %v4169, %v4168
    %v4212 = vpack.c.bf16 %v4171, %v4170
    %v4213 = vpack.c.bf16 %v4173, %v4172
    %v4214 = vpack.c.bf16 %v4175, %v4174
    %v4215 = vpack.c.bf16 %v4176, %v4176
    %v4216 = vld [vmem:[%s1 + $0xc] sm:$0x3]
    %v4218 = vsel %vm297, %v4177, 0
    %v4221 = vsel %vm297, %v4178, 0
    %v4224 = vsel %vm297, %v4179, 0
    %v4227 = vsel %vm297, %v4180, 0
    %v4230 = vsel %vm297, %v4181, 0
    %v4233 = vsel %vm297, %v4182, 0
    %v4236 = vsel %vm297, %v4183, 0
    %v4239 = vsel %vm297, %v4184, 0
    %v4242 = vsel %vm297, %v4185, 0
    %v4245 = vsel %vm297, %v4186, 0
    %v4248 = vsel %vm297, %v4187, 0
    %v4251 = vsel %vm297, %v4188, 0
    %v4254 = vsel %vm297, %v4189, 0
    %v4257 = vsel %vm297, %v4190, 0
    %v4260 = vsel %vm297, %v4191, 0
    %v4263 = vsel %vm297, %v4192, 0
    %v4266 = vsel %vm297, %v4193, 0
    %v4269 = vsel %vm297, %v4194, 0
    %v4272 = vsel %vm297, %v4195, 0
    %v4275 = vsel %vm297, %v4196, 0
    %v4278 = vsel %vm297, %v4197, 0
    %v4281 = vsel %vm297, %v4198, 0
    %v4284 = vsel %vm297, %v4199, 0
    %v4287 = vsel %vm297, %v4200, 0
    %v4290 = vsel %vm297, %v4201, 0
    %v4293 = vsel %vm297, %v4202, 0
    %v4296 = vsel %vm297, %v4203, 0
    %v4299 = vsel %vm297, %v4204, 0
    %v4302 = vsel %vm297, %v4205, 0
    %v4305 = vsel %vm297, %v4206, 0
    %v4308 = vsel %vm297, %v4207, 0
    %v4311 = vsel %vm297, %v4208, 0
    %v4314 = vsel %vm297, %v4209, 0
    %v4317 = vsel %vm297, %v4210, 0
    %v4320 = vsel %vm297, %v4211, 0
    %v4323 = vsel %vm297, %v4212, 0
    %v4326 = vsel %vm297, %v4213, 0
    %v4329 = vsel %vm297, %v4214, 0
    %v4332 = vsel %vm297, %v4215, 0
    %v4335 = vand.u32 %v4216, %v418
    %4337 = vmatpush.bf16.msra.mxu0 0
    %4338 = vmatpush.bf16.msra.mxu0 0
    %4339 = vmatpush.bf16.msra.mxu0 0
    %4340 = vmatpush.bf16.msra.mxu0 0
    %4341 = vmatpush.bf16.msra.mxu0 0
    %4342 = vmatpush.bf16.msra.mxu0 0
    %4343 = vmatpush.bf16.msra.mxu0 0
    %4344 = vmatpush.bf16.msra.mxu0 %v4335
    %4345 = vmatmul.bf16.gmra.mxu0 %v4218
    %v4346 = vpop.f32.mrf.mxu0
    %v4347 = vadd.f32 0.0, %v4346
    %v4348 = vpop.f32.mrf.mxu0
    %v4349 = vadd.f32 0.0, %v4348
    %4350 = vmatmul.bf16.gmra.mxu0 %v4221
    %v4351 = vpop.f32.mrf.mxu0
    %v4352 = vadd.f32 0.0, %v4351
    %v4353 = vpop.f32.mrf.mxu0
    %v4354 = vadd.f32 0.0, %v4353
    %4355 = vmatmul.bf16.gmra.mxu0 %v4224
    %v4356 = vpop.f32.mrf.mxu0
    %v4357 = vadd.f32 0.0, %v4356
    %v4358 = vpop.f32.mrf.mxu0
    %v4359 = vadd.f32 0.0, %v4358
    %4360 = vmatmul.bf16.gmra.mxu0 %v4227
    %v4361 = vpop.f32.mrf.mxu0
    %v4362 = vadd.f32 0.0, %v4361
    %v4363 = vpop.f32.mrf.mxu0
    %v4364 = vadd.f32 0.0, %v4363
    %4365 = vmatmul.bf16.gmra.mxu0 %v4230
    %v4366 = vpop.f32.mrf.mxu0
    %v4367 = vadd.f32 0.0, %v4366
    %v4368 = vpop.f32.mrf.mxu0
    %v4369 = vadd.f32 0.0, %v4368
    %4370 = vmatmul.bf16.gmra.mxu0 %v4233
    %v4371 = vpop.f32.mrf.mxu0
    %v4372 = vadd.f32 0.0, %v4371
    %v4373 = vpop.f32.mrf.mxu0
    %v4374 = vadd.f32 0.0, %v4373
    %4375 = vmatmul.bf16.gmra.mxu0 %v4236
    %v4376 = vpop.f32.mrf.mxu0
    %v4377 = vadd.f32 0.0, %v4376
    %v4378 = vpop.f32.mrf.mxu0
    %v4379 = vadd.f32 0.0, %v4378
    %4380 = vmatmul.bf16.gmra.mxu0 %v4239
    %v4381 = vpop.f32.mrf.mxu0
    %v4382 = vadd.f32 0.0, %v4381
    %v4383 = vpop.f32.mrf.mxu0
    %v4384 = vadd.f32 0.0, %v4383
    %4385 = vmatmul.bf16.gmra.mxu0 %v4242
    %v4386 = vpop.f32.mrf.mxu0
    %v4387 = vadd.f32 0.0, %v4386
    %v4388 = vpop.f32.mrf.mxu0
    %v4389 = vadd.f32 0.0, %v4388
    %4390 = vmatmul.bf16.gmra.mxu0 %v4245
    %v4391 = vpop.f32.mrf.mxu0
    %v4392 = vadd.f32 0.0, %v4391
    %v4393 = vpop.f32.mrf.mxu0
    %v4394 = vadd.f32 0.0, %v4393
    %4395 = vmatmul.bf16.gmra.mxu0 %v4248
    %v4396 = vpop.f32.mrf.mxu0
    %v4397 = vadd.f32 0.0, %v4396
    %v4398 = vpop.f32.mrf.mxu0
    %v4399 = vadd.f32 0.0, %v4398
    %4400 = vmatmul.bf16.gmra.mxu0 %v4251
    %v4401 = vpop.f32.mrf.mxu0
    %v4402 = vadd.f32 0.0, %v4401
    %v4403 = vpop.f32.mrf.mxu0
    %v4404 = vadd.f32 0.0, %v4403
    %4405 = vmatmul.bf16.gmra.mxu0 %v4254
    %v4406 = vpop.f32.mrf.mxu0
    %v4407 = vadd.f32 0.0, %v4406
    %v4408 = vpop.f32.mrf.mxu0
    %v4409 = vadd.f32 0.0, %v4408
    %4410 = vmatmul.bf16.gmra.mxu0 %v4257
    %v4411 = vpop.f32.mrf.mxu0
    %v4412 = vadd.f32 0.0, %v4411
    %v4413 = vpop.f32.mrf.mxu0
    %v4414 = vadd.f32 0.0, %v4413
    %4415 = vmatmul.bf16.gmra.mxu0 %v4260
    %v4416 = vpop.f32.mrf.mxu0
    %v4417 = vadd.f32 0.0, %v4416
    %v4418 = vpop.f32.mrf.mxu0
    %v4419 = vadd.f32 0.0, %v4418
    %4420 = vmatmul.bf16.gmra.mxu0 %v4263
    %v4421 = vpop.f32.mrf.mxu0
    %v4422 = vadd.f32 0.0, %v4421
    %v4423 = vpop.f32.mrf.mxu0
    %v4424 = vadd.f32 0.0, %v4423
    %4425 = vmatmul.bf16.gmra.mxu0 %v4266
    %v4426 = vpop.f32.mrf.mxu0
    %v4427 = vadd.f32 0.0, %v4426
    %v4428 = vpop.f32.mrf.mxu0
    %v4429 = vadd.f32 0.0, %v4428
    %4430 = vmatmul.bf16.gmra.mxu0 %v4269
    %v4431 = vpop.f32.mrf.mxu0
    %v4432 = vadd.f32 0.0, %v4431
    %v4433 = vpop.f32.mrf.mxu0
    %v4434 = vadd.f32 0.0, %v4433
    %4435 = vmatmul.bf16.gmra.mxu0 %v4272
    %v4436 = vpop.f32.mrf.mxu0
    %v4437 = vadd.f32 0.0, %v4436
    %v4438 = vpop.f32.mrf.mxu0
    %v4439 = vadd.f32 0.0, %v4438
    %4440 = vmatmul.bf16.gmra.mxu0 %v4275
    %v4441 = vpop.f32.mrf.mxu0
    %v4442 = vadd.f32 0.0, %v4441
    %v4443 = vpop.f32.mrf.mxu0
    %v4444 = vadd.f32 0.0, %v4443
    %4445 = vmatmul.bf16.gmra.mxu0 %v4278
    %v4446 = vpop.f32.mrf.mxu0
    %v4447 = vadd.f32 0.0, %v4446
    %v4448 = vpop.f32.mrf.mxu0
    %v4449 = vadd.f32 0.0, %v4448
    %4450 = vmatmul.bf16.gmra.mxu0 %v4281
    %v4451 = vpop.f32.mrf.mxu0
    %v4452 = vadd.f32 0.0, %v4451
    %v4453 = vpop.f32.mrf.mxu0
    %v4454 = vadd.f32 0.0, %v4453
    %4455 = vmatmul.bf16.gmra.mxu0 %v4284
    %v4456 = vpop.f32.mrf.mxu0
    %v4457 = vadd.f32 0.0, %v4456
    %v4458 = vpop.f32.mrf.mxu0
    %v4459 = vadd.f32 0.0, %v4458
    %4460 = vmatmul.bf16.gmra.mxu0 %v4287
    %v4461 = vpop.f32.mrf.mxu0
    %v4462 = vadd.f32 0.0, %v4461
    %v4463 = vpop.f32.mrf.mxu0
    %v4464 = vadd.f32 0.0, %v4463
    %4465 = vmatmul.bf16.gmra.mxu0 %v4290
    %v4466 = vpop.f32.mrf.mxu0
    %v4467 = vadd.f32 0.0, %v4466
    %v4468 = vpop.f32.mrf.mxu0
    %v4469 = vadd.f32 0.0, %v4468
    %4470 = vmatmul.bf16.gmra.mxu0 %v4293
    %v4471 = vpop.f32.mrf.mxu0
    %v4472 = vadd.f32 0.0, %v4471
    %v4473 = vpop.f32.mrf.mxu0
    %v4474 = vadd.f32 0.0, %v4473
    %4475 = vmatmul.bf16.gmra.mxu0 %v4296
    %v4476 = vpop.f32.mrf.mxu0
    %v4477 = vadd.f32 0.0, %v4476
    %v4478 = vpop.f32.mrf.mxu0
    %v4479 = vadd.f32 0.0, %v4478
    %4480 = vmatmul.bf16.gmra.mxu0 %v4299
    %v4481 = vpop.f32.mrf.mxu0
    %v4482 = vadd.f32 0.0, %v4481
    %v4483 = vpop.f32.mrf.mxu0
    %v4484 = vadd.f32 0.0, %v4483
    %4485 = vmatmul.bf16.gmra.mxu0 %v4302
    %v4486 = vpop.f32.mrf.mxu0
    %v4487 = vadd.f32 0.0, %v4486
    %v4488 = vpop.f32.mrf.mxu0
    %v4489 = vadd.f32 0.0, %v4488
    %4490 = vmatmul.bf16.gmra.mxu0 %v4305
    %v4491 = vpop.f32.mrf.mxu0
    %v4492 = vadd.f32 0.0, %v4491
    %v4493 = vpop.f32.mrf.mxu0
    %v4494 = vadd.f32 0.0, %v4493
    %4495 = vmatmul.bf16.gmra.mxu0 %v4308
    %v4496 = vpop.f32.mrf.mxu0
    %v4497 = vadd.f32 0.0, %v4496
    %v4498 = vpop.f32.mrf.mxu0
    %v4499 = vadd.f32 0.0, %v4498
    %4500 = vmatmul.bf16.gmra.mxu0 %v4311
    %v4501 = vpop.f32.mrf.mxu0
    %v4502 = vadd.f32 0.0, %v4501
    %v4503 = vpop.f32.mrf.mxu0
    %v4504 = vadd.f32 0.0, %v4503
    %4505 = vmatmul.bf16.gmra.mxu0 %v4314
    %v4506 = vpop.f32.mrf.mxu0
    %v4507 = vadd.f32 0.0, %v4506
    %v4508 = vpop.f32.mrf.mxu0
    %v4509 = vadd.f32 0.0, %v4508
    %4510 = vmatmul.bf16.gmra.mxu0 %v4317
    %v4511 = vpop.f32.mrf.mxu0
    %v4512 = vadd.f32 0.0, %v4511
    %v4513 = vpop.f32.mrf.mxu0
    %v4514 = vadd.f32 0.0, %v4513
    %4515 = vmatmul.bf16.gmra.mxu0 %v4320
    %v4516 = vpop.f32.mrf.mxu0
    %v4517 = vadd.f32 0.0, %v4516
    %v4518 = vpop.f32.mrf.mxu0
    %v4519 = vadd.f32 0.0, %v4518
    %4520 = vmatmul.bf16.gmra.mxu0 %v4323
    %v4521 = vpop.f32.mrf.mxu0
    %v4522 = vadd.f32 0.0, %v4521
    %v4523 = vpop.f32.mrf.mxu0
    %v4524 = vadd.f32 0.0, %v4523
    %4525 = vmatmul.bf16.gmra.mxu0 %v4326
    %v4526 = vpop.f32.mrf.mxu0
    %v4527 = vadd.f32 0.0, %v4526
    %v4528 = vpop.f32.mrf.mxu0
    %v4529 = vadd.f32 0.0, %v4528
    %4530 = vmatmul.bf16.gmra.mxu0 %v4329
    %v4531 = vpop.f32.mrf.mxu0
    %v4532 = vadd.f32 0.0, %v4531
    %v4533 = vpop.f32.mrf.mxu0
    %v4534 = vadd.f32 0.0, %v4533
    %4535 = vmatmul.bf16.gmra.mxu0 %v4332
    %v4536 = vpop.f32.mrf.mxu0
    %v4537 = vadd.f32 0.0, %v4536
    %v4538 = vpop.f32.mrf.mxu0
    %4539 = vdwg.mxu0
    %v4540 = vadd.f32 %v4023, %v4347
    %v4541 = vadd.f32 %v4024, %v4349
    %v4542 = vadd.f32 %v4025, %v4352
    %v4543 = vadd.f32 %v4026, %v4354
    %v4544 = vadd.f32 %v4027, %v4357
    %v4545 = vadd.f32 %v4028, %v4359
    %v4546 = vadd.f32 %v4029, %v4362
    %v4547 = vadd.f32 %v4030, %v4364
    %v4548 = vadd.f32 %v4031, %v4367
    %v4549 = vadd.f32 %v4032, %v4369
    %v4550 = vadd.f32 %v4033, %v4372
    %v4551 = vadd.f32 %v4034, %v4374
    %v4552 = vadd.f32 %v4035, %v4377
    %v4553 = vadd.f32 %v4036, %v4379
    %v4554 = vadd.f32 %v4037, %v4382
    %v4555 = vadd.f32 %v4038, %v4384
    %v4556 = vadd.f32 %v4039, %v4387
    %v4557 = vadd.f32 %v4040, %v4389
    %v4558 = vadd.f32 %v4041, %v4392
    %v4559 = vadd.f32 %v4042, %v4394
    %v4560 = vadd.f32 %v4043, %v4397
    %v4561 = vadd.f32 %v4044, %v4399
    %v4562 = vadd.f32 %v4045, %v4402
    %v4563 = vadd.f32 %v4046, %v4404
    %v4564 = vadd.f32 %v4047, %v4407
    %v4565 = vadd.f32 %v4048, %v4409
    %v4566 = vadd.f32 %v4049, %v4412
    %v4567 = vadd.f32 %v4050, %v4414
    %v4568 = vadd.f32 %v4051, %v4417
    %v4569 = vadd.f32 %v4052, %v4419
    %v4570 = vadd.f32 %v4053, %v4422
    %v4571 = vadd.f32 %v4054, %v4424
    %v4572 = vadd.f32 %v4055, %v4427
    %v4573 = vadd.f32 %v4056, %v4429
    %v4574 = vadd.f32 %v4057, %v4432
    %v4575 = vadd.f32 %v4058, %v4434
    %v4576 = vadd.f32 %v4059, %v4437
    %v4577 = vadd.f32 %v4060, %v4439
    %v4578 = vadd.f32 %v4061, %v4442
    %v4579 = vadd.f32 %v4062, %v4444
    %v4580 = vadd.f32 %v4063, %v4447
    %v4581 = vadd.f32 %v4064, %v4449
    %v4582 = vadd.f32 %v4065, %v4452
    %v4583 = vadd.f32 %v4066, %v4454
    %v4584 = vadd.f32 %v4067, %v4457
    %v4585 = vadd.f32 %v4068, %v4459
    %v4586 = vadd.f32 %v4069, %v4462
    %v4587 = vadd.f32 %v4070, %v4464
    %v4588 = vadd.f32 %v4071, %v4467
    %v4589 = vadd.f32 %v4072, %v4469
    %v4590 = vadd.f32 %v4073, %v4472
    %v4591 = vadd.f32 %v4074, %v4474
    %v4592 = vadd.f32 %v4075, %v4477
    %v4593 = vadd.f32 %v4076, %v4479
    %v4594 = vadd.f32 %v4077, %v4482
    %v4595 = vadd.f32 %v4078, %v4484
    %v4596 = vadd.f32 %v4079, %v4487
    %v4597 = vadd.f32 %v4080, %v4489
    %v4598 = vadd.f32 %v4081, %v4492
    %v4599 = vadd.f32 %v4082, %v4494
    %v4600 = vadd.f32 %v4083, %v4497
    %v4601 = vadd.f32 %v4084, %v4499
    %v4602 = vadd.f32 %v4085, %v4502
    %v4603 = vadd.f32 %v4086, %v4504
    %v4604 = vadd.f32 %v4087, %v4507
    %v4605 = vadd.f32 %v4088, %v4509
    %v4606 = vadd.f32 %v4089, %v4512
    %v4607 = vadd.f32 %v4090, %v4514
    %v4608 = vadd.f32 %v4091, %v4517
    %v4609 = vadd.f32 %v4092, %v4519
    %v4610 = vadd.f32 %v4093, %v4522
    %v4611 = vadd.f32 %v4094, %v4524
    %v4612 = vadd.f32 %v4095, %v4527
    %v4613 = vadd.f32 %v4096, %v4529
    %v4614 = vadd.f32 %v4097, %v4532
    %v4615 = vadd.f32 %v4098, %v4534
    %v4616 = vadd.f32 %v4099, %v4537
    %vm4617 = vcmask 130048
    %4618 = vst.msk [vmem:[#allocation2] sm:$0xff] %vm4617, %v4540
    %4619 = vst.msk [vmem:[#allocation2 + $0x8] sm:$0xff] %vm4617, %v4541
    %4620 = vst.msk [vmem:[#allocation2 + $0x10] sm:$0xff] %vm4617, %v4542
    %4621 = vst.msk [vmem:[#allocation2 + $0x18] sm:$0xff] %vm4617, %v4543
    %4622 = vst.msk [vmem:[#allocation2 + $0x20] sm:$0xff] %vm4617, %v4544
    %4623 = vst.msk [vmem:[#allocation2 + $0x28] sm:$0xff] %vm4617, %v4545
    %4624 = vst.msk [vmem:[#allocation2 + $0x30] sm:$0xff] %vm4617, %v4546
    %4625 = vst.msk [vmem:[#allocation2 + $0x38] sm:$0xff] %vm4617, %v4547
    %4626 = vst.msk [vmem:[#allocation2 + $0x40] sm:$0xff] %vm4617, %v4548
    %4627 = vst.msk [vmem:[#allocation2 + $0x48] sm:$0xff] %vm4617, %v4549
    %4628 = vst.msk [vmem:[#allocation2 + $0x50] sm:$0xff] %vm4617, %v4550
    %4629 = vst.msk [vmem:[#allocation2 + $0x58] sm:$0xff] %vm4617, %v4551
    %4630 = vst.msk [vmem:[#allocation2 + $0x60] sm:$0xff] %vm4617, %v4552
    %4631 = vst.msk [vmem:[#allocation2 + $0x68] sm:$0xff] %vm4617, %v4553
    %4632 = vst.msk [vmem:[#allocation2 + $0x70] sm:$0xff] %vm4617, %v4554
    %4633 = vst.msk [vmem:[#allocation2 + $0x78] sm:$0xff] %vm4617, %v4555
    %4634 = vst.msk [vmem:[#allocation2 + $0x80] sm:$0xff] %vm4617, %v4556
    %4635 = vst.msk [vmem:[#allocation2 + $0x88] sm:$0xff] %vm4617, %v4557
    %4636 = vst.msk [vmem:[#allocation2 + $0x90] sm:$0xff] %vm4617, %v4558
    %4637 = vst.msk [vmem:[#allocation2 + $0x98] sm:$0xff] %vm4617, %v4559
    %4638 = vst.msk [vmem:[#allocation2 + $0xa0] sm:$0xff] %vm4617, %v4560
    %4639 = vst.msk [vmem:[#allocation2 + $0xa8] sm:$0xff] %vm4617, %v4561
    %4640 = vst.msk [vmem:[#allocation2 + $0xb0] sm:$0xff] %vm4617, %v4562
    %4641 = vst.msk [vmem:[#allocation2 + $0xb8] sm:$0xff] %vm4617, %v4563
    %4642 = vst.msk [vmem:[#allocation2 + $0xc0] sm:$0xff] %vm4617, %v4564
    %4643 = vst.msk [vmem:[#allocation2 + $0xc8] sm:$0xff] %vm4617, %v4565
    %4644 = vst.msk [vmem:[#allocation2 + $0xd0] sm:$0xff] %vm4617, %v4566
    %4645 = vst.msk [vmem:[#allocation2 + $0xd8] sm:$0xff] %vm4617, %v4567
    %4646 = vst.msk [vmem:[#allocation2 + $0xe0] sm:$0xff] %vm4617, %v4568
    %4647 = vst.msk [vmem:[#allocation2 + $0xe8] sm:$0xff] %vm4617, %v4569
    %4648 = vst.msk [vmem:[#allocation2 + $0xf0] sm:$0xff] %vm4617, %v4570
    %4649 = vst.msk [vmem:[#allocation2 + $0xf8] sm:$0xff] %vm4617, %v4571
    %4650 = vst.msk [vmem:[#allocation2 + $0x100] sm:$0xff] %vm4617, %v4572
    %4651 = vst.msk [vmem:[#allocation2 + $0x108] sm:$0xff] %vm4617, %v4573
    %4652 = vst.msk [vmem:[#allocation2 + $0x110] sm:$0xff] %vm4617, %v4574
    %4653 = vst.msk [vmem:[#allocation2 + $0x118] sm:$0xff] %vm4617, %v4575
    %4654 = vst.msk [vmem:[#allocation2 + $0x120] sm:$0xff] %vm4617, %v4576
    %4655 = vst.msk [vmem:[#allocation2 + $0x128] sm:$0xff] %vm4617, %v4577
    %4656 = vst.msk [vmem:[#allocation2 + $0x130] sm:$0xff] %vm4617, %v4578
    %4657 = vst.msk [vmem:[#allocation2 + $0x138] sm:$0xff] %vm4617, %v4579
    %4658 = vst.msk [vmem:[#allocation2 + $0x140] sm:$0xff] %vm4617, %v4580
    %4659 = vst.msk [vmem:[#allocation2 + $0x148] sm:$0xff] %vm4617, %v4581
    %4660 = vst.msk [vmem:[#allocation2 + $0x150] sm:$0xff] %vm4617, %v4582
    %4661 = vst.msk [vmem:[#allocation2 + $0x158] sm:$0xff] %vm4617, %v4583
    %4662 = vst.msk [vmem:[#allocation2 + $0x160] sm:$0xff] %vm4617, %v4584
    %4663 = vst.msk [vmem:[#allocation2 + $0x168] sm:$0xff] %vm4617, %v4585
    %4664 = vst.msk [vmem:[#allocation2 + $0x170] sm:$0xff] %vm4617, %v4586
    %4665 = vst.msk [vmem:[#allocation2 + $0x178] sm:$0xff] %vm4617, %v4587
    %4666 = vst.msk [vmem:[#allocation2 + $0x180] sm:$0xff] %vm4617, %v4588
    %4667 = vst.msk [vmem:[#allocation2 + $0x188] sm:$0xff] %vm4617, %v4589
    %4668 = vst.msk [vmem:[#allocation2 + $0x190] sm:$0xff] %vm4617, %v4590
    %4669 = vst.msk [vmem:[#allocation2 + $0x198] sm:$0xff] %vm4617, %v4591
    %4670 = vst.msk [vmem:[#allocation2 + $0x1a0] sm:$0xff] %vm4617, %v4592
    %4671 = vst.msk [vmem:[#allocation2 + $0x1a8] sm:$0xff] %vm4617, %v4593
    %4672 = vst.msk [vmem:[#allocation2 + $0x1b0] sm:$0xff] %vm4617, %v4594
    %4673 = vst.msk [vmem:[#allocation2 + $0x1b8] sm:$0xff] %vm4617, %v4595
    %4674 = vst.msk [vmem:[#allocation2 + $0x1c0] sm:$0xff] %vm4617, %v4596
    %4675 = vst.msk [vmem:[#allocation2 + $0x1c8] sm:$0xff] %vm4617, %v4597
    %4676 = vst.msk [vmem:[#allocation2 + $0x1d0] sm:$0xff] %vm4617, %v4598
    %4677 = vst.msk [vmem:[#allocation2 + $0x1d8] sm:$0xff] %vm4617, %v4599
    %4678 = vst.msk [vmem:[#allocation2 + $0x1e0] sm:$0xff] %vm4617, %v4600
    %4679 = vst.msk [vmem:[#allocation2 + $0x1e8] sm:$0xff] %vm4617, %v4601
    %4680 = vst.msk [vmem:[#allocation2 + $0x1f0] sm:$0xff] %vm4617, %v4602
    %4681 = vst.msk [vmem:[#allocation2 + $0x1f8] sm:$0xff] %vm4617, %v4603
    %4682 = vst.msk [vmem:[#allocation2 + $0x200] sm:$0xff] %vm4617, %v4604
    %4683 = vst.msk [vmem:[#allocation2 + $0x208] sm:$0xff] %vm4617, %v4605
    %4684 = vst.msk [vmem:[#allocation2 + $0x210] sm:$0xff] %vm4617, %v4606
    %4685 = vst.msk [vmem:[#allocation2 + $0x218] sm:$0xff] %vm4617, %v4607
    %4686 = vst.msk [vmem:[#allocation2 + $0x220] sm:$0xff] %vm4617, %v4608
    %4687 = vst.msk [vmem:[#allocation2 + $0x228] sm:$0xff] %vm4617, %v4609
    %4688 = vst.msk [vmem:[#allocation2 + $0x230] sm:$0xff] %vm4617, %v4610
    %4689 = vst.msk [vmem:[#allocation2 + $0x238] sm:$0xff] %vm4617, %v4611
    %4690 = vst.msk [vmem:[#allocation2 + $0x240] sm:$0xff] %vm4617, %v4612
    %4691 = vst.msk [vmem:[#allocation2 + $0x248] sm:$0xff] %vm4617, %v4613
    %4692 = vst.msk [vmem:[#allocation2 + $0x250] sm:$0xff] %vm4617, %v4614
    %4693 = vst.msk [vmem:[#allocation2 + $0x258] sm:$0xff] %vm4617, %v4615
    %vm4694 = vcmask 123904
    %4695 = vst.msk [vmem:[#allocation2 + $0x260] sm:$0x3] %vm4694, %v4616
    %v4696 = vld [vmem:[#allocation2] sm:$0xff]
    %v4697 = vld [vmem:[#allocation2 + $0x8] sm:$0xff]
    %v4698 = vld [vmem:[#allocation2 + $0x10] sm:$0xff]
    %v4699 = vld [vmem:[#allocation2 + $0x18] sm:$0xff]
    %v4700 = vld [vmem:[#allocation2 + $0x20] sm:$0xff]
    %v4701 = vld [vmem:[#allocation2 + $0x28] sm:$0xff]
    %v4702 = vld [vmem:[#allocation2 + $0x30] sm:$0xff]
    %v4703 = vld [vmem:[#allocation2 + $0x38] sm:$0xff]
    %v4704 = vld [vmem:[#allocation2 + $0x40] sm:$0xff]
    %v4705 = vld [vmem:[#allocation2 + $0x48] sm:$0xff]
    %v4706 = vld [vmem:[#allocation2 + $0x50] sm:$0xff]
    %v4707 = vld [vmem:[#allocation2 + $0x58] sm:$0xff]
    %v4708 = vld [vmem:[#allocation2 + $0x60] sm:$0xff]
    %v4709 = vld [vmem:[#allocation2 + $0x68] sm:$0xff]
    %v4710 = vld [vmem:[#allocation2 + $0x70] sm:$0xff]
    %v4711 = vld [vmem:[#allocation2 + $0x78] sm:$0xff]
    %v4712 = vld [vmem:[#allocation2 + $0x80] sm:$0xff]
    %v4713 = vld [vmem:[#allocation2 + $0x88] sm:$0xff]
    %v4714 = vld [vmem:[#allocation2 + $0x90] sm:$0xff]
    %v4715 = vld [vmem:[#allocation2 + $0x98] sm:$0xff]
    %v4716 = vld [vmem:[#allocation2 + $0xa0] sm:$0xff]
    %v4717 = vld [vmem:[#allocation2 + $0xa8] sm:$0xff]
    %v4718 = vld [vmem:[#allocation2 + $0xb0] sm:$0xff]
    %v4719 = vld [vmem:[#allocation2 + $0xb8] sm:$0xff]
    %v4720 = vld [vmem:[#allocation2 + $0xc0] sm:$0xff]
    %v4721 = vld [vmem:[#allocation2 + $0xc8] sm:$0xff]
    %v4722 = vld [vmem:[#allocation2 + $0xd0] sm:$0xff]
    %v4723 = vld [vmem:[#allocation2 + $0xd8] sm:$0xff]
    %v4724 = vld [vmem:[#allocation2 + $0xe0] sm:$0xff]
    %v4725 = vld [vmem:[#allocation2 + $0xe8] sm:$0xff]
    %v4726 = vld [vmem:[#allocation2 + $0xf0] sm:$0xff]
    %v4727 = vld [vmem:[#allocation2 + $0xf8] sm:$0xff]
    %v4728 = vld [vmem:[#allocation2 + $0x100] sm:$0xff]
    %v4729 = vld [vmem:[#allocation2 + $0x108] sm:$0xff]
    %v4730 = vld [vmem:[#allocation2 + $0x110] sm:$0xff]
    %v4731 = vld [vmem:[#allocation2 + $0x118] sm:$0xff]
    %v4732 = vld [vmem:[#allocation2 + $0x120] sm:$0xff]
    %v4733 = vld [vmem:[#allocation2 + $0x128] sm:$0xff]
    %v4734 = vld [vmem:[#allocation2 + $0x130] sm:$0xff]
    %v4735 = vld [vmem:[#allocation2 + $0x138] sm:$0xff]
    %v4736 = vld [vmem:[#allocation2 + $0x140] sm:$0xff]
    %v4737 = vld [vmem:[#allocation2 + $0x148] sm:$0xff]
    %v4738 = vld [vmem:[#allocation2 + $0x150] sm:$0xff]
    %v4739 = vld [vmem:[#allocation2 + $0x158] sm:$0xff]
    %v4740 = vld [vmem:[#allocation2 + $0x160] sm:$0xff]
    %v4741 = vld [vmem:[#allocation2 + $0x168] sm:$0xff]
    %v4742 = vld [vmem:[#allocation2 + $0x170] sm:$0xff]
    %v4743 = vld [vmem:[#allocation2 + $0x178] sm:$0xff]
    %v4744 = vld [vmem:[#allocation2 + $0x180] sm:$0xff]
    %v4745 = vld [vmem:[#allocation2 + $0x188] sm:$0xff]
    %v4746 = vld [vmem:[#allocation2 + $0x190] sm:$0xff]
    %v4747 = vld [vmem:[#allocation2 + $0x198] sm:$0xff]
    %v4748 = vld [vmem:[#allocation2 + $0x1a0] sm:$0xff]
    %v4749 = vld [vmem:[#allocation2 + $0x1a8] sm:$0xff]
    %v4750 = vld [vmem:[#allocation2 + $0x1b0] sm:$0xff]
    %v4751 = vld [vmem:[#allocation2 + $0x1b8] sm:$0xff]
    %v4752 = vld [vmem:[#allocation2 + $0x1c0] sm:$0xff]
    %v4753 = vld [vmem:[#allocation2 + $0x1c8] sm:$0xff]
    %v4754 = vld [vmem:[#allocation2 + $0x1d0] sm:$0xff]
    %v4755 = vld [vmem:[#allocation2 + $0x1d8] sm:$0xff]
    %v4756 = vld [vmem:[#allocation2 + $0x1e0] sm:$0xff]
    %v4757 = vld [vmem:[#allocation2 + $0x1e8] sm:$0xff]
    %v4758 = vld [vmem:[#allocation2 + $0x1f0] sm:$0xff]
    %v4759 = vld [vmem:[#allocation2 + $0x1f8] sm:$0xff]
    %v4760 = vld [vmem:[#allocation2 + $0x200] sm:$0xff]
    %v4761 = vld [vmem:[#allocation2 + $0x208] sm:$0xff]
    %v4762 = vld [vmem:[#allocation2 + $0x210] sm:$0xff]
    %v4763 = vld [vmem:[#allocation2 + $0x218] sm:$0xff]
    %v4764 = vld [vmem:[#allocation2 + $0x220] sm:$0xff]
    %v4765 = vld [vmem:[#allocation2 + $0x228] sm:$0xff]
    %v4766 = vld [vmem:[#allocation2 + $0x230] sm:$0xff]
    %v4767 = vld [vmem:[#allocation2 + $0x238] sm:$0xff]
    %v4768 = vld [vmem:[#allocation2 + $0x240] sm:$0xff]
    %v4769 = vld [vmem:[#allocation2 + $0x248] sm:$0x7f]
    %v4770 = vld [vmem:[#allocation2 + $0x1] sm:$0xff]
    %v4771 = vld [vmem:[#allocation2 + $0x9] sm:$0xff]
    %v4772 = vld [vmem:[#allocation2 + $0x11] sm:$0xff]
    %v4773 = vld [vmem:[#allocation2 + $0x19] sm:$0xff]
    %v4774 = vld [vmem:[#allocation2 + $0x21] sm:$0xff]
    %v4775 = vld [vmem:[#allocation2 + $0x29] sm:$0xff]
    %v4776 = vld [vmem:[#allocation2 + $0x31] sm:$0xff]
    %v4777 = vld [vmem:[#allocation2 + $0x39] sm:$0xff]
    %v4778 = vld [vmem:[#allocation2 + $0x41] sm:$0xff]
    %v4779 = vld [vmem:[#allocation2 + $0x49] sm:$0xff]
    %v4780 = vld [vmem:[#allocation2 + $0x51] sm:$0xff]
    %v4781 = vld [vmem:[#allocation2 + $0x59] sm:$0xff]
    %v4782 = vld [vmem:[#allocation2 + $0x61] sm:$0xff]
    %v4783 = vld [vmem:[#allocation2 + $0x69] sm:$0xff]
    %v4784 = vld [vmem:[#allocation2 + $0x71] sm:$0xff]
    %v4785 = vld [vmem:[#allocation2 + $0x79] sm:$0xff]
    %v4786 = vld [vmem:[#allocation2 + $0x81] sm:$0xff]
    %v4787 = vld [vmem:[#allocation2 + $0x89] sm:$0xff]
    %v4788 = vld [vmem:[#allocation2 + $0x91] sm:$0xff]
    %v4789 = vld [vmem:[#allocation2 + $0x99] sm:$0xff]
    %v4790 = vld [vmem:[#allocation2 + $0xa1] sm:$0xff]
    %v4791 = vld [vmem:[#allocation2 + $0xa9] sm:$0xff]
    %v4792 = vld [vmem:[#allocation2 + $0xb1] sm:$0xff]
    %v4793 = vld [vmem:[#allocation2 + $0xb9] sm:$0xff]
    %v4794 = vld [vmem:[#allocation2 + $0xc1] sm:$0xff]
    %v4795 = vld [vmem:[#allocation2 + $0xc9] sm:$0xff]
    %v4796 = vld [vmem:[#allocation2 + $0xd1] sm:$0xff]
    %v4797 = vld [vmem:[#allocation2 + $0xd9] sm:$0xff]
    %v4798 = vld [vmem:[#allocation2 + $0xe1] sm:$0xff]
    %v4799 = vld [vmem:[#allocation2 + $0xe9] sm:$0xff]
    %v4800 = vld [vmem:[#allocation2 + $0xf1] sm:$0xff]
    %v4801 = vld [vmem:[#allocation2 + $0xf9] sm:$0xff]
    %v4802 = vld [vmem:[#allocation2 + $0x101] sm:$0xff]
    %v4803 = vld [vmem:[#allocation2 + $0x109] sm:$0xff]
    %v4804 = vld [vmem:[#allocation2 + $0x111] sm:$0xff]
    %v4805 = vld [vmem:[#allocation2 + $0x119] sm:$0xff]
    %v4806 = vld [vmem:[#allocation2 + $0x121] sm:$0xff]
    %v4807 = vld [vmem:[#allocation2 + $0x129] sm:$0xff]
    %v4808 = vld [vmem:[#allocation2 + $0x131] sm:$0xff]
    %v4809 = vld [vmem:[#allocation2 + $0x139] sm:$0xff]
    %v4810 = vld [vmem:[#allocation2 + $0x141] sm:$0xff]
    %v4811 = vld [vmem:[#allocation2 + $0x149] sm:$0xff]
    %v4812 = vld [vmem:[#allocation2 + $0x151] sm:$0xff]
    %v4813 = vld [vmem:[#allocation2 + $0x159] sm:$0xff]
    %v4814 = vld [vmem:[#allocation2 + $0x161] sm:$0xff]
    %v4815 = vld [vmem:[#allocation2 + $0x169] sm:$0xff]
    %v4816 = vld [vmem:[#allocation2 + $0x171] sm:$0xff]
    %v4817 = vld [vmem:[#allocation2 + $0x179] sm:$0xff]
    %v4818 = vld [vmem:[#allocation2 + $0x181] sm:$0xff]
    %v4819 = vld [vmem:[#allocation2 + $0x189] sm:$0xff]
    %v4820 = vld [vmem:[#allocation2 + $0x191] sm:$0xff]
    %v4821 = vld [vmem:[#allocation2 + $0x199] sm:$0xff]
    %v4822 = vld [vmem:[#allocation2 + $0x1a1] sm:$0xff]
    %v4823 = vld [vmem:[#allocation2 + $0x1a9] sm:$0xff]
    %v4824 = vld [vmem:[#allocation2 + $0x1b1] sm:$0xff]
    %v4825 = vld [vmem:[#allocation2 + $0x1b9] sm:$0xff]
    %v4826 = vld [vmem:[#allocation2 + $0x1c1] sm:$0xff]
    %v4827 = vld [vmem:[#allocation2 + $0x1c9] sm:$0xff]
    %v4828 = vld [vmem:[#allocation2 + $0x1d1] sm:$0xff]
    %v4829 = vld [vmem:[#allocation2 + $0x1d9] sm:$0xff]
    %v4830 = vld [vmem:[#allocation2 + $0x1e1] sm:$0xff]
    %v4831 = vld [vmem:[#allocation2 + $0x1e9] sm:$0xff]
    %v4832 = vld [vmem:[#allocation2 + $0x1f1] sm:$0xff]
    %v4833 = vld [vmem:[#allocation2 + $0x1f9] sm:$0xff]
    %v4834 = vld [vmem:[#allocation2 + $0x201] sm:$0xff]
    %v4835 = vld [vmem:[#allocation2 + $0x209] sm:$0xff]
    %v4836 = vld [vmem:[#allocation2 + $0x211] sm:$0xff]
    %v4837 = vld [vmem:[#allocation2 + $0x219] sm:$0xff]
    %v4838 = vld [vmem:[#allocation2 + $0x221] sm:$0xff]
    %v4839 = vld [vmem:[#allocation2 + $0x229] sm:$0xff]
    %v4840 = vld [vmem:[#allocation2 + $0x231] sm:$0xff]
    %v4841 = vld [vmem:[#allocation2 + $0x239] sm:$0xff]
    %v4842 = vld [vmem:[#allocation2 + $0x241] sm:$0xff]
    %v4843 = vld [vmem:[#allocation2 + $0x249] sm:$0x7f]
    %v4844 = vld [vmem:[#allocation2 + $0x12] sm:$0xff]
    %v4845 = vld [vmem:[#allocation2 + $0x1a] sm:$0xff]
    %v4846 = vld [vmem:[#allocation2 + $0x22] sm:$0xff]
    %v4847 = vld [vmem:[#allocation2 + $0x2a] sm:$0xff]
    %v4848 = vld [vmem:[#allocation2 + $0x32] sm:$0xff]
    %v4849 = vld [vmem:[#allocation2 + $0x3a] sm:$0xff]
    %v4850 = vld [vmem:[#allocation2 + $0x42] sm:$0xff]
    %v4851 = vld [vmem:[#allocation2 + $0x4a] sm:$0xff]
    %v4852 = vld [vmem:[#allocation2 + $0x52] sm:$0xff]
    %v4853 = vld [vmem:[#allocation2 + $0x5a] sm:$0xff]
    %v4854 = vld [vmem:[#allocation2 + $0x62] sm:$0xff]
    %v4855 = vld [vmem:[#allocation2 + $0x6a] sm:$0xff]
    %v4856 = vld [vmem:[#allocation2 + $0x72] sm:$0xff]
    %v4857 = vld [vmem:[#allocation2 + $0x7a] sm:$0xff]
    %v4858 = vld [vmem:[#allocation2 + $0x82] sm:$0xff]
    %v4859 = vld [vmem:[#allocation2 + $0x8a] sm:$0xff]
    %v4860 = vld [vmem:[#allocation2 + $0x92] sm:$0xff]
    %v4861 = vld [vmem:[#allocation2 + $0x9a] sm:$0xff]
    %v4862 = vld [vmem:[#allocation2 + $0xa2] sm:$0xff]
    %v4863 = vld [vmem:[#allocation2 + $0xaa] sm:$0xff]
    %v4864 = vld [vmem:[#allocation2 + $0xb2] sm:$0xff]
    %v4865 = vld [vmem:[#allocation2 + $0xba] sm:$0xff]
    %v4866 = vld [vmem:[#allocation2 + $0xc2] sm:$0xff]
    %v4867 = vld [vmem:[#allocation2 + $0xca] sm:$0xff]
    %v4868 = vld [vmem:[#allocation2 + $0xd2] sm:$0xff]
    %v4869 = vld [vmem:[#allocation2 + $0xda] sm:$0xff]
    %v4870 = vld [vmem:[#allocation2 + $0xe2] sm:$0xff]
    %v4871 = vld [vmem:[#allocation2 + $0xea] sm:$0xff]
    %v4872 = vld [vmem:[#allocation2 + $0xf2] sm:$0xff]
    %v4873 = vld [vmem:[#allocation2 + $0xfa] sm:$0xff]
    %v4874 = vld [vmem:[#allocation2 + $0x102] sm:$0xff]
    %v4875 = vld [vmem:[#allocation2 + $0x10a] sm:$0xff]
    %v4876 = vld [vmem:[#allocation2 + $0x112] sm:$0xff]
    %v4877 = vld [vmem:[#allocation2 + $0x11a] sm:$0xff]
    %v4878 = vld [vmem:[#allocation2 + $0x122] sm:$0xff]
    %v4879 = vld [vmem:[#allocation2 + $0x12a] sm:$0xff]
    %v4880 = vld [vmem:[#allocation2 + $0x132] sm:$0xff]
    %v4881 = vld [vmem:[#allocation2 + $0x13a] sm:$0xff]
    %v4882 = vld [vmem:[#allocation2 + $0x142] sm:$0xff]
    %v4883 = vld [vmem:[#allocation2 + $0x14a] sm:$0xff]
    %v4884 = vld [vmem:[#allocation2 + $0x152] sm:$0xff]
    %v4885 = vld [vmem:[#allocation2 + $0x15a] sm:$0xff]
    %v4886 = vld [vmem:[#allocation2 + $0x162] sm:$0xff]
    %v4887 = vld [vmem:[#allocation2 + $0x16a] sm:$0xff]
    %v4888 = vld [vmem:[#allocation2 + $0x172] sm:$0xff]
    %v4889 = vld [vmem:[#allocation2 + $0x17a] sm:$0xff]
    %v4890 = vld [vmem:[#allocation2 + $0x182] sm:$0xff]
    %v4891 = vld [vmem:[#allocation2 + $0x18a] sm:$0xff]
    %v4892 = vld [vmem:[#allocation2 + $0x192] sm:$0xff]
    %v4893 = vld [vmem:[#allocation2 + $0x19a] sm:$0xff]
    %v4894 = vld [vmem:[#allocation2 + $0x1a2] sm:$0xff]
    %v4895 = vld [vmem:[#allocation2 + $0x1aa] sm:$0xff]
    %v4896 = vld [vmem:[#allocation2 + $0x1b2] sm:$0xff]
    %v4897 = vld [vmem:[#allocation2 + $0x1ba] sm:$0xff]
    %v4898 = vld [vmem:[#allocation2 + $0x1c2] sm:$0xff]
    %v4899 = vld [vmem:[#allocation2 + $0x1ca] sm:$0xff]
    %v4900 = vld [vmem:[#allocation2 + $0x1d2] sm:$0xff]
    %v4901 = vld [vmem:[#allocation2 + $0x1da] sm:$0xff]
    %v4902 = vld [vmem:[#allocation2 + $0x1e2] sm:$0xff]
    %v4903 = vld [vmem:[#allocation2 + $0x1ea] sm:$0xff]
    %v4904 = vld [vmem:[#allocation2 + $0x1f2] sm:$0xff]
    %v4905 = vld [vmem:[#allocation2 + $0x1fa] sm:$0xff]
    %v4906 = vld [vmem:[#allocation2 + $0x202] sm:$0xff]
    %v4907 = vld [vmem:[#allocation2 + $0x20a] sm:$0xff]
    %v4908 = vld [vmem:[#allocation2 + $0x212] sm:$0xff]
    %v4909 = vld [vmem:[#allocation2 + $0x21a] sm:$0xff]
    %v4910 = vld [vmem:[#allocation2 + $0x222] sm:$0xff]
    %v4911 = vld [vmem:[#allocation2 + $0x22a] sm:$0xff]
    %v4912 = vld [vmem:[#allocation2 + $0x232] sm:$0xff]
    %v4913 = vld [vmem:[#allocation2 + $0x23a] sm:$0xff]
    %v4914 = vld [vmem:[#allocation2 + $0x242] sm:$0xff]
    %v4915 = vld [vmem:[#allocation2 + $0x24a] sm:$0xff]
    %v4916 = vld [vmem:[#allocation2 + $0x252] sm:$0xff]
    %v4917 = vld [vmem:[#allocation2 + $0x25a] sm:$0x7f]
    %v4918 = vld [vmem:[#allocation2 + $0x13] sm:$0xff]
    %v4919 = vld [vmem:[#allocation2 + $0x1b] sm:$0xff]
    %v4920 = vld [vmem:[#allocation2 + $0x23] sm:$0xff]
    %v4921 = vld [vmem:[#allocation2 + $0x2b] sm:$0xff]
    %v4922 = vld [vmem:[#allocation2 + $0x33] sm:$0xff]
    %v4923 = vld [vmem:[#allocation2 + $0x3b] sm:$0xff]
    %v4924 = vld [vmem:[#allocation2 + $0x43] sm:$0xff]
    %v4925 = vld [vmem:[#allocation2 + $0x4b] sm:$0xff]
    %v4926 = vld [vmem:[#allocation2 + $0x53] sm:$0xff]
    %v4927 = vld [vmem:[#allocation2 + $0x5b] sm:$0xff]
    %v4928 = vld [vmem:[#allocation2 + $0x63] sm:$0xff]
    %v4929 = vld [vmem:[#allocation2 + $0x6b] sm:$0xff]
    %v4930 = vld [vmem:[#allocation2 + $0x73] sm:$0xff]
    %v4931 = vld [vmem:[#allocation2 + $0x7b] sm:$0xff]
    %v4932 = vld [vmem:[#allocation2 + $0x83] sm:$0xff]
    %v4933 = vld [vmem:[#allocation2 + $0x8b] sm:$0xff]
    %v4934 = vld [vmem:[#allocation2 + $0x93] sm:$0xff]
    %v4935 = vld [vmem:[#allocation2 + $0x9b] sm:$0xff]
    %v4936 = vld [vmem:[#allocation2 + $0xa3] sm:$0xff]
    %v4937 = vld [vmem:[#allocation2 + $0xab] sm:$0xff]
    %v4938 = vld [vmem:[#allocation2 + $0xb3] sm:$0xff]
    %v4939 = vld [vmem:[#allocation2 + $0xbb] sm:$0xff]
    %v4940 = vld [vmem:[#allocation2 + $0xc3] sm:$0xff]
    %v4941 = vld [vmem:[#allocation2 + $0xcb] sm:$0xff]
    %v4942 = vld [vmem:[#allocation2 + $0xd3] sm:$0xff]
    %v4943 = vld [vmem:[#allocation2 + $0xdb] sm:$0xff]
    %v4944 = vld [vmem:[#allocation2 + $0xe3] sm:$0xff]
    %v4945 = vld [vmem:[#allocation2 + $0xeb] sm:$0xff]
    %v4946 = vld [vmem:[#allocation2 + $0xf3] sm:$0xff]
    %v4947 = vld [vmem:[#allocation2 + $0xfb] sm:$0xff]
    %v4948 = vld [vmem:[#allocation2 + $0x103] sm:$0xff]
    %v4949 = vld [vmem:[#allocation2 + $0x10b] sm:$0xff]
    %v4950 = vld [vmem:[#allocation2 + $0x113] sm:$0xff]
    %v4951 = vld [vmem:[#allocation2 + $0x11b] sm:$0xff]
    %v4952 = vld [vmem:[#allocation2 + $0x123] sm:$0xff]
    %v4953 = vld [vmem:[#allocation2 + $0x12b] sm:$0xff]
    %v4954 = vld [vmem:[#allocation2 + $0x133] sm:$0xff]
    %v4955 = vld [vmem:[#allocation2 + $0x13b] sm:$0xff]
    %v4956 = vld [vmem:[#allocation2 + $0x143] sm:$0xff]
    %v4957 = vld [vmem:[#allocation2 + $0x14b] sm:$0xff]
    %v4958 = vld [vmem:[#allocation2 + $0x153] sm:$0xff]
    %v4959 = vld [vmem:[#allocation2 + $0x15b] sm:$0xff]
    %v4960 = vld [vmem:[#allocation2 + $0x163] sm:$0xff]
    %v4961 = vld [vmem:[#allocation2 + $0x16b] sm:$0xff]
    %v4962 = vld [vmem:[#allocation2 + $0x173] sm:$0xff]
    %v4963 = vld [vmem:[#allocation2 + $0x17b] sm:$0xff]
    %v4964 = vld [vmem:[#allocation2 + $0x183] sm:$0xff]
    %v4965 = vld [vmem:[#allocation2 + $0x18b] sm:$0xff]
    %v4966 = vld [vmem:[#allocation2 + $0x193] sm:$0xff]
    %v4967 = vld [vmem:[#allocation2 + $0x19b] sm:$0xff]
    %v4968 = vld [vmem:[#allocation2 + $0x1a3] sm:$0xff]
    %v4969 = vld [vmem:[#allocation2 + $0x1ab] sm:$0xff]
    %v4970 = vld [vmem:[#allocation2 + $0x1b3] sm:$0xff]
    %v4971 = vld [vmem:[#allocation2 + $0x1bb] sm:$0xff]
    %v4972 = vld [vmem:[#allocation2 + $0x1c3] sm:$0xff]
    %v4973 = vld [vmem:[#allocation2 + $0x1cb] sm:$0xff]
    %v4974 = vld [vmem:[#allocation2 + $0x1d3] sm:$0xff]
    %v4975 = vld [vmem:[#allocation2 + $0x1db] sm:$0xff]
    %v4976 = vld [vmem:[#allocation2 + $0x1e3] sm:$0xff]
    %v4977 = vld [vmem:[#allocation2 + $0x1eb] sm:$0xff]
    %v4978 = vld [vmem:[#allocation2 + $0x1f3] sm:$0xff]
    %v4979 = vld [vmem:[#allocation2 + $0x1fb] sm:$0xff]
    %v4980 = vld [vmem:[#allocation2 + $0x203] sm:$0xff]
    %v4981 = vld [vmem:[#allocation2 + $0x20b] sm:$0xff]
    %v4982 = vld [vmem:[#allocation2 + $0x213] sm:$0xff]
    %v4983 = vld [vmem:[#allocation2 + $0x21b] sm:$0xff]
    %v4984 = vld [vmem:[#allocation2 + $0x223] sm:$0xff]
    %v4985 = vld [vmem:[#allocation2 + $0x22b] sm:$0xff]
    %v4986 = vld [vmem:[#allocation2 + $0x233] sm:$0xff]
    %v4987 = vld [vmem:[#allocation2 + $0x23b] sm:$0xff]
    %v4988 = vld [vmem:[#allocation2 + $0x243] sm:$0xff]
    %v4989 = vld [vmem:[#allocation2 + $0x24b] sm:$0xff]
    %v4990 = vld [vmem:[#allocation2 + $0x253] sm:$0xff]
    %v4991 = vld [vmem:[#allocation2 + $0x25b] sm:$0x7f]
    %v4992 = vmax.f32 %v4696, %v4770
    %v4993 = vmax.f32 %v4697, %v4771
    %v4994 = vmax.f32 %v4698, %v4772
    %v4995 = vmax.f32 %v4699, %v4773
    %v4996 = vmax.f32 %v4700, %v4774
    %v4997 = vmax.f32 %v4701, %v4775
    %v4998 = vmax.f32 %v4702, %v4776
    %v4999 = vmax.f32 %v4703, %v4777
    %v5000 = vmax.f32 %v4704, %v4778
    %v5001 = vmax.f32 %v4705, %v4779
    %v5002 = vmax.f32 %v4706, %v4780
    %v5003 = vmax.f32 %v4707, %v4781
    %v5004 = vmax.f32 %v4708, %v4782
    %v5005 = vmax.f32 %v4709, %v4783
    %v5006 = vmax.f32 %v4710, %v4784
    %v5007 = vmax.f32 %v4711, %v4785
    %v5008 = vmax.f32 %v4712, %v4786
    %v5009 = vmax.f32 %v4713, %v4787
    %v5010 = vmax.f32 %v4714, %v4788
    %v5011 = vmax.f32 %v4715, %v4789
    %v5012 = vmax.f32 %v4716, %v4790
    %v5013 = vmax.f32 %v4717, %v4791
    %v5014 = vmax.f32 %v4718, %v4792
    %v5015 = vmax.f32 %v4719, %v4793
    %v5016 = vmax.f32 %v4720, %v4794
    %v5017 = vmax.f32 %v4721, %v4795
    %v5018 = vmax.f32 %v4722, %v4796
    %v5019 = vmax.f32 %v4723, %v4797
    %v5020 = vmax.f32 %v4724, %v4798
    %v5021 = vmax.f32 %v4725, %v4799
    %v5022 = vmax.f32 %v4726, %v4800
    %v5023 = vmax.f32 %v4727, %v4801
    %v5024 = vmax.f32 %v4728, %v4802
    %v5025 = vmax.f32 %v4729, %v4803
    %v5026 = vmax.f32 %v4730, %v4804
    %v5027 = vmax.f32 %v4731, %v4805
    %v5028 = vmax.f32 %v4732, %v4806
    %v5029 = vmax.f32 %v4733, %v4807
    %v5030 = vmax.f32 %v4734, %v4808
    %v5031 = vmax.f32 %v4735, %v4809
    %v5032 = vmax.f32 %v4736, %v4810
    %v5033 = vmax.f32 %v4737, %v4811
    %v5034 = vmax.f32 %v4738, %v4812
    %v5035 = vmax.f32 %v4739, %v4813
    %v5036 = vmax.f32 %v4740, %v4814
    %v5037 = vmax.f32 %v4741, %v4815
    %v5038 = vmax.f32 %v4742, %v4816
    %v5039 = vmax.f32 %v4743, %v4817
    %v5040 = vmax.f32 %v4744, %v4818
    %v5041 = vmax.f32 %v4745, %v4819
    %v5042 = vmax.f32 %v4746, %v4820
    %v5043 = vmax.f32 %v4747, %v4821
    %v5044 = vmax.f32 %v4748, %v4822
    %v5045 = vmax.f32 %v4749, %v4823
    %v5046 = vmax.f32 %v4750, %v4824
    %v5047 = vmax.f32 %v4751, %v4825
    %v5048 = vmax.f32 %v4752, %v4826
    %v5049 = vmax.f32 %v4753, %v4827
    %v5050 = vmax.f32 %v4754, %v4828
    %v5051 = vmax.f32 %v4755, %v4829
    %v5052 = vmax.f32 %v4756, %v4830
    %v5053 = vmax.f32 %v4757, %v4831
    %v5054 = vmax.f32 %v4758, %v4832
    %v5055 = vmax.f32 %v4759, %v4833
    %v5056 = vmax.f32 %v4760, %v4834
    %v5057 = vmax.f32 %v4761, %v4835
    %v5058 = vmax.f32 %v4762, %v4836
    %v5059 = vmax.f32 %v4763, %v4837
    %v5060 = vmax.f32 %v4764, %v4838
    %v5061 = vmax.f32 %v4765, %v4839
    %v5062 = vmax.f32 %v4766, %v4840
    %v5063 = vmax.f32 %v4767, %v4841
    %v5064 = vmax.f32 %v4768, %v4842
    %v5065 = vmax.f32 %v4769, %v4843
    %v5066 = vmax.f32 %v4844, %v4918
    %v5067 = vmax.f32 %v4845, %v4919
    %v5068 = vmax.f32 %v4846, %v4920
    %v5069 = vmax.f32 %v4847, %v4921
    %v5070 = vmax.f32 %v4848, %v4922
    %v5071 = vmax.f32 %v4849, %v4923
    %v5072 = vmax.f32 %v4850, %v4924
    %v5073 = vmax.f32 %v4851, %v4925
    %v5074 = vmax.f32 %v4852, %v4926
    %v5075 = vmax.f32 %v4853, %v4927
    %v5076 = vmax.f32 %v4854, %v4928
    %v5077 = vmax.f32 %v4855, %v4929
    %v5078 = vmax.f32 %v4856, %v4930
    %v5079 = vmax.f32 %v4857, %v4931
    %v5080 = vmax.f32 %v4858, %v4932
    %v5081 = vmax.f32 %v4859, %v4933
    %v5082 = vmax.f32 %v4860, %v4934
    %v5083 = vmax.f32 %v4861, %v4935
    %v5084 = vmax.f32 %v4862, %v4936
    %v5085 = vmax.f32 %v4863, %v4937
    %v5086 = vmax.f32 %v4864, %v4938
    %v5087 = vmax.f32 %v4865, %v4939
    %v5088 = vmax.f32 %v4866, %v4940
    %v5089 = vmax.f32 %v4867, %v4941
    %v5090 = vmax.f32 %v4868, %v4942
    %v5091 = vmax.f32 %v4869, %v4943
    %v5092 = vmax.f32 %v4870, %v4944
    %v5093 = vmax.f32 %v4871, %v4945
    %v5094 = vmax.f32 %v4872, %v4946
    %v5095 = vmax.f32 %v4873, %v4947
    %v5096 = vmax.f32 %v4874, %v4948
    %v5097 = vmax.f32 %v4875, %v4949
    %v5098 = vmax.f32 %v4876, %v4950
    %v5099 = vmax.f32 %v4877, %v4951
    %v5100 = vmax.f32 %v4878, %v4952
    %v5101 = vmax.f32 %v4879, %v4953
    %v5102 = vmax.f32 %v4880, %v4954
    %v5103 = vmax.f32 %v4881, %v4955
    %v5104 = vmax.f32 %v4882, %v4956
    %v5105 = vmax.f32 %v4883, %v4957
    %v5106 = vmax.f32 %v4884, %v4958
    %v5107 = vmax.f32 %v4885, %v4959
    %v5108 = vmax.f32 %v4886, %v4960
    %v5109 = vmax.f32 %v4887, %v4961
    %v5110 = vmax.f32 %v4888, %v4962
    %v5111 = vmax.f32 %v4889, %v4963
    %v5112 = vmax.f32 %v4890, %v4964
    %v5113 = vmax.f32 %v4891, %v4965
    %v5114 = vmax.f32 %v4892, %v4966
    %v5115 = vmax.f32 %v4893, %v4967
    %v5116 = vmax.f32 %v4894, %v4968
    %v5117 = vmax.f32 %v4895, %v4969
    %v5118 = vmax.f32 %v4896, %v4970
    %v5119 = vmax.f32 %v4897, %v4971
    %v5120 = vmax.f32 %v4898, %v4972
    %v5121 = vmax.f32 %v4899, %v4973
    %v5122 = vmax.f32 %v4900, %v4974
    %v5123 = vmax.f32 %v4901, %v4975
    %v5124 = vmax.f32 %v4902, %v4976
    %v5125 = vmax.f32 %v4903, %v4977
    %v5126 = vmax.f32 %v4904, %v4978
    %v5127 = vmax.f32 %v4905, %v4979
    %v5128 = vmax.f32 %v4906, %v4980
    %v5129 = vmax.f32 %v4907, %v4981
    %v5130 = vmax.f32 %v4908, %v4982
    %v5131 = vmax.f32 %v4909, %v4983
    %v5132 = vmax.f32 %v4910, %v4984
    %v5133 = vmax.f32 %v4911, %v4985
    %v5134 = vmax.f32 %v4912, %v4986
    %v5135 = vmax.f32 %v4913, %v4987
    %v5136 = vmax.f32 %v4914, %v4988
    %v5137 = vmax.f32 %v4915, %v4989
    %v5138 = vmax.f32 %v4916, %v4990
    %v5139 = vmax.f32 %v4917, %v4991
    %v5140 = vmax.f32 %v4992, %v5066
    %v5141 = vmax.f32 %v4993, %v5067
    %v5142 = vmax.f32 %v4994, %v5068
    %v5143 = vmax.f32 %v4995, %v5069
    %v5144 = vmax.f32 %v4996, %v5070
    %v5145 = vmax.f32 %v4997, %v5071
    %v5146 = vmax.f32 %v4998, %v5072
    %v5147 = vmax.f32 %v4999, %v5073
    %v5148 = vmax.f32 %v5000, %v5074
    %v5149 = vmax.f32 %v5001, %v5075
    %v5150 = vmax.f32 %v5002, %v5076
    %v5151 = vmax.f32 %v5003, %v5077
    %v5152 = vmax.f32 %v5004, %v5078
    %v5153 = vmax.f32 %v5005, %v5079
    %v5154 = vmax.f32 %v5006, %v5080
    %v5155 = vmax.f32 %v5007, %v5081
    %v5156 = vmax.f32 %v5008, %v5082
    %v5157 = vmax.f32 %v5009, %v5083
    %v5158 = vmax.f32 %v5010, %v5084
    %v5159 = vmax.f32 %v5011, %v5085
    %v5160 = vmax.f32 %v5012, %v5086
    %v5161 = vmax.f32 %v5013, %v5087
    %v5162 = vmax.f32 %v5014, %v5088
    %v5163 = vmax.f32 %v5015, %v5089
    %v5164 = vmax.f32 %v5016, %v5090
    %v5165 = vmax.f32 %v5017, %v5091
    %v5166 = vmax.f32 %v5018, %v5092
    %v5167 = vmax.f32 %v5019, %v5093
    %v5168 = vmax.f32 %v5020, %v5094
    %v5169 = vmax.f32 %v5021, %v5095
    %v5170 = vmax.f32 %v5022, %v5096
    %v5171 = vmax.f32 %v5023, %v5097
    %v5172 = vmax.f32 %v5024, %v5098
    %v5173 = vmax.f32 %v5025, %v5099
    %v5174 = vmax.f32 %v5026, %v5100
    %v5175 = vmax.f32 %v5027, %v5101
    %v5176 = vmax.f32 %v5028, %v5102
    %v5177 = vmax.f32 %v5029, %v5103
    %v5178 = vmax.f32 %v5030, %v5104
    %v5179 = vmax.f32 %v5031, %v5105
    %v5180 = vmax.f32 %v5032, %v5106
    %v5181 = vmax.f32 %v5033, %v5107
    %v5182 = vmax.f32 %v5034, %v5108
    %v5183 = vmax.f32 %v5035, %v5109
    %v5184 = vmax.f32 %v5036, %v5110
    %v5185 = vmax.f32 %v5037, %v5111
    %v5186 = vmax.f32 %v5038, %v5112
    %v5187 = vmax.f32 %v5039, %v5113
    %v5188 = vmax.f32 %v5040, %v5114
    %v5189 = vmax.f32 %v5041, %v5115
    %v5190 = vmax.f32 %v5042, %v5116
    %v5191 = vmax.f32 %v5043, %v5117
    %v5192 = vmax.f32 %v5044, %v5118
    %v5193 = vmax.f32 %v5045, %v5119
    %v5194 = vmax.f32 %v5046, %v5120
    %v5195 = vmax.f32 %v5047, %v5121
    %v5196 = vmax.f32 %v5048, %v5122
    %v5197 = vmax.f32 %v5049, %v5123
    %v5198 = vmax.f32 %v5050, %v5124
    %v5199 = vmax.f32 %v5051, %v5125
    %v5200 = vmax.f32 %v5052, %v5126
    %v5201 = vmax.f32 %v5053, %v5127
    %v5202 = vmax.f32 %v5054, %v5128
    %v5203 = vmax.f32 %v5055, %v5129
    %v5204 = vmax.f32 %v5056, %v5130
    %v5205 = vmax.f32 %v5057, %v5131
    %v5206 = vmax.f32 %v5058, %v5132
    %v5207 = vmax.f32 %v5059, %v5133
    %v5208 = vmax.f32 %v5060, %v5134
    %v5209 = vmax.f32 %v5061, %v5135
    %v5210 = vmax.f32 %v5062, %v5136
    %v5211 = vmax.f32 %v5063, %v5137
    %v5212 = vmax.f32 %v5064, %v5138
    %v5213 = vmax.f32 %v5065, %v5139
    %v5214 = vld [vmem:[%s2] sm:$0x1]
    %v5216 = vperm.slane %v5214, 0
    %v5218 = vmul.f32 %v5140, %v5216
    %v5219 = vmul.f32 %v5141, %v5216
    %v5220 = vmul.f32 %v5142, %v5216
    %v5221 = vmul.f32 %v5143, %v5216
    %v5222 = vmul.f32 %v5144, %v5216
    %v5223 = vmul.f32 %v5145, %v5216
    %v5224 = vmul.f32 %v5146, %v5216
    %v5225 = vmul.f32 %v5147, %v5216
    %v5226 = vmul.f32 %v5148, %v5216
    %v5227 = vmul.f32 %v5149, %v5216
    %v5228 = vmul.f32 %v5150, %v5216
    %v5229 = vmul.f32 %v5151, %v5216
    %v5230 = vmul.f32 %v5152, %v5216
    %v5231 = vmul.f32 %v5153, %v5216
    %v5232 = vmul.f32 %v5154, %v5216
    %v5233 = vmul.f32 %v5155, %v5216
    %v5234 = vmul.f32 %v5156, %v5216
    %v5235 = vmul.f32 %v5157, %v5216
    %v5236 = vmul.f32 %v5158, %v5216
    %v5237 = vmul.f32 %v5159, %v5216
    %v5238 = vmul.f32 %v5160, %v5216
    %v5239 = vmul.f32 %v5161, %v5216
    %v5240 = vmul.f32 %v5162, %v5216
    %v5241 = vmul.f32 %v5163, %v5216
    %v5242 = vmul.f32 %v5164, %v5216
    %v5243 = vmul.f32 %v5165, %v5216
    %v5244 = vmul.f32 %v5166, %v5216
    %v5245 = vmul.f32 %v5167, %v5216
    %v5246 = vmul.f32 %v5168, %v5216
    %v5247 = vmul.f32 %v5169, %v5216
    %v5248 = vmul.f32 %v5170, %v5216
    %v5249 = vmul.f32 %v5171, %v5216
    %v5250 = vmul.f32 %v5172, %v5216
    %v5251 = vmul.f32 %v5173, %v5216
    %v5252 = vmul.f32 %v5174, %v5216
    %v5253 = vmul.f32 %v5175, %v5216
    %v5254 = vmul.f32 %v5176, %v5216
    %v5255 = vmul.f32 %v5177, %v5216
    %v5256 = vmul.f32 %v5178, %v5216
    %v5257 = vmul.f32 %v5179, %v5216
    %v5258 = vmul.f32 %v5180, %v5216
    %v5259 = vmul.f32 %v5181, %v5216
    %v5260 = vmul.f32 %v5182, %v5216
    %v5261 = vmul.f32 %v5183, %v5216
    %v5262 = vmul.f32 %v5184, %v5216
    %v5263 = vmul.f32 %v5185, %v5216
    %v5264 = vmul.f32 %v5186, %v5216
    %v5265 = vmul.f32 %v5187, %v5216
    %v5266 = vmul.f32 %v5188, %v5216
    %v5267 = vmul.f32 %v5189, %v5216
    %v5268 = vmul.f32 %v5190, %v5216
    %v5269 = vmul.f32 %v5191, %v5216
    %v5270 = vmul.f32 %v5192, %v5216
    %v5271 = vmul.f32 %v5193, %v5216
    %v5272 = vmul.f32 %v5194, %v5216
    %v5273 = vmul.f32 %v5195, %v5216
    %v5274 = vmul.f32 %v5196, %v5216
    %v5275 = vmul.f32 %v5197, %v5216
    %v5276 = vmul.f32 %v5198, %v5216
    %v5277 = vmul.f32 %v5199, %v5216
    %v5278 = vmul.f32 %v5200, %v5216
    %v5279 = vmul.f32 %v5201, %v5216
    %v5280 = vmul.f32 %v5202, %v5216
    %v5281 = vmul.f32 %v5203, %v5216
    %v5282 = vmul.f32 %v5204, %v5216
    %v5283 = vmul.f32 %v5205, %v5216
    %v5284 = vmul.f32 %v5206, %v5216
    %v5285 = vmul.f32 %v5207, %v5216
    %v5286 = vmul.f32 %v5208, %v5216
    %v5287 = vmul.f32 %v5209, %v5216
    %v5288 = vmul.f32 %v5210, %v5216
    %v5289 = vmul.f32 %v5211, %v5216
    %v5290 = vmul.f32 %v5212, %v5216
    %v5291 = vmul.f32 %v5213, %v5216
    %v5292 = vld [vmem:[%s3] sm:$0x1]
    %v5294 = vperm.slane %v5292, 0
    %v5296 = vadd.f32 %v5218, %v5294
    %v5297 = vadd.f32 %v5219, %v5294
    %v5298 = vadd.f32 %v5220, %v5294
    %v5299 = vadd.f32 %v5221, %v5294
    %v5300 = vadd.f32 %v5222, %v5294
    %v5301 = vadd.f32 %v5223, %v5294
    %v5302 = vadd.f32 %v5224, %v5294
    %v5303 = vadd.f32 %v5225, %v5294
    %v5304 = vadd.f32 %v5226, %v5294
    %v5305 = vadd.f32 %v5227, %v5294
    %v5306 = vadd.f32 %v5228, %v5294
    %v5307 = vadd.f32 %v5229, %v5294
    %v5308 = vadd.f32 %v5230, %v5294
    %v5309 = vadd.f32 %v5231, %v5294
    %v5310 = vadd.f32 %v5232, %v5294
    %v5311 = vadd.f32 %v5233, %v5294
    %v5312 = vadd.f32 %v5234, %v5294
    %v5313 = vadd.f32 %v5235, %v5294
    %v5314 = vadd.f32 %v5236, %v5294
    %v5315 = vadd.f32 %v5237, %v5294
    %v5316 = vadd.f32 %v5238, %v5294
    %v5317 = vadd.f32 %v5239, %v5294
    %v5318 = vadd.f32 %v5240, %v5294
    %v5319 = vadd.f32 %v5241, %v5294
    %v5320 = vadd.f32 %v5242, %v5294
    %v5321 = vadd.f32 %v5243, %v5294
    %v5322 = vadd.f32 %v5244, %v5294
    %v5323 = vadd.f32 %v5245, %v5294
    %v5324 = vadd.f32 %v5246, %v5294
    %v5325 = vadd.f32 %v5247, %v5294
    %v5326 = vadd.f32 %v5248, %v5294
    %v5327 = vadd.f32 %v5249, %v5294
    %v5328 = vadd.f32 %v5250, %v5294
    %v5329 = vadd.f32 %v5251, %v5294
    %v5330 = vadd.f32 %v5252, %v5294
    %v5331 = vadd.f32 %v5253, %v5294
    %v5332 = vadd.f32 %v5254, %v5294
    %v5333 = vadd.f32 %v5255, %v5294
    %v5334 = vadd.f32 %v5256, %v5294
    %v5335 = vadd.f32 %v5257, %v5294
    %v5336 = vadd.f32 %v5258, %v5294
    %v5337 = vadd.f32 %v5259, %v5294
    %v5338 = vadd.f32 %v5260, %v5294
    %v5339 = vadd.f32 %v5261, %v5294
    %v5340 = vadd.f32 %v5262, %v5294
    %v5341 = vadd.f32 %v5263, %v5294
    %v5342 = vadd.f32 %v5264, %v5294
    %v5343 = vadd.f32 %v5265, %v5294
    %v5344 = vadd.f32 %v5266, %v5294
    %v5345 = vadd.f32 %v5267, %v5294
    %v5346 = vadd.f32 %v5268, %v5294
    %v5347 = vadd.f32 %v5269, %v5294
    %v5348 = vadd.f32 %v5270, %v5294
    %v5349 = vadd.f32 %v5271, %v5294
    %v5350 = vadd.f32 %v5272, %v5294
    %v5351 = vadd.f32 %v5273, %v5294
    %v5352 = vadd.f32 %v5274, %v5294
    %v5353 = vadd.f32 %v5275, %v5294
    %v5354 = vadd.f32 %v5276, %v5294
    %v5355 = vadd.f32 %v5277, %v5294
    %v5356 = vadd.f32 %v5278, %v5294
    %v5357 = vadd.f32 %v5279, %v5294
    %v5358 = vadd.f32 %v5280, %v5294
    %v5359 = vadd.f32 %v5281, %v5294
    %v5360 = vadd.f32 %v5282, %v5294
    %v5361 = vadd.f32 %v5283, %v5294
    %v5362 = vadd.f32 %v5284, %v5294
    %v5363 = vadd.f32 %v5285, %v5294
    %v5364 = vadd.f32 %v5286, %v5294
    %v5365 = vadd.f32 %v5287, %v5294
    %v5366 = vadd.f32 %v5288, %v5294
    %v5367 = vadd.f32 %v5289, %v5294
    %v5368 = vadd.f32 %v5290, %v5294
    %v5369 = vadd.f32 %v5291, %v5294
    %v5370 = vmax.f32 %v5296, 0.0
    %v5371 = vmax.f32 %v5297, 0.0
    %v5372 = vmax.f32 %v5298, 0.0
    %v5373 = vmax.f32 %v5299, 0.0
    %v5374 = vmax.f32 %v5300, 0.0
    %v5375 = vmax.f32 %v5301, 0.0
    %v5376 = vmax.f32 %v5302, 0.0
    %v5377 = vmax.f32 %v5303, 0.0
    %v5378 = vmax.f32 %v5304, 0.0
    %v5379 = vmax.f32 %v5305, 0.0
    %v5380 = vmax.f32 %v5306, 0.0
    %v5381 = vmax.f32 %v5307, 0.0
    %v5382 = vmax.f32 %v5308, 0.0
    %v5383 = vmax.f32 %v5309, 0.0
    %v5384 = vmax.f32 %v5310, 0.0
    %v5385 = vmax.f32 %v5311, 0.0
    %v5386 = vmax.f32 %v5312, 0.0
    %v5387 = vmax.f32 %v5313, 0.0
    %v5388 = vmax.f32 %v5314, 0.0
    %v5389 = vmax.f32 %v5315, 0.0
    %v5390 = vmax.f32 %v5316, 0.0
    %v5391 = vmax.f32 %v5317, 0.0
    %v5392 = vmax.f32 %v5318, 0.0
    %v5393 = vmax.f32 %v5319, 0.0
    %v5394 = vmax.f32 %v5320, 0.0
    %v5395 = vmax.f32 %v5321, 0.0
    %v5396 = vmax.f32 %v5322, 0.0
    %v5397 = vmax.f32 %v5323, 0.0
    %v5398 = vmax.f32 %v5324, 0.0
    %v5399 = vmax.f32 %v5325, 0.0
    %v5400 = vmax.f32 %v5326, 0.0
    %v5401 = vmax.f32 %v5327, 0.0
    %v5402 = vmax.f32 %v5328, 0.0
    %v5403 = vmax.f32 %v5329, 0.0
    %v5404 = vmax.f32 %v5330, 0.0
    %v5405 = vmax.f32 %v5331, 0.0
    %v5406 = vmax.f32 %v5332, 0.0
    %v5407 = vmax.f32 %v5333, 0.0
    %v5408 = vmax.f32 %v5334, 0.0
    %v5409 = vmax.f32 %v5335, 0.0
    %v5410 = vmax.f32 %v5336, 0.0
    %v5411 = vmax.f32 %v5337, 0.0
    %v5412 = vmax.f32 %v5338, 0.0
    %v5413 = vmax.f32 %v5339, 0.0
    %v5414 = vmax.f32 %v5340, 0.0
    %v5415 = vmax.f32 %v5341, 0.0
    %v5416 = vmax.f32 %v5342, 0.0
    %v5417 = vmax.f32 %v5343, 0.0
    %v5418 = vmax.f32 %v5344, 0.0
    %v5419 = vmax.f32 %v5345, 0.0
    %v5420 = vmax.f32 %v5346, 0.0
    %v5421 = vmax.f32 %v5347, 0.0
    %v5422 = vmax.f32 %v5348, 0.0
    %v5423 = vmax.f32 %v5349, 0.0
    %v5424 = vmax.f32 %v5350, 0.0
    %v5425 = vmax.f32 %v5351, 0.0
    %v5426 = vmax.f32 %v5352, 0.0
    %v5427 = vmax.f32 %v5353, 0.0
    %v5428 = vmax.f32 %v5354, 0.0
    %v5429 = vmax.f32 %v5355, 0.0
    %v5430 = vmax.f32 %v5356, 0.0
    %v5431 = vmax.f32 %v5357, 0.0
    %v5432 = vmax.f32 %v5358, 0.0
    %v5433 = vmax.f32 %v5359, 0.0
    %v5434 = vmax.f32 %v5360, 0.0
    %v5435 = vmax.f32 %v5361, 0.0
    %v5436 = vmax.f32 %v5362, 0.0
    %v5437 = vmax.f32 %v5363, 0.0
    %v5438 = vmax.f32 %v5364, 0.0
    %v5439 = vmax.f32 %v5365, 0.0
    %v5440 = vmax.f32 %v5366, 0.0
    %v5441 = vmax.f32 %v5367, 0.0
    %v5442 = vmax.f32 %v5368, 0.0
    %v5443 = vmax.f32 %v5369, 0.0
    %v5444 = vld [vmem:[%s4] sm:$0xff]
    %v5445 = vld [vmem:[%s4 + $0x8] sm:$0xff]
    %v5446 = vld [vmem:[%s4 + $0x10] sm:$0xf]
    %v5447 = vld [vmem:[%s4 + $0x14] sm:$0xff]
    %v5448 = vld [vmem:[%s4 + $0x1c] sm:$0xff]
    %v5449 = vld [vmem:[%s4 + $0x24] sm:$0xf]
    %v5450 = vld [vmem:[%s4 + $0x28] sm:$0xff]
    %v5451 = vld [vmem:[%s4 + $0x30] sm:$0xff]
    %v5452 = vld [vmem:[%s4 + $0x38] sm:$0xf]
    %v5453 = vld [vmem:[%s4 + $0x3c] sm:$0xff]
    %v5454 = vld [vmem:[%s4 + $0x44] sm:$0xff]
    %v5455 = vld [vmem:[%s4 + $0x4c] sm:$0xf]
    %v5456 = vld [vmem:[%s4 + $0x50] sm:$0xff]
    %v5457 = vld [vmem:[%s4 + $0x58] sm:$0xff]
    %v5458 = vld [vmem:[%s4 + $0x60] sm:$0xf]
    %v5459 = vld [vmem:[%s4 + $0x64] sm:$0xff]
    %v5460 = vld [vmem:[%s4 + $0x6c] sm:$0xff]
    %v5461 = vld [vmem:[%s4 + $0x74] sm:$0xf]
    %v5462 = vld [vmem:[%s4 + $0x78] sm:$0xff]
    %v5463 = vld [vmem:[%s4 + $0x80] sm:$0xff]
    %v5464 = vld [vmem:[%s4 + $0x88] sm:$0xf]
    %v5465 = vld [vmem:[%s4 + $0x8c] sm:$0xff]
    %v5466 = vld [vmem:[%s4 + $0x94] sm:$0xff]
    %v5467 = vld [vmem:[%s4 + $0x9c] sm:$0xf]
    %v5468 = vld [vmem:[%s4 + $0xa0] sm:$0xff]
    %v5469 = vld [vmem:[%s4 + $0xa8] sm:$0xff]
    %v5470 = vld [vmem:[%s4 + $0xb0] sm:$0xf]
    %v5471 = vld [vmem:[%s4 + $0xb4] sm:$0xff]
    %v5472 = vld [vmem:[%s4 + $0xbc] sm:$0xff]
    %v5473 = vld [vmem:[%s4 + $0xc4] sm:$0xf]
    %v5474 = vld [vmem:[%s4 + $0xc8] sm:$0xff]
    %v5475 = vld [vmem:[%s4 + $0xd0] sm:$0xff]
    %v5476 = vld [vmem:[%s4 + $0xd8] sm:$0xf]
    %v5477 = vld [vmem:[%s4 + $0xdc] sm:$0xff]
    %v5478 = vld [vmem:[%s4 + $0xe4] sm:$0xff]
    %v5479 = vld [vmem:[%s4 + $0xec] sm:$0xf]
    %v5480 = vld [vmem:[%s4 + $0xf0] sm:$0xff]
    %v5481 = vld [vmem:[%s4 + $0xf8] sm:$0xff]
    %v5482 = vld [vmem:[%s4 + $0x100] sm:$0xf]
    %v5483 = vld [vmem:[%s4 + $0x104] sm:$0xff]
    %v5484 = vld [vmem:[%s4 + $0x10c] sm:$0xff]
    %v5485 = vld [vmem:[%s4 + $0x114] sm:$0xf]
    %v5486 = vld [vmem:[%s4 + $0x118] sm:$0xff]
    %v5487 = vld [vmem:[%s4 + $0x120] sm:$0xff]
    %v5488 = vld [vmem:[%s4 + $0x128] sm:$0xf]
    %v5489 = vld [vmem:[%s4 + $0x12c] sm:$0xff]
    %v5490 = vld [vmem:[%s4 + $0x134] sm:$0xff]
    %v5491 = vld [vmem:[%s4 + $0x13c] sm:$0xf]
    %v5492 = vld [vmem:[%s4 + $0x140] sm:$0xff]
    %v5493 = vld [vmem:[%s4 + $0x148] sm:$0xff]
    %v5494 = vld [vmem:[%s4 + $0x150] sm:$0xf]
    %v5495 = vld [vmem:[%s4 + $0x154] sm:$0xff]
    %v5496 = vld [vmem:[%s4 + $0x15c] sm:$0xff]
    %v5497 = vld [vmem:[%s4 + $0x164] sm:$0xf]
    %v5498 = vld [vmem:[%s4 + $0x168] sm:$0xff]
    %v5499 = vld [vmem:[%s4 + $0x170] sm:$0xff]
    %v5500 = vld [vmem:[%s4 + $0x178] sm:$0xf]
    %v5501 = vld [vmem:[%s4 + $0x17c] sm:$0xff]
    %v5502 = vld [vmem:[%s4 + $0x184] sm:$0xff]
    %v5503 = vld [vmem:[%s4 + $0x18c] sm:$0xf]
    %v5504 = vld [vmem:[%s4 + $0x190] sm:$0xff]
    %v5505 = vld [vmem:[%s4 + $0x198] sm:$0xff]
    %v5506 = vld [vmem:[%s4 + $0x1a0] sm:$0xf]
    %v5507 = vld [vmem:[%s4 + $0x1a4] sm:$0xff]
    %v5508 = vld [vmem:[%s4 + $0x1ac] sm:$0xff]
    %v5509 = vld [vmem:[%s4 + $0x1b4] sm:$0xf]
    %v5510 = vld [vmem:[%s4 + $0x1b8] sm:$0xff]
    %v5511 = vld [vmem:[%s4 + $0x1c0] sm:$0xff]
    %v5512 = vld [vmem:[%s4 + $0x1c8] sm:$0xf]
    %v5513 = vld [vmem:[%s4 + $0x1cc] sm:$0xff]
    %v5514 = vld [vmem:[%s4 + $0x1d4] sm:$0xff]
    %v5515 = vld [vmem:[%s4 + $0x1dc] sm:$0xf]
    %v5516 = vld [vmem:[%s4 + $0x1e0] sm:$0xff]
    %v5517 = vld [vmem:[%s4 + $0x1e8] sm:$0xff]
    %v5518 = vld [vmem:[%s4 + $0x1f0] sm:$0xf]
    %v5519 = vpack.c.bf16 %v5371, %v5370
    %v5520 = vpack.c.bf16 %v5373, %v5372
    %v5521 = vpack.c.bf16 %v5375, %v5374
    %v5522 = vpack.c.bf16 %v5377, %v5376
    %v5523 = vpack.c.bf16 %v5379, %v5378
    %v5524 = vpack.c.bf16 %v5381, %v5380
    %v5525 = vpack.c.bf16 %v5383, %v5382
    %v5526 = vpack.c.bf16 %v5385, %v5384
    %v5527 = vpack.c.bf16 %v5387, %v5386
    %v5528 = vpack.c.bf16 %v5389, %v5388
    %v5529 = vpack.c.bf16 %v5391, %v5390
    %v5530 = vpack.c.bf16 %v5393, %v5392
    %v5531 = vpack.c.bf16 %v5395, %v5394
    %v5532 = vpack.c.bf16 %v5397, %v5396
    %v5533 = vpack.c.bf16 %v5399, %v5398
    %v5534 = vpack.c.bf16 %v5401, %v5400
    %v5535 = vpack.c.bf16 %v5403, %v5402
    %v5536 = vpack.c.bf16 %v5405, %v5404
    %v5537 = vpack.c.bf16 %v5407, %v5406
    %v5538 = vpack.c.bf16 %v5409, %v5408
    %v5539 = vpack.c.bf16 %v5411, %v5410
    %v5540 = vpack.c.bf16 %v5413, %v5412
    %v5541 = vpack.c.bf16 %v5415, %v5414
    %v5542 = vpack.c.bf16 %v5417, %v5416
    %v5543 = vpack.c.bf16 %v5419, %v5418
    %v5544 = vpack.c.bf16 %v5421, %v5420
    %v5545 = vpack.c.bf16 %v5423, %v5422
    %v5546 = vpack.c.bf16 %v5425, %v5424
    %v5547 = vpack.c.bf16 %v5427, %v5426
    %v5548 = vpack.c.bf16 %v5429, %v5428
    %v5549 = vpack.c.bf16 %v5431, %v5430
    %v5550 = vpack.c.bf16 %v5433, %v5432
    %v5551 = vpack.c.bf16 %v5435, %v5434
    %v5552 = vpack.c.bf16 %v5437, %v5436
    %v5553 = vpack.c.bf16 %v5439, %v5438
    %v5554 = vpack.c.bf16 %v5441, %v5440
    %v5555 = vpack.c.bf16 %v5443, %v5442
    %v5631 = vunpack.c.l.b16 %v5444
    %v5632 = vunpack.c.h.b16 %v5444
    %v5633 = vunpack.c.l.b16 %v5445
    %v5634 = vunpack.c.h.b16 %v5445
    %v5635 = vunpack.c.l.b16 %v5446
    %v5636 = vunpack.c.l.b16 %v5447
    %v5637 = vunpack.c.h.b16 %v5447
    %v5638 = vunpack.c.l.b16 %v5448
    %v5639 = vunpack.c.h.b16 %v5448
    %v5640 = vunpack.c.l.b16 %v5449
    %v5641 = vunpack.c.l.b16 %v5450
    %v5642 = vunpack.c.h.b16 %v5450
    %v5643 = vunpack.c.l.b16 %v5451
    %v5644 = vunpack.c.h.b16 %v5451
    %v5645 = vunpack.c.l.b16 %v5452
    %v5646 = vunpack.c.l.b16 %v5453
    %v5647 = vunpack.c.h.b16 %v5453
    %v5648 = vunpack.c.l.b16 %v5454
    %v5649 = vunpack.c.h.b16 %v5454
    %v5650 = vunpack.c.l.b16 %v5455
    %v5651 = vunpack.c.l.b16 %v5456
    %v5652 = vunpack.c.h.b16 %v5456
    %v5653 = vunpack.c.l.b16 %v5457
    %v5654 = vunpack.c.h.b16 %v5457
    %v5655 = vunpack.c.l.b16 %v5458
    %v5656 = vunpack.c.l.b16 %v5459
    %v5657 = vunpack.c.h.b16 %v5459
    %v5658 = vunpack.c.l.b16 %v5460
    %v5659 = vunpack.c.h.b16 %v5460
    %v5660 = vunpack.c.l.b16 %v5461
    %v5661 = vunpack.c.l.b16 %v5462
    %v5662 = vunpack.c.h.b16 %v5462
    %v5663 = vunpack.c.l.b16 %v5463
    %v5664 = vunpack.c.h.b16 %v5463
    %v5665 = vunpack.c.l.b16 %v5464
    %v5666 = vunpack.c.l.b16 %v5465
    %v5667 = vunpack.c.h.b16 %v5465
    %v5668 = vunpack.c.l.b16 %v5466
    %v5669 = vunpack.c.h.b16 %v5466
    %v5670 = vunpack.c.l.b16 %v5467
    %v5671 = vunpack.c.l.b16 %v5468
    %v5672 = vunpack.c.h.b16 %v5468
    %v5673 = vunpack.c.l.b16 %v5469
    %v5674 = vunpack.c.h.b16 %v5469
    %v5675 = vunpack.c.l.b16 %v5470
    %v5676 = vunpack.c.l.b16 %v5471
    %v5677 = vunpack.c.h.b16 %v5471
    %v5678 = vunpack.c.l.b16 %v5472
    %v5679 = vunpack.c.h.b16 %v5472
    %v5680 = vunpack.c.l.b16 %v5473
    %v5681 = vunpack.c.l.b16 %v5474
    %v5682 = vunpack.c.h.b16 %v5474
    %v5683 = vunpack.c.l.b16 %v5475
    %v5684 = vunpack.c.h.b16 %v5475
    %v5685 = vunpack.c.l.b16 %v5476
    %v5686 = vunpack.c.l.b16 %v5477
    %v5687 = vunpack.c.h.b16 %v5477
    %v5688 = vunpack.c.l.b16 %v5478
    %v5689 = vunpack.c.h.b16 %v5478
    %v5690 = vunpack.c.l.b16 %v5479
    %v5691 = vunpack.c.l.b16 %v5480
    %v5692 = vunpack.c.h.b16 %v5480
    %v5693 = vunpack.c.l.b16 %v5481
    %v5694 = vunpack.c.h.b16 %v5481
    %v5695 = vunpack.c.l.b16 %v5482
    %v5696 = vunpack.c.l.b16 %v5483
    %v5697 = vunpack.c.h.b16 %v5483
    %v5698 = vunpack.c.l.b16 %v5484
    %v5699 = vunpack.c.h.b16 %v5484
    %v5700 = vunpack.c.l.b16 %v5485
    %v5701 = vunpack.c.l.b16 %v5486
    %v5702 = vunpack.c.h.b16 %v5486
    %v5703 = vunpack.c.l.b16 %v5487
    %v5704 = vunpack.c.h.b16 %v5487
    %v5705 = vunpack.c.l.b16 %v5488
    %v5706 = vunpack.c.l.b16 %v5489
    %v5707 = vunpack.c.h.b16 %v5489
    %v5708 = vunpack.c.l.b16 %v5490
    %v5709 = vunpack.c.h.b16 %v5490
    %v5710 = vunpack.c.l.b16 %v5491
    %v5711 = vunpack.c.l.b16 %v5492
    %v5712 = vunpack.c.h.b16 %v5492
    %v5713 = vunpack.c.l.b16 %v5493
    %v5714 = vunpack.c.h.b16 %v5493
    %v5715 = vunpack.c.l.b16 %v5494
    %v5716 = vunpack.c.l.b16 %v5495
    %v5717 = vunpack.c.h.b16 %v5495
    %v5718 = vunpack.c.l.b16 %v5496
    %v5719 = vunpack.c.h.b16 %v5496
    %v5720 = vunpack.c.l.b16 %v5497
    %v5721 = vunpack.c.l.b16 %v5498
    %v5722 = vunpack.c.h.b16 %v5498
    %v5723 = vunpack.c.l.b16 %v5499
    %v5724 = vunpack.c.h.b16 %v5499
    %v5725 = vunpack.c.l.b16 %v5500
    %v5726 = vunpack.c.l.b16 %v5501
    %v5727 = vunpack.c.h.b16 %v5501
    %v5728 = vunpack.c.l.b16 %v5502
    %v5729 = vunpack.c.h.b16 %v5502
    %v5730 = vunpack.c.l.b16 %v5503
    %v5731 = vunpack.c.l.b16 %v5504
    %v5732 = vunpack.c.h.b16 %v5504
    %v5733 = vunpack.c.l.b16 %v5505
    %v5734 = vunpack.c.h.b16 %v5505
    %v5735 = vunpack.c.l.b16 %v5506
    %v5736 = vunpack.c.l.b16 %v5507
    %v5737 = vunpack.c.h.b16 %v5507
    %v5738 = vunpack.c.l.b16 %v5508
    %v5739 = vunpack.c.h.b16 %v5508
    %v5740 = vunpack.c.l.b16 %v5509
    %v5741 = vunpack.c.l.b16 %v5510
    %v5742 = vunpack.c.h.b16 %v5510
    %v5743 = vunpack.c.l.b16 %v5511
    %v5744 = vunpack.c.h.b16 %v5511
    %v5745 = vunpack.c.l.b16 %v5512
    %v5746 = vunpack.c.l.b16 %v5513
    %v5747 = vunpack.c.h.b16 %v5513
    %v5748 = vunpack.c.l.b16 %v5514
    %v5749 = vunpack.c.h.b16 %v5514
    %v5750 = vunpack.c.l.b16 %v5515
    %v5751 = vunpack.c.l.b16 %v5516
    %v5752 = vunpack.c.h.b16 %v5516
    %v5753 = vunpack.c.l.b16 %v5517
    %v5754 = vunpack.c.h.b16 %v5517
    %v5755 = vunpack.c.l.b16 %v5518
    %v5756 = vpack.c.b16 %v5636, %v5631
    %v5757 = vpack.c.b16 %v5637, %v5632
    %v5758 = vpack.c.b16 %v5638, %v5633
    %v5759 = vpack.c.b16 %v5639, %v5634
    %v5760 = vpack.c.b16 %v5640, %v5635
    %v5761 = vpack.c.b16 %v5646, %v5641
    %v5762 = vpack.c.b16 %v5647, %v5642
    %v5763 = vpack.c.b16 %v5648, %v5643
    %v5764 = vpack.c.b16 %v5649, %v5644
    %v5765 = vpack.c.b16 %v5650, %v5645
    %v5766 = vpack.c.b16 %v5656, %v5651
    %v5767 = vpack.c.b16 %v5657, %v5652
    %v5768 = vpack.c.b16 %v5658, %v5653
    %v5769 = vpack.c.b16 %v5659, %v5654
    %v5770 = vpack.c.b16 %v5660, %v5655
    %v5771 = vpack.c.b16 %v5666, %v5661
    %v5772 = vpack.c.b16 %v5667, %v5662
    %v5773 = vpack.c.b16 %v5668, %v5663
    %v5774 = vpack.c.b16 %v5669, %v5664
    %v5775 = vpack.c.b16 %v5670, %v5665
    %v5776 = vpack.c.b16 %v5676, %v5671
    %v5777 = vpack.c.b16 %v5677, %v5672
    %v5778 = vpack.c.b16 %v5678, %v5673
    %v5779 = vpack.c.b16 %v5679, %v5674
    %v5780 = vpack.c.b16 %v5680, %v5675
    %v5781 = vpack.c.b16 %v5686, %v5681
    %v5782 = vpack.c.b16 %v5687, %v5682
    %v5783 = vpack.c.b16 %v5688, %v5683
    %v5784 = vpack.c.b16 %v5689, %v5684
    %v5785 = vpack.c.b16 %v5690, %v5685
    %v5786 = vpack.c.b16 %v5696, %v5691
    %v5787 = vpack.c.b16 %v5697, %v5692
    %v5788 = vpack.c.b16 %v5698, %v5693
    %v5789 = vpack.c.b16 %v5699, %v5694
    %v5790 = vpack.c.b16 %v5700, %v5695
    %v5791 = vpack.c.b16 %v5706, %v5701
    %v5792 = vpack.c.b16 %v5707, %v5702
    %v5793 = vpack.c.b16 %v5708, %v5703
    %v5794 = vpack.c.b16 %v5709, %v5704
    %v5795 = vpack.c.b16 %v5710, %v5705
    %v5796 = vpack.c.b16 %v5716, %v5711
    %v5797 = vpack.c.b16 %v5717, %v5712
    %v5798 = vpack.c.b16 %v5718, %v5713
    %v5799 = vpack.c.b16 %v5719, %v5714
    %v5800 = vpack.c.b16 %v5720, %v5715
    %v5801 = vpack.c.b16 %v5726, %v5721
    %v5802 = vpack.c.b16 %v5727, %v5722
    %v5803 = vpack.c.b16 %v5728, %v5723
    %v5804 = vpack.c.b16 %v5729, %v5724
    %v5805 = vpack.c.b16 %v5730, %v5725
    %v5806 = vpack.c.b16 %v5736, %v5731
    %v5807 = vpack.c.b16 %v5737, %v5732
    %v5808 = vpack.c.b16 %v5738, %v5733
    %v5809 = vpack.c.b16 %v5739, %v5734
    %v5810 = vpack.c.b16 %v5740, %v5735
    %v5811 = vpack.c.b16 %v5746, %v5741
    %v5812 = vpack.c.b16 %v5747, %v5742
    %v5813 = vpack.c.b16 %v5748, %v5743
    %v5814 = vpack.c.b16 %v5749, %v5744
    %v5815 = vpack.c.b16 %v5750, %v5745
    %v5816 = vpack.c.b16 %v5751, %v5751
    %v5817 = vpack.c.b16 %v5752, %v5752
    %v5818 = vpack.c.b16 %v5753, %v5753
    %v5819 = vpack.c.b16 %v5754, %v5754
    %v5820 = vpack.c.b16 %v5755, %v5755
    %vm5873 = vcmask 646144
    %v5875 = vsel %vm5873, %v5760, 0
    %v5878 = vsel %vm5873, %v5765, 0
    %v5881 = vsel %vm5873, %v5770, 0
    %v5884 = vsel %vm5873, %v5775, 0
    %v5887 = vsel %vm5873, %v5780, 0
    %v5890 = vsel %vm5873, %v5785, 0
    %v5893 = vsel %vm5873, %v5790, 0
    %v5896 = vsel %vm5873, %v5795, 0
    %v5899 = vsel %vm5873, %v5800, 0
    %v5902 = vsel %vm5873, %v5805, 0
    %v5905 = vsel %vm5873, %v5810, 0
    %v5908 = vsel %vm5873, %v5815, 0
    %v5911 = vsel %vm5873, %v5820, 0
    %vm5913 = vcmask 1046528
    %vm5914 = vcmask 1047552
    %v5915 = vsel %vm5913, 4294967295, 65535
    %v5916 = vsel %vm5914, %v5915, 0
    %v5918 = vand.u32 %v5555, %v5916
    %5920 = vmatpush.bf16.msra.mxu0 %v5526
    %5921 = vmatpush.bf16.msra.mxu0 %v5525
    %5922 = vmatpush.bf16.msra.mxu0 %v5524
    %5923 = vmatpush.bf16.msra.mxu0 %v5523
    %5924 = vmatpush.bf16.msra.mxu0 %v5522
    %5925 = vmatpush.bf16.msra.mxu0 %v5521
    %5926 = vmatpush.bf16.msra.mxu0 %v5520
    %5927 = vmatpush.bf16.msra.mxu0 %v5519
    %5928 = vmatmul.bf16.gmra.mxu0 %v5756
    %v5929 = vpop.f32.mrf.mxu0
    %v5930 = vadd.f32 0.0, %v5929
    %v5931 = vpop.f32.mrf.mxu0
    %v5932 = vadd.f32 0.0, %v5931
    %5933 = vmatmul.bf16.gmra.mxu0 %v5761
    %v5934 = vpop.f32.mrf.mxu0
    %v5935 = vadd.f32 0.0, %v5934
    %v5936 = vpop.f32.mrf.mxu0
    %v5937 = vadd.f32 0.0, %v5936
    %5938 = vmatmul.bf16.gmra.mxu0 %v5766
    %v5939 = vpop.f32.mrf.mxu0
    %v5940 = vadd.f32 0.0, %v5939
    %v5941 = vpop.f32.mrf.mxu0
    %v5942 = vadd.f32 0.0, %v5941
    %5943 = vmatmul.bf16.gmra.mxu0 %v5771
    %v5944 = vpop.f32.mrf.mxu0
    %v5945 = vadd.f32 0.0, %v5944
    %v5946 = vpop.f32.mrf.mxu0
    %v5947 = vadd.f32 0.0, %v5946
    %5948 = vmatmul.bf16.gmra.mxu0 %v5776
    %v5949 = vpop.f32.mrf.mxu0
    %v5950 = vadd.f32 0.0, %v5949
    %v5951 = vpop.f32.mrf.mxu0
    %v5952 = vadd.f32 0.0, %v5951
    %5953 = vmatmul.bf16.gmra.mxu0 %v5781
    %v5954 = vpop.f32.mrf.mxu0
    %v5955 = vadd.f32 0.0, %v5954
    %v5956 = vpop.f32.mrf.mxu0
    %v5957 = vadd.f32 0.0, %v5956
    %5958 = vmatmul.bf16.gmra.mxu0 %v5786
    %v5959 = vpop.f32.mrf.mxu0
    %v5960 = vadd.f32 0.0, %v5959
    %v5961 = vpop.f32.mrf.mxu0
    %v5962 = vadd.f32 0.0, %v5961
    %5963 = vmatmul.bf16.gmra.mxu0 %v5791
    %v5964 = vpop.f32.mrf.mxu0
    %v5965 = vadd.f32 0.0, %v5964
    %v5966 = vpop.f32.mrf.mxu0
    %v5967 = vadd.f32 0.0, %v5966
    %5968 = vmatmul.bf16.gmra.mxu0 %v5796
    %v5969 = vpop.f32.mrf.mxu0
    %v5970 = vadd.f32 0.0, %v5969
    %v5971 = vpop.f32.mrf.mxu0
    %v5972 = vadd.f32 0.0, %v5971
    %5973 = vmatmul.bf16.gmra.mxu0 %v5801
    %v5974 = vpop.f32.mrf.mxu0
    %v5975 = vadd.f32 0.0, %v5974
    %v5976 = vpop.f32.mrf.mxu0
    %v5977 = vadd.f32 0.0, %v5976
    %5978 = vmatmul.bf16.gmra.mxu0 %v5806
    %v5979 = vpop.f32.mrf.mxu0
    %v5980 = vadd.f32 0.0, %v5979
    %v5981 = vpop.f32.mrf.mxu0
    %v5982 = vadd.f32 0.0, %v5981
    %5983 = vmatmul.bf16.gmra.mxu0 %v5811
    %v5984 = vpop.f32.mrf.mxu0
    %v5985 = vadd.f32 0.0, %v5984
    %v5986 = vpop.f32.mrf.mxu0
    %v5987 = vadd.f32 0.0, %v5986
    %5988 = vmatmul.bf16.gmra.mxu0 %v5816
    %v5989 = vpop.f32.mrf.mxu0
    %v5990 = vadd.f32 0.0, %v5989
    %v5991 = vpop.f32.mrf.mxu0
    %5992 = vdwg.mxu0
    %5993 = vmatpush.bf16.msra.mxu0 %v5534
    %5994 = vmatpush.bf16.msra.mxu0 %v5533
    %5995 = vmatpush.bf16.msra.mxu0 %v5532
    %5996 = vmatpush.bf16.msra.mxu0 %v5531
    %5997 = vmatpush.bf16.msra.mxu0 %v5530
    %5998 = vmatpush.bf16.msra.mxu0 %v5529
    %5999 = vmatpush.bf16.msra.mxu0 %v5528
    %6000 = vmatpush.bf16.msra.mxu0 %v5527
    %6001 = vmatmul.bf16.gmra.mxu0 %v5757
    %v6002 = vpop.f32.mrf.mxu0
    %v6003 = vadd.f32 %v5930, %v6002
    %v6004 = vpop.f32.mrf.mxu0
    %v6005 = vadd.f32 %v5932, %v6004
    %6006 = vmatmul.bf16.gmra.mxu0 %v5762
    %v6007 = vpop.f32.mrf.mxu0
    %v6008 = vadd.f32 %v5935, %v6007
    %v6009 = vpop.f32.mrf.mxu0
    %v6010 = vadd.f32 %v5937, %v6009
    %6011 = vmatmul.bf16.gmra.mxu0 %v5767
    %v6012 = vpop.f32.mrf.mxu0
    %v6013 = vadd.f32 %v5940, %v6012
    %v6014 = vpop.f32.mrf.mxu0
    %v6015 = vadd.f32 %v5942, %v6014
    %6016 = vmatmul.bf16.gmra.mxu0 %v5772
    %v6017 = vpop.f32.mrf.mxu0
    %v6018 = vadd.f32 %v5945, %v6017
    %v6019 = vpop.f32.mrf.mxu0
    %v6020 = vadd.f32 %v5947, %v6019
    %6021 = vmatmul.bf16.gmra.mxu0 %v5777
    %v6022 = vpop.f32.mrf.mxu0
    %v6023 = vadd.f32 %v5950, %v6022
    %v6024 = vpop.f32.mrf.mxu0
    %v6025 = vadd.f32 %v5952, %v6024
    %6026 = vmatmul.bf16.gmra.mxu0 %v5782
    %v6027 = vpop.f32.mrf.mxu0
    %v6028 = vadd.f32 %v5955, %v6027
    %v6029 = vpop.f32.mrf.mxu0
    %v6030 = vadd.f32 %v5957, %v6029
    %6031 = vmatmul.bf16.gmra.mxu0 %v5787
    %v6032 = vpop.f32.mrf.mxu0
    %v6033 = vadd.f32 %v5960, %v6032
    %v6034 = vpop.f32.mrf.mxu0
    %v6035 = vadd.f32 %v5962, %v6034
    %6036 = vmatmul.bf16.gmra.mxu0 %v5792
    %v6037 = vpop.f32.mrf.mxu0
    %v6038 = vadd.f32 %v5965, %v6037
    %v6039 = vpop.f32.mrf.mxu0
    %v6040 = vadd.f32 %v5967, %v6039
    %6041 = vmatmul.bf16.gmra.mxu0 %v5797
    %v6042 = vpop.f32.mrf.mxu0
    %v6043 = vadd.f32 %v5970, %v6042
    %v6044 = vpop.f32.mrf.mxu0
    %v6045 = vadd.f32 %v5972, %v6044
    %6046 = vmatmul.bf16.gmra.mxu0 %v5802
    %v6047 = vpop.f32.mrf.mxu0
    %v6048 = vadd.f32 %v5975, %v6047
    %v6049 = vpop.f32.mrf.mxu0
    %v6050 = vadd.f32 %v5977, %v6049
    %6051 = vmatmul.bf16.gmra.mxu0 %v5807
    %v6052 = vpop.f32.mrf.mxu0
    %v6053 = vadd.f32 %v5980, %v6052
    %v6054 = vpop.f32.mrf.mxu0
    %v6055 = vadd.f32 %v5982, %v6054
    %6056 = vmatmul.bf16.gmra.mxu0 %v5812
    %v6057 = vpop.f32.mrf.mxu0
    %v6058 = vadd.f32 %v5985, %v6057
    %v6059 = vpop.f32.mrf.mxu0
    %v6060 = vadd.f32 %v5987, %v6059
    %6061 = vmatmul.bf16.gmra.mxu0 %v5817
    %v6062 = vpop.f32.mrf.mxu0
    %v6063 = vadd.f32 %v5990, %v6062
    %v6064 = vpop.f32.mrf.mxu0
    %6065 = vdwg.mxu0
    %6066 = vmatpush.bf16.msra.mxu0 %v5542
    %6067 = vmatpush.bf16.msra.mxu0 %v5541
    %6068 = vmatpush.bf16.msra.mxu0 %v5540
    %6069 = vmatpush.bf16.msra.mxu0 %v5539
    %6070 = vmatpush.bf16.msra.mxu0 %v5538
    %6071 = vmatpush.bf16.msra.mxu0 %v5537
    %6072 = vmatpush.bf16.msra.mxu0 %v5536
    %6073 = vmatpush.bf16.msra.mxu0 %v5535
    %6074 = vmatmul.bf16.gmra.mxu0 %v5758
    %v6075 = vpop.f32.mrf.mxu0
    %v6076 = vadd.f32 %v6003, %v6075
    %v6077 = vpop.f32.mrf.mxu0
    %v6078 = vadd.f32 %v6005, %v6077
    %6079 = vmatmul.bf16.gmra.mxu0 %v5763
    %v6080 = vpop.f32.mrf.mxu0
    %v6081 = vadd.f32 %v6008, %v6080
    %v6082 = vpop.f32.mrf.mxu0
    %v6083 = vadd.f32 %v6010, %v6082
    %6084 = vmatmul.bf16.gmra.mxu0 %v5768
    %v6085 = vpop.f32.mrf.mxu0
    %v6086 = vadd.f32 %v6013, %v6085
    %v6087 = vpop.f32.mrf.mxu0
    %v6088 = vadd.f32 %v6015, %v6087
    %6089 = vmatmul.bf16.gmra.mxu0 %v5773
    %v6090 = vpop.f32.mrf.mxu0
    %v6091 = vadd.f32 %v6018, %v6090
    %v6092 = vpop.f32.mrf.mxu0
    %v6093 = vadd.f32 %v6020, %v6092
    %6094 = vmatmul.bf16.gmra.mxu0 %v5778
    %v6095 = vpop.f32.mrf.mxu0
    %v6096 = vadd.f32 %v6023, %v6095
    %v6097 = vpop.f32.mrf.mxu0
    %v6098 = vadd.f32 %v6025, %v6097
    %6099 = vmatmul.bf16.gmra.mxu0 %v5783
    %v6100 = vpop.f32.mrf.mxu0
    %v6101 = vadd.f32 %v6028, %v6100
    %v6102 = vpop.f32.mrf.mxu0
    %v6103 = vadd.f32 %v6030, %v6102
    %6104 = vmatmul.bf16.gmra.mxu0 %v5788
    %v6105 = vpop.f32.mrf.mxu0
    %v6106 = vadd.f32 %v6033, %v6105
    %v6107 = vpop.f32.mrf.mxu0
    %v6108 = vadd.f32 %v6035, %v6107
    %6109 = vmatmul.bf16.gmra.mxu0 %v5793
    %v6110 = vpop.f32.mrf.mxu0
    %v6111 = vadd.f32 %v6038, %v6110
    %v6112 = vpop.f32.mrf.mxu0
    %v6113 = vadd.f32 %v6040, %v6112
    %6114 = vmatmul.bf16.gmra.mxu0 %v5798
    %v6115 = vpop.f32.mrf.mxu0
    %v6116 = vadd.f32 %v6043, %v6115
    %v6117 = vpop.f32.mrf.mxu0
    %v6118 = vadd.f32 %v6045, %v6117
    %6119 = vmatmul.bf16.gmra.mxu0 %v5803
    %v6120 = vpop.f32.mrf.mxu0
    %v6121 = vadd.f32 %v6048, %v6120
    %v6122 = vpop.f32.mrf.mxu0
    %v6123 = vadd.f32 %v6050, %v6122
    %6124 = vmatmul.bf16.gmra.mxu0 %v5808
    %v6125 = vpop.f32.mrf.mxu0
    %v6126 = vadd.f32 %v6053, %v6125
    %v6127 = vpop.f32.mrf.mxu0
    %v6128 = vadd.f32 %v6055, %v6127
    %6129 = vmatmul.bf16.gmra.mxu0 %v5813
    %v6130 = vpop.f32.mrf.mxu0
    %v6131 = vadd.f32 %v6058, %v6130
    %v6132 = vpop.f32.mrf.mxu0
    %v6133 = vadd.f32 %v6060, %v6132
    %6134 = vmatmul.bf16.gmra.mxu0 %v5818
    %v6135 = vpop.f32.mrf.mxu0
    %v6136 = vadd.f32 %v6063, %v6135
    %v6137 = vpop.f32.mrf.mxu0
    %6138 = vdwg.mxu0
    %6139 = vmatpush.bf16.msra.mxu0 %v5550
    %6140 = vmatpush.bf16.msra.mxu0 %v5549
    %6141 = vmatpush.bf16.msra.mxu0 %v5548
    %6142 = vmatpush.bf16.msra.mxu0 %v5547
    %6143 = vmatpush.bf16.msra.mxu0 %v5546
    %6144 = vmatpush.bf16.msra.mxu0 %v5545
    %6145 = vmatpush.bf16.msra.mxu0 %v5544
    %6146 = vmatpush.bf16.msra.mxu0 %v5543
    %6147 = vmatmul.bf16.gmra.mxu0 %v5759
    %v6148 = vpop.f32.mrf.mxu0
    %v6149 = vadd.f32 %v6076, %v6148
    %v6150 = vpop.f32.mrf.mxu0
    %v6151 = vadd.f32 %v6078, %v6150
    %6152 = vmatmul.bf16.gmra.mxu0 %v5764
    %v6153 = vpop.f32.mrf.mxu0
    %v6154 = vadd.f32 %v6081, %v6153
    %v6155 = vpop.f32.mrf.mxu0
    %v6156 = vadd.f32 %v6083, %v6155
    %6157 = vmatmul.bf16.gmra.mxu0 %v5769
    %v6158 = vpop.f32.mrf.mxu0
    %v6159 = vadd.f32 %v6086, %v6158
    %v6160 = vpop.f32.mrf.mxu0
    %v6161 = vadd.f32 %v6088, %v6160
    %6162 = vmatmul.bf16.gmra.mxu0 %v5774
    %v6163 = vpop.f32.mrf.mxu0
    %v6164 = vadd.f32 %v6091, %v6163
    %v6165 = vpop.f32.mrf.mxu0
    %v6166 = vadd.f32 %v6093, %v6165
    %6167 = vmatmul.bf16.gmra.mxu0 %v5779
    %v6168 = vpop.f32.mrf.mxu0
    %v6169 = vadd.f32 %v6096, %v6168
    %v6170 = vpop.f32.mrf.mxu0
    %v6171 = vadd.f32 %v6098, %v6170
    %6172 = vmatmul.bf16.gmra.mxu0 %v5784
    %v6173 = vpop.f32.mrf.mxu0
    %v6174 = vadd.f32 %v6101, %v6173
    %v6175 = vpop.f32.mrf.mxu0
    %v6176 = vadd.f32 %v6103, %v6175
    %6177 = vmatmul.bf16.gmra.mxu0 %v5789
    %v6178 = vpop.f32.mrf.mxu0
    %v6179 = vadd.f32 %v6106, %v6178
    %v6180 = vpop.f32.mrf.mxu0
    %v6181 = vadd.f32 %v6108, %v6180
    %6182 = vmatmul.bf16.gmra.mxu0 %v5794
    %v6183 = vpop.f32.mrf.mxu0
    %v6184 = vadd.f32 %v6111, %v6183
    %v6185 = vpop.f32.mrf.mxu0
    %v6186 = vadd.f32 %v6113, %v6185
    %6187 = vmatmul.bf16.gmra.mxu0 %v5799
    %v6188 = vpop.f32.mrf.mxu0
    %v6189 = vadd.f32 %v6116, %v6188
    %v6190 = vpop.f32.mrf.mxu0
    %v6191 = vadd.f32 %v6118, %v6190
    %6192 = vmatmul.bf16.gmra.mxu0 %v5804
    %v6193 = vpop.f32.mrf.mxu0
    %v6194 = vadd.f32 %v6121, %v6193
    %v6195 = vpop.f32.mrf.mxu0
    %v6196 = vadd.f32 %v6123, %v6195
    %6197 = vmatmul.bf16.gmra.mxu0 %v5809
    %v6198 = vpop.f32.mrf.mxu0
    %v6199 = vadd.f32 %v6126, %v6198
    %v6200 = vpop.f32.mrf.mxu0
    %v6201 = vadd.f32 %v6128, %v6200
    %6202 = vmatmul.bf16.gmra.mxu0 %v5814
    %v6203 = vpop.f32.mrf.mxu0
    %v6204 = vadd.f32 %v6131, %v6203
    %v6205 = vpop.f32.mrf.mxu0
    %v6206 = vadd.f32 %v6133, %v6205
    %6207 = vmatmul.bf16.gmra.mxu0 %v5819
    %v6208 = vpop.f32.mrf.mxu0
    %v6209 = vadd.f32 %v6136, %v6208
    %v6210 = vpop.f32.mrf.mxu0
    %6211 = vdwg.mxu0
    %6212 = vmatpush.bf16.msra.mxu0 0
    %6213 = vmatpush.bf16.msra.mxu0 0
    %6214 = vmatpush.bf16.msra.mxu0 0
    %6215 = vmatpush.bf16.msra.mxu0 %v5918
    %6216 = vmatpush.bf16.msra.mxu0 %v5554
    %6217 = vmatpush.bf16.msra.mxu0 %v5553
    %6218 = vmatpush.bf16.msra.mxu0 %v5552
    %6219 = vmatpush.bf16.msra.mxu0 %v5551
    %6220 = vmatmul.bf16.gmra.mxu0 %v5875
    %v6221 = vpop.f32.mrf.mxu0
    %v6222 = vadd.f32 %v6149, %v6221
    %v6223 = vpop.f32.mrf.mxu0
    %v6224 = vadd.f32 %v6151, %v6223
    %6225 = vmatmul.bf16.gmra.mxu0 %v5878
    %v6226 = vpop.f32.mrf.mxu0
    %v6227 = vadd.f32 %v6154, %v6226
    %v6228 = vpop.f32.mrf.mxu0
    %v6229 = vadd.f32 %v6156, %v6228
    %6230 = vmatmul.bf16.gmra.mxu0 %v5881
    %v6231 = vpop.f32.mrf.mxu0
    %v6232 = vadd.f32 %v6159, %v6231
    %v6233 = vpop.f32.mrf.mxu0
    %v6234 = vadd.f32 %v6161, %v6233
    %6235 = vmatmul.bf16.gmra.mxu0 %v5884
    %v6236 = vpop.f32.mrf.mxu0
    %v6237 = vadd.f32 %v6164, %v6236
    %v6238 = vpop.f32.mrf.mxu0
    %v6239 = vadd.f32 %v6166, %v6238
    %6240 = vmatmul.bf16.gmra.mxu0 %v5887
    %v6241 = vpop.f32.mrf.mxu0
    %v6242 = vadd.f32 %v6169, %v6241
    %v6243 = vpop.f32.mrf.mxu0
    %v6244 = vadd.f32 %v6171, %v6243
    %6245 = vmatmul.bf16.gmra.mxu0 %v5890
    %v6246 = vpop.f32.mrf.mxu0
    %v6247 = vadd.f32 %v6174, %v6246
    %v6248 = vpop.f32.mrf.mxu0
    %v6249 = vadd.f32 %v6176, %v6248
    %6250 = vmatmul.bf16.gmra.mxu0 %v5893
    %v6251 = vpop.f32.mrf.mxu0
    %v6252 = vadd.f32 %v6179, %v6251
    %v6253 = vpop.f32.mrf.mxu0
    %v6254 = vadd.f32 %v6181, %v6253
    %6255 = vmatmul.bf16.gmra.mxu0 %v5896
    %v6256 = vpop.f32.mrf.mxu0
    %v6257 = vadd.f32 %v6184, %v6256
    %v6258 = vpop.f32.mrf.mxu0
    %v6259 = vadd.f32 %v6186, %v6258
    %6260 = vmatmul.bf16.gmra.mxu0 %v5899
    %v6261 = vpop.f32.mrf.mxu0
    %v6262 = vadd.f32 %v6189, %v6261
    %v6263 = vpop.f32.mrf.mxu0
    %v6264 = vadd.f32 %v6191, %v6263
    %6265 = vmatmul.bf16.gmra.mxu0 %v5902
    %v6266 = vpop.f32.mrf.mxu0
    %v6267 = vadd.f32 %v6194, %v6266
    %v6268 = vpop.f32.mrf.mxu0
    %v6269 = vadd.f32 %v6196, %v6268
    %6270 = vmatmul.bf16.gmra.mxu0 %v5905
    %v6271 = vpop.f32.mrf.mxu0
    %v6272 = vadd.f32 %v6199, %v6271
    %v6273 = vpop.f32.mrf.mxu0
    %v6274 = vadd.f32 %v6201, %v6273
    %6275 = vmatmul.bf16.gmra.mxu0 %v5908
    %v6276 = vpop.f32.mrf.mxu0
    %v6277 = vadd.f32 %v6204, %v6276
    %v6278 = vpop.f32.mrf.mxu0
    %v6279 = vadd.f32 %v6206, %v6278
    %6280 = vmatmul.bf16.gmra.mxu0 %v5911
    %v6281 = vpop.f32.mrf.mxu0
    %v6282 = vadd.f32 %v6209, %v6281
    %v6283 = vpop.f32.mrf.mxu0
    %6284 = vdwg.mxu0
    %6285 = vst.msk [vmem:[#allocation3] sm:$0xff] %vm4617, %v6222
    %6286 = vst.msk [vmem:[#allocation3 + $0x8] sm:$0xff] %vm4617, %v6224
    %6287 = vst.msk [vmem:[#allocation3 + $0x10] sm:$0xff] %vm4617, %v6227
    %6288 = vst.msk [vmem:[#allocation3 + $0x18] sm:$0xff] %vm4617, %v6229
    %6289 = vst.msk [vmem:[#allocation3 + $0x20] sm:$0xff] %vm4617, %v6232
    %6290 = vst.msk [vmem:[#allocation3 + $0x28] sm:$0xff] %vm4617, %v6234
    %6291 = vst.msk [vmem:[#allocation3 + $0x30] sm:$0xff] %vm4617, %v6237
    %6292 = vst.msk [vmem:[#allocation3 + $0x38] sm:$0xff] %vm4617, %v6239
    %6293 = vst.msk [vmem:[#allocation3 + $0x40] sm:$0xff] %vm4617, %v6242
    %6294 = vst.msk [vmem:[#allocation3 + $0x48] sm:$0xff] %vm4617, %v6244
    %6295 = vst.msk [vmem:[#allocation3 + $0x50] sm:$0xff] %vm4617, %v6247
    %6296 = vst.msk [vmem:[#allocation3 + $0x58] sm:$0xff] %vm4617, %v6249
    %6297 = vst.msk [vmem:[#allocation3 + $0x60] sm:$0xff] %vm4617, %v6252
    %6298 = vst.msk [vmem:[#allocation3 + $0x68] sm:$0xff] %vm4617, %v6254
    %6299 = vst.msk [vmem:[#allocation3 + $0x70] sm:$0xff] %vm4617, %v6257
    %6300 = vst.msk [vmem:[#allocation3 + $0x78] sm:$0xff] %vm4617, %v6259
    %6301 = vst.msk [vmem:[#allocation3 + $0x80] sm:$0xff] %vm4617, %v6262
    %6302 = vst.msk [vmem:[#allocation3 + $0x88] sm:$0xff] %vm4617, %v6264
    %6303 = vst.msk [vmem:[#allocation3 + $0x90] sm:$0xff] %vm4617, %v6267
    %6304 = vst.msk [vmem:[#allocation3 + $0x98] sm:$0xff] %vm4617, %v6269
    %6305 = vst.msk [vmem:[#allocation3 + $0xa0] sm:$0xff] %vm4617, %v6272
    %6306 = vst.msk [vmem:[#allocation3 + $0xa8] sm:$0xff] %vm4617, %v6274
    %6307 = vst.msk [vmem:[#allocation3 + $0xb0] sm:$0xff] %vm4617, %v6277
    %6308 = vst.msk [vmem:[#allocation3 + $0xb8] sm:$0xff] %vm4617, %v6279
    %6309 = vst.msk [vmem:[#allocation3 + $0xc0] sm:$0xff] %vm4617, %v6282
    %v6310 = vld [vmem:[#allocation3] sm:$0xff]
    %v6311 = vld [vmem:[#allocation3 + $0x8] sm:$0xff]
    %v6312 = vld [vmem:[#allocation3 + $0x10] sm:$0xff]
    %v6313 = vld [vmem:[#allocation3 + $0x18] sm:$0xff]
    %v6314 = vld [vmem:[#allocation3 + $0x20] sm:$0xff]
    %v6315 = vld [vmem:[#allocation3 + $0x28] sm:$0xff]
    %v6316 = vld [vmem:[#allocation3 + $0x30] sm:$0xff]
    %v6317 = vld [vmem:[#allocation3 + $0x38] sm:$0xff]
    %v6318 = vld [vmem:[#allocation3 + $0x40] sm:$0xff]
    %v6319 = vld [vmem:[#allocation3 + $0x48] sm:$0xff]
    %v6320 = vld [vmem:[#allocation3 + $0x50] sm:$0xff]
    %v6321 = vld [vmem:[#allocation3 + $0x58] sm:$0xff]
    %v6322 = vld [vmem:[#allocation3 + $0x60] sm:$0xff]
    %v6323 = vld [vmem:[#allocation3 + $0x68] sm:$0xff]
    %v6324 = vld [vmem:[#allocation3 + $0x70] sm:$0xff]
    %v6325 = vld [vmem:[#allocation3 + $0x78] sm:$0xff]
    %v6326 = vld [vmem:[#allocation3 + $0x80] sm:$0xff]
    %v6327 = vld [vmem:[#allocation3 + $0x88] sm:$0xff]
    %v6328 = vld [vmem:[#allocation3 + $0x90] sm:$0xff]
    %v6329 = vld [vmem:[#allocation3 + $0x98] sm:$0xff]
    %v6330 = vld [vmem:[#allocation3 + $0xa0] sm:$0xff]
    %v6331 = vld [vmem:[#allocation3 + $0xa8] sm:$0xff]
    %v6332 = vld [vmem:[#allocation3 + $0xb0] sm:$0x3]
    %v6333 = vpack.c.bf16 %v6311, %v6310
    %v6334 = vpack.c.bf16 %v6313, %v6312
    %v6335 = vpack.c.bf16 %v6315, %v6314
    %v6336 = vpack.c.bf16 %v6317, %v6316
    %v6337 = vpack.c.bf16 %v6319, %v6318
    %v6338 = vpack.c.bf16 %v6321, %v6320
    %v6339 = vpack.c.bf16 %v6323, %v6322
    %v6340 = vpack.c.bf16 %v6325, %v6324
    %v6341 = vpack.c.bf16 %v6327, %v6326
    %v6342 = vpack.c.bf16 %v6329, %v6328
    %v6343 = vpack.c.bf16 %v6331, %v6330
    %v6344 = vpack.c.bf16 %v6332, %v6332
    %v6345 = vld [vmem:[%s5] sm:$0xf]
    %v6346 = vld [vmem:[%s5 + $0x4] sm:$0xf]
    %v6347 = vld [vmem:[#allocation3 + $0x1] sm:$0xff]
    %v6348 = vld [vmem:[#allocation3 + $0x9] sm:$0xff]
    %v6349 = vld [vmem:[#allocation3 + $0x11] sm:$0xff]
    %v6350 = vld [vmem:[#allocation3 + $0x19] sm:$0xff]
    %v6351 = vld [vmem:[#allocation3 + $0x21] sm:$0xff]
    %v6352 = vld [vmem:[#allocation3 + $0x29] sm:$0xff]
    %v6353 = vld [vmem:[#allocation3 + $0x31] sm:$0xff]
    %v6354 = vld [vmem:[#allocation3 + $0x39] sm:$0xff]
    %v6355 = vld [vmem:[#allocation3 + $0x41] sm:$0xff]
    %v6356 = vld [vmem:[#allocation3 + $0x49] sm:$0xff]
    %v6357 = vld [vmem:[#allocation3 + $0x51] sm:$0xff]
    %v6358 = vld [vmem:[#allocation3 + $0x59] sm:$0xff]
    %v6359 = vld [vmem:[#allocation3 + $0x61] sm:$0xff]
    %v6360 = vld [vmem:[#allocation3 + $0x69] sm:$0xff]
    %v6361 = vld [vmem:[#allocation3 + $0x71] sm:$0xff]
    %v6362 = vld [vmem:[#allocation3 + $0x79] sm:$0xff]
    %v6363 = vld [vmem:[#allocation3 + $0x81] sm:$0xff]
    %v6364 = vld [vmem:[#allocation3 + $0x89] sm:$0xff]
    %v6365 = vld [vmem:[#allocation3 + $0x91] sm:$0xff]
    %v6366 = vld [vmem:[#allocation3 + $0x99] sm:$0xff]
    %v6367 = vld [vmem:[#allocation3 + $0xa1] sm:$0xff]
    %v6368 = vld [vmem:[#allocation3 + $0xa9] sm:$0xff]
    %v6369 = vld [vmem:[#allocation3 + $0xb1] sm:$0x3]
    %v6370 = vpack.c.bf16 %v6348, %v6347
    %v6371 = vpack.c.bf16 %v6350, %v6349
    %v6372 = vpack.c.bf16 %v6352, %v6351
    %v6373 = vpack.c.bf16 %v6354, %v6353
    %v6374 = vpack.c.bf16 %v6356, %v6355
    %v6375 = vpack.c.bf16 %v6358, %v6357
    %v6376 = vpack.c.bf16 %v6360, %v6359
    %v6377 = vpack.c.bf16 %v6362, %v6361
    %v6378 = vpack.c.bf16 %v6364, %v6363
    %v6379 = vpack.c.bf16 %v6366, %v6365
    %v6380 = vpack.c.bf16 %v6368, %v6367
    %v6381 = vpack.c.bf16 %v6369, %v6369
    %v6382 = vld [vmem:[%s5 + $0x8] sm:$0xf]
    %v6383 = vld [vmem:[%s5 + $0xc] sm:$0xf]
    %v6386 = vunpack.c.l.b16 %v6382
    %v6387 = vunpack.c.l.b16 %v6383
    %v6388 = vpack.c.b16 %v6387, %v6386
    %v6391 = vsel %vm4617, %v6370, 0
    %v6394 = vsel %vm4617, %v6371, 0
    %v6397 = vsel %vm4617, %v6372, 0
    %v6400 = vsel %vm4617, %v6373, 0
    %v6403 = vsel %vm4617, %v6374, 0
    %v6406 = vsel %vm4617, %v6375, 0
    %v6409 = vsel %vm4617, %v6376, 0
    %v6412 = vsel %vm4617, %v6377, 0
    %v6415 = vsel %vm4617, %v6378, 0
    %v6418 = vsel %vm4617, %v6379, 0
    %v6421 = vsel %vm4617, %v6380, 0
    %v6424 = vsel %vm4617, %v6381, 0
    %6426 = vmatpush.bf16.msra.mxu0 0
    %6427 = vmatpush.bf16.msra.mxu0 0
    %6428 = vmatpush.bf16.msra.mxu0 0
    %6429 = vmatpush.bf16.msra.mxu0 0
    %6430 = vmatpush.bf16.msra.mxu0 0
    %6431 = vmatpush.bf16.msra.mxu0 0
    %6432 = vmatpush.bf16.msra.mxu0 0
    %6433 = vmatpush.bf16.msra.mxu0 %v6388
    %6434 = vmatmul.bf16.gmra.mxu0 %v6391
    %v6435 = vpop.f32.mrf.mxu0
    %v6436 = vadd.f32 0.0, %v6435
    %v6437 = vpop.f32.mrf.mxu0
    %v6438 = vadd.f32 0.0, %v6437
    %6439 = vmatmul.bf16.gmra.mxu0 %v6394
    %v6440 = vpop.f32.mrf.mxu0
    %v6441 = vadd.f32 0.0, %v6440
    %v6442 = vpop.f32.mrf.mxu0
    %v6443 = vadd.f32 0.0, %v6442
    %6444 = vmatmul.bf16.gmra.mxu0 %v6397
    %v6445 = vpop.f32.mrf.mxu0
    %v6446 = vadd.f32 0.0, %v6445
    %v6447 = vpop.f32.mrf.mxu0
    %v6448 = vadd.f32 0.0, %v6447
    %6449 = vmatmul.bf16.gmra.mxu0 %v6400
    %v6450 = vpop.f32.mrf.mxu0
    %v6451 = vadd.f32 0.0, %v6450
    %v6452 = vpop.f32.mrf.mxu0
    %v6453 = vadd.f32 0.0, %v6452
    %6454 = vmatmul.bf16.gmra.mxu0 %v6403
    %v6455 = vpop.f32.mrf.mxu0
    %v6456 = vadd.f32 0.0, %v6455
    %v6457 = vpop.f32.mrf.mxu0
    %v6458 = vadd.f32 0.0, %v6457
    %6459 = vmatmul.bf16.gmra.mxu0 %v6406
    %v6460 = vpop.f32.mrf.mxu0
    %v6461 = vadd.f32 0.0, %v6460
    %v6462 = vpop.f32.mrf.mxu0
    %v6463 = vadd.f32 0.0, %v6462
    %6464 = vmatmul.bf16.gmra.mxu0 %v6409
    %v6465 = vpop.f32.mrf.mxu0
    %v6466 = vadd.f32 0.0, %v6465
    %v6467 = vpop.f32.mrf.mxu0
    %v6468 = vadd.f32 0.0, %v6467
    %6469 = vmatmul.bf16.gmra.mxu0 %v6412
    %v6470 = vpop.f32.mrf.mxu0
    %v6471 = vadd.f32 0.0, %v6470
    %v6472 = vpop.f32.mrf.mxu0
    %v6473 = vadd.f32 0.0, %v6472
    %6474 = vmatmul.bf16.gmra.mxu0 %v6415
    %v6475 = vpop.f32.mrf.mxu0
    %v6476 = vadd.f32 0.0, %v6475
    %v6477 = vpop.f32.mrf.mxu0
    %v6478 = vadd.f32 0.0, %v6477
    %6479 = vmatmul.bf16.gmra.mxu0 %v6418
    %v6480 = vpop.f32.mrf.mxu0
    %v6481 = vadd.f32 0.0, %v6480
    %v6482 = vpop.f32.mrf.mxu0
    %v6483 = vadd.f32 0.0, %v6482
    %6484 = vmatmul.bf16.gmra.mxu0 %v6421
    %v6485 = vpop.f32.mrf.mxu0
    %v6486 = vadd.f32 0.0, %v6485
    %v6487 = vpop.f32.mrf.mxu0
    %v6488 = vadd.f32 0.0, %v6487
    %6489 = vmatmul.bf16.gmra.mxu0 %v6424
    %v6490 = vpop.f32.mrf.mxu0
    %v6491 = vadd.f32 0.0, %v6490
    %v6492 = vpop.f32.mrf.mxu0
    %6493 = vdwg.mxu0
    %v6496 = vunpack.c.l.b16 %v6345
    %v6497 = vunpack.c.l.b16 %v6346
    %v6498 = vpack.c.b16 %v6497, %v6496
    %v6501 = vsel %vm4617, %v6333, 0
    %v6504 = vsel %vm4617, %v6334, 0
    %v6507 = vsel %vm4617, %v6335, 0
    %v6510 = vsel %vm4617, %v6336, 0
    %v6513 = vsel %vm4617, %v6337, 0
    %v6516 = vsel %vm4617, %v6338, 0
    %v6519 = vsel %vm4617, %v6339, 0
    %v6522 = vsel %vm4617, %v6340, 0
    %v6525 = vsel %vm4617, %v6341, 0
    %v6528 = vsel %vm4617, %v6342, 0
    %v6531 = vsel %vm4617, %v6343, 0
    %v6534 = vsel %vm4617, %v6344, 0
    %6536 = vmatpush.bf16.msra.mxu0 0
    %6537 = vmatpush.bf16.msra.mxu0 0
    %6538 = vmatpush.bf16.msra.mxu0 0
    %6539 = vmatpush.bf16.msra.mxu0 0
    %6540 = vmatpush.bf16.msra.mxu0 0
    %6541 = vmatpush.bf16.msra.mxu0 0
    %6542 = vmatpush.bf16.msra.mxu0 0
    %6543 = vmatpush.bf16.msra.mxu0 %v6498
    %6544 = vmatmul.bf16.gmra.mxu0 %v6501
    %v6545 = vpop.f32.mrf.mxu0
    %v6546 = vadd.f32 %v6436, %v6545
    %v6547 = vpop.f32.mrf.mxu0
    %v6548 = vadd.f32 %v6438, %v6547
    %6549 = vmatmul.bf16.gmra.mxu0 %v6504
    %v6550 = vpop.f32.mrf.mxu0
    %v6551 = vadd.f32 %v6441, %v6550
    %v6552 = vpop.f32.mrf.mxu0
    %v6553 = vadd.f32 %v6443, %v6552
    %6554 = vmatmul.bf16.gmra.mxu0 %v6507
    %v6555 = vpop.f32.mrf.mxu0
    %v6556 = vadd.f32 %v6446, %v6555
    %v6557 = vpop.f32.mrf.mxu0
    %v6558 = vadd.f32 %v6448, %v6557
    %6559 = vmatmul.bf16.gmra.mxu0 %v6510
    %v6560 = vpop.f32.mrf.mxu0
    %v6561 = vadd.f32 %v6451, %v6560
    %v6562 = vpop.f32.mrf.mxu0
    %v6563 = vadd.f32 %v6453, %v6562
    %6564 = vmatmul.bf16.gmra.mxu0 %v6513
    %v6565 = vpop.f32.mrf.mxu0
    %v6566 = vadd.f32 %v6456, %v6565
    %v6567 = vpop.f32.mrf.mxu0
    %v6568 = vadd.f32 %v6458, %v6567
    %6569 = vmatmul.bf16.gmra.mxu0 %v6516
    %v6570 = vpop.f32.mrf.mxu0
    %v6571 = vadd.f32 %v6461, %v6570
    %v6572 = vpop.f32.mrf.mxu0
    %v6573 = vadd.f32 %v6463, %v6572
    %6574 = vmatmul.bf16.gmra.mxu0 %v6519
    %v6575 = vpop.f32.mrf.mxu0
    %v6576 = vadd.f32 %v6466, %v6575
    %v6577 = vpop.f32.mrf.mxu0
    %v6578 = vadd.f32 %v6468, %v6577
    %6579 = vmatmul.bf16.gmra.mxu0 %v6522
    %v6580 = vpop.f32.mrf.mxu0
    %v6581 = vadd.f32 %v6471, %v6580
    %v6582 = vpop.f32.mrf.mxu0
    %v6583 = vadd.f32 %v6473, %v6582
    %6584 = vmatmul.bf16.gmra.mxu0 %v6525
    %v6585 = vpop.f32.mrf.mxu0
    %v6586 = vadd.f32 %v6476, %v6585
    %v6587 = vpop.f32.mrf.mxu0
    %v6588 = vadd.f32 %v6478, %v6587
    %6589 = vmatmul.bf16.gmra.mxu0 %v6528
    %v6590 = vpop.f32.mrf.mxu0
    %v6591 = vadd.f32 %v6481, %v6590
    %v6592 = vpop.f32.mrf.mxu0
    %v6593 = vadd.f32 %v6483, %v6592
    %6594 = vmatmul.bf16.gmra.mxu0 %v6531
    %v6595 = vpop.f32.mrf.mxu0
    %v6596 = vadd.f32 %v6486, %v6595
    %v6597 = vpop.f32.mrf.mxu0
    %v6598 = vadd.f32 %v6488, %v6597
    %6599 = vmatmul.bf16.gmra.mxu0 %v6534
    %v6600 = vpop.f32.mrf.mxu0
    %v6601 = vadd.f32 %v6491, %v6600
    %v6602 = vpop.f32.mrf.mxu0
    %6603 = vdwg.mxu0
    %v6604 = vld [vmem:[#allocation3 + $0x2] sm:$0xff]
    %v6605 = vld [vmem:[#allocation3 + $0xa] sm:$0xff]
    %v6606 = vld [vmem:[#allocation3 + $0x12] sm:$0xff]
    %v6607 = vld [vmem:[#allocation3 + $0x1a] sm:$0xff]
    %v6608 = vld [vmem:[#allocation3 + $0x22] sm:$0xff]
    %v6609 = vld [vmem:[#allocation3 + $0x2a] sm:$0xff]
    %v6610 = vld [vmem:[#allocation3 + $0x32] sm:$0xff]
    %v6611 = vld [vmem:[#allocation3 + $0x3a] sm:$0xff]
    %v6612 = vld [vmem:[#allocation3 + $0x42] sm:$0xff]
    %v6613 = vld [vmem:[#allocation3 + $0x4a] sm:$0xff]
    %v6614 = vld [vmem:[#allocation3 + $0x52] sm:$0xff]
    %v6615 = vld [vmem:[#allocation3 + $0x5a] sm:$0xff]
    %v6616 = vld [vmem:[#allocation3 + $0x62] sm:$0xff]
    %v6617 = vld [vmem:[#allocation3 + $0x6a] sm:$0xff]
    %v6618 = vld [vmem:[#allocation3 + $0x72] sm:$0xff]
    %v6619 = vld [vmem:[#allocation3 + $0x7a] sm:$0xff]
    %v6620 = vld [vmem:[#allocation3 + $0x82] sm:$0xff]
    %v6621 = vld [vmem:[#allocation3 + $0x8a] sm:$0xff]
    %v6622 = vld [vmem:[#allocation3 + $0x92] sm:$0xff]
    %v6623 = vld [vmem:[#allocation3 + $0x9a] sm:$0xff]
    %v6624 = vld [vmem:[#allocation3 + $0xa2] sm:$0xff]
    %v6625 = vld [vmem:[#allocation3 + $0xaa] sm:$0xff]
    %v6626 = vld [vmem:[#allocation3 + $0xb2] sm:$0x3]
    %v6627 = vpack.c.bf16 %v6605, %v6604
    %v6628 = vpack.c.bf16 %v6607, %v6606
    %v6629 = vpack.c.bf16 %v6609, %v6608
    %v6630 = vpack.c.bf16 %v6611, %v6610
    %v6631 = vpack.c.bf16 %v6613, %v6612
    %v6632 = vpack.c.bf16 %v6615, %v6614
    %v6633 = vpack.c.bf16 %v6617, %v6616
    %v6634 = vpack.c.bf16 %v6619, %v6618
    %v6635 = vpack.c.bf16 %v6621, %v6620
    %v6636 = vpack.c.bf16 %v6623, %v6622
    %v6637 = vpack.c.bf16 %v6625, %v6624
    %v6638 = vpack.c.bf16 %v6626, %v6626
    %v6639 = vld [vmem:[%s5 + $0x10] sm:$0xf]
    %v6640 = vld [vmem:[%s5 + $0x14] sm:$0xf]
    %v6643 = vunpack.c.l.b16 %v6639
    %v6644 = vunpack.c.l.b16 %v6640
    %v6645 = vpack.c.b16 %v6644, %v6643
    %v6648 = vsel %vm4617, %v6627, 0
    %v6651 = vsel %vm4617, %v6628, 0
    %v6654 = vsel %vm4617, %v6629, 0
    %v6657 = vsel %vm4617, %v6630, 0
    %v6660 = vsel %vm4617, %v6631, 0
    %v6663 = vsel %vm4617, %v6632, 0
    %v6666 = vsel %vm4617, %v6633, 0
    %v6669 = vsel %vm4617, %v6634, 0
    %v6672 = vsel %vm4617, %v6635, 0
    %v6675 = vsel %vm4617, %v6636, 0
    %v6678 = vsel %vm4617, %v6637, 0
    %v6681 = vsel %vm4617, %v6638, 0
    %6683 = vmatpush.bf16.msra.mxu0 0
    %6684 = vmatpush.bf16.msra.mxu0 0
    %6685 = vmatpush.bf16.msra.mxu0 0
    %6686 = vmatpush.bf16.msra.mxu0 0
    %6687 = vmatpush.bf16.msra.mxu0 0
    %6688 = vmatpush.bf16.msra.mxu0 0
    %6689 = vmatpush.bf16.msra.mxu0 0
    %6690 = vmatpush.bf16.msra.mxu0 %v6645
    %6691 = vmatmul.bf16.gmra.mxu0 %v6648
    %v6692 = vpop.f32.mrf.mxu0
    %v6693 = vadd.f32 0.0, %v6692
    %v6694 = vpop.f32.mrf.mxu0
    %v6695 = vadd.f32 0.0, %v6694
    %6696 = vmatmul.bf16.gmra.mxu0 %v6651
    %v6697 = vpop.f32.mrf.mxu0
    %v6698 = vadd.f32 0.0, %v6697
    %v6699 = vpop.f32.mrf.mxu0
    %v6700 = vadd.f32 0.0, %v6699
    %6701 = vmatmul.bf16.gmra.mxu0 %v6654
    %v6702 = vpop.f32.mrf.mxu0
    %v6703 = vadd.f32 0.0, %v6702
    %v6704 = vpop.f32.mrf.mxu0
    %v6705 = vadd.f32 0.0, %v6704
    %6706 = vmatmul.bf16.gmra.mxu0 %v6657
    %v6707 = vpop.f32.mrf.mxu0
    %v6708 = vadd.f32 0.0, %v6707
    %v6709 = vpop.f32.mrf.mxu0
    %v6710 = vadd.f32 0.0, %v6709
    %6711 = vmatmul.bf16.gmra.mxu0 %v6660
    %v6712 = vpop.f32.mrf.mxu0
    %v6713 = vadd.f32 0.0, %v6712
    %v6714 = vpop.f32.mrf.mxu0
    %v6715 = vadd.f32 0.0, %v6714
    %6716 = vmatmul.bf16.gmra.mxu0 %v6663
    %v6717 = vpop.f32.mrf.mxu0
    %v6718 = vadd.f32 0.0, %v6717
    %v6719 = vpop.f32.mrf.mxu0
    %v6720 = vadd.f32 0.0, %v6719
    %6721 = vmatmul.bf16.gmra.mxu0 %v6666
    %v6722 = vpop.f32.mrf.mxu0
    %v6723 = vadd.f32 0.0, %v6722
    %v6724 = vpop.f32.mrf.mxu0
    %v6725 = vadd.f32 0.0, %v6724
    %6726 = vmatmul.bf16.gmra.mxu0 %v6669
    %v6727 = vpop.f32.mrf.mxu0
    %v6728 = vadd.f32 0.0, %v6727
    %v6729 = vpop.f32.mrf.mxu0
    %v6730 = vadd.f32 0.0, %v6729
    %6731 = vmatmul.bf16.gmra.mxu0 %v6672
    %v6732 = vpop.f32.mrf.mxu0
    %v6733 = vadd.f32 0.0, %v6732
    %v6734 = vpop.f32.mrf.mxu0
    %v6735 = vadd.f32 0.0, %v6734
    %6736 = vmatmul.bf16.gmra.mxu0 %v6675
    %v6737 = vpop.f32.mrf.mxu0
    %v6738 = vadd.f32 0.0, %v6737
    %v6739 = vpop.f32.mrf.mxu0
    %v6740 = vadd.f32 0.0, %v6739
    %6741 = vmatmul.bf16.gmra.mxu0 %v6678
    %v6742 = vpop.f32.mrf.mxu0
    %v6743 = vadd.f32 0.0, %v6742
    %v6744 = vpop.f32.mrf.mxu0
    %v6745 = vadd.f32 0.0, %v6744
    %6746 = vmatmul.bf16.gmra.mxu0 %v6681
    %v6747 = vpop.f32.mrf.mxu0
    %v6748 = vadd.f32 0.0, %v6747
    %v6749 = vpop.f32.mrf.mxu0
    %6750 = vdwg.mxu0
    %v6751 = vadd.f32 %v6546, %v6693
    %v6752 = vadd.f32 %v6548, %v6695
    %v6753 = vadd.f32 %v6551, %v6698
    %v6754 = vadd.f32 %v6553, %v6700
    %v6755 = vadd.f32 %v6556, %v6703
    %v6756 = vadd.f32 %v6558, %v6705
    %v6757 = vadd.f32 %v6561, %v6708
    %v6758 = vadd.f32 %v6563, %v6710
    %v6759 = vadd.f32 %v6566, %v6713
    %v6760 = vadd.f32 %v6568, %v6715
    %v6761 = vadd.f32 %v6571, %v6718
    %v6762 = vadd.f32 %v6573, %v6720
    %v6763 = vadd.f32 %v6576, %v6723
    %v6764 = vadd.f32 %v6578, %v6725
    %v6765 = vadd.f32 %v6581, %v6728
    %v6766 = vadd.f32 %v6583, %v6730
    %v6767 = vadd.f32 %v6586, %v6733
    %v6768 = vadd.f32 %v6588, %v6735
    %v6769 = vadd.f32 %v6591, %v6738
    %v6770 = vadd.f32 %v6593, %v6740
    %v6771 = vadd.f32 %v6596, %v6743
    %v6772 = vadd.f32 %v6598, %v6745
    %v6773 = vadd.f32 %v6601, %v6748
    %v6774 = vld [vmem:[#allocation3 + $0xa] sm:$0xff]
    %v6775 = vld [vmem:[#allocation3 + $0x12] sm:$0xff]
    %v6776 = vld [vmem:[#allocation3 + $0x1a] sm:$0xff]
    %v6777 = vld [vmem:[#allocation3 + $0x22] sm:$0xff]
    %v6778 = vld [vmem:[#allocation3 + $0x2a] sm:$0xff]
    %v6779 = vld [vmem:[#allocation3 + $0x32] sm:$0xff]
    %v6780 = vld [vmem:[#allocation3 + $0x3a] sm:$0xff]
    %v6781 = vld [vmem:[#allocation3 + $0x42] sm:$0xff]
    %v6782 = vld [vmem:[#allocation3 + $0x4a] sm:$0xff]
    %v6783 = vld [vmem:[#allocation3 + $0x52] sm:$0xff]
    %v6784 = vld [vmem:[#allocation3 + $0x5a] sm:$0xff]
    %v6785 = vld [vmem:[#allocation3 + $0x62] sm:$0xff]
    %v6786 = vld [vmem:[#allocation3 + $0x6a] sm:$0xff]
    %v6787 = vld [vmem:[#allocation3 + $0x72] sm:$0xff]
    %v6788 = vld [vmem:[#allocation3 + $0x7a] sm:$0xff]
    %v6789 = vld [vmem:[#allocation3 + $0x82] sm:$0xff]
    %v6790 = vld [vmem:[#allocation3 + $0x8a] sm:$0xff]
    %v6791 = vld [vmem:[#allocation3 + $0x92] sm:$0xff]
    %v6792 = vld [vmem:[#allocation3 + $0x9a] sm:$0xff]
    %v6793 = vld [vmem:[#allocation3 + $0xa2] sm:$0xff]
    %v6794 = vld [vmem:[#allocation3 + $0xaa] sm:$0xff]
    %v6795 = vld [vmem:[#allocation3 + $0xb2] sm:$0xff]
    %v6796 = vld [vmem:[#allocation3 + $0xba] sm:$0x3]
    %v6797 = vpack.c.bf16 %v6775, %v6774
    %v6798 = vpack.c.bf16 %v6777, %v6776
    %v6799 = vpack.c.bf16 %v6779, %v6778
    %v6800 = vpack.c.bf16 %v6781, %v6780
    %v6801 = vpack.c.bf16 %v6783, %v6782
    %v6802 = vpack.c.bf16 %v6785, %v6784
    %v6803 = vpack.c.bf16 %v6787, %v6786
    %v6804 = vpack.c.bf16 %v6789, %v6788
    %v6805 = vpack.c.bf16 %v6791, %v6790
    %v6806 = vpack.c.bf16 %v6793, %v6792
    %v6807 = vpack.c.bf16 %v6795, %v6794
    %v6808 = vpack.c.bf16 %v6796, %v6796
    %v6809 = vld [vmem:[%s5 + $0x18] sm:$0xf]
    %v6810 = vld [vmem:[%s5 + $0x1c] sm:$0xf]
    %v6813 = vunpack.c.l.b16 %v6809
    %v6814 = vunpack.c.l.b16 %v6810
    %v6815 = vpack.c.b16 %v6814, %v6813
    %v6818 = vsel %vm4617, %v6797, 0
    %v6821 = vsel %vm4617, %v6798, 0
    %v6824 = vsel %vm4617, %v6799, 0
    %v6827 = vsel %vm4617, %v6800, 0
    %v6830 = vsel %vm4617, %v6801, 0
    %v6833 = vsel %vm4617, %v6802, 0
    %v6836 = vsel %vm4617, %v6803, 0
    %v6839 = vsel %vm4617, %v6804, 0
    %v6842 = vsel %vm4617, %v6805, 0
    %v6845 = vsel %vm4617, %v6806, 0
    %v6848 = vsel %vm4617, %v6807, 0
    %v6851 = vsel %vm4617, %v6808, 0
    %6853 = vmatpush.bf16.msra.mxu0 0
    %6854 = vmatpush.bf16.msra.mxu0 0
    %6855 = vmatpush.bf16.msra.mxu0 0
    %6856 = vmatpush.bf16.msra.mxu0 0
    %6857 = vmatpush.bf16.msra.mxu0 0
    %6858 = vmatpush.bf16.msra.mxu0 0
    %6859 = vmatpush.bf16.msra.mxu0 0
    %6860 = vmatpush.bf16.msra.mxu0 %v6815
    %6861 = vmatmul.bf16.gmra.mxu0 %v6818
    %v6862 = vpop.f32.mrf.mxu0
    %v6863 = vadd.f32 0.0, %v6862
    %v6864 = vpop.f32.mrf.mxu0
    %v6865 = vadd.f32 0.0, %v6864
    %6866 = vmatmul.bf16.gmra.mxu0 %v6821
    %v6867 = vpop.f32.mrf.mxu0
    %v6868 = vadd.f32 0.0, %v6867
    %v6869 = vpop.f32.mrf.mxu0
    %v6870 = vadd.f32 0.0, %v6869
    %6871 = vmatmul.bf16.gmra.mxu0 %v6824
    %v6872 = vpop.f32.mrf.mxu0
    %v6873 = vadd.f32 0.0, %v6872
    %v6874 = vpop.f32.mrf.mxu0
    %v6875 = vadd.f32 0.0, %v6874
    %6876 = vmatmul.bf16.gmra.mxu0 %v6827
    %v6877 = vpop.f32.mrf.mxu0
    %v6878 = vadd.f32 0.0, %v6877
    %v6879 = vpop.f32.mrf.mxu0
    %v6880 = vadd.f32 0.0, %v6879
    %6881 = vmatmul.bf16.gmra.mxu0 %v6830
    %v6882 = vpop.f32.mrf.mxu0
    %v6883 = vadd.f32 0.0, %v6882
    %v6884 = vpop.f32.mrf.mxu0
    %v6885 = vadd.f32 0.0, %v6884
    %6886 = vmatmul.bf16.gmra.mxu0 %v6833
    %v6887 = vpop.f32.mrf.mxu0
    %v6888 = vadd.f32 0.0, %v6887
    %v6889 = vpop.f32.mrf.mxu0
    %v6890 = vadd.f32 0.0, %v6889
    %6891 = vmatmul.bf16.gmra.mxu0 %v6836
    %v6892 = vpop.f32.mrf.mxu0
    %v6893 = vadd.f32 0.0, %v6892
    %v6894 = vpop.f32.mrf.mxu0
    %v6895 = vadd.f32 0.0, %v6894
    %6896 = vmatmul.bf16.gmra.mxu0 %v6839
    %v6897 = vpop.f32.mrf.mxu0
    %v6898 = vadd.f32 0.0, %v6897
    %v6899 = vpop.f32.mrf.mxu0
    %v6900 = vadd.f32 0.0, %v6899
    %6901 = vmatmul.bf16.gmra.mxu0 %v6842
    %v6902 = vpop.f32.mrf.mxu0
    %v6903 = vadd.f32 0.0, %v6902
    %v6904 = vpop.f32.mrf.mxu0
    %v6905 = vadd.f32 0.0, %v6904
    %6906 = vmatmul.bf16.gmra.mxu0 %v6845
    %v6907 = vpop.f32.mrf.mxu0
    %v6908 = vadd.f32 0.0, %v6907
    %v6909 = vpop.f32.mrf.mxu0
    %v6910 = vadd.f32 0.0, %v6909
    %6911 = vmatmul.bf16.gmra.mxu0 %v6848
    %v6912 = vpop.f32.mrf.mxu0
    %v6913 = vadd.f32 0.0, %v6912
    %v6914 = vpop.f32.mrf.mxu0
    %v6915 = vadd.f32 0.0, %v6914
    %6916 = vmatmul.bf16.gmra.mxu0 %v6851
    %v6917 = vpop.f32.mrf.mxu0
    %v6918 = vadd.f32 0.0, %v6917
    %v6919 = vpop.f32.mrf.mxu0
    %6920 = vdwg.mxu0
    %v6921 = vadd.f32 %v6751, %v6863
    %v6922 = vadd.f32 %v6752, %v6865
    %v6923 = vadd.f32 %v6753, %v6868
    %v6924 = vadd.f32 %v6754, %v6870
    %v6925 = vadd.f32 %v6755, %v6873
    %v6926 = vadd.f32 %v6756, %v6875
    %v6927 = vadd.f32 %v6757, %v6878
    %v6928 = vadd.f32 %v6758, %v6880
    %v6929 = vadd.f32 %v6759, %v6883
    %v6930 = vadd.f32 %v6760, %v6885
    %v6931 = vadd.f32 %v6761, %v6888
    %v6932 = vadd.f32 %v6762, %v6890
    %v6933 = vadd.f32 %v6763, %v6893
    %v6934 = vadd.f32 %v6764, %v6895
    %v6935 = vadd.f32 %v6765, %v6898
    %v6936 = vadd.f32 %v6766, %v6900
    %v6937 = vadd.f32 %v6767, %v6903
    %v6938 = vadd.f32 %v6768, %v6905
    %v6939 = vadd.f32 %v6769, %v6908
    %v6940 = vadd.f32 %v6770, %v6910
    %v6941 = vadd.f32 %v6771, %v6913
    %v6942 = vadd.f32 %v6772, %v6915
    %v6943 = vadd.f32 %v6773, %v6918
    %v6944 = vld [vmem:[#allocation3 + $0xb] sm:$0xff]
    %v6945 = vld [vmem:[#allocation3 + $0x13] sm:$0xff]
    %v6946 = vld [vmem:[#allocation3 + $0x1b] sm:$0xff]
    %v6947 = vld [vmem:[#allocation3 + $0x23] sm:$0xff]
    %v6948 = vld [vmem:[#allocation3 + $0x2b] sm:$0xff]
    %v6949 = vld [vmem:[#allocation3 + $0x33] sm:$0xff]
    %v6950 = vld [vmem:[#allocation3 + $0x3b] sm:$0xff]
    %v6951 = vld [vmem:[#allocation3 + $0x43] sm:$0xff]
    %v6952 = vld [vmem:[#allocation3 + $0x4b] sm:$0xff]
    %v6953 = vld [vmem:[#allocation3 + $0x53] sm:$0xff]
    %v6954 = vld [vmem:[#allocation3 + $0x5b] sm:$0xff]
    %v6955 = vld [vmem:[#allocation3 + $0x63] sm:$0xff]
    %v6956 = vld [vmem:[#allocation3 + $0x6b] sm:$0xff]
    %v6957 = vld [vmem:[#allocation3 + $0x73] sm:$0xff]
    %v6958 = vld [vmem:[#allocation3 + $0x7b] sm:$0xff]
    %v6959 = vld [vmem:[#allocation3 + $0x83] sm:$0xff]
    %v6960 = vld [vmem:[#allocation3 + $0x8b] sm:$0xff]
    %v6961 = vld [vmem:[#allocation3 + $0x93] sm:$0xff]
    %v6962 = vld [vmem:[#allocation3 + $0x9b] sm:$0xff]
    %v6963 = vld [vmem:[#allocation3 + $0xa3] sm:$0xff]
    %v6964 = vld [vmem:[#allocation3 + $0xab] sm:$0xff]
    %v6965 = vld [vmem:[#allocation3 + $0xb3] sm:$0xff]
    %v6966 = vld [vmem:[#allocation3 + $0xbb] sm:$0x3]
    %v6967 = vpack.c.bf16 %v6945, %v6944
    %v6968 = vpack.c.bf16 %v6947, %v6946
    %v6969 = vpack.c.bf16 %v6949, %v6948
    %v6970 = vpack.c.bf16 %v6951, %v6950
    %v6971 = vpack.c.bf16 %v6953, %v6952
    %v6972 = vpack.c.bf16 %v6955, %v6954
    %v6973 = vpack.c.bf16 %v6957, %v6956
    %v6974 = vpack.c.bf16 %v6959, %v6958
    %v6975 = vpack.c.bf16 %v6961, %v6960
    %v6976 = vpack.c.bf16 %v6963, %v6962
    %v6977 = vpack.c.bf16 %v6965, %v6964
    %v6978 = vpack.c.bf16 %v6966, %v6966
    %v6979 = vld [vmem:[%s5 + $0x20] sm:$0xf]
    %v6980 = vld [vmem:[%s5 + $0x24] sm:$0xf]
    %v6983 = vunpack.c.l.b16 %v6979
    %v6984 = vunpack.c.l.b16 %v6980
    %v6985 = vpack.c.b16 %v6984, %v6983
    %v6988 = vsel %vm4617, %v6967, 0
    %v6991 = vsel %vm4617, %v6968, 0
    %v6994 = vsel %vm4617, %v6969, 0
    %v6997 = vsel %vm4617, %v6970, 0
    %v7000 = vsel %vm4617, %v6971, 0
    %v7003 = vsel %vm4617, %v6972, 0
    %v7006 = vsel %vm4617, %v6973, 0
    %v7009 = vsel %vm4617, %v6974, 0
    %v7012 = vsel %vm4617, %v6975, 0
    %v7015 = vsel %vm4617, %v6976, 0
    %v7018 = vsel %vm4617, %v6977, 0
    %v7021 = vsel %vm4617, %v6978, 0
    %7023 = vmatpush.bf16.msra.mxu0 0
    %7024 = vmatpush.bf16.msra.mxu0 0
    %7025 = vmatpush.bf16.msra.mxu0 0
    %7026 = vmatpush.bf16.msra.mxu0 0
    %7027 = vmatpush.bf16.msra.mxu0 0
    %7028 = vmatpush.bf16.msra.mxu0 0
    %7029 = vmatpush.bf16.msra.mxu0 0
    %7030 = vmatpush.bf16.msra.mxu0 %v6985
    %7031 = vmatmul.bf16.gmra.mxu0 %v6988
    %v7032 = vpop.f32.mrf.mxu0
    %v7033 = vadd.f32 0.0, %v7032
    %v7034 = vpop.f32.mrf.mxu0
    %v7035 = vadd.f32 0.0, %v7034
    %7036 = vmatmul.bf16.gmra.mxu0 %v6991
    %v7037 = vpop.f32.mrf.mxu0
    %v7038 = vadd.f32 0.0, %v7037
    %v7039 = vpop.f32.mrf.mxu0
    %v7040 = vadd.f32 0.0, %v7039
    %7041 = vmatmul.bf16.gmra.mxu0 %v6994
    %v7042 = vpop.f32.mrf.mxu0
    %v7043 = vadd.f32 0.0, %v7042
    %v7044 = vpop.f32.mrf.mxu0
    %v7045 = vadd.f32 0.0, %v7044
    %7046 = vmatmul.bf16.gmra.mxu0 %v6997
    %v7047 = vpop.f32.mrf.mxu0
    %v7048 = vadd.f32 0.0, %v7047
    %v7049 = vpop.f32.mrf.mxu0
    %v7050 = vadd.f32 0.0, %v7049
    %7051 = vmatmul.bf16.gmra.mxu0 %v7000
    %v7052 = vpop.f32.mrf.mxu0
    %v7053 = vadd.f32 0.0, %v7052
    %v7054 = vpop.f32.mrf.mxu0
    %v7055 = vadd.f32 0.0, %v7054
    %7056 = vmatmul.bf16.gmra.mxu0 %v7003
    %v7057 = vpop.f32.mrf.mxu0
    %v7058 = vadd.f32 0.0, %v7057
    %v7059 = vpop.f32.mrf.mxu0
    %v7060 = vadd.f32 0.0, %v7059
    %7061 = vmatmul.bf16.gmra.mxu0 %v7006
    %v7062 = vpop.f32.mrf.mxu0
    %v7063 = vadd.f32 0.0, %v7062
    %v7064 = vpop.f32.mrf.mxu0
    %v7065 = vadd.f32 0.0, %v7064
    %7066 = vmatmul.bf16.gmra.mxu0 %v7009
    %v7067 = vpop.f32.mrf.mxu0
    %v7068 = vadd.f32 0.0, %v7067
    %v7069 = vpop.f32.mrf.mxu0
    %v7070 = vadd.f32 0.0, %v7069
    %7071 = vmatmul.bf16.gmra.mxu0 %v7012
    %v7072 = vpop.f32.mrf.mxu0
    %v7073 = vadd.f32 0.0, %v7072
    %v7074 = vpop.f32.mrf.mxu0
    %v7075 = vadd.f32 0.0, %v7074
    %7076 = vmatmul.bf16.gmra.mxu0 %v7015
    %v7077 = vpop.f32.mrf.mxu0
    %v7078 = vadd.f32 0.0, %v7077
    %v7079 = vpop.f32.mrf.mxu0
    %v7080 = vadd.f32 0.0, %v7079
    %7081 = vmatmul.bf16.gmra.mxu0 %v7018
    %v7082 = vpop.f32.mrf.mxu0
    %v7083 = vadd.f32 0.0, %v7082
    %v7084 = vpop.f32.mrf.mxu0
    %v7085 = vadd.f32 0.0, %v7084
    %7086 = vmatmul.bf16.gmra.mxu0 %v7021
    %v7087 = vpop.f32.mrf.mxu0
    %v7088 = vadd.f32 0.0, %v7087
    %v7089 = vpop.f32.mrf.mxu0
    %7090 = vdwg.mxu0
    %v7091 = vadd.f32 %v6921, %v7033
    %v7092 = vadd.f32 %v6922, %v7035
    %v7093 = vadd.f32 %v6923, %v7038
    %v7094 = vadd.f32 %v6924, %v7040
    %v7095 = vadd.f32 %v6925, %v7043
    %v7096 = vadd.f32 %v6926, %v7045
    %v7097 = vadd.f32 %v6927, %v7048
    %v7098 = vadd.f32 %v6928, %v7050
    %v7099 = vadd.f32 %v6929, %v7053
    %v7100 = vadd.f32 %v6930, %v7055
    %v7101 = vadd.f32 %v6931, %v7058
    %v7102 = vadd.f32 %v6932, %v7060
    %v7103 = vadd.f32 %v6933, %v7063
    %v7104 = vadd.f32 %v6934, %v7065
    %v7105 = vadd.f32 %v6935, %v7068
    %v7106 = vadd.f32 %v6936, %v7070
    %v7107 = vadd.f32 %v6937, %v7073
    %v7108 = vadd.f32 %v6938, %v7075
    %v7109 = vadd.f32 %v6939, %v7078
    %v7110 = vadd.f32 %v6940, %v7080
    %v7111 = vadd.f32 %v6941, %v7083
    %v7112 = vadd.f32 %v6942, %v7085
    %v7113 = vadd.f32 %v6943, %v7088
    %v7114 = vld [vmem:[#allocation3 + $0xc] sm:$0xff]
    %v7115 = vld [vmem:[#allocation3 + $0x14] sm:$0xff]
    %v7116 = vld [vmem:[#allocation3 + $0x1c] sm:$0xff]
    %v7117 = vld [vmem:[#allocation3 + $0x24] sm:$0xff]
    %v7118 = vld [vmem:[#allocation3 + $0x2c] sm:$0xff]
    %v7119 = vld [vmem:[#allocation3 + $0x34] sm:$0xff]
    %v7120 = vld [vmem:[#allocation3 + $0x3c] sm:$0xff]
    %v7121 = vld [vmem:[#allocation3 + $0x44] sm:$0xff]
    %v7122 = vld [vmem:[#allocation3 + $0x4c] sm:$0xff]
    %v7123 = vld [vmem:[#allocation3 + $0x54] sm:$0xff]
    %v7124 = vld [vmem:[#allocation3 + $0x5c] sm:$0xff]
    %v7125 = vld [vmem:[#allocation3 + $0x64] sm:$0xff]
    %v7126 = vld [vmem:[#allocation3 + $0x6c] sm:$0xff]
    %v7127 = vld [vmem:[#allocation3 + $0x74] sm:$0xff]
    %v7128 = vld [vmem:[#allocation3 + $0x7c] sm:$0xff]
    %v7129 = vld [vmem:[#allocation3 + $0x84] sm:$0xff]
    %v7130 = vld [vmem:[#allocation3 + $0x8c] sm:$0xff]
    %v7131 = vld [vmem:[#allocation3 + $0x94] sm:$0xff]
    %v7132 = vld [vmem:[#allocation3 + $0x9c] sm:$0xff]
    %v7133 = vld [vmem:[#allocation3 + $0xa4] sm:$0xff]
    %v7134 = vld [vmem:[#allocation3 + $0xac] sm:$0xff]
    %v7135 = vld [vmem:[#allocation3 + $0xb4] sm:$0xff]
    %v7136 = vld [vmem:[#allocation3 + $0xbc] sm:$0x3]
    %v7137 = vpack.c.bf16 %v7115, %v7114
    %v7138 = vpack.c.bf16 %v7117, %v7116
    %v7139 = vpack.c.bf16 %v7119, %v7118
    %v7140 = vpack.c.bf16 %v7121, %v7120
    %v7141 = vpack.c.bf16 %v7123, %v7122
    %v7142 = vpack.c.bf16 %v7125, %v7124
    %v7143 = vpack.c.bf16 %v7127, %v7126
    %v7144 = vpack.c.bf16 %v7129, %v7128
    %v7145 = vpack.c.bf16 %v7131, %v7130
    %v7146 = vpack.c.bf16 %v7133, %v7132
    %v7147 = vpack.c.bf16 %v7135, %v7134
    %v7148 = vpack.c.bf16 %v7136, %v7136
    %v7149 = vld [vmem:[%s5 + $0x28] sm:$0xf]
    %v7150 = vld [vmem:[%s5 + $0x2c] sm:$0xf]
    %v7153 = vunpack.c.l.b16 %v7149
    %v7154 = vunpack.c.l.b16 %v7150
    %v7155 = vpack.c.b16 %v7154, %v7153
    %v7158 = vsel %vm4617, %v7137, 0
    %v7161 = vsel %vm4617, %v7138, 0
    %v7164 = vsel %vm4617, %v7139, 0
    %v7167 = vsel %vm4617, %v7140, 0
    %v7170 = vsel %vm4617, %v7141, 0
    %v7173 = vsel %vm4617, %v7142, 0
    %v7176 = vsel %vm4617, %v7143, 0
    %v7179 = vsel %vm4617, %v7144, 0
    %v7182 = vsel %vm4617, %v7145, 0
    %v7185 = vsel %vm4617, %v7146, 0
    %v7188 = vsel %vm4617, %v7147, 0
    %v7191 = vsel %vm4617, %v7148, 0
    %7193 = vmatpush.bf16.msra.mxu0 0
    %7194 = vmatpush.bf16.msra.mxu0 0
    %7195 = vmatpush.bf16.msra.mxu0 0
    %7196 = vmatpush.bf16.msra.mxu0 0
    %7197 = vmatpush.bf16.msra.mxu0 0
    %7198 = vmatpush.bf16.msra.mxu0 0
    %7199 = vmatpush.bf16.msra.mxu0 0
    %7200 = vmatpush.bf16.msra.mxu0 %v7155
    %7201 = vmatmul.bf16.gmra.mxu0 %v7158
    %v7202 = vpop.f32.mrf.mxu0
    %v7203 = vadd.f32 0.0, %v7202
    %v7204 = vpop.f32.mrf.mxu0
    %v7205 = vadd.f32 0.0, %v7204
    %7206 = vmatmul.bf16.gmra.mxu0 %v7161
    %v7207 = vpop.f32.mrf.mxu0
    %v7208 = vadd.f32 0.0, %v7207
    %v7209 = vpop.f32.mrf.mxu0
    %v7210 = vadd.f32 0.0, %v7209
    %7211 = vmatmul.bf16.gmra.mxu0 %v7164
    %v7212 = vpop.f32.mrf.mxu0
    %v7213 = vadd.f32 0.0, %v7212
    %v7214 = vpop.f32.mrf.mxu0
    %v7215 = vadd.f32 0.0, %v7214
    %7216 = vmatmul.bf16.gmra.mxu0 %v7167
    %v7217 = vpop.f32.mrf.mxu0
    %v7218 = vadd.f32 0.0, %v7217
    %v7219 = vpop.f32.mrf.mxu0
    %v7220 = vadd.f32 0.0, %v7219
    %7221 = vmatmul.bf16.gmra.mxu0 %v7170
    %v7222 = vpop.f32.mrf.mxu0
    %v7223 = vadd.f32 0.0, %v7222
    %v7224 = vpop.f32.mrf.mxu0
    %v7225 = vadd.f32 0.0, %v7224
    %7226 = vmatmul.bf16.gmra.mxu0 %v7173
    %v7227 = vpop.f32.mrf.mxu0
    %v7228 = vadd.f32 0.0, %v7227
    %v7229 = vpop.f32.mrf.mxu0
    %v7230 = vadd.f32 0.0, %v7229
    %7231 = vmatmul.bf16.gmra.mxu0 %v7176
    %v7232 = vpop.f32.mrf.mxu0
    %v7233 = vadd.f32 0.0, %v7232
    %v7234 = vpop.f32.mrf.mxu0
    %v7235 = vadd.f32 0.0, %v7234
    %7236 = vmatmul.bf16.gmra.mxu0 %v7179
    %v7237 = vpop.f32.mrf.mxu0
    %v7238 = vadd.f32 0.0, %v7237
    %v7239 = vpop.f32.mrf.mxu0
    %v7240 = vadd.f32 0.0, %v7239
    %7241 = vmatmul.bf16.gmra.mxu0 %v7182
    %v7242 = vpop.f32.mrf.mxu0
    %v7243 = vadd.f32 0.0, %v7242
    %v7244 = vpop.f32.mrf.mxu0
    %v7245 = vadd.f32 0.0, %v7244
    %7246 = vmatmul.bf16.gmra.mxu0 %v7185
    %v7247 = vpop.f32.mrf.mxu0
    %v7248 = vadd.f32 0.0, %v7247
    %v7249 = vpop.f32.mrf.mxu0
    %v7250 = vadd.f32 0.0, %v7249
    %7251 = vmatmul.bf16.gmra.mxu0 %v7188
    %v7252 = vpop.f32.mrf.mxu0
    %v7253 = vadd.f32 0.0, %v7252
    %v7254 = vpop.f32.mrf.mxu0
    %v7255 = vadd.f32 0.0, %v7254
    %7256 = vmatmul.bf16.gmra.mxu0 %v7191
    %v7257 = vpop.f32.mrf.mxu0
    %v7258 = vadd.f32 0.0, %v7257
    %v7259 = vpop.f32.mrf.mxu0
    %7260 = vdwg.mxu0
    %v7261 = vadd.f32 %v7091, %v7203
    %v7262 = vadd.f32 %v7092, %v7205
    %v7263 = vadd.f32 %v7093, %v7208
    %v7264 = vadd.f32 %v7094, %v7210
    %v7265 = vadd.f32 %v7095, %v7213
    %v7266 = vadd.f32 %v7096, %v7215
    %v7267 = vadd.f32 %v7097, %v7218
    %v7268 = vadd.f32 %v7098, %v7220
    %v7269 = vadd.f32 %v7099, %v7223
    %v7270 = vadd.f32 %v7100, %v7225
    %v7271 = vadd.f32 %v7101, %v7228
    %v7272 = vadd.f32 %v7102, %v7230
    %v7273 = vadd.f32 %v7103, %v7233
    %v7274 = vadd.f32 %v7104, %v7235
    %v7275 = vadd.f32 %v7105, %v7238
    %v7276 = vadd.f32 %v7106, %v7240
    %v7277 = vadd.f32 %v7107, %v7243
    %v7278 = vadd.f32 %v7108, %v7245
    %v7279 = vadd.f32 %v7109, %v7248
    %v7280 = vadd.f32 %v7110, %v7250
    %v7281 = vadd.f32 %v7111, %v7253
    %v7282 = vadd.f32 %v7112, %v7255
    %v7283 = vadd.f32 %v7113, %v7258
    %v7284 = vld [vmem:[#allocation3 + $0x14] sm:$0xff]
    %v7285 = vld [vmem:[#allocation3 + $0x1c] sm:$0xff]
    %v7286 = vld [vmem:[#allocation3 + $0x24] sm:$0xff]
    %v7287 = vld [vmem:[#allocation3 + $0x2c] sm:$0xff]
    %v7288 = vld [vmem:[#allocation3 + $0x34] sm:$0xff]
    %v7289 = vld [vmem:[#allocation3 + $0x3c] sm:$0xff]
    %v7290 = vld [vmem:[#allocation3 + $0x44] sm:$0xff]
    %v7291 = vld [vmem:[#allocation3 + $0x4c] sm:$0xff]
    %v7292 = vld [vmem:[#allocation3 + $0x54] sm:$0xff]
    %v7293 = vld [vmem:[#allocation3 + $0x5c] sm:$0xff]
    %v7294 = vld [vmem:[#allocation3 + $0x64] sm:$0xff]
    %v7295 = vld [vmem:[#allocation3 + $0x6c] sm:$0xff]
    %v7296 = vld [vmem:[#allocation3 + $0x74] sm:$0xff]
    %v7297 = vld [vmem:[#allocation3 + $0x7c] sm:$0xff]
    %v7298 = vld [vmem:[#allocation3 + $0x84] sm:$0xff]
    %v7299 = vld [vmem:[#allocation3 + $0x8c] sm:$0xff]
    %v7300 = vld [vmem:[#allocation3 + $0x94] sm:$0xff]
    %v7301 = vld [vmem:[#allocation3 + $0x9c] sm:$0xff]
    %v7302 = vld [vmem:[#allocation3 + $0xa4] sm:$0xff]
    %v7303 = vld [vmem:[#allocation3 + $0xac] sm:$0xff]
    %v7304 = vld [vmem:[#allocation3 + $0xb4] sm:$0xff]
    %v7305 = vld [vmem:[#allocation3 + $0xbc] sm:$0xff]
    %v7306 = vld [vmem:[#allocation3 + $0xc4] sm:$0x3]
    %v7307 = vpack.c.bf16 %v7285, %v7284
    %v7308 = vpack.c.bf16 %v7287, %v7286
    %v7309 = vpack.c.bf16 %v7289, %v7288
    %v7310 = vpack.c.bf16 %v7291, %v7290
    %v7311 = vpack.c.bf16 %v7293, %v7292
    %v7312 = vpack.c.bf16 %v7295, %v7294
    %v7313 = vpack.c.bf16 %v7297, %v7296
    %v7314 = vpack.c.bf16 %v7299, %v7298
    %v7315 = vpack.c.bf16 %v7301, %v7300
    %v7316 = vpack.c.bf16 %v7303, %v7302
    %v7317 = vpack.c.bf16 %v7305, %v7304
    %v7318 = vpack.c.bf16 %v7306, %v7306
    %v7319 = vld [vmem:[%s5 + $0x30] sm:$0xf]
    %v7320 = vld [vmem:[%s5 + $0x34] sm:$0xf]
    %v7323 = vunpack.c.l.b16 %v7319
    %v7324 = vunpack.c.l.b16 %v7320
    %v7325 = vpack.c.b16 %v7324, %v7323
    %v7328 = vsel %vm4617, %v7307, 0
    %v7331 = vsel %vm4617, %v7308, 0
    %v7334 = vsel %vm4617, %v7309, 0
    %v7337 = vsel %vm4617, %v7310, 0
    %v7340 = vsel %vm4617, %v7311, 0
    %v7343 = vsel %vm4617, %v7312, 0
    %v7346 = vsel %vm4617, %v7313, 0
    %v7349 = vsel %vm4617, %v7314, 0
    %v7352 = vsel %vm4617, %v7315, 0
    %v7355 = vsel %vm4617, %v7316, 0
    %v7358 = vsel %vm4617, %v7317, 0
    %v7361 = vsel %vm4617, %v7318, 0
    %7363 = vmatpush.bf16.msra.mxu0 0
    %7364 = vmatpush.bf16.msra.mxu0 0
    %7365 = vmatpush.bf16.msra.mxu0 0
    %7366 = vmatpush.bf16.msra.mxu0 0
    %7367 = vmatpush.bf16.msra.mxu0 0
    %7368 = vmatpush.bf16.msra.mxu0 0
    %7369 = vmatpush.bf16.msra.mxu0 0
    %7370 = vmatpush.bf16.msra.mxu0 %v7325
    %7371 = vmatmul.bf16.gmra.mxu0 %v7328
    %v7372 = vpop.f32.mrf.mxu0
    %v7373 = vadd.f32 0.0, %v7372
    %v7374 = vpop.f32.mrf.mxu0
    %v7375 = vadd.f32 0.0, %v7374
    %7376 = vmatmul.bf16.gmra.mxu0 %v7331
    %v7377 = vpop.f32.mrf.mxu0
    %v7378 = vadd.f32 0.0, %v7377
    %v7379 = vpop.f32.mrf.mxu0
    %v7380 = vadd.f32 0.0, %v7379
    %7381 = vmatmul.bf16.gmra.mxu0 %v7334
    %v7382 = vpop.f32.mrf.mxu0
    %v7383 = vadd.f32 0.0, %v7382
    %v7384 = vpop.f32.mrf.mxu0
    %v7385 = vadd.f32 0.0, %v7384
    %7386 = vmatmul.bf16.gmra.mxu0 %v7337
    %v7387 = vpop.f32.mrf.mxu0
    %v7388 = vadd.f32 0.0, %v7387
    %v7389 = vpop.f32.mrf.mxu0
    %v7390 = vadd.f32 0.0, %v7389
    %7391 = vmatmul.bf16.gmra.mxu0 %v7340
    %v7392 = vpop.f32.mrf.mxu0
    %v7393 = vadd.f32 0.0, %v7392
    %v7394 = vpop.f32.mrf.mxu0
    %v7395 = vadd.f32 0.0, %v7394
    %7396 = vmatmul.bf16.gmra.mxu0 %v7343
    %v7397 = vpop.f32.mrf.mxu0
    %v7398 = vadd.f32 0.0, %v7397
    %v7399 = vpop.f32.mrf.mxu0
    %v7400 = vadd.f32 0.0, %v7399
    %7401 = vmatmul.bf16.gmra.mxu0 %v7346
    %v7402 = vpop.f32.mrf.mxu0
    %v7403 = vadd.f32 0.0, %v7402
    %v7404 = vpop.f32.mrf.mxu0
    %v7405 = vadd.f32 0.0, %v7404
    %7406 = vmatmul.bf16.gmra.mxu0 %v7349
    %v7407 = vpop.f32.mrf.mxu0
    %v7408 = vadd.f32 0.0, %v7407
    %v7409 = vpop.f32.mrf.mxu0
    %v7410 = vadd.f32 0.0, %v7409
    %7411 = vmatmul.bf16.gmra.mxu0 %v7352
    %v7412 = vpop.f32.mrf.mxu0
    %v7413 = vadd.f32 0.0, %v7412
    %v7414 = vpop.f32.mrf.mxu0
    %v7415 = vadd.f32 0.0, %v7414
    %7416 = vmatmul.bf16.gmra.mxu0 %v7355
    %v7417 = vpop.f32.mrf.mxu0
    %v7418 = vadd.f32 0.0, %v7417
    %v7419 = vpop.f32.mrf.mxu0
    %v7420 = vadd.f32 0.0, %v7419
    %7421 = vmatmul.bf16.gmra.mxu0 %v7358
    %v7422 = vpop.f32.mrf.mxu0
    %v7423 = vadd.f32 0.0, %v7422
    %v7424 = vpop.f32.mrf.mxu0
    %v7425 = vadd.f32 0.0, %v7424
    %7426 = vmatmul.bf16.gmra.mxu0 %v7361
    %v7427 = vpop.f32.mrf.mxu0
    %v7428 = vadd.f32 0.0, %v7427
    %v7429 = vpop.f32.mrf.mxu0
    %7430 = vdwg.mxu0
    %v7431 = vadd.f32 %v7261, %v7373
    %v7432 = vadd.f32 %v7262, %v7375
    %v7433 = vadd.f32 %v7263, %v7378
    %v7434 = vadd.f32 %v7264, %v7380
    %v7435 = vadd.f32 %v7265, %v7383
    %v7436 = vadd.f32 %v7266, %v7385
    %v7437 = vadd.f32 %v7267, %v7388
    %v7438 = vadd.f32 %v7268, %v7390
    %v7439 = vadd.f32 %v7269, %v7393
    %v7440 = vadd.f32 %v7270, %v7395
    %v7441 = vadd.f32 %v7271, %v7398
    %v7442 = vadd.f32 %v7272, %v7400
    %v7443 = vadd.f32 %v7273, %v7403
    %v7444 = vadd.f32 %v7274, %v7405
    %v7445 = vadd.f32 %v7275, %v7408
    %v7446 = vadd.f32 %v7276, %v7410
    %v7447 = vadd.f32 %v7277, %v7413
    %v7448 = vadd.f32 %v7278, %v7415
    %v7449 = vadd.f32 %v7279, %v7418
    %v7450 = vadd.f32 %v7280, %v7420
    %v7451 = vadd.f32 %v7281, %v7423
    %v7452 = vadd.f32 %v7282, %v7425
    %v7453 = vadd.f32 %v7283, %v7428
    %v7454 = vld [vmem:[#allocation3 + $0x15] sm:$0xff]
    %v7455 = vld [vmem:[#allocation3 + $0x1d] sm:$0xff]
    %v7456 = vld [vmem:[#allocation3 + $0x25] sm:$0xff]
    %v7457 = vld [vmem:[#allocation3 + $0x2d] sm:$0xff]
    %v7458 = vld [vmem:[#allocation3 + $0x35] sm:$0xff]
    %v7459 = vld [vmem:[#allocation3 + $0x3d] sm:$0xff]
    %v7460 = vld [vmem:[#allocation3 + $0x45] sm:$0xff]
    %v7461 = vld [vmem:[#allocation3 + $0x4d] sm:$0xff]
    %v7462 = vld [vmem:[#allocation3 + $0x55] sm:$0xff]
    %v7463 = vld [vmem:[#allocation3 + $0x5d] sm:$0xff]
    %v7464 = vld [vmem:[#allocation3 + $0x65] sm:$0xff]
    %v7465 = vld [vmem:[#allocation3 + $0x6d] sm:$0xff]
    %v7466 = vld [vmem:[#allocation3 + $0x75] sm:$0xff]
    %v7467 = vld [vmem:[#allocation3 + $0x7d] sm:$0xff]
    %v7468 = vld [vmem:[#allocation3 + $0x85] sm:$0xff]
    %v7469 = vld [vmem:[#allocation3 + $0x8d] sm:$0xff]
    %v7470 = vld [vmem:[#allocation3 + $0x95] sm:$0xff]
    %v7471 = vld [vmem:[#allocation3 + $0x9d] sm:$0xff]
    %v7472 = vld [vmem:[#allocation3 + $0xa5] sm:$0xff]
    %v7473 = vld [vmem:[#allocation3 + $0xad] sm:$0xff]
    %v7474 = vld [vmem:[#allocation3 + $0xb5] sm:$0xff]
    %v7475 = vld [vmem:[#allocation3 + $0xbd] sm:$0xff]
    %v7476 = vld [vmem:[#allocation3 + $0xc5] sm:$0x3]
    %v7477 = vpack.c.bf16 %v7455, %v7454
    %v7478 = vpack.c.bf16 %v7457, %v7456
    %v7479 = vpack.c.bf16 %v7459, %v7458
    %v7480 = vpack.c.bf16 %v7461, %v7460
    %v7481 = vpack.c.bf16 %v7463, %v7462
    %v7482 = vpack.c.bf16 %v7465, %v7464
    %v7483 = vpack.c.bf16 %v7467, %v7466
    %v7484 = vpack.c.bf16 %v7469, %v7468
    %v7485 = vpack.c.bf16 %v7471, %v7470
    %v7486 = vpack.c.bf16 %v7473, %v7472
    %v7487 = vpack.c.bf16 %v7475, %v7474
    %v7488 = vpack.c.bf16 %v7476, %v7476
    %v7489 = vld [vmem:[%s5 + $0x38] sm:$0xf]
    %v7490 = vld [vmem:[%s5 + $0x3c] sm:$0xf]
    %v7493 = vunpack.c.l.b16 %v7489
    %v7494 = vunpack.c.l.b16 %v7490
    %v7495 = vpack.c.b16 %v7494, %v7493
    %v7498 = vsel %vm4617, %v7477, 0
    %v7501 = vsel %vm4617, %v7478, 0
    %v7504 = vsel %vm4617, %v7479, 0
    %v7507 = vsel %vm4617, %v7480, 0
    %v7510 = vsel %vm4617, %v7481, 0
    %v7513 = vsel %vm4617, %v7482, 0
    %v7516 = vsel %vm4617, %v7483, 0
    %v7519 = vsel %vm4617, %v7484, 0
    %v7522 = vsel %vm4617, %v7485, 0
    %v7525 = vsel %vm4617, %v7486, 0
    %v7528 = vsel %vm4617, %v7487, 0
    %v7531 = vsel %vm4617, %v7488, 0
    %7533 = vmatpush.bf16.msra.mxu0 0
    %7534 = vmatpush.bf16.msra.mxu0 0
    %7535 = vmatpush.bf16.msra.mxu0 0
    %7536 = vmatpush.bf16.msra.mxu0 0
    %7537 = vmatpush.bf16.msra.mxu0 0
    %7538 = vmatpush.bf16.msra.mxu0 0
    %7539 = vmatpush.bf16.msra.mxu0 0
    %7540 = vmatpush.bf16.msra.mxu0 %v7495
    %7541 = vmatmul.bf16.gmra.mxu0 %v7498
    %v7542 = vpop.f32.mrf.mxu0
    %v7543 = vadd.f32 0.0, %v7542
    %v7544 = vpop.f32.mrf.mxu0
    %v7545 = vadd.f32 0.0, %v7544
    %7546 = vmatmul.bf16.gmra.mxu0 %v7501
    %v7547 = vpop.f32.mrf.mxu0
    %v7548 = vadd.f32 0.0, %v7547
    %v7549 = vpop.f32.mrf.mxu0
    %v7550 = vadd.f32 0.0, %v7549
    %7551 = vmatmul.bf16.gmra.mxu0 %v7504
    %v7552 = vpop.f32.mrf.mxu0
    %v7553 = vadd.f32 0.0, %v7552
    %v7554 = vpop.f32.mrf.mxu0
    %v7555 = vadd.f32 0.0, %v7554
    %7556 = vmatmul.bf16.gmra.mxu0 %v7507
    %v7557 = vpop.f32.mrf.mxu0
    %v7558 = vadd.f32 0.0, %v7557
    %v7559 = vpop.f32.mrf.mxu0
    %v7560 = vadd.f32 0.0, %v7559
    %7561 = vmatmul.bf16.gmra.mxu0 %v7510
    %v7562 = vpop.f32.mrf.mxu0
    %v7563 = vadd.f32 0.0, %v7562
    %v7564 = vpop.f32.mrf.mxu0
    %v7565 = vadd.f32 0.0, %v7564
    %7566 = vmatmul.bf16.gmra.mxu0 %v7513
    %v7567 = vpop.f32.mrf.mxu0
    %v7568 = vadd.f32 0.0, %v7567
    %v7569 = vpop.f32.mrf.mxu0
    %v7570 = vadd.f32 0.0, %v7569
    %7571 = vmatmul.bf16.gmra.mxu0 %v7516
    %v7572 = vpop.f32.mrf.mxu0
    %v7573 = vadd.f32 0.0, %v7572
    %v7574 = vpop.f32.mrf.mxu0
    %v7575 = vadd.f32 0.0, %v7574
    %7576 = vmatmul.bf16.gmra.mxu0 %v7519
    %v7577 = vpop.f32.mrf.mxu0
    %v7578 = vadd.f32 0.0, %v7577
    %v7579 = vpop.f32.mrf.mxu0
    %v7580 = vadd.f32 0.0, %v7579
    %7581 = vmatmul.bf16.gmra.mxu0 %v7522
    %v7582 = vpop.f32.mrf.mxu0
    %v7583 = vadd.f32 0.0, %v7582
    %v7584 = vpop.f32.mrf.mxu0
    %v7585 = vadd.f32 0.0, %v7584
    %7586 = vmatmul.bf16.gmra.mxu0 %v7525
    %v7587 = vpop.f32.mrf.mxu0
    %v7588 = vadd.f32 0.0, %v7587
    %v7589 = vpop.f32.mrf.mxu0
    %v7590 = vadd.f32 0.0, %v7589
    %7591 = vmatmul.bf16.gmra.mxu0 %v7528
    %v7592 = vpop.f32.mrf.mxu0
    %v7593 = vadd.f32 0.0, %v7592
    %v7594 = vpop.f32.mrf.mxu0
    %v7595 = vadd.f32 0.0, %v7594
    %7596 = vmatmul.bf16.gmra.mxu0 %v7531
    %v7597 = vpop.f32.mrf.mxu0
    %v7598 = vadd.f32 0.0, %v7597
    %v7599 = vpop.f32.mrf.mxu0
    %7600 = vdwg.mxu0
    %v7601 = vadd.f32 %v7431, %v7543
    %v7602 = vadd.f32 %v7432, %v7545
    %v7603 = vadd.f32 %v7433, %v7548
    %v7604 = vadd.f32 %v7434, %v7550
    %v7605 = vadd.f32 %v7435, %v7553
    %v7606 = vadd.f32 %v7436, %v7555
    %v7607 = vadd.f32 %v7437, %v7558
    %v7608 = vadd.f32 %v7438, %v7560
    %v7609 = vadd.f32 %v7439, %v7563
    %v7610 = vadd.f32 %v7440, %v7565
    %v7611 = vadd.f32 %v7441, %v7568
    %v7612 = vadd.f32 %v7442, %v7570
    %v7613 = vadd.f32 %v7443, %v7573
    %v7614 = vadd.f32 %v7444, %v7575
    %v7615 = vadd.f32 %v7445, %v7578
    %v7616 = vadd.f32 %v7446, %v7580
    %v7617 = vadd.f32 %v7447, %v7583
    %v7618 = vadd.f32 %v7448, %v7585
    %v7619 = vadd.f32 %v7449, %v7588
    %v7620 = vadd.f32 %v7450, %v7590
    %v7621 = vadd.f32 %v7451, %v7593
    %v7622 = vadd.f32 %v7452, %v7595
    %v7623 = vadd.f32 %v7453, %v7598
    %v7624 = vld [vmem:[#allocation3 + $0x16] sm:$0xff]
    %v7625 = vld [vmem:[#allocation3 + $0x1e] sm:$0xff]
    %v7626 = vld [vmem:[#allocation3 + $0x26] sm:$0xff]
    %v7627 = vld [vmem:[#allocation3 + $0x2e] sm:$0xff]
    %v7628 = vld [vmem:[#allocation3 + $0x36] sm:$0xff]
    %v7629 = vld [vmem:[#allocation3 + $0x3e] sm:$0xff]
    %v7630 = vld [vmem:[#allocation3 + $0x46] sm:$0xff]
    %v7631 = vld [vmem:[#allocation3 + $0x4e] sm:$0xff]
    %v7632 = vld [vmem:[#allocation3 + $0x56] sm:$0xff]
    %v7633 = vld [vmem:[#allocation3 + $0x5e] sm:$0xff]
    %v7634 = vld [vmem:[#allocation3 + $0x66] sm:$0xff]
    %v7635 = vld [vmem:[#allocation3 + $0x6e] sm:$0xff]
    %v7636 = vld [vmem:[#allocation3 + $0x76] sm:$0xff]
    %v7637 = vld [vmem:[#allocation3 + $0x7e] sm:$0xff]
    %v7638 = vld [vmem:[#allocation3 + $0x86] sm:$0xff]
    %v7639 = vld [vmem:[#allocation3 + $0x8e] sm:$0xff]
    %v7640 = vld [vmem:[#allocation3 + $0x96] sm:$0xff]
    %v7641 = vld [vmem:[#allocation3 + $0x9e] sm:$0xff]
    %v7642 = vld [vmem:[#allocation3 + $0xa6] sm:$0xff]
    %v7643 = vld [vmem:[#allocation3 + $0xae] sm:$0xff]
    %v7644 = vld [vmem:[#allocation3 + $0xb6] sm:$0xff]
    %v7645 = vld [vmem:[#allocation3 + $0xbe] sm:$0xff]
    %v7646 = vld [vmem:[#allocation3 + $0xc6] sm:$0x3]
    %v7647 = vpack.c.bf16 %v7625, %v7624
    %v7648 = vpack.c.bf16 %v7627, %v7626
    %v7649 = vpack.c.bf16 %v7629, %v7628
    %v7650 = vpack.c.bf16 %v7631, %v7630
    %v7651 = vpack.c.bf16 %v7633, %v7632
    %v7652 = vpack.c.bf16 %v7635, %v7634
    %v7653 = vpack.c.bf16 %v7637, %v7636
    %v7654 = vpack.c.bf16 %v7639, %v7638
    %v7655 = vpack.c.bf16 %v7641, %v7640
    %v7656 = vpack.c.bf16 %v7643, %v7642
    %v7657 = vpack.c.bf16 %v7645, %v7644
    %v7658 = vpack.c.bf16 %v7646, %v7646
    %v7659 = vld [vmem:[%s5 + $0x40] sm:$0xf]
    %v7660 = vld [vmem:[%s5 + $0x44] sm:$0xf]
    %v7663 = vunpack.c.l.b16 %v7659
    %v7664 = vunpack.c.l.b16 %v7660
    %v7665 = vpack.c.b16 %v7664, %v7663
    %v7668 = vsel %vm4617, %v7647, 0
    %v7671 = vsel %vm4617, %v7648, 0
    %v7674 = vsel %vm4617, %v7649, 0
    %v7677 = vsel %vm4617, %v7650, 0
    %v7680 = vsel %vm4617, %v7651, 0
    %v7683 = vsel %vm4617, %v7652, 0
    %v7686 = vsel %vm4617, %v7653, 0
    %v7689 = vsel %vm4617, %v7654, 0
    %v7692 = vsel %vm4617, %v7655, 0
    %v7695 = vsel %vm4617, %v7656, 0
    %v7698 = vsel %vm4617, %v7657, 0
    %v7701 = vsel %vm4617, %v7658, 0
    %7703 = vmatpush.bf16.msra.mxu0 0
    %7704 = vmatpush.bf16.msra.mxu0 0
    %7705 = vmatpush.bf16.msra.mxu0 0
    %7706 = vmatpush.bf16.msra.mxu0 0
    %7707 = vmatpush.bf16.msra.mxu0 0
    %7708 = vmatpush.bf16.msra.mxu0 0
    %7709 = vmatpush.bf16.msra.mxu0 0
    %7710 = vmatpush.bf16.msra.mxu0 %v7665
    %7711 = vmatmul.bf16.gmra.mxu0 %v7668
    %v7712 = vpop.f32.mrf.mxu0
    %v7713 = vadd.f32 0.0, %v7712
    %v7714 = vpop.f32.mrf.mxu0
    %v7715 = vadd.f32 0.0, %v7714
    %7716 = vmatmul.bf16.gmra.mxu0 %v7671
    %v7717 = vpop.f32.mrf.mxu0
    %v7718 = vadd.f32 0.0, %v7717
    %v7719 = vpop.f32.mrf.mxu0
    %v7720 = vadd.f32 0.0, %v7719
    %7721 = vmatmul.bf16.gmra.mxu0 %v7674
    %v7722 = vpop.f32.mrf.mxu0
    %v7723 = vadd.f32 0.0, %v7722
    %v7724 = vpop.f32.mrf.mxu0
    %v7725 = vadd.f32 0.0, %v7724
    %7726 = vmatmul.bf16.gmra.mxu0 %v7677
    %v7727 = vpop.f32.mrf.mxu0
    %v7728 = vadd.f32 0.0, %v7727
    %v7729 = vpop.f32.mrf.mxu0
    %v7730 = vadd.f32 0.0, %v7729
    %7731 = vmatmul.bf16.gmra.mxu0 %v7680
    %v7732 = vpop.f32.mrf.mxu0
    %v7733 = vadd.f32 0.0, %v7732
    %v7734 = vpop.f32.mrf.mxu0
    %v7735 = vadd.f32 0.0, %v7734
    %7736 = vmatmul.bf16.gmra.mxu0 %v7683
    %v7737 = vpop.f32.mrf.mxu0
    %v7738 = vadd.f32 0.0, %v7737
    %v7739 = vpop.f32.mrf.mxu0
    %v7740 = vadd.f32 0.0, %v7739
    %7741 = vmatmul.bf16.gmra.mxu0 %v7686
    %v7742 = vpop.f32.mrf.mxu0
    %v7743 = vadd.f32 0.0, %v7742
    %v7744 = vpop.f32.mrf.mxu0
    %v7745 = vadd.f32 0.0, %v7744
    %7746 = vmatmul.bf16.gmra.mxu0 %v7689
    %v7747 = vpop.f32.mrf.mxu0
    %v7748 = vadd.f32 0.0, %v7747
    %v7749 = vpop.f32.mrf.mxu0
    %v7750 = vadd.f32 0.0, %v7749
    %7751 = vmatmul.bf16.gmra.mxu0 %v7692
    %v7752 = vpop.f32.mrf.mxu0
    %v7753 = vadd.f32 0.0, %v7752
    %v7754 = vpop.f32.mrf.mxu0
    %v7755 = vadd.f32 0.0, %v7754
    %7756 = vmatmul.bf16.gmra.mxu0 %v7695
    %v7757 = vpop.f32.mrf.mxu0
    %v7758 = vadd.f32 0.0, %v7757
    %v7759 = vpop.f32.mrf.mxu0
    %v7760 = vadd.f32 0.0, %v7759
    %7761 = vmatmul.bf16.gmra.mxu0 %v7698
    %v7762 = vpop.f32.mrf.mxu0
    %v7763 = vadd.f32 0.0, %v7762
    %v7764 = vpop.f32.mrf.mxu0
    %v7765 = vadd.f32 0.0, %v7764
    %7766 = vmatmul.bf16.gmra.mxu0 %v7701
    %v7767 = vpop.f32.mrf.mxu0
    %v7768 = vadd.f32 0.0, %v7767
    %v7769 = vpop.f32.mrf.mxu0
    %7770 = vdwg.mxu0
    %v7771 = vadd.f32 %v7601, %v7713
    %v7772 = vadd.f32 %v7602, %v7715
    %v7773 = vadd.f32 %v7603, %v7718
    %v7774 = vadd.f32 %v7604, %v7720
    %v7775 = vadd.f32 %v7605, %v7723
    %v7776 = vadd.f32 %v7606, %v7725
    %v7777 = vadd.f32 %v7607, %v7728
    %v7778 = vadd.f32 %v7608, %v7730
    %v7779 = vadd.f32 %v7609, %v7733
    %v7780 = vadd.f32 %v7610, %v7735
    %v7781 = vadd.f32 %v7611, %v7738
    %v7782 = vadd.f32 %v7612, %v7740
    %v7783 = vadd.f32 %v7613, %v7743
    %v7784 = vadd.f32 %v7614, %v7745
    %v7785 = vadd.f32 %v7615, %v7748
    %v7786 = vadd.f32 %v7616, %v7750
    %v7787 = vadd.f32 %v7617, %v7753
    %v7788 = vadd.f32 %v7618, %v7755
    %v7789 = vadd.f32 %v7619, %v7758
    %v7790 = vadd.f32 %v7620, %v7760
    %v7791 = vadd.f32 %v7621, %v7763
    %v7792 = vadd.f32 %v7622, %v7765
    %v7793 = vadd.f32 %v7623, %v7768
    %vm7794 = vcmask 523264
    %7795 = vst.msk [vmem:[#allocation4] sm:$0xff] %vm7794, %v7771
    %7796 = vst.msk [vmem:[#allocation4 + $0x8] sm:$0xff] %vm7794, %v7772
    %7797 = vst.msk [vmem:[#allocation4 + $0x10] sm:$0xff] %vm7794, %v7773
    %7798 = vst.msk [vmem:[#allocation4 + $0x18] sm:$0xff] %vm7794, %v7774
    %7799 = vst.msk [vmem:[#allocation4 + $0x20] sm:$0xff] %vm7794, %v7775
    %7800 = vst.msk [vmem:[#allocation4 + $0x28] sm:$0xff] %vm7794, %v7776
    %7801 = vst.msk [vmem:[#allocation4 + $0x30] sm:$0xff] %vm7794, %v7777
    %7802 = vst.msk [vmem:[#allocation4 + $0x38] sm:$0xff] %vm7794, %v7778
    %7803 = vst.msk [vmem:[#allocation4 + $0x40] sm:$0xff] %vm7794, %v7779
    %7804 = vst.msk [vmem:[#allocation4 + $0x48] sm:$0xff] %vm7794, %v7780
    %7805 = vst.msk [vmem:[#allocation4 + $0x50] sm:$0xff] %vm7794, %v7781
    %7806 = vst.msk [vmem:[#allocation4 + $0x58] sm:$0xff] %vm7794, %v7782
    %7807 = vst.msk [vmem:[#allocation4 + $0x60] sm:$0xff] %vm7794, %v7783
    %7808 = vst.msk [vmem:[#allocation4 + $0x68] sm:$0xff] %vm7794, %v7784
    %7809 = vst.msk [vmem:[#allocation4 + $0x70] sm:$0xff] %vm7794, %v7785
    %7810 = vst.msk [vmem:[#allocation4 + $0x78] sm:$0xff] %vm7794, %v7786
    %7811 = vst.msk [vmem:[#allocation4 + $0x80] sm:$0xff] %vm7794, %v7787
    %7812 = vst.msk [vmem:[#allocation4 + $0x88] sm:$0xff] %vm7794, %v7788
    %7813 = vst.msk [vmem:[#allocation4 + $0x90] sm:$0xff] %vm7794, %v7789
    %7814 = vst.msk [vmem:[#allocation4 + $0x98] sm:$0xff] %vm7794, %v7790
    %7815 = vst.msk [vmem:[#allocation4 + $0xa0] sm:$0xff] %vm7794, %v7791
    %7816 = vst.msk [vmem:[#allocation4 + $0xa8] sm:$0xff] %vm7794, %v7792
    %vm7817 = vcmask 517120
    %7818 = vst.msk [vmem:[#allocation4 + $0xb0] sm:$0x3] %vm7817, %v7793
    %v7819 = vld [vmem:[#allocation4] sm:$0xff]
    %v7820 = vld [vmem:[#allocation4 + $0x8] sm:$0xff]
    %v7821 = vld [vmem:[#allocation4 + $0x10] sm:$0xff]
    %v7822 = vld [vmem:[#allocation4 + $0x18] sm:$0xff]
    %v7823 = vld [vmem:[#allocation4 + $0x20] sm:$0xff]
    %v7824 = vld [vmem:[#allocation4 + $0x28] sm:$0xff]
    %v7825 = vld [vmem:[#allocation4 + $0x30] sm:$0xff]
    %v7826 = vld [vmem:[#allocation4 + $0x38] sm:$0xff]
    %v7827 = vld [vmem:[#allocation4 + $0x40] sm:$0xff]
    %v7828 = vld [vmem:[#allocation4 + $0x48] sm:$0xff]
    %v7829 = vld [vmem:[#allocation4 + $0x50] sm:$0xff]
    %v7830 = vld [vmem:[#allocation4 + $0x58] sm:$0xff]
    %v7831 = vld [vmem:[#allocation4 + $0x60] sm:$0xff]
    %v7832 = vld [vmem:[#allocation4 + $0x68] sm:$0xff]
    %v7833 = vld [vmem:[#allocation4 + $0x70] sm:$0xff]
    %v7834 = vld [vmem:[#allocation4 + $0x78] sm:$0xff]
    %v7835 = vld [vmem:[#allocation4 + $0x80] sm:$0xff]
    %v7836 = vld [vmem:[#allocation4 + $0x88] sm:$0xff]
    %v7837 = vld [vmem:[#allocation4 + $0x90] sm:$0xff]
    %v7838 = vld [vmem:[#allocation4 + $0x98] sm:$0xff]
    %v7839 = vld [vmem:[#allocation4 + $0xa0] sm:$0x7f]
    %v7840 = vld [vmem:[#allocation4 + $0x1] sm:$0xff]
    %v7841 = vld [vmem:[#allocation4 + $0x9] sm:$0xff]
    %v7842 = vld [vmem:[#allocation4 + $0x11] sm:$0xff]
    %v7843 = vld [vmem:[#allocation4 + $0x19] sm:$0xff]
    %v7844 = vld [vmem:[#allocation4 + $0x21] sm:$0xff]
    %v7845 = vld [vmem:[#allocation4 + $0x29] sm:$0xff]
    %v7846 = vld [vmem:[#allocation4 + $0x31] sm:$0xff]
    %v7847 = vld [vmem:[#allocation4 + $0x39] sm:$0xff]
    %v7848 = vld [vmem:[#allocation4 + $0x41] sm:$0xff]
    %v7849 = vld [vmem:[#allocation4 + $0x49] sm:$0xff]
    %v7850 = vld [vmem:[#allocation4 + $0x51] sm:$0xff]
    %v7851 = vld [vmem:[#allocation4 + $0x59] sm:$0xff]
    %v7852 = vld [vmem:[#allocation4 + $0x61] sm:$0xff]
    %v7853 = vld [vmem:[#allocation4 + $0x69] sm:$0xff]
    %v7854 = vld [vmem:[#allocation4 + $0x71] sm:$0xff]
    %v7855 = vld [vmem:[#allocation4 + $0x79] sm:$0xff]
    %v7856 = vld [vmem:[#allocation4 + $0x81] sm:$0xff]
    %v7857 = vld [vmem:[#allocation4 + $0x89] sm:$0xff]
    %v7858 = vld [vmem:[#allocation4 + $0x91] sm:$0xff]
    %v7859 = vld [vmem:[#allocation4 + $0x99] sm:$0xff]
    %v7860 = vld [vmem:[#allocation4 + $0xa1] sm:$0x7f]
    %v7861 = vld [vmem:[#allocation4 + $0xa] sm:$0xff]
    %v7862 = vld [vmem:[#allocation4 + $0x12] sm:$0xff]
    %v7863 = vld [vmem:[#allocation4 + $0x1a] sm:$0xff]
    %v7864 = vld [vmem:[#allocation4 + $0x22] sm:$0xff]
    %v7865 = vld [vmem:[#allocation4 + $0x2a] sm:$0xff]
    %v7866 = vld [vmem:[#allocation4 + $0x32] sm:$0xff]
    %v7867 = vld [vmem:[#allocation4 + $0x3a] sm:$0xff]
    %v7868 = vld [vmem:[#allocation4 + $0x42] sm:$0xff]
    %v7869 = vld [vmem:[#allocation4 + $0x4a] sm:$0xff]
    %v7870 = vld [vmem:[#allocation4 + $0x52] sm:$0xff]
    %v7871 = vld [vmem:[#allocation4 + $0x5a] sm:$0xff]
    %v7872 = vld [vmem:[#allocation4 + $0x62] sm:$0xff]
    %v7873 = vld [vmem:[#allocation4 + $0x6a] sm:$0xff]
    %v7874 = vld [vmem:[#allocation4 + $0x72] sm:$0xff]
    %v7875 = vld [vmem:[#allocation4 + $0x7a] sm:$0xff]
    %v7876 = vld [vmem:[#allocation4 + $0x82] sm:$0xff]
    %v7877 = vld [vmem:[#allocation4 + $0x8a] sm:$0xff]
    %v7878 = vld [vmem:[#allocation4 + $0x92] sm:$0xff]
    %v7879 = vld [vmem:[#allocation4 + $0x9a] sm:$0xff]
    %v7880 = vld [vmem:[#allocation4 + $0xa2] sm:$0xff]
    %v7881 = vld [vmem:[#allocation4 + $0xaa] sm:$0x7f]
    %v7882 = vld [vmem:[#allocation4 + $0xb] sm:$0xff]
    %v7883 = vld [vmem:[#allocation4 + $0x13] sm:$0xff]
    %v7884 = vld [vmem:[#allocation4 + $0x1b] sm:$0xff]
    %v7885 = vld [vmem:[#allocation4 + $0x23] sm:$0xff]
    %v7886 = vld [vmem:[#allocation4 + $0x2b] sm:$0xff]
    %v7887 = vld [vmem:[#allocation4 + $0x33] sm:$0xff]
    %v7888 = vld [vmem:[#allocation4 + $0x3b] sm:$0xff]
    %v7889 = vld [vmem:[#allocation4 + $0x43] sm:$0xff]
    %v7890 = vld [vmem:[#allocation4 + $0x4b] sm:$0xff]
    %v7891 = vld [vmem:[#allocation4 + $0x53] sm:$0xff]
    %v7892 = vld [vmem:[#allocation4 + $0x5b] sm:$0xff]
    %v7893 = vld [vmem:[#allocation4 + $0x63] sm:$0xff]
    %v7894 = vld [vmem:[#allocation4 + $0x6b] sm:$0xff]
    %v7895 = vld [vmem:[#allocation4 + $0x73] sm:$0xff]
    %v7896 = vld [vmem:[#allocation4 + $0x7b] sm:$0xff]
    %v7897 = vld [vmem:[#allocation4 + $0x83] sm:$0xff]
    %v7898 = vld [vmem:[#allocation4 + $0x8b] sm:$0xff]
    %v7899 = vld [vmem:[#allocation4 + $0x93] sm:$0xff]
    %v7900 = vld [vmem:[#allocation4 + $0x9b] sm:$0xff]
    %v7901 = vld [vmem:[#allocation4 + $0xa3] sm:$0xff]
    %v7902 = vld [vmem:[#allocation4 + $0xab] sm:$0x7f]
    %v7903 = vmax.f32 %v7819, %v7840
    %v7904 = vmax.f32 %v7820, %v7841
    %v7905 = vmax.f32 %v7821, %v7842
    %v7906 = vmax.f32 %v7822, %v7843
    %v7907 = vmax.f32 %v7823, %v7844
    %v7908 = vmax.f32 %v7824, %v7845
    %v7909 = vmax.f32 %v7825, %v7846
    %v7910 = vmax.f32 %v7826, %v7847
    %v7911 = vmax.f32 %v7827, %v7848
    %v7912 = vmax.f32 %v7828, %v7849
    %v7913 = vmax.f32 %v7829, %v7850
    %v7914 = vmax.f32 %v7830, %v7851
    %v7915 = vmax.f32 %v7831, %v7852
    %v7916 = vmax.f32 %v7832, %v7853
    %v7917 = vmax.f32 %v7833, %v7854
    %v7918 = vmax.f32 %v7834, %v7855
    %v7919 = vmax.f32 %v7835, %v7856
    %v7920 = vmax.f32 %v7836, %v7857
    %v7921 = vmax.f32 %v7837, %v7858
    %v7922 = vmax.f32 %v7838, %v7859
    %v7923 = vmax.f32 %v7839, %v7860
    %v7924 = vmax.f32 %v7861, %v7882
    %v7925 = vmax.f32 %v7862, %v7883
    %v7926 = vmax.f32 %v7863, %v7884
    %v7927 = vmax.f32 %v7864, %v7885
    %v7928 = vmax.f32 %v7865, %v7886
    %v7929 = vmax.f32 %v7866, %v7887
    %v7930 = vmax.f32 %v7867, %v7888
    %v7931 = vmax.f32 %v7868, %v7889
    %v7932 = vmax.f32 %v7869, %v7890
    %v7933 = vmax.f32 %v7870, %v7891
    %v7934 = vmax.f32 %v7871, %v7892
    %v7935 = vmax.f32 %v7872, %v7893
    %v7936 = vmax.f32 %v7873, %v7894
    %v7937 = vmax.f32 %v7874, %v7895
    %v7938 = vmax.f32 %v7875, %v7896
    %v7939 = vmax.f32 %v7876, %v7897
    %v7940 = vmax.f32 %v7877, %v7898
    %v7941 = vmax.f32 %v7878, %v7899
    %v7942 = vmax.f32 %v7879, %v7900
    %v7943 = vmax.f32 %v7880, %v7901
    %v7944 = vmax.f32 %v7881, %v7902
    %v7945 = vmax.f32 %v7903, %v7924
    %v7946 = vmax.f32 %v7904, %v7925
    %v7947 = vmax.f32 %v7905, %v7926
    %v7948 = vmax.f32 %v7906, %v7927
    %v7949 = vmax.f32 %v7907, %v7928
    %v7950 = vmax.f32 %v7908, %v7929
    %v7951 = vmax.f32 %v7909, %v7930
    %v7952 = vmax.f32 %v7910, %v7931
    %v7953 = vmax.f32 %v7911, %v7932
    %v7954 = vmax.f32 %v7912, %v7933
    %v7955 = vmax.f32 %v7913, %v7934
    %v7956 = vmax.f32 %v7914, %v7935
    %v7957 = vmax.f32 %v7915, %v7936
    %v7958 = vmax.f32 %v7916, %v7937
    %v7959 = vmax.f32 %v7917, %v7938
    %v7960 = vmax.f32 %v7918, %v7939
    %v7961 = vmax.f32 %v7919, %v7940
    %v7962 = vmax.f32 %v7920, %v7941
    %v7963 = vmax.f32 %v7921, %v7942
    %v7964 = vmax.f32 %v7922, %v7943
    %v7965 = vmax.f32 %v7923, %v7944
    %v7966 = vld [vmem:[%s6] sm:$0x1]
    %v7968 = vperm.slane %v7966, 0
    %v7970 = vmul.f32 %v7945, %v7968
    %v7971 = vmul.f32 %v7946, %v7968
    %v7972 = vmul.f32 %v7947, %v7968
    %v7973 = vmul.f32 %v7948, %v7968
    %v7974 = vmul.f32 %v7949, %v7968
    %v7975 = vmul.f32 %v7950, %v7968
    %v7976 = vmul.f32 %v7951, %v7968
    %v7977 = vmul.f32 %v7952, %v7968
    %v7978 = vmul.f32 %v7953, %v7968
    %v7979 = vmul.f32 %v7954, %v7968
    %v7980 = vmul.f32 %v7955, %v7968
    %v7981 = vmul.f32 %v7956, %v7968
    %v7982 = vmul.f32 %v7957, %v7968
    %v7983 = vmul.f32 %v7958, %v7968
    %v7984 = vmul.f32 %v7959, %v7968
    %v7985 = vmul.f32 %v7960, %v7968
    %v7986 = vmul.f32 %v7961, %v7968
    %v7987 = vmul.f32 %v7962, %v7968
    %v7988 = vmul.f32 %v7963, %v7968
    %v7989 = vmul.f32 %v7964, %v7968
    %v7990 = vmul.f32 %v7965, %v7968
    %v7991 = vld [vmem:[%s7] sm:$0x1]
    %v7993 = vperm.slane %v7991, 0
    %v7995 = vadd.f32 %v7970, %v7993
    %v7996 = vadd.f32 %v7971, %v7993
    %v7997 = vadd.f32 %v7972, %v7993
    %v7998 = vadd.f32 %v7973, %v7993
    %v7999 = vadd.f32 %v7974, %v7993
    %v8000 = vadd.f32 %v7975, %v7993
    %v8001 = vadd.f32 %v7976, %v7993
    %v8002 = vadd.f32 %v7977, %v7993
    %v8003 = vadd.f32 %v7978, %v7993
    %v8004 = vadd.f32 %v7979, %v7993
    %v8005 = vadd.f32 %v7980, %v7993
    %v8006 = vadd.f32 %v7981, %v7993
    %v8007 = vadd.f32 %v7982, %v7993
    %v8008 = vadd.f32 %v7983, %v7993
    %v8009 = vadd.f32 %v7984, %v7993
    %v8010 = vadd.f32 %v7985, %v7993
    %v8011 = vadd.f32 %v7986, %v7993
    %v8012 = vadd.f32 %v7987, %v7993
    %v8013 = vadd.f32 %v7988, %v7993
    %v8014 = vadd.f32 %v7989, %v7993
    %v8015 = vadd.f32 %v7990, %v7993
    %v8016 = vmax.f32 %v7995, 0.0
    %v8017 = vmax.f32 %v7996, 0.0
    %v8018 = vmax.f32 %v7997, 0.0
    %v8019 = vmax.f32 %v7998, 0.0
    %v8020 = vmax.f32 %v7999, 0.0
    %v8021 = vmax.f32 %v8000, 0.0
    %v8022 = vmax.f32 %v8001, 0.0
    %v8023 = vmax.f32 %v8002, 0.0
    %v8024 = vmax.f32 %v8003, 0.0
    %v8025 = vmax.f32 %v8004, 0.0
    %v8026 = vmax.f32 %v8005, 0.0
    %v8027 = vmax.f32 %v8006, 0.0
    %v8028 = vmax.f32 %v8007, 0.0
    %v8029 = vmax.f32 %v8008, 0.0
    %v8030 = vmax.f32 %v8009, 0.0
    %v8031 = vmax.f32 %v8010, 0.0
    %v8032 = vmax.f32 %v8011, 0.0
    %v8033 = vmax.f32 %v8012, 0.0
    %v8034 = vmax.f32 %v8013, 0.0
    %v8035 = vmax.f32 %v8014, 0.0
    %v8036 = vmax.f32 %v8015, 0.0
    %v8037 = vld [vmem:[%s8] sm:$0xff]
    %v8038 = vld [vmem:[%s8 + $0x8] sm:$0xff]
    %v8039 = vld [vmem:[%s8 + $0x10] sm:$0xff]
    %v8040 = vld [vmem:[%s8 + $0x18] sm:$0xff]
    %v8041 = vld [vmem:[%s8 + $0x20] sm:$0xff]
    %v8042 = vld [vmem:[%s8 + $0x28] sm:$0xff]
    %v8043 = vld [vmem:[%s8 + $0x30] sm:$0xff]
    %v8044 = vld [vmem:[%s8 + $0x38] sm:$0xff]
    %v8045 = vld [vmem:[%s8 + $0x40] sm:$0xff]
    %v8046 = vpack.c.bf16 %v8017, %v8016
    %v8047 = vpack.c.bf16 %v8019, %v8018
    %v8048 = vpack.c.bf16 %v8021, %v8020
    %v8049 = vpack.c.bf16 %v8023, %v8022
    %v8050 = vpack.c.bf16 %v8025, %v8024
    %v8051 = vpack.c.bf16 %v8027, %v8026
    %v8052 = vpack.c.bf16 %v8029, %v8028
    %v8053 = vpack.c.bf16 %v8031, %v8030
    %v8054 = vpack.c.bf16 %v8033, %v8032
    %v8055 = vpack.c.bf16 %v8035, %v8034
    %v8056 = vpack.c.bf16 %v8036, %v8036
    %v8066 = vunpack.c.l.b16 %v8037
    %v8067 = vunpack.c.h.b16 %v8037
    %v8068 = vunpack.c.l.b16 %v8038
    %v8069 = vunpack.c.h.b16 %v8038
    %v8070 = vunpack.c.l.b16 %v8039
    %v8071 = vunpack.c.h.b16 %v8039
    %v8072 = vunpack.c.l.b16 %v8040
    %v8073 = vunpack.c.h.b16 %v8040
    %v8074 = vunpack.c.l.b16 %v8041
    %v8075 = vunpack.c.h.b16 %v8041
    %v8076 = vunpack.c.l.b16 %v8042
    %v8077 = vunpack.c.h.b16 %v8042
    %v8078 = vunpack.c.l.b16 %v8043
    %v8079 = vunpack.c.h.b16 %v8043
    %v8080 = vunpack.c.l.b16 %v8044
    %v8081 = vunpack.c.h.b16 %v8044
    %v8082 = vunpack.c.l.b16 %v8045
    %v8083 = vunpack.c.h.b16 %v8045
    %v8084 = vpack.c.b16 %v8068, %v8066
    %v8085 = vpack.c.b16 %v8069, %v8067
    %v8086 = vpack.c.b16 %v8072, %v8070
    %v8087 = vpack.c.b16 %v8073, %v8071
    %v8088 = vpack.c.b16 %v8076, %v8074
    %v8089 = vpack.c.b16 %v8077, %v8075
    %v8090 = vpack.c.b16 %v8080, %v8078
    %v8091 = vpack.c.b16 %v8081, %v8079
    %v8092 = vpack.c.b16 %v8082, %v8082
    %v8093 = vpack.c.b16 %v8083, %v8083
    %vm8099 = vcmask 318464
    %v8101 = vsel %vm8099, %v8085, 0
    %v8104 = vsel %vm8099, %v8087, 0
    %v8107 = vsel %vm8099, %v8089, 0
    %v8110 = vsel %vm8099, %v8091, 0
    %v8113 = vsel %vm8099, %v8093, 0
    %vm8115 = vcmask 1042432
    %vm8116 = vcmask 1043456
    %v8117 = vsel %vm8115, 4294967295, 65535
    %v8118 = vsel %vm8116, %v8117, 0
    %v8120 = vand.u32 %v8056, %v8118
    %8122 = vmatpush.bf16.msra.mxu0 %v8053
    %8123 = vmatpush.bf16.msra.mxu0 %v8052
    %8124 = vmatpush.bf16.msra.mxu0 %v8051
    %8125 = vmatpush.bf16.msra.mxu0 %v8050
    %8126 = vmatpush.bf16.msra.mxu0 %v8049
    %8127 = vmatpush.bf16.msra.mxu0 %v8048
    %8128 = vmatpush.bf16.msra.mxu0 %v8047
    %8129 = vmatpush.bf16.msra.mxu0 %v8046
    %8130 = vmatmul.bf16.gmra.mxu0 %v8084
    %v8131 = vpop.f32.mrf.mxu0
    %v8132 = vadd.f32 0.0, %v8131
    %v8133 = vpop.f32.mrf.mxu0
    %v8134 = vadd.f32 0.0, %v8133
    %8135 = vmatmul.bf16.gmra.mxu0 %v8086
    %v8136 = vpop.f32.mrf.mxu0
    %v8137 = vadd.f32 0.0, %v8136
    %v8138 = vpop.f32.mrf.mxu0
    %v8139 = vadd.f32 0.0, %v8138
    %8140 = vmatmul.bf16.gmra.mxu0 %v8088
    %v8141 = vpop.f32.mrf.mxu0
    %v8142 = vadd.f32 0.0, %v8141
    %v8143 = vpop.f32.mrf.mxu0
    %v8144 = vadd.f32 0.0, %v8143
    %8145 = vmatmul.bf16.gmra.mxu0 %v8090
    %v8146 = vpop.f32.mrf.mxu0
    %v8147 = vadd.f32 0.0, %v8146
    %v8148 = vpop.f32.mrf.mxu0
    %v8149 = vadd.f32 0.0, %v8148
    %8150 = vmatmul.bf16.gmra.mxu0 %v8092
    %v8151 = vpop.f32.mrf.mxu0
    %v8152 = vadd.f32 0.0, %v8151
    %v8153 = vpop.f32.mrf.mxu0
    %8154 = vdwg.mxu0
    %8155 = vmatpush.bf16.msra.mxu0 0
    %8156 = vmatpush.bf16.msra.mxu0 0
    %8157 = vmatpush.bf16.msra.mxu0 0
    %8158 = vmatpush.bf16.msra.mxu0 0
    %8159 = vmatpush.bf16.msra.mxu0 0
    %8160 = vmatpush.bf16.msra.mxu0 %v8120
    %8161 = vmatpush.bf16.msra.mxu0 %v8055
    %8162 = vmatpush.bf16.msra.mxu0 %v8054
    %8163 = vmatmul.bf16.gmra.mxu0 %v8101
    %v8164 = vpop.f32.mrf.mxu0
    %v8165 = vadd.f32 %v8132, %v8164
    %v8166 = vpop.f32.mrf.mxu0
    %v8167 = vadd.f32 %v8134, %v8166
    %8168 = vmatmul.bf16.gmra.mxu0 %v8104
    %v8169 = vpop.f32.mrf.mxu0
    %v8170 = vadd.f32 %v8137, %v8169
    %v8171 = vpop.f32.mrf.mxu0
    %v8172 = vadd.f32 %v8139, %v8171
    %8173 = vmatmul.bf16.gmra.mxu0 %v8107
    %v8174 = vpop.f32.mrf.mxu0
    %v8175 = vadd.f32 %v8142, %v8174
    %v8176 = vpop.f32.mrf.mxu0
    %v8177 = vadd.f32 %v8144, %v8176
    %8178 = vmatmul.bf16.gmra.mxu0 %v8110
    %v8179 = vpop.f32.mrf.mxu0
    %v8180 = vadd.f32 %v8147, %v8179
    %v8181 = vpop.f32.mrf.mxu0
    %v8182 = vadd.f32 %v8149, %v8181
    %8183 = vmatmul.bf16.gmra.mxu0 %v8113
    %v8184 = vpop.f32.mrf.mxu0
    %v8185 = vadd.f32 %v8152, %v8184
    %v8186 = vpop.f32.mrf.mxu0
    %8187 = vdwg.mxu0
    %8188 = vst.msk [vmem:[#allocation5] sm:$0xff] %vm7794, %v8165
    %8189 = vst.msk [vmem:[#allocation5 + $0x8] sm:$0xff] %vm7794, %v8167
    %8190 = vst.msk [vmem:[#allocation5 + $0x10] sm:$0xff] %vm7794, %v8170
    %8191 = vst.msk [vmem:[#allocation5 + $0x18] sm:$0xff] %vm7794, %v8172
    %8192 = vst.msk [vmem:[#allocation5 + $0x20] sm:$0xff] %vm7794, %v8175
    %8193 = vst.msk [vmem:[#allocation5 + $0x28] sm:$0xff] %vm7794, %v8177
    %8194 = vst.msk [vmem:[#allocation5 + $0x30] sm:$0xff] %vm7794, %v8180
    %8195 = vst.msk [vmem:[#allocation5 + $0x38] sm:$0xff] %vm7794, %v8182
    %8196 = vst.msk [vmem:[#allocation5 + $0x40] sm:$0xff] %vm7794, %v8185
    %v8197 = vld [vmem:[#allocation5] sm:$0xff]
    %v8198 = vld [vmem:[#allocation5 + $0x8] sm:$0xff]
    %v8199 = vld [vmem:[#allocation5 + $0x10] sm:$0xff]
    %v8200 = vld [vmem:[#allocation5 + $0x18] sm:$0xff]
    %v8201 = vld [vmem:[#allocation5 + $0x20] sm:$0xff]
    %v8202 = vld [vmem:[#allocation5 + $0x28] sm:$0xff]
    %v8203 = vld [vmem:[#allocation5 + $0x30] sm:$0xff]
    %v8204 = vld [vmem:[#allocation5 + $0x38] sm:$0x3]
    %v8205 = vpack.c.bf16 %v8198, %v8197
    %v8206 = vpack.c.bf16 %v8200, %v8199
    %v8207 = vpack.c.bf16 %v8202, %v8201
    %v8208 = vpack.c.bf16 %v8204, %v8203
    %v8209 = vld [vmem:[%s9] sm:$0xff]
    %v8210 = vld [vmem:[%s9 + $0x8] sm:$0xff]
    %v8211 = vld [vmem:[%s9 + $0x10] sm:$0xff]
    %v8212 = vld [vmem:[%s9 + $0x18] sm:$0xff]
    %v8213 = vld [vmem:[%s9 + $0x20] sm:$0xff]
    %v8214 = vld [vmem:[%s9 + $0x28] sm:$0xff]
    %v8215 = vld [vmem:[%s9 + $0x30] sm:$0xff]
    %v8216 = vld [vmem:[%s9 + $0x38] sm:$0xff]
    %v8217 = vld [vmem:[%s9 + $0x40] sm:$0xff]
    %v8218 = vld [vmem:[%s9 + $0x48] sm:$0xff]
    %v8219 = vld [vmem:[%s9 + $0x50] sm:$0xff]
    %v8220 = vld [vmem:[%s9 + $0x58] sm:$0xff]
    %v8221 = vld [vmem:[%s9 + $0x60] sm:$0xff]
    %v8222 = vld [vmem:[%s9 + $0x68] sm:$0xff]
    %v8223 = vld [vmem:[%s9 + $0x70] sm:$0xff]
    %v8224 = vld [vmem:[%s9 + $0x78] sm:$0xff]
    %v8225 = vld [vmem:[#allocation5 + $0x1] sm:$0xff]
    %v8226 = vld [vmem:[#allocation5 + $0x9] sm:$0xff]
    %v8227 = vld [vmem:[#allocation5 + $0x11] sm:$0xff]
    %v8228 = vld [vmem:[#allocation5 + $0x19] sm:$0xff]
    %v8229 = vld [vmem:[#allocation5 + $0x21] sm:$0xff]
    %v8230 = vld [vmem:[#allocation5 + $0x29] sm:$0xff]
    %v8231 = vld [vmem:[#allocation5 + $0x31] sm:$0xff]
    %v8232 = vld [vmem:[#allocation5 + $0x39] sm:$0x3]
    %v8233 = vpack.c.bf16 %v8226, %v8225
    %v8234 = vpack.c.bf16 %v8228, %v8227
    %v8235 = vpack.c.bf16 %v8230, %v8229
    %v8236 = vpack.c.bf16 %v8232, %v8231
    %v8237 = vld [vmem:[%s9 + $0x80] sm:$0xff]
    %v8238 = vld [vmem:[%s9 + $0x88] sm:$0xff]
    %v8239 = vld [vmem:[%s9 + $0x90] sm:$0xff]
    %v8240 = vld [vmem:[%s9 + $0x98] sm:$0xff]
    %v8241 = vld [vmem:[%s9 + $0xa0] sm:$0xff]
    %v8242 = vld [vmem:[%s9 + $0xa8] sm:$0xff]
    %v8243 = vld [vmem:[%s9 + $0xb0] sm:$0xff]
    %v8244 = vld [vmem:[%s9 + $0xb8] sm:$0xff]
    %v8245 = vld [vmem:[%s9 + $0xc0] sm:$0xff]
    %v8246 = vld [vmem:[%s9 + $0xc8] sm:$0xff]
    %v8247 = vld [vmem:[%s9 + $0xd0] sm:$0xff]
    %v8248 = vld [vmem:[%s9 + $0xd8] sm:$0xff]
    %v8249 = vld [vmem:[%s9 + $0xe0] sm:$0xff]
    %v8250 = vld [vmem:[%s9 + $0xe8] sm:$0xff]
    %v8251 = vld [vmem:[%s9 + $0xf0] sm:$0xff]
    %v8252 = vld [vmem:[%s9 + $0xf8] sm:$0xff]
    %v8269 = vunpack.c.l.b16 %v8237
    %v8270 = vunpack.c.h.b16 %v8237
    %v8271 = vunpack.c.l.b16 %v8238
    %v8272 = vunpack.c.h.b16 %v8238
    %v8273 = vunpack.c.l.b16 %v8239
    %v8274 = vunpack.c.h.b16 %v8239
    %v8275 = vunpack.c.l.b16 %v8240
    %v8276 = vunpack.c.h.b16 %v8240
    %v8277 = vunpack.c.l.b16 %v8241
    %v8278 = vunpack.c.h.b16 %v8241
    %v8279 = vunpack.c.l.b16 %v8242
    %v8280 = vunpack.c.h.b16 %v8242
    %v8281 = vunpack.c.l.b16 %v8243
    %v8282 = vunpack.c.h.b16 %v8243
    %v8283 = vunpack.c.l.b16 %v8244
    %v8284 = vunpack.c.h.b16 %v8244
    %v8285 = vunpack.c.l.b16 %v8245
    %v8286 = vunpack.c.h.b16 %v8245
    %v8287 = vunpack.c.l.b16 %v8246
    %v8288 = vunpack.c.h.b16 %v8246
    %v8289 = vunpack.c.l.b16 %v8247
    %v8290 = vunpack.c.h.b16 %v8247
    %v8291 = vunpack.c.l.b16 %v8248
    %v8292 = vunpack.c.h.b16 %v8248
    %v8293 = vunpack.c.l.b16 %v8249
    %v8294 = vunpack.c.h.b16 %v8249
    %v8295 = vunpack.c.l.b16 %v8250
    %v8296 = vunpack.c.h.b16 %v8250
    %v8297 = vunpack.c.l.b16 %v8251
    %v8298 = vunpack.c.h.b16 %v8251
    %v8299 = vunpack.c.l.b16 %v8252
    %v8300 = vunpack.c.h.b16 %v8252
    %v8301 = vpack.c.b16 %v8273, %v8269
    %v8302 = vpack.c.b16 %v8274, %v8270
    %v8303 = vpack.c.b16 %v8275, %v8271
    %v8304 = vpack.c.b16 %v8276, %v8272
    %v8305 = vpack.c.b16 %v8281, %v8277
    %v8306 = vpack.c.b16 %v8282, %v8278
    %v8307 = vpack.c.b16 %v8283, %v8279
    %v8308 = vpack.c.b16 %v8284, %v8280
    %v8309 = vpack.c.b16 %v8289, %v8285
    %v8310 = vpack.c.b16 %v8290, %v8286
    %v8311 = vpack.c.b16 %v8291, %v8287
    %v8312 = vpack.c.b16 %v8292, %v8288
    %v8313 = vpack.c.b16 %v8297, %v8293
    %v8314 = vpack.c.b16 %v8298, %v8294
    %v8315 = vpack.c.b16 %v8299, %v8295
    %v8316 = vpack.c.b16 %v8300, %v8296
    %v8334 = vsel %vm7794, %v8233, 0
    %v8337 = vsel %vm7794, %v8234, 0
    %v8340 = vsel %vm7794, %v8235, 0
    %v8343 = vsel %vm7794, %v8236, 0
    %8345 = vmatpush.bf16.msra.mxu0 0
    %8346 = vmatpush.bf16.msra.mxu0 0
    %8347 = vmatpush.bf16.msra.mxu0 0
    %8348 = vmatpush.bf16.msra.mxu0 0
    %8349 = vmatpush.bf16.msra.mxu0 %v8313
    %8350 = vmatpush.bf16.msra.mxu0 %v8309
    %8351 = vmatpush.bf16.msra.mxu0 %v8305
    %8352 = vmatpush.bf16.msra.mxu0 %v8301
    %8353 = vmatmul.bf16.gmra.mxu0 %v8334
    %v8354 = vpop.f32.mrf.mxu0
    %v8355 = vadd.f32 0.0, %v8354
    %v8356 = vpop.f32.mrf.mxu0
    %v8357 = vadd.f32 0.0, %v8356
    %8358 = vmatmul.bf16.gmra.mxu0 %v8337
    %v8359 = vpop.f32.mrf.mxu0
    %v8360 = vadd.f32 0.0, %v8359
    %v8361 = vpop.f32.mrf.mxu0
    %v8362 = vadd.f32 0.0, %v8361
    %8363 = vmatmul.bf16.gmra.mxu0 %v8340
    %v8364 = vpop.f32.mrf.mxu0
    %v8365 = vadd.f32 0.0, %v8364
    %v8366 = vpop.f32.mrf.mxu0
    %v8367 = vadd.f32 0.0, %v8366
    %8368 = vmatmul.bf16.gmra.mxu0 %v8343
    %v8369 = vpop.f32.mrf.mxu0
    %v8370 = vadd.f32 0.0, %v8369
    %v8371 = vpop.f32.mrf.mxu0
    %v8372 = vadd.f32 0.0, %v8371
    %8373 = vdwg.mxu0
    %8374 = vmatpush.bf16.msra.mxu0 0
    %8375 = vmatpush.bf16.msra.mxu0 0
    %8376 = vmatpush.bf16.msra.mxu0 0
    %8377 = vmatpush.bf16.msra.mxu0 0
    %8378 = vmatpush.bf16.msra.mxu0 %v8314
    %8379 = vmatpush.bf16.msra.mxu0 %v8310
    %8380 = vmatpush.bf16.msra.mxu0 %v8306
    %8381 = vmatpush.bf16.msra.mxu0 %v8302
    %8382 = vmatmul.bf16.gmra.mxu0 %v8334
    %v8383 = vpop.f32.mrf.mxu0
    %v8384 = vadd.f32 0.0, %v8383
    %v8385 = vpop.f32.mrf.mxu0
    %v8386 = vadd.f32 0.0, %v8385
    %8387 = vmatmul.bf16.gmra.mxu0 %v8337
    %v8388 = vpop.f32.mrf.mxu0
    %v8389 = vadd.f32 0.0, %v8388
    %v8390 = vpop.f32.mrf.mxu0
    %v8391 = vadd.f32 0.0, %v8390
    %8392 = vmatmul.bf16.gmra.mxu0 %v8340
    %v8393 = vpop.f32.mrf.mxu0
    %v8394 = vadd.f32 0.0, %v8393
    %v8395 = vpop.f32.mrf.mxu0
    %v8396 = vadd.f32 0.0, %v8395
    %8397 = vmatmul.bf16.gmra.mxu0 %v8343
    %v8398 = vpop.f32.mrf.mxu0
    %v8399 = vadd.f32 0.0, %v8398
    %v8400 = vpop.f32.mrf.mxu0
    %v8401 = vadd.f32 0.0, %v8400
    %8402 = vdwg.mxu0
    %8403 = vmatpush.bf16.msra.mxu0 0
    %8404 = vmatpush.bf16.msra.mxu0 0
    %8405 = vmatpush.bf16.msra.mxu0 0
    %8406 = vmatpush.bf16.msra.mxu0 0
    %8407 = vmatpush.bf16.msra.mxu0 %v8315
    %8408 = vmatpush.bf16.msra.mxu0 %v8311
    %8409 = vmatpush.bf16.msra.mxu0 %v8307
    %8410 = vmatpush.bf16.msra.mxu0 %v8303
    %8411 = vmatmul.bf16.gmra.mxu0 %v8334
    %v8412 = vpop.f32.mrf.mxu0
    %v8413 = vadd.f32 0.0, %v8412
    %v8414 = vpop.f32.mrf.mxu0
    %v8415 = vadd.f32 0.0, %v8414
    %8416 = vmatmul.bf16.gmra.mxu0 %v8337
    %v8417 = vpop.f32.mrf.mxu0
    %v8418 = vadd.f32 0.0, %v8417
    %v8419 = vpop.f32.mrf.mxu0
    %v8420 = vadd.f32 0.0, %v8419
    %8421 = vmatmul.bf16.gmra.mxu0 %v8340
    %v8422 = vpop.f32.mrf.mxu0
    %v8423 = vadd.f32 0.0, %v8422
    %v8424 = vpop.f32.mrf.mxu0
    %v8425 = vadd.f32 0.0, %v8424
    %8426 = vmatmul.bf16.gmra.mxu0 %v8343
    %v8427 = vpop.f32.mrf.mxu0
    %v8428 = vadd.f32 0.0, %v8427
    %v8429 = vpop.f32.mrf.mxu0
    %v8430 = vadd.f32 0.0, %v8429
    %8431 = vdwg.mxu0
    %8432 = vmatpush.bf16.msra.mxu0 0
    %8433 = vmatpush.bf16.msra.mxu0 0
    %8434 = vmatpush.bf16.msra.mxu0 0
    %8435 = vmatpush.bf16.msra.mxu0 0
    %8436 = vmatpush.bf16.msra.mxu0 %v8316
    %8437 = vmatpush.bf16.msra.mxu0 %v8312
    %8438 = vmatpush.bf16.msra.mxu0 %v8308
    %8439 = vmatpush.bf16.msra.mxu0 %v8304
    %8440 = vmatmul.bf16.gmra.mxu0 %v8334
    %v8441 = vpop.f32.mrf.mxu0
    %v8442 = vadd.f32 0.0, %v8441
    %v8443 = vpop.f32.mrf.mxu0
    %v8444 = vadd.f32 0.0, %v8443
    %8445 = vmatmul.bf16.gmra.mxu0 %v8337
    %v8446 = vpop.f32.mrf.mxu0
    %v8447 = vadd.f32 0.0, %v8446
    %v8448 = vpop.f32.mrf.mxu0
    %v8449 = vadd.f32 0.0, %v8448
    %8450 = vmatmul.bf16.gmra.mxu0 %v8340
    %v8451 = vpop.f32.mrf.mxu0
    %v8452 = vadd.f32 0.0, %v8451
    %v8453 = vpop.f32.mrf.mxu0
    %v8454 = vadd.f32 0.0, %v8453
    %8455 = vmatmul.bf16.gmra.mxu0 %v8343
    %v8456 = vpop.f32.mrf.mxu0
    %v8457 = vadd.f32 0.0, %v8456
    %v8458 = vpop.f32.mrf.mxu0
    %v8459 = vadd.f32 0.0, %v8458
    %8460 = vdwg.mxu0
    %v8477 = vunpack.c.l.b16 %v8209
    %v8478 = vunpack.c.h.b16 %v8209
    %v8479 = vunpack.c.l.b16 %v8210
    %v8480 = vunpack.c.h.b16 %v8210
    %v8481 = vunpack.c.l.b16 %v8211
    %v8482 = vunpack.c.h.b16 %v8211
    %v8483 = vunpack.c.l.b16 %v8212
    %v8484 = vunpack.c.h.b16 %v8212
    %v8485 = vunpack.c.l.b16 %v8213
    %v8486 = vunpack.c.h.b16 %v8213
    %v8487 = vunpack.c.l.b16 %v8214
    %v8488 = vunpack.c.h.b16 %v8214
    %v8489 = vunpack.c.l.b16 %v8215
    %v8490 = vunpack.c.h.b16 %v8215
    %v8491 = vunpack.c.l.b16 %v8216
    %v8492 = vunpack.c.h.b16 %v8216
    %v8493 = vunpack.c.l.b16 %v8217
    %v8494 = vunpack.c.h.b16 %v8217
    %v8495 = vunpack.c.l.b16 %v8218
    %v8496 = vunpack.c.h.b16 %v8218
    %v8497 = vunpack.c.l.b16 %v8219
    %v8498 = vunpack.c.h.b16 %v8219
    %v8499 = vunpack.c.l.b16 %v8220
    %v8500 = vunpack.c.h.b16 %v8220
    %v8501 = vunpack.c.l.b16 %v8221
    %v8502 = vunpack.c.h.b16 %v8221
    %v8503 = vunpack.c.l.b16 %v8222
    %v8504 = vunpack.c.h.b16 %v8222
    %v8505 = vunpack.c.l.b16 %v8223
    %v8506 = vunpack.c.h.b16 %v8223
    %v8507 = vunpack.c.l.b16 %v8224
    %v8508 = vunpack.c.h.b16 %v8224
    %v8509 = vpack.c.b16 %v8481, %v8477
    %v8510 = vpack.c.b16 %v8482, %v8478
    %v8511 = vpack.c.b16 %v8483, %v8479
    %v8512 = vpack.c.b16 %v8484, %v8480
    %v8513 = vpack.c.b16 %v8489, %v8485
    %v8514 = vpack.c.b16 %v8490, %v8486
    %v8515 = vpack.c.b16 %v8491, %v8487
    %v8516 = vpack.c.b16 %v8492, %v8488
    %v8517 = vpack.c.b16 %v8497, %v8493
    %v8518 = vpack.c.b16 %v8498, %v8494
    %v8519 = vpack.c.b16 %v8499, %v8495
    %v8520 = vpack.c.b16 %v8500, %v8496
    %v8521 = vpack.c.b16 %v8505, %v8501
    %v8522 = vpack.c.b16 %v8506, %v8502
    %v8523 = vpack.c.b16 %v8507, %v8503
    %v8524 = vpack.c.b16 %v8508, %v8504
    %v8542 = vsel %vm7794, %v8205, 0
    %v8545 = vsel %vm7794, %v8206, 0
    %v8548 = vsel %vm7794, %v8207, 0
    %v8551 = vsel %vm7794, %v8208, 0
    %8553 = vmatpush.bf16.msra.mxu0 0
    %8554 = vmatpush.bf16.msra.mxu0 0
    %8555 = vmatpush.bf16.msra.mxu0 0
    %8556 = vmatpush.bf16.msra.mxu0 0
    %8557 = vmatpush.bf16.msra.mxu0 %v8521
    %8558 = vmatpush.bf16.msra.mxu0 %v8517
    %8559 = vmatpush.bf16.msra.mxu0 %v8513
    %8560 = vmatpush.bf16.msra.mxu0 %v8509
    %8561 = vmatmul.bf16.gmra.mxu0 %v8542
    %v8562 = vpop.f32.mrf.mxu0
    %v8563 = vadd.f32 %v8355, %v8562
    %v8564 = vpop.f32.mrf.mxu0
    %v8565 = vadd.f32 %v8357, %v8564
    %8566 = vmatmul.bf16.gmra.mxu0 %v8545
    %v8567 = vpop.f32.mrf.mxu0
    %v8568 = vadd.f32 %v8360, %v8567
    %v8569 = vpop.f32.mrf.mxu0
    %v8570 = vadd.f32 %v8362, %v8569
    %8571 = vmatmul.bf16.gmra.mxu0 %v8548
    %v8572 = vpop.f32.mrf.mxu0
    %v8573 = vadd.f32 %v8365, %v8572
    %v8574 = vpop.f32.mrf.mxu0
    %v8575 = vadd.f32 %v8367, %v8574
    %8576 = vmatmul.bf16.gmra.mxu0 %v8551
    %v8577 = vpop.f32.mrf.mxu0
    %v8578 = vadd.f32 %v8370, %v8577
    %v8579 = vpop.f32.mrf.mxu0
    %v8580 = vadd.f32 %v8372, %v8579
    %8581 = vdwg.mxu0
    %8582 = vmatpush.bf16.msra.mxu0 0
    %8583 = vmatpush.bf16.msra.mxu0 0
    %8584 = vmatpush.bf16.msra.mxu0 0
    %8585 = vmatpush.bf16.msra.mxu0 0
    %8586 = vmatpush.bf16.msra.mxu0 %v8522
    %8587 = vmatpush.bf16.msra.mxu0 %v8518
    %8588 = vmatpush.bf16.msra.mxu0 %v8514
    %8589 = vmatpush.bf16.msra.mxu0 %v8510
    %8590 = vmatmul.bf16.gmra.mxu0 %v8542
    %v8591 = vpop.f32.mrf.mxu0
    %v8592 = vadd.f32 %v8384, %v8591
    %v8593 = vpop.f32.mrf.mxu0
    %v8594 = vadd.f32 %v8386, %v8593
    %8595 = vmatmul.bf16.gmra.mxu0 %v8545
    %v8596 = vpop.f32.mrf.mxu0
    %v8597 = vadd.f32 %v8389, %v8596
    %v8598 = vpop.f32.mrf.mxu0
    %v8599 = vadd.f32 %v8391, %v8598
    %8600 = vmatmul.bf16.gmra.mxu0 %v8548
    %v8601 = vpop.f32.mrf.mxu0
    %v8602 = vadd.f32 %v8394, %v8601
    %v8603 = vpop.f32.mrf.mxu0
    %v8604 = vadd.f32 %v8396, %v8603
    %8605 = vmatmul.bf16.gmra.mxu0 %v8551
    %v8606 = vpop.f32.mrf.mxu0
    %v8607 = vadd.f32 %v8399, %v8606
    %v8608 = vpop.f32.mrf.mxu0
    %v8609 = vadd.f32 %v8401, %v8608
    %8610 = vdwg.mxu0
    %8611 = vmatpush.bf16.msra.mxu0 0
    %8612 = vmatpush.bf16.msra.mxu0 0
    %8613 = vmatpush.bf16.msra.mxu0 0
    %8614 = vmatpush.bf16.msra.mxu0 0
    %8615 = vmatpush.bf16.msra.mxu0 %v8523
    %8616 = vmatpush.bf16.msra.mxu0 %v8519
    %8617 = vmatpush.bf16.msra.mxu0 %v8515
    %8618 = vmatpush.bf16.msra.mxu0 %v8511
    %8619 = vmatmul.bf16.gmra.mxu0 %v8542
    %v8620 = vpop.f32.mrf.mxu0
    %v8621 = vadd.f32 %v8413, %v8620
    %v8622 = vpop.f32.mrf.mxu0
    %v8623 = vadd.f32 %v8415, %v8622
    %8624 = vmatmul.bf16.gmra.mxu0 %v8545
    %v8625 = vpop.f32.mrf.mxu0
    %v8626 = vadd.f32 %v8418, %v8625
    %v8627 = vpop.f32.mrf.mxu0
    %v8628 = vadd.f32 %v8420, %v8627
    %8629 = vmatmul.bf16.gmra.mxu0 %v8548
    %v8630 = vpop.f32.mrf.mxu0
    %v8631 = vadd.f32 %v8423, %v8630
    %v8632 = vpop.f32.mrf.mxu0
    %v8633 = vadd.f32 %v8425, %v8632
    %8634 = vmatmul.bf16.gmra.mxu0 %v8551
    %v8635 = vpop.f32.mrf.mxu0
    %v8636 = vadd.f32 %v8428, %v8635
    %v8637 = vpop.f32.mrf.mxu0
    %v8638 = vadd.f32 %v8430, %v8637
    %8639 = vdwg.mxu0
    %8640 = vmatpush.bf16.msra.mxu0 0
    %8641 = vmatpush.bf16.msra.mxu0 0
    %8642 = vmatpush.bf16.msra.mxu0 0
    %8643 = vmatpush.bf16.msra.mxu0 0
    %8644 = vmatpush.bf16.msra.mxu0 %v8524
    %8645 = vmatpush.bf16.msra.mxu0 %v8520
    %8646 = vmatpush.bf16.msra.mxu0 %v8516
    %8647 = vmatpush.bf16.msra.mxu0 %v8512
    %8648 = vmatmul.bf16.gmra.mxu0 %v8542
    %v8649 = vpop.f32.mrf.mxu0
    %v8650 = vadd.f32 %v8442, %v8649
    %v8651 = vpop.f32.mrf.mxu0
    %v8652 = vadd.f32 %v8444, %v8651
    %8653 = vmatmul.bf16.gmra.mxu0 %v8545
    %v8654 = vpop.f32.mrf.mxu0
    %v8655 = vadd.f32 %v8447, %v8654
    %v8656 = vpop.f32.mrf.mxu0
    %v8657 = vadd.f32 %v8449, %v8656
    %8658 = vmatmul.bf16.gmra.mxu0 %v8548
    %v8659 = vpop.f32.mrf.mxu0
    %v8660 = vadd.f32 %v8452, %v8659
    %v8661 = vpop.f32.mrf.mxu0
    %v8662 = vadd.f32 %v8454, %v8661
    %8663 = vmatmul.bf16.gmra.mxu0 %v8551
    %v8664 = vpop.f32.mrf.mxu0
    %v8665 = vadd.f32 %v8457, %v8664
    %v8666 = vpop.f32.mrf.mxu0
    %v8667 = vadd.f32 %v8459, %v8666
    %8668 = vdwg.mxu0
    %v8669 = vld [vmem:[#allocation5 + $0x2] sm:$0xff]
    %v8670 = vld [vmem:[#allocation5 + $0xa] sm:$0xff]
    %v8671 = vld [vmem:[#allocation5 + $0x12] sm:$0xff]
    %v8672 = vld [vmem:[#allocation5 + $0x1a] sm:$0xff]
    %v8673 = vld [vmem:[#allocation5 + $0x22] sm:$0xff]
    %v8674 = vld [vmem:[#allocation5 + $0x2a] sm:$0xff]
    %v8675 = vld [vmem:[#allocation5 + $0x32] sm:$0xff]
    %v8676 = vld [vmem:[#allocation5 + $0x3a] sm:$0x3]
    %v8677 = vpack.c.bf16 %v8670, %v8669
    %v8678 = vpack.c.bf16 %v8672, %v8671
    %v8679 = vpack.c.bf16 %v8674, %v8673
    %v8680 = vpack.c.bf16 %v8676, %v8675
    %v8681 = vld [vmem:[%s9 + $0x100] sm:$0xff]
    %v8682 = vld [vmem:[%s9 + $0x108] sm:$0xff]
    %v8683 = vld [vmem:[%s9 + $0x110] sm:$0xff]
    %v8684 = vld [vmem:[%s9 + $0x118] sm:$0xff]
    %v8685 = vld [vmem:[%s9 + $0x120] sm:$0xff]
    %v8686 = vld [vmem:[%s9 + $0x128] sm:$0xff]
    %v8687 = vld [vmem:[%s9 + $0x130] sm:$0xff]
    %v8688 = vld [vmem:[%s9 + $0x138] sm:$0xff]
    %v8689 = vld [vmem:[%s9 + $0x140] sm:$0xff]
    %v8690 = vld [vmem:[%s9 + $0x148] sm:$0xff]
    %v8691 = vld [vmem:[%s9 + $0x150] sm:$0xff]
    %v8692 = vld [vmem:[%s9 + $0x158] sm:$0xff]
    %v8693 = vld [vmem:[%s9 + $0x160] sm:$0xff]
    %v8694 = vld [vmem:[%s9 + $0x168] sm:$0xff]
    %v8695 = vld [vmem:[%s9 + $0x170] sm:$0xff]
    %v8696 = vld [vmem:[%s9 + $0x178] sm:$0xff]
    %v8713 = vunpack.c.l.b16 %v8681
    %v8714 = vunpack.c.h.b16 %v8681
    %v8715 = vunpack.c.l.b16 %v8682
    %v8716 = vunpack.c.h.b16 %v8682
    %v8717 = vunpack.c.l.b16 %v8683
    %v8718 = vunpack.c.h.b16 %v8683
    %v8719 = vunpack.c.l.b16 %v8684
    %v8720 = vunpack.c.h.b16 %v8684
    %v8721 = vunpack.c.l.b16 %v8685
    %v8722 = vunpack.c.h.b16 %v8685
    %v8723 = vunpack.c.l.b16 %v8686
    %v8724 = vunpack.c.h.b16 %v8686
    %v8725 = vunpack.c.l.b16 %v8687
    %v8726 = vunpack.c.h.b16 %v8687
    %v8727 = vunpack.c.l.b16 %v8688
    %v8728 = vunpack.c.h.b16 %v8688
    %v8729 = vunpack.c.l.b16 %v8689
    %v8730 = vunpack.c.h.b16 %v8689
    %v8731 = vunpack.c.l.b16 %v8690
    %v8732 = vunpack.c.h.b16 %v8690
    %v8733 = vunpack.c.l.b16 %v8691
    %v8734 = vunpack.c.h.b16 %v8691
    %v8735 = vunpack.c.l.b16 %v8692
    %v8736 = vunpack.c.h.b16 %v8692
    %v8737 = vunpack.c.l.b16 %v8693
    %v8738 = vunpack.c.h.b16 %v8693
    %v8739 = vunpack.c.l.b16 %v8694
    %v8740 = vunpack.c.h.b16 %v8694
    %v8741 = vunpack.c.l.b16 %v8695
    %v8742 = vunpack.c.h.b16 %v8695
    %v8743 = vunpack.c.l.b16 %v8696
    %v8744 = vunpack.c.h.b16 %v8696
    %v8745 = vpack.c.b16 %v8717, %v8713
    %v8746 = vpack.c.b16 %v8718, %v8714
    %v8747 = vpack.c.b16 %v8719, %v8715
    %v8748 = vpack.c.b16 %v8720, %v8716
    %v8749 = vpack.c.b16 %v8725, %v8721
    %v8750 = vpack.c.b16 %v8726, %v8722
    %v8751 = vpack.c.b16 %v8727, %v8723
    %v8752 = vpack.c.b16 %v8728, %v8724
    %v8753 = vpack.c.b16 %v8733, %v8729
    %v8754 = vpack.c.b16 %v8734, %v8730
    %v8755 = vpack.c.b16 %v8735, %v8731
    %v8756 = vpack.c.b16 %v8736, %v8732
    %v8757 = vpack.c.b16 %v8741, %v8737
    %v8758 = vpack.c.b16 %v8742, %v8738
    %v8759 = vpack.c.b16 %v8743, %v8739
    %v8760 = vpack.c.b16 %v8744, %v8740
    %v8778 = vsel %vm7794, %v8677, 0
    %v8781 = vsel %vm7794, %v8678, 0
    %v8784 = vsel %vm7794, %v8679, 0
    %v8787 = vsel %vm7794, %v8680, 0
    %8789 = vmatpush.bf16.msra.mxu0 0
    %8790 = vmatpush.bf16.msra.mxu0 0
    %8791 = vmatpush.bf16.msra.mxu0 0
    %8792 = vmatpush.bf16.msra.mxu0 0
    %8793 = vmatpush.bf16.msra.mxu0 %v8757
    %8794 = vmatpush.bf16.msra.mxu0 %v8753
    %8795 = vmatpush.bf16.msra.mxu0 %v8749
    %8796 = vmatpush.bf16.msra.mxu0 %v8745
    %8797 = vmatmul.bf16.gmra.mxu0 %v8778
    %v8798 = vpop.f32.mrf.mxu0
    %v8799 = vadd.f32 0.0, %v8798
    %v8800 = vpop.f32.mrf.mxu0
    %v8801 = vadd.f32 0.0, %v8800
    %8802 = vmatmul.bf16.gmra.mxu0 %v8781
    %v8803 = vpop.f32.mrf.mxu0
    %v8804 = vadd.f32 0.0, %v8803
    %v8805 = vpop.f32.mrf.mxu0
    %v8806 = vadd.f32 0.0, %v8805
    %8807 = vmatmul.bf16.gmra.mxu0 %v8784
    %v8808 = vpop.f32.mrf.mxu0
    %v8809 = vadd.f32 0.0, %v8808
    %v8810 = vpop.f32.mrf.mxu0
    %v8811 = vadd.f32 0.0, %v8810
    %8812 = vmatmul.bf16.gmra.mxu0 %v8787
    %v8813 = vpop.f32.mrf.mxu0
    %v8814 = vadd.f32 0.0, %v8813
    %v8815 = vpop.f32.mrf.mxu0
    %v8816 = vadd.f32 0.0, %v8815
    %8817 = vdwg.mxu0
    %8818 = vmatpush.bf16.msra.mxu0 0
    %8819 = vmatpush.bf16.msra.mxu0 0
    %8820 = vmatpush.bf16.msra.mxu0 0
    %8821 = vmatpush.bf16.msra.mxu0 0
    %8822 = vmatpush.bf16.msra.mxu0 %v8758
    %8823 = vmatpush.bf16.msra.mxu0 %v8754
    %8824 = vmatpush.bf16.msra.mxu0 %v8750
    %8825 = vmatpush.bf16.msra.mxu0 %v8746
    %8826 = vmatmul.bf16.gmra.mxu0 %v8778
    %v8827 = vpop.f32.mrf.mxu0
    %v8828 = vadd.f32 0.0, %v8827
    %v8829 = vpop.f32.mrf.mxu0
    %v8830 = vadd.f32 0.0, %v8829
    %8831 = vmatmul.bf16.gmra.mxu0 %v8781
    %v8832 = vpop.f32.mrf.mxu0
    %v8833 = vadd.f32 0.0, %v8832
    %v8834 = vpop.f32.mrf.mxu0
    %v8835 = vadd.f32 0.0, %v8834
    %8836 = vmatmul.bf16.gmra.mxu0 %v8784
    %v8837 = vpop.f32.mrf.mxu0
    %v8838 = vadd.f32 0.0, %v8837
    %v8839 = vpop.f32.mrf.mxu0
    %v8840 = vadd.f32 0.0, %v8839
    %8841 = vmatmul.bf16.gmra.mxu0 %v8787
    %v8842 = vpop.f32.mrf.mxu0
    %v8843 = vadd.f32 0.0, %v8842
    %v8844 = vpop.f32.mrf.mxu0
    %v8845 = vadd.f32 0.0, %v8844
    %8846 = vdwg.mxu0
    %8847 = vmatpush.bf16.msra.mxu0 0
    %8848 = vmatpush.bf16.msra.mxu0 0
    %8849 = vmatpush.bf16.msra.mxu0 0
    %8850 = vmatpush.bf16.msra.mxu0 0
    %8851 = vmatpush.bf16.msra.mxu0 %v8759
    %8852 = vmatpush.bf16.msra.mxu0 %v8755
    %8853 = vmatpush.bf16.msra.mxu0 %v8751
    %8854 = vmatpush.bf16.msra.mxu0 %v8747
    %8855 = vmatmul.bf16.gmra.mxu0 %v8778
    %v8856 = vpop.f32.mrf.mxu0
    %v8857 = vadd.f32 0.0, %v8856
    %v8858 = vpop.f32.mrf.mxu0
    %v8859 = vadd.f32 0.0, %v8858
    %8860 = vmatmul.bf16.gmra.mxu0 %v8781
    %v8861 = vpop.f32.mrf.mxu0
    %v8862 = vadd.f32 0.0, %v8861
    %v8863 = vpop.f32.mrf.mxu0
    %v8864 = vadd.f32 0.0, %v8863
    %8865 = vmatmul.bf16.gmra.mxu0 %v8784
    %v8866 = vpop.f32.mrf.mxu0
    %v8867 = vadd.f32 0.0, %v8866
    %v8868 = vpop.f32.mrf.mxu0
    %v8869 = vadd.f32 0.0, %v8868
    %8870 = vmatmul.bf16.gmra.mxu0 %v8787
    %v8871 = vpop.f32.mrf.mxu0
    %v8872 = vadd.f32 0.0, %v8871
    %v8873 = vpop.f32.mrf.mxu0
    %v8874 = vadd.f32 0.0, %v8873
    %8875 = vdwg.mxu0
    %8876 = vmatpush.bf16.msra.mxu0 0
    %8877 = vmatpush.bf16.msra.mxu0 0
    %8878 = vmatpush.bf16.msra.mxu0 0
    %8879 = vmatpush.bf16.msra.mxu0 0
    %8880 = vmatpush.bf16.msra.mxu0 %v8760
    %8881 = vmatpush.bf16.msra.mxu0 %v8756
    %8882 = vmatpush.bf16.msra.mxu0 %v8752
    %8883 = vmatpush.bf16.msra.mxu0 %v8748
    %8884 = vmatmul.bf16.gmra.mxu0 %v8778
    %v8885 = vpop.f32.mrf.mxu0
    %v8886 = vadd.f32 0.0, %v8885
    %v8887 = vpop.f32.mrf.mxu0
    %v8888 = vadd.f32 0.0, %v8887
    %8889 = vmatmul.bf16.gmra.mxu0 %v8781
    %v8890 = vpop.f32.mrf.mxu0
    %v8891 = vadd.f32 0.0, %v8890
    %v8892 = vpop.f32.mrf.mxu0
    %v8893 = vadd.f32 0.0, %v8892
    %8894 = vmatmul.bf16.gmra.mxu0 %v8784
    %v8895 = vpop.f32.mrf.mxu0
    %v8896 = vadd.f32 0.0, %v8895
    %v8897 = vpop.f32.mrf.mxu0
    %v8898 = vadd.f32 0.0, %v8897
    %8899 = vmatmul.bf16.gmra.mxu0 %v8787
    %v8900 = vpop.f32.mrf.mxu0
    %v8901 = vadd.f32 0.0, %v8900
    %v8902 = vpop.f32.mrf.mxu0
    %v8903 = vadd.f32 0.0, %v8902
    %8904 = vdwg.mxu0
    %v8905 = vadd.f32 %v8563, %v8799
    %v8906 = vadd.f32 %v8592, %v8828
    %v8907 = vadd.f32 %v8621, %v8857
    %v8908 = vadd.f32 %v8650, %v8886
    %v8909 = vadd.f32 %v8565, %v8801
    %v8910 = vadd.f32 %v8594, %v8830
    %v8911 = vadd.f32 %v8623, %v8859
    %v8912 = vadd.f32 %v8652, %v8888
    %v8913 = vadd.f32 %v8568, %v8804
    %v8914 = vadd.f32 %v8597, %v8833
    %v8915 = vadd.f32 %v8626, %v8862
    %v8916 = vadd.f32 %v8655, %v8891
    %v8917 = vadd.f32 %v8570, %v8806
    %v8918 = vadd.f32 %v8599, %v8835
    %v8919 = vadd.f32 %v8628, %v8864
    %v8920 = vadd.f32 %v8657, %v8893
    %v8921 = vadd.f32 %v8573, %v8809
    %v8922 = vadd.f32 %v8602, %v8838
    %v8923 = vadd.f32 %v8631, %v8867
    %v8924 = vadd.f32 %v8660, %v8896
    %v8925 = vadd.f32 %v8575, %v8811
    %v8926 = vadd.f32 %v8604, %v8840
    %v8927 = vadd.f32 %v8633, %v8869
    %v8928 = vadd.f32 %v8662, %v8898
    %v8929 = vadd.f32 %v8578, %v8814
    %v8930 = vadd.f32 %v8607, %v8843
    %v8931 = vadd.f32 %v8636, %v8872
    %v8932 = vadd.f32 %v8665, %v8901
    %v8933 = vadd.f32 %v8580, %v8816
    %v8934 = vadd.f32 %v8609, %v8845
    %v8935 = vadd.f32 %v8638, %v8874
    %v8936 = vadd.f32 %v8667, %v8903
    %v8937 = vld [vmem:[#allocation5 + $0x6] sm:$0xff]
    %v8938 = vld [vmem:[#allocation5 + $0xe] sm:$0xff]
    %v8939 = vld [vmem:[#allocation5 + $0x16] sm:$0xff]
    %v8940 = vld [vmem:[#allocation5 + $0x1e] sm:$0xff]
    %v8941 = vld [vmem:[#allocation5 + $0x26] sm:$0xff]
    %v8942 = vld [vmem:[#allocation5 + $0x2e] sm:$0xff]
    %v8943 = vld [vmem:[#allocation5 + $0x36] sm:$0xff]
    %v8944 = vld [vmem:[#allocation5 + $0x3e] sm:$0x3]
    %v8945 = vpack.c.bf16 %v8938, %v8937
    %v8946 = vpack.c.bf16 %v8940, %v8939
    %v8947 = vpack.c.bf16 %v8942, %v8941
    %v8948 = vpack.c.bf16 %v8944, %v8943
    %v8949 = vld [vmem:[%s9 + $0x180] sm:$0xff]
    %v8950 = vld [vmem:[%s9 + $0x188] sm:$0xff]
    %v8951 = vld [vmem:[%s9 + $0x190] sm:$0xff]
    %v8952 = vld [vmem:[%s9 + $0x198] sm:$0xff]
    %v8953 = vld [vmem:[%s9 + $0x1a0] sm:$0xff]
    %v8954 = vld [vmem:[%s9 + $0x1a8] sm:$0xff]
    %v8955 = vld [vmem:[%s9 + $0x1b0] sm:$0xff]
    %v8956 = vld [vmem:[%s9 + $0x1b8] sm:$0xff]
    %v8957 = vld [vmem:[%s9 + $0x1c0] sm:$0xff]
    %v8958 = vld [vmem:[%s9 + $0x1c8] sm:$0xff]
    %v8959 = vld [vmem:[%s9 + $0x1d0] sm:$0xff]
    %v8960 = vld [vmem:[%s9 + $0x1d8] sm:$0xff]
    %v8961 = vld [vmem:[%s9 + $0x1e0] sm:$0xff]
    %v8962 = vld [vmem:[%s9 + $0x1e8] sm:$0xff]
    %v8963 = vld [vmem:[%s9 + $0x1f0] sm:$0xff]
    %v8964 = vld [vmem:[%s9 + $0x1f8] sm:$0xff]
    %v8981 = vunpack.c.l.b16 %v8949
    %v8982 = vunpack.c.h.b16 %v8949
    %v8983 = vunpack.c.l.b16 %v8950
    %v8984 = vunpack.c.h.b16 %v8950
    %v8985 = vunpack.c.l.b16 %v8951
    %v8986 = vunpack.c.h.b16 %v8951
    %v8987 = vunpack.c.l.b16 %v8952
    %v8988 = vunpack.c.h.b16 %v8952
    %v8989 = vunpack.c.l.b16 %v8953
    %v8990 = vunpack.c.h.b16 %v8953
    %v8991 = vunpack.c.l.b16 %v8954
    %v8992 = vunpack.c.h.b16 %v8954
    %v8993 = vunpack.c.l.b16 %v8955
    %v8994 = vunpack.c.h.b16 %v8955
    %v8995 = vunpack.c.l.b16 %v8956
    %v8996 = vunpack.c.h.b16 %v8956
    %v8997 = vunpack.c.l.b16 %v8957
    %v8998 = vunpack.c.h.b16 %v8957
    %v8999 = vunpack.c.l.b16 %v8958
    %v9000 = vunpack.c.h.b16 %v8958
    %v9001 = vunpack.c.l.b16 %v8959
    %v9002 = vunpack.c.h.b16 %v8959
    %v9003 = vunpack.c.l.b16 %v8960
    %v9004 = vunpack.c.h.b16 %v8960
    %v9005 = vunpack.c.l.b16 %v8961
    %v9006 = vunpack.c.h.b16 %v8961
    %v9007 = vunpack.c.l.b16 %v8962
    %v9008 = vunpack.c.h.b16 %v8962
    %v9009 = vunpack.c.l.b16 %v8963
    %v9010 = vunpack.c.h.b16 %v8963
    %v9011 = vunpack.c.l.b16 %v8964
    %v9012 = vunpack.c.h.b16 %v8964
    %v9013 = vpack.c.b16 %v8985, %v8981
    %v9014 = vpack.c.b16 %v8986, %v8982
    %v9015 = vpack.c.b16 %v8987, %v8983
    %v9016 = vpack.c.b16 %v8988, %v8984
    %v9017 = vpack.c.b16 %v8993, %v8989
    %v9018 = vpack.c.b16 %v8994, %v8990
    %v9019 = vpack.c.b16 %v8995, %v8991
    %v9020 = vpack.c.b16 %v8996, %v8992
    %v9021 = vpack.c.b16 %v9001, %v8997
    %v9022 = vpack.c.b16 %v9002, %v8998
    %v9023 = vpack.c.b16 %v9003, %v8999
    %v9024 = vpack.c.b16 %v9004, %v9000
    %v9025 = vpack.c.b16 %v9009, %v9005
    %v9026 = vpack.c.b16 %v9010, %v9006
    %v9027 = vpack.c.b16 %v9011, %v9007
    %v9028 = vpack.c.b16 %v9012, %v9008
    %v9046 = vsel %vm7794, %v8945, 0
    %v9049 = vsel %vm7794, %v8946, 0
    %v9052 = vsel %vm7794, %v8947, 0
    %v9055 = vsel %vm7794, %v8948, 0
    %9057 = vmatpush.bf16.msra.mxu0 0
    %9058 = vmatpush.bf16.msra.mxu0 0
    %9059 = vmatpush.bf16.msra.mxu0 0
    %9060 = vmatpush.bf16.msra.mxu0 0
    %9061 = vmatpush.bf16.msra.mxu0 %v9025
    %9062 = vmatpush.bf16.msra.mxu0 %v9021
    %9063 = vmatpush.bf16.msra.mxu0 %v9017
    %9064 = vmatpush.bf16.msra.mxu0 %v9013
    %9065 = vmatmul.bf16.gmra.mxu0 %v9046
    %v9066 = vpop.f32.mrf.mxu0
    %v9067 = vadd.f32 0.0, %v9066
    %v9068 = vpop.f32.mrf.mxu0
    %v9069 = vadd.f32 0.0, %v9068
    %9070 = vmatmul.bf16.gmra.mxu0 %v9049
    %v9071 = vpop.f32.mrf.mxu0
    %v9072 = vadd.f32 0.0, %v9071
    %v9073 = vpop.f32.mrf.mxu0
    %v9074 = vadd.f32 0.0, %v9073
    %9075 = vmatmul.bf16.gmra.mxu0 %v9052
    %v9076 = vpop.f32.mrf.mxu0
    %v9077 = vadd.f32 0.0, %v9076
    %v9078 = vpop.f32.mrf.mxu0
    %v9079 = vadd.f32 0.0, %v9078
    %9080 = vmatmul.bf16.gmra.mxu0 %v9055
    %v9081 = vpop.f32.mrf.mxu0
    %v9082 = vadd.f32 0.0, %v9081
    %v9083 = vpop.f32.mrf.mxu0
    %v9084 = vadd.f32 0.0, %v9083
    %9085 = vdwg.mxu0
    %9086 = vmatpush.bf16.msra.mxu0 0
    %9087 = vmatpush.bf16.msra.mxu0 0
    %9088 = vmatpush.bf16.msra.mxu0 0
    %9089 = vmatpush.bf16.msra.mxu0 0
    %9090 = vmatpush.bf16.msra.mxu0 %v9026
    %9091 = vmatpush.bf16.msra.mxu0 %v9022
    %9092 = vmatpush.bf16.msra.mxu0 %v9018
    %9093 = vmatpush.bf16.msra.mxu0 %v9014
    %9094 = vmatmul.bf16.gmra.mxu0 %v9046
    %v9095 = vpop.f32.mrf.mxu0
    %v9096 = vadd.f32 0.0, %v9095
    %v9097 = vpop.f32.mrf.mxu0
    %v9098 = vadd.f32 0.0, %v9097
    %9099 = vmatmul.bf16.gmra.mxu0 %v9049
    %v9100 = vpop.f32.mrf.mxu0
    %v9101 = vadd.f32 0.0, %v9100
    %v9102 = vpop.f32.mrf.mxu0
    %v9103 = vadd.f32 0.0, %v9102
    %9104 = vmatmul.bf16.gmra.mxu0 %v9052
    %v9105 = vpop.f32.mrf.mxu0
    %v9106 = vadd.f32 0.0, %v9105
    %v9107 = vpop.f32.mrf.mxu0
    %v9108 = vadd.f32 0.0, %v9107
    %9109 = vmatmul.bf16.gmra.mxu0 %v9055
    %v9110 = vpop.f32.mrf.mxu0
    %v9111 = vadd.f32 0.0, %v9110
    %v9112 = vpop.f32.mrf.mxu0
    %v9113 = vadd.f32 0.0, %v9112
    %9114 = vdwg.mxu0
    %9115 = vmatpush.bf16.msra.mxu0 0
    %9116 = vmatpush.bf16.msra.mxu0 0
    %9117 = vmatpush.bf16.msra.mxu0 0
    %9118 = vmatpush.bf16.msra.mxu0 0
    %9119 = vmatpush.bf16.msra.mxu0 %v9027
    %9120 = vmatpush.bf16.msra.mxu0 %v9023
    %9121 = vmatpush.bf16.msra.mxu0 %v9019
    %9122 = vmatpush.bf16.msra.mxu0 %v9015
    %9123 = vmatmul.bf16.gmra.mxu0 %v9046
    %v9124 = vpop.f32.mrf.mxu0
    %v9125 = vadd.f32 0.0, %v9124
    %v9126 = vpop.f32.mrf.mxu0
    %v9127 = vadd.f32 0.0, %v9126
    %9128 = vmatmul.bf16.gmra.mxu0 %v9049
    %v9129 = vpop.f32.mrf.mxu0
    %v9130 = vadd.f32 0.0, %v9129
    %v9131 = vpop.f32.mrf.mxu0
    %v9132 = vadd.f32 0.0, %v9131
    %9133 = vmatmul.bf16.gmra.mxu0 %v9052
    %v9134 = vpop.f32.mrf.mxu0
    %v9135 = vadd.f32 0.0, %v9134
    %v9136 = vpop.f32.mrf.mxu0
    %v9137 = vadd.f32 0.0, %v9136
    %9138 = vmatmul.bf16.gmra.mxu0 %v9055
    %v9139 = vpop.f32.mrf.mxu0
    %v9140 = vadd.f32 0.0, %v9139
    %v9141 = vpop.f32.mrf.mxu0
    %v9142 = vadd.f32 0.0, %v9141
    %9143 = vdwg.mxu0
    %9144 = vmatpush.bf16.msra.mxu0 0
    %9145 = vmatpush.bf16.msra.mxu0 0
    %9146 = vmatpush.bf16.msra.mxu0 0
    %9147 = vmatpush.bf16.msra.mxu0 0
    %9148 = vmatpush.bf16.msra.mxu0 %v9028
    %9149 = vmatpush.bf16.msra.mxu0 %v9024
    %9150 = vmatpush.bf16.msra.mxu0 %v9020
    %9151 = vmatpush.bf16.msra.mxu0 %v9016
    %9152 = vmatmul.bf16.gmra.mxu0 %v9046
    %v9153 = vpop.f32.mrf.mxu0
    %v9154 = vadd.f32 0.0, %v9153
    %v9155 = vpop.f32.mrf.mxu0
    %v9156 = vadd.f32 0.0, %v9155
    %9157 = vmatmul.bf16.gmra.mxu0 %v9049
    %v9158 = vpop.f32.mrf.mxu0
    %v9159 = vadd.f32 0.0, %v9158
    %v9160 = vpop.f32.mrf.mxu0
    %v9161 = vadd.f32 0.0, %v9160
    %9162 = vmatmul.bf16.gmra.mxu0 %v9052
    %v9163 = vpop.f32.mrf.mxu0
    %v9164 = vadd.f32 0.0, %v9163
    %v9165 = vpop.f32.mrf.mxu0
    %v9166 = vadd.f32 0.0, %v9165
    %9167 = vmatmul.bf16.gmra.mxu0 %v9055
    %v9168 = vpop.f32.mrf.mxu0
    %v9169 = vadd.f32 0.0, %v9168
    %v9170 = vpop.f32.mrf.mxu0
    %v9171 = vadd.f32 0.0, %v9170
    %9172 = vdwg.mxu0
    %v9173 = vadd.f32 %v8905, %v9067
    %v9174 = vadd.f32 %v8906, %v9096
    %v9175 = vadd.f32 %v8907, %v9125
    %v9176 = vadd.f32 %v8908, %v9154
    %v9177 = vadd.f32 %v8909, %v9069
    %v9178 = vadd.f32 %v8910, %v9098
    %v9179 = vadd.f32 %v8911, %v9127
    %v9180 = vadd.f32 %v8912, %v9156
    %v9181 = vadd.f32 %v8913, %v9072
    %v9182 = vadd.f32 %v8914, %v9101
    %v9183 = vadd.f32 %v8915, %v9130
    %v9184 = vadd.f32 %v8916, %v9159
    %v9185 = vadd.f32 %v8917, %v9074
    %v9186 = vadd.f32 %v8918, %v9103
    %v9187 = vadd.f32 %v8919, %v9132
    %v9188 = vadd.f32 %v8920, %v9161
    %v9189 = vadd.f32 %v8921, %v9077
    %v9190 = vadd.f32 %v8922, %v9106
    %v9191 = vadd.f32 %v8923, %v9135
    %v9192 = vadd.f32 %v8924, %v9164
    %v9193 = vadd.f32 %v8925, %v9079
    %v9194 = vadd.f32 %v8926, %v9108
    %v9195 = vadd.f32 %v8927, %v9137
    %v9196 = vadd.f32 %v8928, %v9166
    %v9197 = vadd.f32 %v8929, %v9082
    %v9198 = vadd.f32 %v8930, %v9111
    %v9199 = vadd.f32 %v8931, %v9140
    %v9200 = vadd.f32 %v8932, %v9169
    %v9201 = vadd.f32 %v8933, %v9084
    %v9202 = vadd.f32 %v8934, %v9113
    %v9203 = vadd.f32 %v8935, %v9142
    %v9204 = vadd.f32 %v8936, %v9171
    %v9205 = vld [vmem:[#allocation5 + $0x7] sm:$0xff]
    %v9206 = vld [vmem:[#allocation5 + $0xf] sm:$0xff]
    %v9207 = vld [vmem:[#allocation5 + $0x17] sm:$0xff]
    %v9208 = vld [vmem:[#allocation5 + $0x1f] sm:$0xff]
    %v9209 = vld [vmem:[#allocation5 + $0x27] sm:$0xff]
    %v9210 = vld [vmem:[#allocation5 + $0x2f] sm:$0xff]
    %v9211 = vld [vmem:[#allocation5 + $0x37] sm:$0xff]
    %v9212 = vld [vmem:[#allocation5 + $0x3f] sm:$0x3]
    %v9213 = vpack.c.bf16 %v9206, %v9205
    %v9214 = vpack.c.bf16 %v9208, %v9207
    %v9215 = vpack.c.bf16 %v9210, %v9209
    %v9216 = vpack.c.bf16 %v9212, %v9211
    %v9217 = vld [vmem:[%s9 + $0x200] sm:$0xff]
    %v9218 = vld [vmem:[%s9 + $0x208] sm:$0xff]
    %v9219 = vld [vmem:[%s9 + $0x210] sm:$0xff]
    %v9220 = vld [vmem:[%s9 + $0x218] sm:$0xff]
    %v9221 = vld [vmem:[%s9 + $0x220] sm:$0xff]
    %v9222 = vld [vmem:[%s9 + $0x228] sm:$0xff]
    %v9223 = vld [vmem:[%s9 + $0x230] sm:$0xff]
    %v9224 = vld [vmem:[%s9 + $0x238] sm:$0xff]
    %v9225 = vld [vmem:[%s9 + $0x240] sm:$0xff]
    %v9226 = vld [vmem:[%s9 + $0x248] sm:$0xff]
    %v9227 = vld [vmem:[%s9 + $0x250] sm:$0xff]
    %v9228 = vld [vmem:[%s9 + $0x258] sm:$0xff]
    %v9229 = vld [vmem:[%s9 + $0x260] sm:$0xff]
    %v9230 = vld [vmem:[%s9 + $0x268] sm:$0xff]
    %v9231 = vld [vmem:[%s9 + $0x270] sm:$0xff]
    %v9232 = vld [vmem:[%s9 + $0x278] sm:$0xff]
    %v9249 = vunpack.c.l.b16 %v9217
    %v9250 = vunpack.c.h.b16 %v9217
    %v9251 = vunpack.c.l.b16 %v9218
    %v9252 = vunpack.c.h.b16 %v9218
    %v9253 = vunpack.c.l.b16 %v9219
    %v9254 = vunpack.c.h.b16 %v9219
    %v9255 = vunpack.c.l.b16 %v9220
    %v9256 = vunpack.c.h.b16 %v9220
    %v9257 = vunpack.c.l.b16 %v9221
    %v9258 = vunpack.c.h.b16 %v9221
    %v9259 = vunpack.c.l.b16 %v9222
    %v9260 = vunpack.c.h.b16 %v9222
    %v9261 = vunpack.c.l.b16 %v9223
    %v9262 = vunpack.c.h.b16 %v9223
    %v9263 = vunpack.c.l.b16 %v9224
    %v9264 = vunpack.c.h.b16 %v9224
    %v9265 = vunpack.c.l.b16 %v9225
    %v9266 = vunpack.c.h.b16 %v9225
    %v9267 = vunpack.c.l.b16 %v9226
    %v9268 = vunpack.c.h.b16 %v9226
    %v9269 = vunpack.c.l.b16 %v9227
    %v9270 = vunpack.c.h.b16 %v9227
    %v9271 = vunpack.c.l.b16 %v9228
    %v9272 = vunpack.c.h.b16 %v9228
    %v9273 = vunpack.c.l.b16 %v9229
    %v9274 = vunpack.c.h.b16 %v9229
    %v9275 = vunpack.c.l.b16 %v9230
    %v9276 = vunpack.c.h.b16 %v9230
    %v9277 = vunpack.c.l.b16 %v9231
    %v9278 = vunpack.c.h.b16 %v9231
    %v9279 = vunpack.c.l.b16 %v9232
    %v9280 = vunpack.c.h.b16 %v9232
    %v9281 = vpack.c.b16 %v9253, %v9249
    %v9282 = vpack.c.b16 %v9254, %v9250
    %v9283 = vpack.c.b16 %v9255, %v9251
    %v9284 = vpack.c.b16 %v9256, %v9252
    %v9285 = vpack.c.b16 %v9261, %v9257
    %v9286 = vpack.c.b16 %v9262, %v9258
    %v9287 = vpack.c.b16 %v9263, %v9259
    %v9288 = vpack.c.b16 %v9264, %v9260
    %v9289 = vpack.c.b16 %v9269, %v9265
    %v9290 = vpack.c.b16 %v9270, %v9266
    %v9291 = vpack.c.b16 %v9271, %v9267
    %v9292 = vpack.c.b16 %v9272, %v9268
    %v9293 = vpack.c.b16 %v9277, %v9273
    %v9294 = vpack.c.b16 %v9278, %v9274
    %v9295 = vpack.c.b16 %v9279, %v9275
    %v9296 = vpack.c.b16 %v9280, %v9276
    %v9314 = vsel %vm7794, %v9213, 0
    %v9317 = vsel %vm7794, %v9214, 0
    %v9320 = vsel %vm7794, %v9215, 0
    %v9323 = vsel %vm7794, %v9216, 0
    %9325 = vmatpush.bf16.msra.mxu0 0
    %9326 = vmatpush.bf16.msra.mxu0 0
    %9327 = vmatpush.bf16.msra.mxu0 0
    %9328 = vmatpush.bf16.msra.mxu0 0
    %9329 = vmatpush.bf16.msra.mxu0 %v9293
    %9330 = vmatpush.bf16.msra.mxu0 %v9289
    %9331 = vmatpush.bf16.msra.mxu0 %v9285
    %9332 = vmatpush.bf16.msra.mxu0 %v9281
    %9333 = vmatmul.bf16.gmra.mxu0 %v9314
    %v9334 = vpop.f32.mrf.mxu0
    %v9335 = vadd.f32 0.0, %v9334
    %v9336 = vpop.f32.mrf.mxu0
    %v9337 = vadd.f32 0.0, %v9336
    %9338 = vmatmul.bf16.gmra.mxu0 %v9317
    %v9339 = vpop.f32.mrf.mxu0
    %v9340 = vadd.f32 0.0, %v9339
    %v9341 = vpop.f32.mrf.mxu0
    %v9342 = vadd.f32 0.0, %v9341
    %9343 = vmatmul.bf16.gmra.mxu0 %v9320
    %v9344 = vpop.f32.mrf.mxu0
    %v9345 = vadd.f32 0.0, %v9344
    %v9346 = vpop.f32.mrf.mxu0
    %v9347 = vadd.f32 0.0, %v9346
    %9348 = vmatmul.bf16.gmra.mxu0 %v9323
    %v9349 = vpop.f32.mrf.mxu0
    %v9350 = vadd.f32 0.0, %v9349
    %v9351 = vpop.f32.mrf.mxu0
    %v9352 = vadd.f32 0.0, %v9351
    %9353 = vdwg.mxu0
    %9354 = vmatpush.bf16.msra.mxu0 0
    %9355 = vmatpush.bf16.msra.mxu0 0
    %9356 = vmatpush.bf16.msra.mxu0 0
    %9357 = vmatpush.bf16.msra.mxu0 0
    %9358 = vmatpush.bf16.msra.mxu0 %v9294
    %9359 = vmatpush.bf16.msra.mxu0 %v9290
    %9360 = vmatpush.bf16.msra.mxu0 %v9286
    %9361 = vmatpush.bf16.msra.mxu0 %v9282
    %9362 = vmatmul.bf16.gmra.mxu0 %v9314
    %v9363 = vpop.f32.mrf.mxu0
    %v9364 = vadd.f32 0.0, %v9363
    %v9365 = vpop.f32.mrf.mxu0
    %v9366 = vadd.f32 0.0, %v9365
    %9367 = vmatmul.bf16.gmra.mxu0 %v9317
    %v9368 = vpop.f32.mrf.mxu0
    %v9369 = vadd.f32 0.0, %v9368
    %v9370 = vpop.f32.mrf.mxu0
    %v9371 = vadd.f32 0.0, %v9370
    %9372 = vmatmul.bf16.gmra.mxu0 %v9320
    %v9373 = vpop.f32.mrf.mxu0
    %v9374 = vadd.f32 0.0, %v9373
    %v9375 = vpop.f32.mrf.mxu0
    %v9376 = vadd.f32 0.0, %v9375
    %9377 = vmatmul.bf16.gmra.mxu0 %v9323
    %v9378 = vpop.f32.mrf.mxu0
    %v9379 = vadd.f32 0.0, %v9378
    %v9380 = vpop.f32.mrf.mxu0
    %v9381 = vadd.f32 0.0, %v9380
    %9382 = vdwg.mxu0
    %9383 = vmatpush.bf16.msra.mxu0 0
    %9384 = vmatpush.bf16.msra.mxu0 0
    %9385 = vmatpush.bf16.msra.mxu0 0
    %9386 = vmatpush.bf16.msra.mxu0 0
    %9387 = vmatpush.bf16.msra.mxu0 %v9295
    %9388 = vmatpush.bf16.msra.mxu0 %v9291
    %9389 = vmatpush.bf16.msra.mxu0 %v9287
    %9390 = vmatpush.bf16.msra.mxu0 %v9283
    %9391 = vmatmul.bf16.gmra.mxu0 %v9314
    %v9392 = vpop.f32.mrf.mxu0
    %v9393 = vadd.f32 0.0, %v9392
    %v9394 = vpop.f32.mrf.mxu0
    %v9395 = vadd.f32 0.0, %v9394
    %9396 = vmatmul.bf16.gmra.mxu0 %v9317
    %v9397 = vpop.f32.mrf.mxu0
    %v9398 = vadd.f32 0.0, %v9397
    %v9399 = vpop.f32.mrf.mxu0
    %v9400 = vadd.f32 0.0, %v9399
    %9401 = vmatmul.bf16.gmra.mxu0 %v9320
    %v9402 = vpop.f32.mrf.mxu0
    %v9403 = vadd.f32 0.0, %v9402
    %v9404 = vpop.f32.mrf.mxu0
    %v9405 = vadd.f32 0.0, %v9404
    %9406 = vmatmul.bf16.gmra.mxu0 %v9323
    %v9407 = vpop.f32.mrf.mxu0
    %v9408 = vadd.f32 0.0, %v9407
    %v9409 = vpop.f32.mrf.mxu0
    %v9410 = vadd.f32 0.0, %v9409
    %9411 = vdwg.mxu0
    %9412 = vmatpush.bf16.msra.mxu0 0
    %9413 = vmatpush.bf16.msra.mxu0 0
    %9414 = vmatpush.bf16.msra.mxu0 0
    %9415 = vmatpush.bf16.msra.mxu0 0
    %9416 = vmatpush.bf16.msra.mxu0 %v9296
    %9417 = vmatpush.bf16.msra.mxu0 %v9292
    %9418 = vmatpush.bf16.msra.mxu0 %v9288
    %9419 = vmatpush.bf16.msra.mxu0 %v9284
    %9420 = vmatmul.bf16.gmra.mxu0 %v9314
    %v9421 = vpop.f32.mrf.mxu0
    %v9422 = vadd.f32 0.0, %v9421
    %v9423 = vpop.f32.mrf.mxu0
    %v9424 = vadd.f32 0.0, %v9423
    %9425 = vmatmul.bf16.gmra.mxu0 %v9317
    %v9426 = vpop.f32.mrf.mxu0
    %v9427 = vadd.f32 0.0, %v9426
    %v9428 = vpop.f32.mrf.mxu0
    %v9429 = vadd.f32 0.0, %v9428
    %9430 = vmatmul.bf16.gmra.mxu0 %v9320
    %v9431 = vpop.f32.mrf.mxu0
    %v9432 = vadd.f32 0.0, %v9431
    %v9433 = vpop.f32.mrf.mxu0
    %v9434 = vadd.f32 0.0, %v9433
    %9435 = vmatmul.bf16.gmra.mxu0 %v9323
    %v9436 = vpop.f32.mrf.mxu0
    %v9437 = vadd.f32 0.0, %v9436
    %v9438 = vpop.f32.mrf.mxu0
    %v9439 = vadd.f32 0.0, %v9438
    %9440 = vdwg.mxu0
    %v9441 = vadd.f32 %v9173, %v9335
    %v9442 = vadd.f32 %v9174, %v9364
    %v9443 = vadd.f32 %v9175, %v9393
    %v9444 = vadd.f32 %v9176, %v9422
    %v9445 = vadd.f32 %v9177, %v9337
    %v9446 = vadd.f32 %v9178, %v9366
    %v9447 = vadd.f32 %v9179, %v9395
    %v9448 = vadd.f32 %v9180, %v9424
    %v9449 = vadd.f32 %v9181, %v9340
    %v9450 = vadd.f32 %v9182, %v9369
    %v9451 = vadd.f32 %v9183, %v9398
    %v9452 = vadd.f32 %v9184, %v9427
    %v9453 = vadd.f32 %v9185, %v9342
    %v9454 = vadd.f32 %v9186, %v9371
    %v9455 = vadd.f32 %v9187, %v9400
    %v9456 = vadd.f32 %v9188, %v9429
    %v9457 = vadd.f32 %v9189, %v9345
    %v9458 = vadd.f32 %v9190, %v9374
    %v9459 = vadd.f32 %v9191, %v9403
    %v9460 = vadd.f32 %v9192, %v9432
    %v9461 = vadd.f32 %v9193, %v9347
    %v9462 = vadd.f32 %v9194, %v9376
    %v9463 = vadd.f32 %v9195, %v9405
    %v9464 = vadd.f32 %v9196, %v9434
    %v9465 = vadd.f32 %v9197, %v9350
    %v9466 = vadd.f32 %v9198, %v9379
    %v9467 = vadd.f32 %v9199, %v9408
    %v9468 = vadd.f32 %v9200, %v9437
    %v9469 = vadd.f32 %v9201, %v9352
    %v9470 = vadd.f32 %v9202, %v9381
    %v9471 = vadd.f32 %v9203, %v9410
    %v9472 = vadd.f32 %v9204, %v9439
    %v9473 = vld [vmem:[#allocation5 + $0x8] sm:$0xff]
    %v9474 = vld [vmem:[#allocation5 + $0x10] sm:$0xff]
    %v9475 = vld [vmem:[#allocation5 + $0x18] sm:$0xff]
    %v9476 = vld [vmem:[#allocation5 + $0x20] sm:$0xff]
    %v9477 = vld [vmem:[#allocation5 + $0x28] sm:$0xff]
    %v9478 = vld [vmem:[#allocation5 + $0x30] sm:$0xff]
    %v9479 = vld [vmem:[#allocation5 + $0x38] sm:$0xff]
    %v9480 = vld [vmem:[#allocation5 + $0x40] sm:$0x3]
    %v9481 = vpack.c.bf16 %v9474, %v9473
    %v9482 = vpack.c.bf16 %v9476, %v9475
    %v9483 = vpack.c.bf16 %v9478, %v9477
    %v9484 = vpack.c.bf16 %v9480, %v9479
    %v9485 = vld [vmem:[%s9 + $0x280] sm:$0xff]
    %v9486 = vld [vmem:[%s9 + $0x288] sm:$0xff]
    %v9487 = vld [vmem:[%s9 + $0x290] sm:$0xff]
    %v9488 = vld [vmem:[%s9 + $0x298] sm:$0xff]
    %v9489 = vld [vmem:[%s9 + $0x2a0] sm:$0xff]
    %v9490 = vld [vmem:[%s9 + $0x2a8] sm:$0xff]
    %v9491 = vld [vmem:[%s9 + $0x2b0] sm:$0xff]
    %v9492 = vld [vmem:[%s9 + $0x2b8] sm:$0xff]
    %v9493 = vld [vmem:[%s9 + $0x2c0] sm:$0xff]
    %v9494 = vld [vmem:[%s9 + $0x2c8] sm:$0xff]
    %v9495 = vld [vmem:[%s9 + $0x2d0] sm:$0xff]
    %v9496 = vld [vmem:[%s9 + $0x2d8] sm:$0xff]
    %v9497 = vld [vmem:[%s9 + $0x2e0] sm:$0xff]
    %v9498 = vld [vmem:[%s9 + $0x2e8] sm:$0xff]
    %v9499 = vld [vmem:[%s9 + $0x2f0] sm:$0xff]
    %v9500 = vld [vmem:[%s9 + $0x2f8] sm:$0xff]
    %v9517 = vunpack.c.l.b16 %v9485
    %v9518 = vunpack.c.h.b16 %v9485
    %v9519 = vunpack.c.l.b16 %v9486
    %v9520 = vunpack.c.h.b16 %v9486
    %v9521 = vunpack.c.l.b16 %v9487
    %v9522 = vunpack.c.h.b16 %v9487
    %v9523 = vunpack.c.l.b16 %v9488
    %v9524 = vunpack.c.h.b16 %v9488
    %v9525 = vunpack.c.l.b16 %v9489
    %v9526 = vunpack.c.h.b16 %v9489
    %v9527 = vunpack.c.l.b16 %v9490
    %v9528 = vunpack.c.h.b16 %v9490
    %v9529 = vunpack.c.l.b16 %v9491
    %v9530 = vunpack.c.h.b16 %v9491
    %v9531 = vunpack.c.l.b16 %v9492
    %v9532 = vunpack.c.h.b16 %v9492
    %v9533 = vunpack.c.l.b16 %v9493
    %v9534 = vunpack.c.h.b16 %v9493
    %v9535 = vunpack.c.l.b16 %v9494
    %v9536 = vunpack.c.h.b16 %v9494
    %v9537 = vunpack.c.l.b16 %v9495
    %v9538 = vunpack.c.h.b16 %v9495
    %v9539 = vunpack.c.l.b16 %v9496
    %v9540 = vunpack.c.h.b16 %v9496
    %v9541 = vunpack.c.l.b16 %v9497
    %v9542 = vunpack.c.h.b16 %v9497
    %v9543 = vunpack.c.l.b16 %v9498
    %v9544 = vunpack.c.h.b16 %v9498
    %v9545 = vunpack.c.l.b16 %v9499
    %v9546 = vunpack.c.h.b16 %v9499
    %v9547 = vunpack.c.l.b16 %v9500
    %v9548 = vunpack.c.h.b16 %v9500
    %v9549 = vpack.c.b16 %v9521, %v9517
    %v9550 = vpack.c.b16 %v9522, %v9518
    %v9551 = vpack.c.b16 %v9523, %v9519
    %v9552 = vpack.c.b16 %v9524, %v9520
    %v9553 = vpack.c.b16 %v9529, %v9525
    %v9554 = vpack.c.b16 %v9530, %v9526
    %v9555 = vpack.c.b16 %v9531, %v9527
    %v9556 = vpack.c.b16 %v9532, %v9528
    %v9557 = vpack.c.b16 %v9537, %v9533
    %v9558 = vpack.c.b16 %v9538, %v9534
    %v9559 = vpack.c.b16 %v9539, %v9535
    %v9560 = vpack.c.b16 %v9540, %v9536
    %v9561 = vpack.c.b16 %v9545, %v9541
    %v9562 = vpack.c.b16 %v9546, %v9542
    %v9563 = vpack.c.b16 %v9547, %v9543
    %v9564 = vpack.c.b16 %v9548, %v9544
    %v9582 = vsel %vm7794, %v9481, 0
    %v9585 = vsel %vm7794, %v9482, 0
    %v9588 = vsel %vm7794, %v9483, 0
    %v9591 = vsel %vm7794, %v9484, 0
    %9593 = vmatpush.bf16.msra.mxu0 0
    %9594 = vmatpush.bf16.msra.mxu0 0
    %9595 = vmatpush.bf16.msra.mxu0 0
    %9596 = vmatpush.bf16.msra.mxu0 0
    %9597 = vmatpush.bf16.msra.mxu0 %v9561
    %9598 = vmatpush.bf16.msra.mxu0 %v9557
    %9599 = vmatpush.bf16.msra.mxu0 %v9553
    %9600 = vmatpush.bf16.msra.mxu0 %v9549
    %9601 = vmatmul.bf16.gmra.mxu0 %v9582
    %v9602 = vpop.f32.mrf.mxu0
    %v9603 = vadd.f32 0.0, %v9602
    %v9604 = vpop.f32.mrf.mxu0
    %v9605 = vadd.f32 0.0, %v9604
    %9606 = vmatmul.bf16.gmra.mxu0 %v9585
    %v9607 = vpop.f32.mrf.mxu0
    %v9608 = vadd.f32 0.0, %v9607
    %v9609 = vpop.f32.mrf.mxu0
    %v9610 = vadd.f32 0.0, %v9609
    %9611 = vmatmul.bf16.gmra.mxu0 %v9588
    %v9612 = vpop.f32.mrf.mxu0
    %v9613 = vadd.f32 0.0, %v9612
    %v9614 = vpop.f32.mrf.mxu0
    %v9615 = vadd.f32 0.0, %v9614
    %9616 = vmatmul.bf16.gmra.mxu0 %v9591
    %v9617 = vpop.f32.mrf.mxu0
    %v9618 = vadd.f32 0.0, %v9617
    %v9619 = vpop.f32.mrf.mxu0
    %v9620 = vadd.f32 0.0, %v9619
    %9621 = vdwg.mxu0
    %9622 = vmatpush.bf16.msra.mxu0 0
    %9623 = vmatpush.bf16.msra.mxu0 0
    %9624 = vmatpush.bf16.msra.mxu0 0
    %9625 = vmatpush.bf16.msra.mxu0 0
    %9626 = vmatpush.bf16.msra.mxu0 %v9562
    %9627 = vmatpush.bf16.msra.mxu0 %v9558
    %9628 = vmatpush.bf16.msra.mxu0 %v9554
    %9629 = vmatpush.bf16.msra.mxu0 %v9550
    %9630 = vmatmul.bf16.gmra.mxu0 %v9582
    %v9631 = vpop.f32.mrf.mxu0
    %v9632 = vadd.f32 0.0, %v9631
    %v9633 = vpop.f32.mrf.mxu0
    %v9634 = vadd.f32 0.0, %v9633
    %9635 = vmatmul.bf16.gmra.mxu0 %v9585
    %v9636 = vpop.f32.mrf.mxu0
    %v9637 = vadd.f32 0.0, %v9636
    %v9638 = vpop.f32.mrf.mxu0
    %v9639 = vadd.f32 0.0, %v9638
    %9640 = vmatmul.bf16.gmra.mxu0 %v9588
    %v9641 = vpop.f32.mrf.mxu0
    %v9642 = vadd.f32 0.0, %v9641
    %v9643 = vpop.f32.mrf.mxu0
    %v9644 = vadd.f32 0.0, %v9643
    %9645 = vmatmul.bf16.gmra.mxu0 %v9591
    %v9646 = vpop.f32.mrf.mxu0
    %v9647 = vadd.f32 0.0, %v9646
    %v9648 = vpop.f32.mrf.mxu0
    %v9649 = vadd.f32 0.0, %v9648
    %9650 = vdwg.mxu0
    %9651 = vmatpush.bf16.msra.mxu0 0
    %9652 = vmatpush.bf16.msra.mxu0 0
    %9653 = vmatpush.bf16.msra.mxu0 0
    %9654 = vmatpush.bf16.msra.mxu0 0
    %9655 = vmatpush.bf16.msra.mxu0 %v9563
    %9656 = vmatpush.bf16.msra.mxu0 %v9559
    %9657 = vmatpush.bf16.msra.mxu0 %v9555
    %9658 = vmatpush.bf16.msra.mxu0 %v9551
    %9659 = vmatmul.bf16.gmra.mxu0 %v9582
    %v9660 = vpop.f32.mrf.mxu0
    %v9661 = vadd.f32 0.0, %v9660
    %v9662 = vpop.f32.mrf.mxu0
    %v9663 = vadd.f32 0.0, %v9662
    %9664 = vmatmul.bf16.gmra.mxu0 %v9585
    %v9665 = vpop.f32.mrf.mxu0
    %v9666 = vadd.f32 0.0, %v9665
    %v9667 = vpop.f32.mrf.mxu0
    %v9668 = vadd.f32 0.0, %v9667
    %9669 = vmatmul.bf16.gmra.mxu0 %v9588
    %v9670 = vpop.f32.mrf.mxu0
    %v9671 = vadd.f32 0.0, %v9670
    %v9672 = vpop.f32.mrf.mxu0
    %v9673 = vadd.f32 0.0, %v9672
    %9674 = vmatmul.bf16.gmra.mxu0 %v9591
    %v9675 = vpop.f32.mrf.mxu0
    %v9676 = vadd.f32 0.0, %v9675
    %v9677 = vpop.f32.mrf.mxu0
    %v9678 = vadd.f32 0.0, %v9677
    %9679 = vdwg.mxu0
    %9680 = vmatpush.bf16.msra.mxu0 0
    %9681 = vmatpush.bf16.msra.mxu0 0
    %9682 = vmatpush.bf16.msra.mxu0 0
    %9683 = vmatpush.bf16.msra.mxu0 0
    %9684 = vmatpush.bf16.msra.mxu0 %v9564
    %9685 = vmatpush.bf16.msra.mxu0 %v9560
    %9686 = vmatpush.bf16.msra.mxu0 %v9556
    %9687 = vmatpush.bf16.msra.mxu0 %v9552
    %9688 = vmatmul.bf16.gmra.mxu0 %v9582
    %v9689 = vpop.f32.mrf.mxu0
    %v9690 = vadd.f32 0.0, %v9689
    %v9691 = vpop.f32.mrf.mxu0
    %v9692 = vadd.f32 0.0, %v9691
    %9693 = vmatmul.bf16.gmra.mxu0 %v9585
    %v9694 = vpop.f32.mrf.mxu0
    %v9695 = vadd.f32 0.0, %v9694
    %v9696 = vpop.f32.mrf.mxu0
    %v9697 = vadd.f32 0.0, %v9696
    %9698 = vmatmul.bf16.gmra.mxu0 %v9588
    %v9699 = vpop.f32.mrf.mxu0
    %v9700 = vadd.f32 0.0, %v9699
    %v9701 = vpop.f32.mrf.mxu0
    %v9702 = vadd.f32 0.0, %v9701
    %9703 = vmatmul.bf16.gmra.mxu0 %v9591
    %v9704 = vpop.f32.mrf.mxu0
    %v9705 = vadd.f32 0.0, %v9704
    %v9706 = vpop.f32.mrf.mxu0
    %v9707 = vadd.f32 0.0, %v9706
    %9708 = vdwg.mxu0
    %v9709 = vadd.f32 %v9441, %v9603
    %v9710 = vadd.f32 %v9442, %v9632
    %v9711 = vadd.f32 %v9443, %v9661
    %v9712 = vadd.f32 %v9444, %v9690
    %v9713 = vadd.f32 %v9445, %v9605
    %v9714 = vadd.f32 %v9446, %v9634
    %v9715 = vadd.f32 %v9447, %v9663
    %v9716 = vadd.f32 %v9448, %v9692
    %v9717 = vadd.f32 %v9449, %v9608
    %v9718 = vadd.f32 %v9450, %v9637
    %v9719 = vadd.f32 %v9451, %v9666
    %v9720 = vadd.f32 %v9452, %v9695
    %v9721 = vadd.f32 %v9453, %v9610
    %v9722 = vadd.f32 %v9454, %v9639
    %v9723 = vadd.f32 %v9455, %v9668
    %v9724 = vadd.f32 %v9456, %v9697
    %v9725 = vadd.f32 %v9457, %v9613
    %v9726 = vadd.f32 %v9458, %v9642
    %v9727 = vadd.f32 %v9459, %v9671
    %v9728 = vadd.f32 %v9460, %v9700
    %v9729 = vadd.f32 %v9461, %v9615
    %v9730 = vadd.f32 %v9462, %v9644
    %v9731 = vadd.f32 %v9463, %v9673
    %v9732 = vadd.f32 %v9464, %v9702
    %v9733 = vadd.f32 %v9465, %v9618
    %v9734 = vadd.f32 %v9466, %v9647
    %v9735 = vadd.f32 %v9467, %v9676
    %v9736 = vadd.f32 %v9468, %v9705
    %v9737 = vadd.f32 %v9469, %v9620
    %v9738 = vadd.f32 %v9470, %v9649
    %v9739 = vadd.f32 %v9471, %v9678
    %v9740 = vadd.f32 %v9472, %v9707
    %v9741 = vld [vmem:[#allocation5 + $0xc] sm:$0xff]
    %v9742 = vld [vmem:[#allocation5 + $0x14] sm:$0xff]
    %v9743 = vld [vmem:[#allocation5 + $0x1c] sm:$0xff]
    %v9744 = vld [vmem:[#allocation5 + $0x24] sm:$0xff]
    %v9745 = vld [vmem:[#allocation5 + $0x2c] sm:$0xff]
    %v9746 = vld [vmem:[#allocation5 + $0x34] sm:$0xff]
    %v9747 = vld [vmem:[#allocation5 + $0x3c] sm:$0xff]
    %v9748 = vld [vmem:[#allocation5 + $0x44] sm:$0x3]
    %v9749 = vpack.c.bf16 %v9742, %v9741
    %v9750 = vpack.c.bf16 %v9744, %v9743
    %v9751 = vpack.c.bf16 %v9746, %v9745
    %v9752 = vpack.c.bf16 %v9748, %v9747
    %v9753 = vld [vmem:[%s9 + $0x300] sm:$0xff]
    %v9754 = vld [vmem:[%s9 + $0x308] sm:$0xff]
    %v9755 = vld [vmem:[%s9 + $0x310] sm:$0xff]
    %v9756 = vld [vmem:[%s9 + $0x318] sm:$0xff]
    %v9757 = vld [vmem:[%s9 + $0x320] sm:$0xff]
    %v9758 = vld [vmem:[%s9 + $0x328] sm:$0xff]
    %v9759 = vld [vmem:[%s9 + $0x330] sm:$0xff]
    %v9760 = vld [vmem:[%s9 + $0x338] sm:$0xff]
    %v9761 = vld [vmem:[%s9 + $0x340] sm:$0xff]
    %v9762 = vld [vmem:[%s9 + $0x348] sm:$0xff]
    %v9763 = vld [vmem:[%s9 + $0x350] sm:$0xff]
    %v9764 = vld [vmem:[%s9 + $0x358] sm:$0xff]
    %v9765 = vld [vmem:[%s9 + $0x360] sm:$0xff]
    %v9766 = vld [vmem:[%s9 + $0x368] sm:$0xff]
    %v9767 = vld [vmem:[%s9 + $0x370] sm:$0xff]
    %v9768 = vld [vmem:[%s9 + $0x378] sm:$0xff]
    %v9785 = vunpack.c.l.b16 %v9753
    %v9786 = vunpack.c.h.b16 %v9753
    %v9787 = vunpack.c.l.b16 %v9754
    %v9788 = vunpack.c.h.b16 %v9754
    %v9789 = vunpack.c.l.b16 %v9755
    %v9790 = vunpack.c.h.b16 %v9755
    %v9791 = vunpack.c.l.b16 %v9756
    %v9792 = vunpack.c.h.b16 %v9756
    %v9793 = vunpack.c.l.b16 %v9757
    %v9794 = vunpack.c.h.b16 %v9757
    %v9795 = vunpack.c.l.b16 %v9758
    %v9796 = vunpack.c.h.b16 %v9758
    %v9797 = vunpack.c.l.b16 %v9759
    %v9798 = vunpack.c.h.b16 %v9759
    %v9799 = vunpack.c.l.b16 %v9760
    %v9800 = vunpack.c.h.b16 %v9760
    %v9801 = vunpack.c.l.b16 %v9761
    %v9802 = vunpack.c.h.b16 %v9761
    %v9803 = vunpack.c.l.b16 %v9762
    %v9804 = vunpack.c.h.b16 %v9762
    %v9805 = vunpack.c.l.b16 %v9763
    %v9806 = vunpack.c.h.b16 %v9763
    %v9807 = vunpack.c.l.b16 %v9764
    %v9808 = vunpack.c.h.b16 %v9764
    %v9809 = vunpack.c.l.b16 %v9765
    %v9810 = vunpack.c.h.b16 %v9765
    %v9811 = vunpack.c.l.b16 %v9766
    %v9812 = vunpack.c.h.b16 %v9766
    %v9813 = vunpack.c.l.b16 %v9767
    %v9814 = vunpack.c.h.b16 %v9767
    %v9815 = vunpack.c.l.b16 %v9768
    %v9816 = vunpack.c.h.b16 %v9768
    %v9817 = vpack.c.b16 %v9789, %v9785
    %v9818 = vpack.c.b16 %v9790, %v9786
    %v9819 = vpack.c.b16 %v9791, %v9787
    %v9820 = vpack.c.b16 %v9792, %v9788
    %v9821 = vpack.c.b16 %v9797, %v9793
    %v9822 = vpack.c.b16 %v9798, %v9794
    %v9823 = vpack.c.b16 %v9799, %v9795
    %v9824 = vpack.c.b16 %v9800, %v9796
    %v9825 = vpack.c.b16 %v9805, %v9801
    %v9826 = vpack.c.b16 %v9806, %v9802
    %v9827 = vpack.c.b16 %v9807, %v9803
    %v9828 = vpack.c.b16 %v9808, %v9804
    %v9829 = vpack.c.b16 %v9813, %v9809
    %v9830 = vpack.c.b16 %v9814, %v9810
    %v9831 = vpack.c.b16 %v9815, %v9811
    %v9832 = vpack.c.b16 %v9816, %v9812
    %v9850 = vsel %vm7794, %v9749, 0
    %v9853 = vsel %vm7794, %v9750, 0
    %v9856 = vsel %vm7794, %v9751, 0
    %v9859 = vsel %vm7794, %v9752, 0
    %9861 = vmatpush.bf16.msra.mxu0 0
    %9862 = vmatpush.bf16.msra.mxu0 0
    %9863 = vmatpush.bf16.msra.mxu0 0
    %9864 = vmatpush.bf16.msra.mxu0 0
    %9865 = vmatpush.bf16.msra.mxu0 %v9829
    %9866 = vmatpush.bf16.msra.mxu0 %v9825
    %9867 = vmatpush.bf16.msra.mxu0 %v9821
    %9868 = vmatpush.bf16.msra.mxu0 %v9817
    %9869 = vmatmul.bf16.gmra.mxu0 %v9850
    %v9870 = vpop.f32.mrf.mxu0
    %v9871 = vadd.f32 0.0, %v9870
    %v9872 = vpop.f32.mrf.mxu0
    %v9873 = vadd.f32 0.0, %v9872
    %9874 = vmatmul.bf16.gmra.mxu0 %v9853
    %v9875 = vpop.f32.mrf.mxu0
    %v9876 = vadd.f32 0.0, %v9875
    %v9877 = vpop.f32.mrf.mxu0
    %v9878 = vadd.f32 0.0, %v9877
    %9879 = vmatmul.bf16.gmra.mxu0 %v9856
    %v9880 = vpop.f32.mrf.mxu0
    %v9881 = vadd.f32 0.0, %v9880
    %v9882 = vpop.f32.mrf.mxu0
    %v9883 = vadd.f32 0.0, %v9882
    %9884 = vmatmul.bf16.gmra.mxu0 %v9859
    %v9885 = vpop.f32.mrf.mxu0
    %v9886 = vadd.f32 0.0, %v9885
    %v9887 = vpop.f32.mrf.mxu0
    %v9888 = vadd.f32 0.0, %v9887
    %9889 = vdwg.mxu0
    %9890 = vmatpush.bf16.msra.mxu0 0
    %9891 = vmatpush.bf16.msra.mxu0 0
    %9892 = vmatpush.bf16.msra.mxu0 0
    %9893 = vmatpush.bf16.msra.mxu0 0
    %9894 = vmatpush.bf16.msra.mxu0 %v9830
    %9895 = vmatpush.bf16.msra.mxu0 %v9826
    %9896 = vmatpush.bf16.msra.mxu0 %v9822
    %9897 = vmatpush.bf16.msra.mxu0 %v9818
    %9898 = vmatmul.bf16.gmra.mxu0 %v9850
    %v9899 = vpop.f32.mrf.mxu0
    %v9900 = vadd.f32 0.0, %v9899
    %v9901 = vpop.f32.mrf.mxu0
    %v9902 = vadd.f32 0.0, %v9901
    %9903 = vmatmul.bf16.gmra.mxu0 %v9853
    %v9904 = vpop.f32.mrf.mxu0
    %v9905 = vadd.f32 0.0, %v9904
    %v9906 = vpop.f32.mrf.mxu0
    %v9907 = vadd.f32 0.0, %v9906
    %9908 = vmatmul.bf16.gmra.mxu0 %v9856
    %v9909 = vpop.f32.mrf.mxu0
    %v9910 = vadd.f32 0.0, %v9909
    %v9911 = vpop.f32.mrf.mxu0
    %v9912 = vadd.f32 0.0, %v9911
    %9913 = vmatmul.bf16.gmra.mxu0 %v9859
    %v9914 = vpop.f32.mrf.mxu0
    %v9915 = vadd.f32 0.0, %v9914
    %v9916 = vpop.f32.mrf.mxu0
    %v9917 = vadd.f32 0.0, %v9916
    %9918 = vdwg.mxu0
    %9919 = vmatpush.bf16.msra.mxu0 0
    %9920 = vmatpush.bf16.msra.mxu0 0
    %9921 = vmatpush.bf16.msra.mxu0 0
    %9922 = vmatpush.bf16.msra.mxu0 0
    %9923 = vmatpush.bf16.msra.mxu0 %v9831
    %9924 = vmatpush.bf16.msra.mxu0 %v9827
    %9925 = vmatpush.bf16.msra.mxu0 %v9823
    %9926 = vmatpush.bf16.msra.mxu0 %v9819
    %9927 = vmatmul.bf16.gmra.mxu0 %v9850
    %v9928 = vpop.f32.mrf.mxu0
    %v9929 = vadd.f32 0.0, %v9928
    %v9930 = vpop.f32.mrf.mxu0
    %v9931 = vadd.f32 0.0, %v9930
    %9932 = vmatmul.bf16.gmra.mxu0 %v9853
    %v9933 = vpop.f32.mrf.mxu0
    %v9934 = vadd.f32 0.0, %v9933
    %v9935 = vpop.f32.mrf.mxu0
    %v9936 = vadd.f32 0.0, %v9935
    %9937 = vmatmul.bf16.gmra.mxu0 %v9856
    %v9938 = vpop.f32.mrf.mxu0
    %v9939 = vadd.f32 0.0, %v9938
    %v9940 = vpop.f32.mrf.mxu0
    %v9941 = vadd.f32 0.0, %v9940
    %9942 = vmatmul.bf16.gmra.mxu0 %v9859
    %v9943 = vpop.f32.mrf.mxu0
    %v9944 = vadd.f32 0.0, %v9943
    %v9945 = vpop.f32.mrf.mxu0
    %v9946 = vadd.f32 0.0, %v9945
    %9947 = vdwg.mxu0
    %9948 = vmatpush.bf16.msra.mxu0 0
    %9949 = vmatpush.bf16.msra.mxu0 0
    %9950 = vmatpush.bf16.msra.mxu0 0
    %9951 = vmatpush.bf16.msra.mxu0 0
    %9952 = vmatpush.bf16.msra.mxu0 %v9832
    %9953 = vmatpush.bf16.msra.mxu0 %v9828
    %9954 = vmatpush.bf16.msra.mxu0 %v9824
    %9955 = vmatpush.bf16.msra.mxu0 %v9820
    %9956 = vmatmul.bf16.gmra.mxu0 %v9850
    %v9957 = vpop.f32.mrf.mxu0
    %v9958 = vadd.f32 0.0, %v9957
    %v9959 = vpop.f32.mrf.mxu0
    %v9960 = vadd.f32 0.0, %v9959
    %9961 = vmatmul.bf16.gmra.mxu0 %v9853
    %v9962 = vpop.f32.mrf.mxu0
    %v9963 = vadd.f32 0.0, %v9962
    %v9964 = vpop.f32.mrf.mxu0
    %v9965 = vadd.f32 0.0, %v9964
    %9966 = vmatmul.bf16.gmra.mxu0 %v9856
    %v9967 = vpop.f32.mrf.mxu0
    %v9968 = vadd.f32 0.0, %v9967
    %v9969 = vpop.f32.mrf.mxu0
    %v9970 = vadd.f32 0.0, %v9969
    %9971 = vmatmul.bf16.gmra.mxu0 %v9859
    %v9972 = vpop.f32.mrf.mxu0
    %v9973 = vadd.f32 0.0, %v9972
    %v9974 = vpop.f32.mrf.mxu0
    %v9975 = vadd.f32 0.0, %v9974
    %9976 = vdwg.mxu0
    %v9977 = vadd.f32 %v9709, %v9871
    %v9978 = vadd.f32 %v9710, %v9900
    %v9979 = vadd.f32 %v9711, %v9929
    %v9980 = vadd.f32 %v9712, %v9958
    %v9981 = vadd.f32 %v9713, %v9873
    %v9982 = vadd.f32 %v9714, %v9902
    %v9983 = vadd.f32 %v9715, %v9931
    %v9984 = vadd.f32 %v9716, %v9960
    %v9985 = vadd.f32 %v9717, %v9876
    %v9986 = vadd.f32 %v9718, %v9905
    %v9987 = vadd.f32 %v9719, %v9934
    %v9988 = vadd.f32 %v9720, %v9963
    %v9989 = vadd.f32 %v9721, %v9878
    %v9990 = vadd.f32 %v9722, %v9907
    %v9991 = vadd.f32 %v9723, %v9936
    %v9992 = vadd.f32 %v9724, %v9965
    %v9993 = vadd.f32 %v9725, %v9881
    %v9994 = vadd.f32 %v9726, %v9910
    %v9995 = vadd.f32 %v9727, %v9939
    %v9996 = vadd.f32 %v9728, %v9968
    %v9997 = vadd.f32 %v9729, %v9883
    %v9998 = vadd.f32 %v9730, %v9912
    %v9999 = vadd.f32 %v9731, %v9941
    %v10000 = vadd.f32 %v9732, %v9970
    %v10001 = vadd.f32 %v9733, %v9886
    %v10002 = vadd.f32 %v9734, %v9915
    %v10003 = vadd.f32 %v9735, %v9944
    %v10004 = vadd.f32 %v9736, %v9973
    %v10005 = vadd.f32 %v9737, %v9888
    %v10006 = vadd.f32 %v9738, %v9917
    %v10007 = vadd.f32 %v9739, %v9946
    %v10008 = vadd.f32 %v9740, %v9975
    %v10009 = vld [vmem:[#allocation5 + $0xd] sm:$0xff]
    %v10010 = vld [vmem:[#allocation5 + $0x15] sm:$0xff]
    %v10011 = vld [vmem:[#allocation5 + $0x1d] sm:$0xff]
    %v10012 = vld [vmem:[#allocation5 + $0x25] sm:$0xff]
    %v10013 = vld [vmem:[#allocation5 + $0x2d] sm:$0xff]
    %v10014 = vld [vmem:[#allocation5 + $0x35] sm:$0xff]
    %v10015 = vld [vmem:[#allocation5 + $0x3d] sm:$0xff]
    %v10016 = vld [vmem:[#allocation5 + $0x45] sm:$0x3]
    %v10017 = vpack.c.bf16 %v10010, %v10009
    %v10018 = vpack.c.bf16 %v10012, %v10011
    %v10019 = vpack.c.bf16 %v10014, %v10013
    %v10020 = vpack.c.bf16 %v10016, %v10015
    %v10021 = vld [vmem:[%s9 + $0x380] sm:$0xff]
    %v10022 = vld [vmem:[%s9 + $0x388] sm:$0xff]
    %v10023 = vld [vmem:[%s9 + $0x390] sm:$0xff]
    %v10024 = vld [vmem:[%s9 + $0x398] sm:$0xff]
    %v10025 = vld [vmem:[%s9 + $0x3a0] sm:$0xff]
    %v10026 = vld [vmem:[%s9 + $0x3a8] sm:$0xff]
    %v10027 = vld [vmem:[%s9 + $0x3b0] sm:$0xff]
    %v10028 = vld [vmem:[%s9 + $0x3b8] sm:$0xff]
    %v10029 = vld [vmem:[%s9 + $0x3c0] sm:$0xff]
    %v10030 = vld [vmem:[%s9 + $0x3c8] sm:$0xff]
    %v10031 = vld [vmem:[%s9 + $0x3d0] sm:$0xff]
    %v10032 = vld [vmem:[%s9 + $0x3d8] sm:$0xff]
    %v10033 = vld [vmem:[%s9 + $0x3e0] sm:$0xff]
    %v10034 = vld [vmem:[%s9 + $0x3e8] sm:$0xff]
    %v10035 = vld [vmem:[%s9 + $0x3f0] sm:$0xff]
    %v10036 = vld [vmem:[%s9 + $0x3f8] sm:$0xff]
    %v10053 = vunpack.c.l.b16 %v10021
    %v10054 = vunpack.c.h.b16 %v10021
    %v10055 = vunpack.c.l.b16 %v10022
    %v10056 = vunpack.c.h.b16 %v10022
    %v10057 = vunpack.c.l.b16 %v10023
    %v10058 = vunpack.c.h.b16 %v10023
    %v10059 = vunpack.c.l.b16 %v10024
    %v10060 = vunpack.c.h.b16 %v10024
    %v10061 = vunpack.c.l.b16 %v10025
    %v10062 = vunpack.c.h.b16 %v10025
    %v10063 = vunpack.c.l.b16 %v10026
    %v10064 = vunpack.c.h.b16 %v10026
    %v10065 = vunpack.c.l.b16 %v10027
    %v10066 = vunpack.c.h.b16 %v10027
    %v10067 = vunpack.c.l.b16 %v10028
    %v10068 = vunpack.c.h.b16 %v10028
    %v10069 = vunpack.c.l.b16 %v10029
    %v10070 = vunpack.c.h.b16 %v10029
    %v10071 = vunpack.c.l.b16 %v10030
    %v10072 = vunpack.c.h.b16 %v10030
    %v10073 = vunpack.c.l.b16 %v10031
    %v10074 = vunpack.c.h.b16 %v10031
    %v10075 = vunpack.c.l.b16 %v10032
    %v10076 = vunpack.c.h.b16 %v10032
    %v10077 = vunpack.c.l.b16 %v10033
    %v10078 = vunpack.c.h.b16 %v10033
    %v10079 = vunpack.c.l.b16 %v10034
    %v10080 = vunpack.c.h.b16 %v10034
    %v10081 = vunpack.c.l.b16 %v10035
    %v10082 = vunpack.c.h.b16 %v10035
    %v10083 = vunpack.c.l.b16 %v10036
    %v10084 = vunpack.c.h.b16 %v10036
    %v10085 = vpack.c.b16 %v10057, %v10053
    %v10086 = vpack.c.b16 %v10058, %v10054
    %v10087 = vpack.c.b16 %v10059, %v10055
    %v10088 = vpack.c.b16 %v10060, %v10056
    %v10089 = vpack.c.b16 %v10065, %v10061
    %v10090 = vpack.c.b16 %v10066, %v10062
    %v10091 = vpack.c.b16 %v10067, %v10063
    %v10092 = vpack.c.b16 %v10068, %v10064
    %v10093 = vpack.c.b16 %v10073, %v10069
    %v10094 = vpack.c.b16 %v10074, %v10070
    %v10095 = vpack.c.b16 %v10075, %v10071
    %v10096 = vpack.c.b16 %v10076, %v10072
    %v10097 = vpack.c.b16 %v10081, %v10077
    %v10098 = vpack.c.b16 %v10082, %v10078
    %v10099 = vpack.c.b16 %v10083, %v10079
    %v10100 = vpack.c.b16 %v10084, %v10080
    %v10118 = vsel %vm7794, %v10017, 0
    %v10121 = vsel %vm7794, %v10018, 0
    %v10124 = vsel %vm7794, %v10019, 0
    %v10127 = vsel %vm7794, %v10020, 0
    %10129 = vmatpush.bf16.msra.mxu0 0
    %10130 = vmatpush.bf16.msra.mxu0 0
    %10131 = vmatpush.bf16.msra.mxu0 0
    %10132 = vmatpush.bf16.msra.mxu0 0
    %10133 = vmatpush.bf16.msra.mxu0 %v10097
    %10134 = vmatpush.bf16.msra.mxu0 %v10093
    %10135 = vmatpush.bf16.msra.mxu0 %v10089
    %10136 = vmatpush.bf16.msra.mxu0 %v10085
    %10137 = vmatmul.bf16.gmra.mxu0 %v10118
    %v10138 = vpop.f32.mrf.mxu0
    %v10139 = vadd.f32 0.0, %v10138
    %v10140 = vpop.f32.mrf.mxu0
    %v10141 = vadd.f32 0.0, %v10140
    %10142 = vmatmul.bf16.gmra.mxu0 %v10121
    %v10143 = vpop.f32.mrf.mxu0
    %v10144 = vadd.f32 0.0, %v10143
    %v10145 = vpop.f32.mrf.mxu0
    %v10146 = vadd.f32 0.0, %v10145
    %10147 = vmatmul.bf16.gmra.mxu0 %v10124
    %v10148 = vpop.f32.mrf.mxu0
    %v10149 = vadd.f32 0.0, %v10148
    %v10150 = vpop.f32.mrf.mxu0
    %v10151 = vadd.f32 0.0, %v10150
    %10152 = vmatmul.bf16.gmra.mxu0 %v10127
    %v10153 = vpop.f32.mrf.mxu0
    %v10154 = vadd.f32 0.0, %v10153
    %v10155 = vpop.f32.mrf.mxu0
    %v10156 = vadd.f32 0.0, %v10155
    %10157 = vdwg.mxu0
    %10158 = vmatpush.bf16.msra.mxu0 0
    %10159 = vmatpush.bf16.msra.mxu0 0
    %10160 = vmatpush.bf16.msra.mxu0 0
    %10161 = vmatpush.bf16.msra.mxu0 0
    %10162 = vmatpush.bf16.msra.mxu0 %v10098
    %10163 = vmatpush.bf16.msra.mxu0 %v10094
    %10164 = vmatpush.bf16.msra.mxu0 %v10090
    %10165 = vmatpush.bf16.msra.mxu0 %v10086
    %10166 = vmatmul.bf16.gmra.mxu0 %v10118
    %v10167 = vpop.f32.mrf.mxu0
    %v10168 = vadd.f32 0.0, %v10167
    %v10169 = vpop.f32.mrf.mxu0
    %v10170 = vadd.f32 0.0, %v10169
    %10171 = vmatmul.bf16.gmra.mxu0 %v10121
    %v10172 = vpop.f32.mrf.mxu0
    %v10173 = vadd.f32 0.0, %v10172
    %v10174 = vpop.f32.mrf.mxu0
    %v10175 = vadd.f32 0.0, %v10174
    %10176 = vmatmul.bf16.gmra.mxu0 %v10124
    %v10177 = vpop.f32.mrf.mxu0
    %v10178 = vadd.f32 0.0, %v10177
    %v10179 = vpop.f32.mrf.mxu0
    %v10180 = vadd.f32 0.0, %v10179
    %10181 = vmatmul.bf16.gmra.mxu0 %v10127
    %v10182 = vpop.f32.mrf.mxu0
    %v10183 = vadd.f32 0.0, %v10182
    %v10184 = vpop.f32.mrf.mxu0
    %v10185 = vadd.f32 0.0, %v10184
    %10186 = vdwg.mxu0
    %10187 = vmatpush.bf16.msra.mxu0 0
    %10188 = vmatpush.bf16.msra.mxu0 0
    %10189 = vmatpush.bf16.msra.mxu0 0
    %10190 = vmatpush.bf16.msra.mxu0 0
    %10191 = vmatpush.bf16.msra.mxu0 %v10099
    %10192 = vmatpush.bf16.msra.mxu0 %v10095
    %10193 = vmatpush.bf16.msra.mxu0 %v10091
    %10194 = vmatpush.bf16.msra.mxu0 %v10087
    %10195 = vmatmul.bf16.gmra.mxu0 %v10118
    %v10196 = vpop.f32.mrf.mxu0
    %v10197 = vadd.f32 0.0, %v10196
    %v10198 = vpop.f32.mrf.mxu0
    %v10199 = vadd.f32 0.0, %v10198
    %10200 = vmatmul.bf16.gmra.mxu0 %v10121
    %v10201 = vpop.f32.mrf.mxu0
    %v10202 = vadd.f32 0.0, %v10201
    %v10203 = vpop.f32.mrf.mxu0
    %v10204 = vadd.f32 0.0, %v10203
    %10205 = vmatmul.bf16.gmra.mxu0 %v10124
    %v10206 = vpop.f32.mrf.mxu0
    %v10207 = vadd.f32 0.0, %v10206
    %v10208 = vpop.f32.mrf.mxu0
    %v10209 = vadd.f32 0.0, %v10208
    %10210 = vmatmul.bf16.gmra.mxu0 %v10127
    %v10211 = vpop.f32.mrf.mxu0
    %v10212 = vadd.f32 0.0, %v10211
    %v10213 = vpop.f32.mrf.mxu0
    %v10214 = vadd.f32 0.0, %v10213
    %10215 = vdwg.mxu0
    %10216 = vmatpush.bf16.msra.mxu0 0
    %10217 = vmatpush.bf16.msra.mxu0 0
    %10218 = vmatpush.bf16.msra.mxu0 0
    %10219 = vmatpush.bf16.msra.mxu0 0
    %10220 = vmatpush.bf16.msra.mxu0 %v10100
    %10221 = vmatpush.bf16.msra.mxu0 %v10096
    %10222 = vmatpush.bf16.msra.mxu0 %v10092
    %10223 = vmatpush.bf16.msra.mxu0 %v10088
    %10224 = vmatmul.bf16.gmra.mxu0 %v10118
    %v10225 = vpop.f32.mrf.mxu0
    %v10226 = vadd.f32 0.0, %v10225
    %v10227 = vpop.f32.mrf.mxu0
    %v10228 = vadd.f32 0.0, %v10227
    %10229 = vmatmul.bf16.gmra.mxu0 %v10121
    %v10230 = vpop.f32.mrf.mxu0
    %v10231 = vadd.f32 0.0, %v10230
    %v10232 = vpop.f32.mrf.mxu0
    %v10233 = vadd.f32 0.0, %v10232
    %10234 = vmatmul.bf16.gmra.mxu0 %v10124
    %v10235 = vpop.f32.mrf.mxu0
    %v10236 = vadd.f32 0.0, %v10235
    %v10237 = vpop.f32.mrf.mxu0
    %v10238 = vadd.f32 0.0, %v10237
    %10239 = vmatmul.bf16.gmra.mxu0 %v10127
    %v10240 = vpop.f32.mrf.mxu0
    %v10241 = vadd.f32 0.0, %v10240
    %v10242 = vpop.f32.mrf.mxu0
    %v10243 = vadd.f32 0.0, %v10242
    %10244 = vdwg.mxu0
    %v10245 = vadd.f32 %v9977, %v10139
    %v10246 = vadd.f32 %v9978, %v10168
    %v10247 = vadd.f32 %v9979, %v10197
    %v10248 = vadd.f32 %v9980, %v10226
    %v10249 = vadd.f32 %v9981, %v10141
    %v10250 = vadd.f32 %v9982, %v10170
    %v10251 = vadd.f32 %v9983, %v10199
    %v10252 = vadd.f32 %v9984, %v10228
    %v10253 = vadd.f32 %v9985, %v10144
    %v10254 = vadd.f32 %v9986, %v10173
    %v10255 = vadd.f32 %v9987, %v10202
    %v10256 = vadd.f32 %v9988, %v10231
    %v10257 = vadd.f32 %v9989, %v10146
    %v10258 = vadd.f32 %v9990, %v10175
    %v10259 = vadd.f32 %v9991, %v10204
    %v10260 = vadd.f32 %v9992, %v10233
    %v10261 = vadd.f32 %v9993, %v10149
    %v10262 = vadd.f32 %v9994, %v10178
    %v10263 = vadd.f32 %v9995, %v10207
    %v10264 = vadd.f32 %v9996, %v10236
    %v10265 = vadd.f32 %v9997, %v10151
    %v10266 = vadd.f32 %v9998, %v10180
    %v10267 = vadd.f32 %v9999, %v10209
    %v10268 = vadd.f32 %v10000, %v10238
    %v10269 = vadd.f32 %v10001, %v10154
    %v10270 = vadd.f32 %v10002, %v10183
    %v10271 = vadd.f32 %v10003, %v10212
    %v10272 = vadd.f32 %v10004, %v10241
    %v10273 = vadd.f32 %v10005, %v10156
    %v10274 = vadd.f32 %v10006, %v10185
    %v10275 = vadd.f32 %v10007, %v10214
    %v10276 = vadd.f32 %v10008, %v10243
    %v10277 = vld [vmem:[#allocation5 + $0xe] sm:$0xff]
    %v10278 = vld [vmem:[#allocation5 + $0x16] sm:$0xff]
    %v10279 = vld [vmem:[#allocation5 + $0x1e] sm:$0xff]
    %v10280 = vld [vmem:[#allocation5 + $0x26] sm:$0xff]
    %v10281 = vld [vmem:[#allocation5 + $0x2e] sm:$0xff]
    %v10282 = vld [vmem:[#allocation5 + $0x36] sm:$0xff]
    %v10283 = vld [vmem:[#allocation5 + $0x3e] sm:$0xff]
    %v10284 = vld [vmem:[#allocation5 + $0x46] sm:$0x3]
    %v10285 = vpack.c.bf16 %v10278, %v10277
    %v10286 = vpack.c.bf16 %v10280, %v10279
    %v10287 = vpack.c.bf16 %v10282, %v10281
    %v10288 = vpack.c.bf16 %v10284, %v10283
    %v10289 = vld [vmem:[%s9 + $0x400] sm:$0xff]
    %v10290 = vld [vmem:[%s9 + $0x408] sm:$0xff]
    %v10291 = vld [vmem:[%s9 + $0x410] sm:$0xff]
    %v10292 = vld [vmem:[%s9 + $0x418] sm:$0xff]
    %v10293 = vld [vmem:[%s9 + $0x420] sm:$0xff]
    %v10294 = vld [vmem:[%s9 + $0x428] sm:$0xff]
    %v10295 = vld [vmem:[%s9 + $0x430] sm:$0xff]
    %v10296 = vld [vmem:[%s9 + $0x438] sm:$0xff]
    %v10297 = vld [vmem:[%s9 + $0x440] sm:$0xff]
    %v10298 = vld [vmem:[%s9 + $0x448] sm:$0xff]
    %v10299 = vld [vmem:[%s9 + $0x450] sm:$0xff]
    %v10300 = vld [vmem:[%s9 + $0x458] sm:$0xff]
    %v10301 = vld [vmem:[%s9 + $0x460] sm:$0xff]
    %v10302 = vld [vmem:[%s9 + $0x468] sm:$0xff]
    %v10303 = vld [vmem:[%s9 + $0x470] sm:$0xff]
    %v10304 = vld [vmem:[%s9 + $0x478] sm:$0xff]
    %v10321 = vunpack.c.l.b16 %v10289
    %v10322 = vunpack.c.h.b16 %v10289
    %v10323 = vunpack.c.l.b16 %v10290
    %v10324 = vunpack.c.h.b16 %v10290
    %v10325 = vunpack.c.l.b16 %v10291
    %v10326 = vunpack.c.h.b16 %v10291
    %v10327 = vunpack.c.l.b16 %v10292
    %v10328 = vunpack.c.h.b16 %v10292
    %v10329 = vunpack.c.l.b16 %v10293
    %v10330 = vunpack.c.h.b16 %v10293
    %v10331 = vunpack.c.l.b16 %v10294
    %v10332 = vunpack.c.h.b16 %v10294
    %v10333 = vunpack.c.l.b16 %v10295
    %v10334 = vunpack.c.h.b16 %v10295
    %v10335 = vunpack.c.l.b16 %v10296
    %v10336 = vunpack.c.h.b16 %v10296
    %v10337 = vunpack.c.l.b16 %v10297
    %v10338 = vunpack.c.h.b16 %v10297
    %v10339 = vunpack.c.l.b16 %v10298
    %v10340 = vunpack.c.h.b16 %v10298
    %v10341 = vunpack.c.l.b16 %v10299
    %v10342 = vunpack.c.h.b16 %v10299
    %v10343 = vunpack.c.l.b16 %v10300
    %v10344 = vunpack.c.h.b16 %v10300
    %v10345 = vunpack.c.l.b16 %v10301
    %v10346 = vunpack.c.h.b16 %v10301
    %v10347 = vunpack.c.l.b16 %v10302
    %v10348 = vunpack.c.h.b16 %v10302
    %v10349 = vunpack.c.l.b16 %v10303
    %v10350 = vunpack.c.h.b16 %v10303
    %v10351 = vunpack.c.l.b16 %v10304
    %v10352 = vunpack.c.h.b16 %v10304
    %v10353 = vpack.c.b16 %v10325, %v10321
    %v10354 = vpack.c.b16 %v10326, %v10322
    %v10355 = vpack.c.b16 %v10327, %v10323
    %v10356 = vpack.c.b16 %v10328, %v10324
    %v10357 = vpack.c.b16 %v10333, %v10329
    %v10358 = vpack.c.b16 %v10334, %v10330
    %v10359 = vpack.c.b16 %v10335, %v10331
    %v10360 = vpack.c.b16 %v10336, %v10332
    %v10361 = vpack.c.b16 %v10341, %v10337
    %v10362 = vpack.c.b16 %v10342, %v10338
    %v10363 = vpack.c.b16 %v10343, %v10339
    %v10364 = vpack.c.b16 %v10344, %v10340
    %v10365 = vpack.c.b16 %v10349, %v10345
    %v10366 = vpack.c.b16 %v10350, %v10346
    %v10367 = vpack.c.b16 %v10351, %v10347
    %v10368 = vpack.c.b16 %v10352, %v10348
    %v10386 = vsel %vm7794, %v10285, 0
    %v10389 = vsel %vm7794, %v10286, 0
    %v10392 = vsel %vm7794, %v10287, 0
    %v10395 = vsel %vm7794, %v10288, 0
    %10397 = vmatpush.bf16.msra.mxu0 0
    %10398 = vmatpush.bf16.msra.mxu0 0
    %10399 = vmatpush.bf16.msra.mxu0 0
    %10400 = vmatpush.bf16.msra.mxu0 0
    %10401 = vmatpush.bf16.msra.mxu0 %v10365
    %10402 = vmatpush.bf16.msra.mxu0 %v10361
    %10403 = vmatpush.bf16.msra.mxu0 %v10357
    %10404 = vmatpush.bf16.msra.mxu0 %v10353
    %10405 = vmatmul.bf16.gmra.mxu0 %v10386
    %v10406 = vpop.f32.mrf.mxu0
    %v10407 = vadd.f32 0.0, %v10406
    %v10408 = vpop.f32.mrf.mxu0
    %v10409 = vadd.f32 0.0, %v10408
    %10410 = vmatmul.bf16.gmra.mxu0 %v10389
    %v10411 = vpop.f32.mrf.mxu0
    %v10412 = vadd.f32 0.0, %v10411
    %v10413 = vpop.f32.mrf.mxu0
    %v10414 = vadd.f32 0.0, %v10413
    %10415 = vmatmul.bf16.gmra.mxu0 %v10392
    %v10416 = vpop.f32.mrf.mxu0
    %v10417 = vadd.f32 0.0, %v10416
    %v10418 = vpop.f32.mrf.mxu0
    %v10419 = vadd.f32 0.0, %v10418
    %10420 = vmatmul.bf16.gmra.mxu0 %v10395
    %v10421 = vpop.f32.mrf.mxu0
    %v10422 = vadd.f32 0.0, %v10421
    %v10423 = vpop.f32.mrf.mxu0
    %v10424 = vadd.f32 0.0, %v10423
    %10425 = vdwg.mxu0
    %10426 = vmatpush.bf16.msra.mxu0 0
    %10427 = vmatpush.bf16.msra.mxu0 0
    %10428 = vmatpush.bf16.msra.mxu0 0
    %10429 = vmatpush.bf16.msra.mxu0 0
    %10430 = vmatpush.bf16.msra.mxu0 %v10366
    %10431 = vmatpush.bf16.msra.mxu0 %v10362
    %10432 = vmatpush.bf16.msra.mxu0 %v10358
    %10433 = vmatpush.bf16.msra.mxu0 %v10354
    %10434 = vmatmul.bf16.gmra.mxu0 %v10386
    %v10435 = vpop.f32.mrf.mxu0
    %v10436 = vadd.f32 0.0, %v10435
    %v10437 = vpop.f32.mrf.mxu0
    %v10438 = vadd.f32 0.0, %v10437
    %10439 = vmatmul.bf16.gmra.mxu0 %v10389
    %v10440 = vpop.f32.mrf.mxu0
    %v10441 = vadd.f32 0.0, %v10440
    %v10442 = vpop.f32.mrf.mxu0
    %v10443 = vadd.f32 0.0, %v10442
    %10444 = vmatmul.bf16.gmra.mxu0 %v10392
    %v10445 = vpop.f32.mrf.mxu0
    %v10446 = vadd.f32 0.0, %v10445
    %v10447 = vpop.f32.mrf.mxu0
    %v10448 = vadd.f32 0.0, %v10447
    %10449 = vmatmul.bf16.gmra.mxu0 %v10395
    %v10450 = vpop.f32.mrf.mxu0
    %v10451 = vadd.f32 0.0, %v10450
    %v10452 = vpop.f32.mrf.mxu0
    %v10453 = vadd.f32 0.0, %v10452
    %10454 = vdwg.mxu0
    %10455 = vmatpush.bf16.msra.mxu0 0
    %10456 = vmatpush.bf16.msra.mxu0 0
    %10457 = vmatpush.bf16.msra.mxu0 0
    %10458 = vmatpush.bf16.msra.mxu0 0
    %10459 = vmatpush.bf16.msra.mxu0 %v10367
    %10460 = vmatpush.bf16.msra.mxu0 %v10363
    %10461 = vmatpush.bf16.msra.mxu0 %v10359
    %10462 = vmatpush.bf16.msra.mxu0 %v10355
    %10463 = vmatmul.bf16.gmra.mxu0 %v10386
    %v10464 = vpop.f32.mrf.mxu0
    %v10465 = vadd.f32 0.0, %v10464
    %v10466 = vpop.f32.mrf.mxu0
    %v10467 = vadd.f32 0.0, %v10466
    %10468 = vmatmul.bf16.gmra.mxu0 %v10389
    %v10469 = vpop.f32.mrf.mxu0
    %v10470 = vadd.f32 0.0, %v10469
    %v10471 = vpop.f32.mrf.mxu0
    %v10472 = vadd.f32 0.0, %v10471
    %10473 = vmatmul.bf16.gmra.mxu0 %v10392
    %v10474 = vpop.f32.mrf.mxu0
    %v10475 = vadd.f32 0.0, %v10474
    %v10476 = vpop.f32.mrf.mxu0
    %v10477 = vadd.f32 0.0, %v10476
    %10478 = vmatmul.bf16.gmra.mxu0 %v10395
    %v10479 = vpop.f32.mrf.mxu0
    %v10480 = vadd.f32 0.0, %v10479
    %v10481 = vpop.f32.mrf.mxu0
    %v10482 = vadd.f32 0.0, %v10481
    %10483 = vdwg.mxu0
    %10484 = vmatpush.bf16.msra.mxu0 0
    %10485 = vmatpush.bf16.msra.mxu0 0
    %10486 = vmatpush.bf16.msra.mxu0 0
    %10487 = vmatpush.bf16.msra.mxu0 0
    %10488 = vmatpush.bf16.msra.mxu0 %v10368
    %10489 = vmatpush.bf16.msra.mxu0 %v10364
    %10490 = vmatpush.bf16.msra.mxu0 %v10360
    %10491 = vmatpush.bf16.msra.mxu0 %v10356
    %10492 = vmatmul.bf16.gmra.mxu0 %v10386
    %v10493 = vpop.f32.mrf.mxu0
    %v10494 = vadd.f32 0.0, %v10493
    %v10495 = vpop.f32.mrf.mxu0
    %v10496 = vadd.f32 0.0, %v10495
    %10497 = vmatmul.bf16.gmra.mxu0 %v10389
    %v10498 = vpop.f32.mrf.mxu0
    %v10499 = vadd.f32 0.0, %v10498
    %v10500 = vpop.f32.mrf.mxu0
    %v10501 = vadd.f32 0.0, %v10500
    %10502 = vmatmul.bf16.gmra.mxu0 %v10392
    %v10503 = vpop.f32.mrf.mxu0
    %v10504 = vadd.f32 0.0, %v10503
    %v10505 = vpop.f32.mrf.mxu0
    %v10506 = vadd.f32 0.0, %v10505
    %10507 = vmatmul.bf16.gmra.mxu0 %v10395
    %v10508 = vpop.f32.mrf.mxu0
    %v10509 = vadd.f32 0.0, %v10508
    %v10510 = vpop.f32.mrf.mxu0
    %v10511 = vadd.f32 0.0, %v10510
    %10512 = vdwg.mxu0
    %v10513 = vadd.f32 %v10245, %v10407
    %v10514 = vadd.f32 %v10246, %v10436
    %v10515 = vadd.f32 %v10247, %v10465
    %v10516 = vadd.f32 %v10248, %v10494
    %v10517 = vadd.f32 %v10249, %v10409
    %v10518 = vadd.f32 %v10250, %v10438
    %v10519 = vadd.f32 %v10251, %v10467
    %v10520 = vadd.f32 %v10252, %v10496
    %v10521 = vadd.f32 %v10253, %v10412
    %v10522 = vadd.f32 %v10254, %v10441
    %v10523 = vadd.f32 %v10255, %v10470
    %v10524 = vadd.f32 %v10256, %v10499
    %v10525 = vadd.f32 %v10257, %v10414
    %v10526 = vadd.f32 %v10258, %v10443
    %v10527 = vadd.f32 %v10259, %v10472
    %v10528 = vadd.f32 %v10260, %v10501
    %v10529 = vadd.f32 %v10261, %v10417
    %v10530 = vadd.f32 %v10262, %v10446
    %v10531 = vadd.f32 %v10263, %v10475
    %v10532 = vadd.f32 %v10264, %v10504
    %v10533 = vadd.f32 %v10265, %v10419
    %v10534 = vadd.f32 %v10266, %v10448
    %v10535 = vadd.f32 %v10267, %v10477
    %v10536 = vadd.f32 %v10268, %v10506
    %v10537 = vadd.f32 %v10269, %v10422
    %v10538 = vadd.f32 %v10270, %v10451
    %v10539 = vadd.f32 %v10271, %v10480
    %v10540 = vadd.f32 %v10272, %v10509
    %v10541 = vadd.f32 %v10273, %v10424
    %v10542 = vadd.f32 %v10274, %v10453
    %v10543 = vadd.f32 %v10275, %v10482
    %v10544 = vadd.f32 %v10276, %v10511
    %10545 = vst [vmem:[#allocation6] sm:$0xff] %v10513
    %10546 = vst [vmem:[#allocation6 + $0x8] sm:$0xff] %v10514
    %10547 = vst [vmem:[#allocation6 + $0x10] sm:$0xff] %v10515
    %10548 = vst [vmem:[#allocation6 + $0x18] sm:$0xff] %v10516
    %10549 = vst [vmem:[#allocation6 + $0x20] sm:$0xff] %v10517
    %10550 = vst [vmem:[#allocation6 + $0x28] sm:$0xff] %v10518
    %10551 = vst [vmem:[#allocation6 + $0x30] sm:$0xff] %v10519
    %10552 = vst [vmem:[#allocation6 + $0x38] sm:$0xff] %v10520
    %10553 = vst [vmem:[#allocation6 + $0x40] sm:$0xff] %v10521
    %10554 = vst [vmem:[#allocation6 + $0x48] sm:$0xff] %v10522
    %10555 = vst [vmem:[#allocation6 + $0x50] sm:$0xff] %v10523
    %10556 = vst [vmem:[#allocation6 + $0x58] sm:$0xff] %v10524
    %10557 = vst [vmem:[#allocation6 + $0x60] sm:$0xff] %v10525
    %10558 = vst [vmem:[#allocation6 + $0x68] sm:$0xff] %v10526
    %10559 = vst [vmem:[#allocation6 + $0x70] sm:$0xff] %v10527
    %10560 = vst [vmem:[#allocation6 + $0x78] sm:$0xff] %v10528
    %10561 = vst [vmem:[#allocation6 + $0x80] sm:$0xff] %v10529
    %10562 = vst [vmem:[#allocation6 + $0x88] sm:$0xff] %v10530
    %10563 = vst [vmem:[#allocation6 + $0x90] sm:$0xff] %v10531
    %10564 = vst [vmem:[#allocation6 + $0x98] sm:$0xff] %v10532
    %10565 = vst [vmem:[#allocation6 + $0xa0] sm:$0xff] %v10533
    %10566 = vst [vmem:[#allocation6 + $0xa8] sm:$0xff] %v10534
    %10567 = vst [vmem:[#allocation6 + $0xb0] sm:$0xff] %v10535
    %10568 = vst [vmem:[#allocation6 + $0xb8] sm:$0xff] %v10536
    %10569 = vst [vmem:[#allocation6 + $0xc0] sm:$0xff] %v10537
    %10570 = vst [vmem:[#allocation6 + $0xc8] sm:$0xff] %v10538
    %10571 = vst [vmem:[#allocation6 + $0xd0] sm:$0xff] %v10539
    %10572 = vst [vmem:[#allocation6 + $0xd8] sm:$0xff] %v10540
    %10573 = vst [vmem:[#allocation6 + $0xe0] sm:$0x3] %v10541
    %10574 = vst [vmem:[#allocation6 + $0xe8] sm:$0x3] %v10542
    %10575 = vst [vmem:[#allocation6 + $0xf0] sm:$0x3] %v10543
    %10576 = vst [vmem:[#allocation6 + $0xf8] sm:$0x3] %v10544
    %v10577 = vld [vmem:[#allocation6] sm:$0xff]
    %v10578 = vld [vmem:[#allocation6 + $0x8] sm:$0xff]
    %v10579 = vld [vmem:[#allocation6 + $0x10] sm:$0xff]
    %v10580 = vld [vmem:[#allocation6 + $0x18] sm:$0xff]
    %v10581 = vld [vmem:[#allocation6 + $0x20] sm:$0xff]
    %v10582 = vld [vmem:[#allocation6 + $0x28] sm:$0xff]
    %v10583 = vld [vmem:[#allocation6 + $0x30] sm:$0xff]
    %v10584 = vld [vmem:[#allocation6 + $0x38] sm:$0xff]
    %v10585 = vld [vmem:[#allocation6 + $0x40] sm:$0xff]
    %v10586 = vld [vmem:[#allocation6 + $0x48] sm:$0xff]
    %v10587 = vld [vmem:[#allocation6 + $0x50] sm:$0xff]
    %v10588 = vld [vmem:[#allocation6 + $0x58] sm:$0xff]
    %v10589 = vld [vmem:[#allocation6 + $0x60] sm:$0xff]
    %v10590 = vld [vmem:[#allocation6 + $0x68] sm:$0xff]
    %v10591 = vld [vmem:[#allocation6 + $0x70] sm:$0xff]
    %v10592 = vld [vmem:[#allocation6 + $0x78] sm:$0xff]
    %v10593 = vld [vmem:[#allocation6 + $0x80] sm:$0xff]
    %v10594 = vld [vmem:[#allocation6 + $0x88] sm:$0xff]
    %v10595 = vld [vmem:[#allocation6 + $0x90] sm:$0xff]
    %v10596 = vld [vmem:[#allocation6 + $0x98] sm:$0xff]
    %v10597 = vld [vmem:[#allocation6 + $0xa0] sm:$0xff]
    %v10598 = vld [vmem:[#allocation6 + $0xa8] sm:$0xff]
    %v10599 = vld [vmem:[#allocation6 + $0xb0] sm:$0xff]
    %v10600 = vld [vmem:[#allocation6 + $0xb8] sm:$0xff]
    %v10601 = vld [vmem:[#allocation6 + $0xc0] sm:$0x7]
    %v10602 = vld [vmem:[#allocation6 + $0xc8] sm:$0x7]
    %v10603 = vld [vmem:[#allocation6 + $0xd0] sm:$0x7]
    %v10604 = vld [vmem:[#allocation6 + $0xd8] sm:$0x7]
    %v10605 = vld [vmem:[#allocation6] sm:$0xfe]
    %v10606 = vld [vmem:[#allocation6 + $0x8] sm:$0xfe]
    %v10607 = vld [vmem:[#allocation6 + $0x10] sm:$0xfe]
    %v10608 = vld [vmem:[#allocation6 + $0x18] sm:$0xfe]
    %v10609 = vld [vmem:[#allocation6 + $0xc0] sm:$0xf]
    %v10610 = vld [vmem:[#allocation6 + $0xc8] sm:$0xf]
    %v10611 = vld [vmem:[#allocation6 + $0xd0] sm:$0xf]
    %v10612 = vld [vmem:[#allocation6 + $0xd8] sm:$0xf]
    %v10613 = vld [vmem:[#allocation6] sm:$0xc0]
    %v10614 = vld [vmem:[#allocation6 + $0x8] sm:$0xc0]
    %v10615 = vld [vmem:[#allocation6 + $0x10] sm:$0xc0]
    %v10616 = vld [vmem:[#allocation6 + $0x18] sm:$0xc0]
    %v10617 = vld [vmem:[#allocation6 + $0xc0] sm:$0xff]
    %v10618 = vld [vmem:[#allocation6 + $0xc8] sm:$0xff]
    %v10619 = vld [vmem:[#allocation6 + $0xd0] sm:$0xff]
    %v10620 = vld [vmem:[#allocation6 + $0xd8] sm:$0xff]
    %v10621 = vld [vmem:[#allocation6 + $0xe0] sm:$0x1]
    %v10622 = vld [vmem:[#allocation6 + $0xe8] sm:$0x1]
    %v10623 = vld [vmem:[#allocation6 + $0xf0] sm:$0x1]
    %v10624 = vld [vmem:[#allocation6 + $0xf8] sm:$0x1]
    %v10625 = vld [vmem:[#allocation6] sm:$0x80]
    %v10626 = vld [vmem:[#allocation6 + $0x8] sm:$0x80]
    %v10627 = vld [vmem:[#allocation6 + $0x10] sm:$0x80]
    %v10628 = vld [vmem:[#allocation6 + $0x18] sm:$0x80]
    %v10629 = vld [vmem:[#allocation6 + $0xe0] sm:$0x3]
    %v10630 = vld [vmem:[#allocation6 + $0xe8] sm:$0x3]
    %v10631 = vld [vmem:[#allocation6 + $0xf0] sm:$0x3]
    %v10632 = vld [vmem:[#allocation6 + $0xf8] sm:$0x3]
    %v10661 = vrot.slane %v10605, 1
    %v10662 = vrot.slane %v10581, 1
    %v10663 = vsel %vm5913, %v10661, %v10662
    %v10664 = vrot.slane %v10606, 1
    %v10665 = vrot.slane %v10582, 1
    %v10666 = vsel %vm5913, %v10664, %v10665
    %v10667 = vrot.slane %v10607, 1
    %v10668 = vrot.slane %v10583, 1
    %v10669 = vsel %vm5913, %v10667, %v10668
    %v10670 = vrot.slane %v10608, 1
    %v10671 = vrot.slane %v10584, 1
    %v10672 = vsel %vm5913, %v10670, %v10671
    %v10673 = vrot.slane %v10585, 1
    %v10674 = vsel %vm5913, %v10662, %v10673
    %v10675 = vrot.slane %v10586, 1
    %v10676 = vsel %vm5913, %v10665, %v10675
    %v10677 = vrot.slane %v10587, 1
    %v10678 = vsel %vm5913, %v10668, %v10677
    %v10679 = vrot.slane %v10588, 1
    %v10680 = vsel %vm5913, %v10671, %v10679
    %v10681 = vrot.slane %v10589, 1
    %v10682 = vsel %vm5913, %v10673, %v10681
    %v10683 = vrot.slane %v10590, 1
    %v10684 = vsel %vm5913, %v10675, %v10683
    %v10685 = vrot.slane %v10591, 1
    %v10686 = vsel %vm5913, %v10677, %v10685
    %v10687 = vrot.slane %v10592, 1
    %v10688 = vsel %vm5913, %v10679, %v10687
    %v10689 = vrot.slane %v10593, 1
    %v10690 = vsel %vm5913, %v10681, %v10689
    %v10691 = vrot.slane %v10594, 1
    %v10692 = vsel %vm5913, %v10683, %v10691
    %v10693 = vrot.slane %v10595, 1
    %v10694 = vsel %vm5913, %v10685, %v10693
    %v10695 = vrot.slane %v10596, 1
    %v10696 = vsel %vm5913, %v10687, %v10695
    %v10697 = vrot.slane %v10597, 1
    %v10698 = vsel %vm5913, %v10689, %v10697
    %v10699 = vrot.slane %v10598, 1
    %v10700 = vsel %vm5913, %v10691, %v10699
    %v10701 = vrot.slane %v10599, 1
    %v10702 = vsel %vm5913, %v10693, %v10701
    %v10703 = vrot.slane %v10600, 1
    %v10704 = vsel %vm5913, %v10695, %v10703
    %v10705 = vrot.slane %v10609, 1
    %v10706 = vsel %vm5913, %v10697, %v10705
    %v10707 = vrot.slane %v10610, 1
    %v10708 = vsel %vm5913, %v10699, %v10707
    %v10709 = vrot.slane %v10611, 1
    %v10710 = vsel %vm5913, %v10701, %v10709
    %v10711 = vrot.slane %v10612, 1
    %v10712 = vsel %vm5913, %v10703, %v10711
    %v10741 = vmax.f32 %v10577, %v10663
    %v10742 = vmax.f32 %v10578, %v10666
    %v10743 = vmax.f32 %v10579, %v10669
    %v10744 = vmax.f32 %v10580, %v10672
    %v10745 = vmax.f32 %v10581, %v10674
    %v10746 = vmax.f32 %v10582, %v10676
    %v10747 = vmax.f32 %v10583, %v10678
    %v10748 = vmax.f32 %v10584, %v10680
    %v10749 = vmax.f32 %v10585, %v10682
    %v10750 = vmax.f32 %v10586, %v10684
    %v10751 = vmax.f32 %v10587, %v10686
    %v10752 = vmax.f32 %v10588, %v10688
    %v10753 = vmax.f32 %v10589, %v10690
    %v10754 = vmax.f32 %v10590, %v10692
    %v10755 = vmax.f32 %v10591, %v10694
    %v10756 = vmax.f32 %v10592, %v10696
    %v10757 = vmax.f32 %v10593, %v10698
    %v10758 = vmax.f32 %v10594, %v10700
    %v10759 = vmax.f32 %v10595, %v10702
    %v10760 = vmax.f32 %v10596, %v10704
    %v10761 = vmax.f32 %v10597, %v10706
    %v10762 = vmax.f32 %v10598, %v10708
    %v10763 = vmax.f32 %v10599, %v10710
    %v10764 = vmax.f32 %v10600, %v10712
    %v10765 = vmax.f32 %v10601, %v10705
    %v10766 = vmax.f32 %v10602, %v10707
    %v10767 = vmax.f32 %v10603, %v10709
    %v10768 = vmax.f32 %v10604, %v10711
    %v10781 = vrot.slane %v10625, 1
    %v10782 = vsel %vm5913, %v10781, %v10662
    %v10783 = vrot.slane %v10626, 1
    %v10784 = vsel %vm5913, %v10783, %v10665
    %v10785 = vrot.slane %v10627, 1
    %v10786 = vsel %vm5913, %v10785, %v10668
    %v10787 = vrot.slane %v10628, 1
    %v10788 = vsel %vm5913, %v10787, %v10671
    %v10789 = vrot.slane %v10617, 1
    %v10790 = vsel %vm5913, %v10697, %v10789
    %v10791 = vrot.slane %v10618, 1
    %v10792 = vsel %vm5913, %v10699, %v10791
    %v10793 = vrot.slane %v10619, 1
    %v10794 = vsel %vm5913, %v10701, %v10793
    %v10795 = vrot.slane %v10620, 1
    %v10796 = vsel %vm5913, %v10703, %v10795
    %v10797 = vrot.slane %v10629, 1
    %v10798 = vsel %vm5913, %v10789, %v10797
    %v10799 = vrot.slane %v10630, 1
    %v10800 = vsel %vm5913, %v10791, %v10799
    %v10801 = vrot.slane %v10631, 1
    %v10802 = vsel %vm5913, %v10793, %v10801
    %v10803 = vrot.slane %v10632, 1
    %v10804 = vsel %vm5913, %v10795, %v10803
    %v10821 = vmax.f32 %v10613, %v10782
    %v10822 = vmax.f32 %v10614, %v10784
    %v10823 = vmax.f32 %v10615, %v10786
    %v10824 = vmax.f32 %v10616, %v10788
    %v10825 = vmax.f32 %v10597, %v10790
    %v10826 = vmax.f32 %v10598, %v10792
    %v10827 = vmax.f32 %v10599, %v10794
    %v10828 = vmax.f32 %v10600, %v10796
    %v10829 = vmax.f32 %v10617, %v10798
    %v10830 = vmax.f32 %v10618, %v10800
    %v10831 = vmax.f32 %v10619, %v10802
    %v10832 = vmax.f32 %v10620, %v10804
    %v10833 = vmax.f32 %v10621, %v10797
    %v10834 = vmax.f32 %v10622, %v10799
    %v10835 = vmax.f32 %v10623, %v10801
    %v10836 = vmax.f32 %v10624, %v10803
    %v10869 = vrot.slane %v10821, 6
    %v10870 = vrot.slane %v10745, 6
    %v10871 = vsel %vm416, %v10869, %v10870
    %v10872 = vrot.slane %v10822, 6
    %v10873 = vrot.slane %v10746, 6
    %v10874 = vsel %vm416, %v10872, %v10873
    %v10875 = vrot.slane %v10823, 6
    %v10876 = vrot.slane %v10747, 6
    %v10877 = vsel %vm416, %v10875, %v10876
    %v10878 = vrot.slane %v10824, 6
    %v10879 = vrot.slane %v10748, 6
    %v10880 = vsel %vm416, %v10878, %v10879
    %v10881 = vrot.slane %v10749, 6
    %v10882 = vsel %vm416, %v10870, %v10881
    %v10883 = vrot.slane %v10750, 6
    %v10884 = vsel %vm416, %v10873, %v10883
    %v10885 = vrot.slane %v10751, 6
    %v10886 = vsel %vm416, %v10876, %v10885
    %v10887 = vrot.slane %v10752, 6
    %v10888 = vsel %vm416, %v10879, %v10887
    %v10889 = vrot.slane %v10753, 6
    %v10890 = vsel %vm416, %v10881, %v10889
    %v10891 = vrot.slane %v10754, 6
    %v10892 = vsel %vm416, %v10883, %v10891
    %v10893 = vrot.slane %v10755, 6
    %v10894 = vsel %vm416, %v10885, %v10893
    %v10895 = vrot.slane %v10756, 6
    %v10896 = vsel %vm416, %v10887, %v10895
    %v10897 = vrot.slane %v10757, 6
    %v10898 = vsel %vm416, %v10889, %v10897
    %v10899 = vrot.slane %v10758, 6
    %v10900 = vsel %vm416, %v10891, %v10899
    %v10901 = vrot.slane %v10759, 6
    %v10902 = vsel %vm416, %v10893, %v10901
    %v10903 = vrot.slane %v10760, 6
    %v10904 = vsel %vm416, %v10895, %v10903
    %v10905 = vrot.slane %v10825, 6
    %v10906 = vsel %vm416, %v10897, %v10905
    %v10907 = vrot.slane %v10826, 6
    %v10908 = vsel %vm416, %v10899, %v10907
    %v10909 = vrot.slane %v10827, 6
    %v10910 = vsel %vm416, %v10901, %v10909
    %v10911 = vrot.slane %v10828, 6
    %v10912 = vsel %vm416, %v10903, %v10911
    %v10913 = vrot.slane %v10829, 6
    %v10914 = vsel %vm416, %v10905, %v10913
    %v10915 = vrot.slane %v10830, 6
    %v10916 = vsel %vm416, %v10907, %v10915
    %v10917 = vrot.slane %v10831, 6
    %v10918 = vsel %vm416, %v10909, %v10917
    %v10919 = vrot.slane %v10832, 6
    %v10920 = vsel %vm416, %v10911, %v10919
    %v10921 = vrot.slane %v10833, 6
    %v10922 = vsel %vm416, %v10913, %v10921
    %v10923 = vrot.slane %v10834, 6
    %v10924 = vsel %vm416, %v10915, %v10923
    %v10925 = vrot.slane %v10835, 6
    %v10926 = vsel %vm416, %v10917, %v10925
    %v10927 = vrot.slane %v10836, 6
    %v10928 = vsel %vm416, %v10919, %v10927
    %v10957 = vmax.f32 %v10741, %v10871
    %v10958 = vmax.f32 %v10742, %v10874
    %v10959 = vmax.f32 %v10743, %v10877
    %v10960 = vmax.f32 %v10744, %v10880
    %v10961 = vmax.f32 %v10745, %v10882
    %v10962 = vmax.f32 %v10746, %v10884
    %v10963 = vmax.f32 %v10747, %v10886
    %v10964 = vmax.f32 %v10748, %v10888
    %v10965 = vmax.f32 %v10749, %v10890
    %v10966 = vmax.f32 %v10750, %v10892
    %v10967 = vmax.f32 %v10751, %v10894
    %v10968 = vmax.f32 %v10752, %v10896
    %v10969 = vmax.f32 %v10753, %v10898
    %v10970 = vmax.f32 %v10754, %v10900
    %v10971 = vmax.f32 %v10755, %v10902
    %v10972 = vmax.f32 %v10756, %v10904
    %v10973 = vmax.f32 %v10757, %v10906
    %v10974 = vmax.f32 %v10758, %v10908
    %v10975 = vmax.f32 %v10759, %v10910
    %v10976 = vmax.f32 %v10760, %v10912
    %v10977 = vmax.f32 %v10761, %v10914
    %v10978 = vmax.f32 %v10762, %v10916
    %v10979 = vmax.f32 %v10763, %v10918
    %v10980 = vmax.f32 %v10764, %v10920
    %v10981 = vmax.f32 %v10765, %v10922
    %v10982 = vmax.f32 %v10766, %v10924
    %v10983 = vmax.f32 %v10767, %v10926
    %v10984 = vmax.f32 %v10768, %v10928
    %v10985 = vld [vmem:[%s10] sm:$0xf]
    %v10987 = vperm.slane %v10985, 0
    %v10988 = vperm.slane %v10985, 1
    %v10989 = vperm.slane %v10985, 2
    %v10990 = vperm.slane %v10985, 3
    %v10995 = vmul.f32 %v10957, %v10987
    %v10996 = vmul.f32 %v10958, %v10988
    %v10997 = vmul.f32 %v10959, %v10989
    %v10998 = vmul.f32 %v10960, %v10990
    %v10999 = vmul.f32 %v10961, %v10987
    %v11000 = vmul.f32 %v10962, %v10988
    %v11001 = vmul.f32 %v10963, %v10989
    %v11002 = vmul.f32 %v10964, %v10990
    %v11003 = vmul.f32 %v10965, %v10987
    %v11004 = vmul.f32 %v10966, %v10988
    %v11005 = vmul.f32 %v10967, %v10989
    %v11006 = vmul.f32 %v10968, %v10990
    %v11007 = vmul.f32 %v10969, %v10987
    %v11008 = vmul.f32 %v10970, %v10988
    %v11009 = vmul.f32 %v10971, %v10989
    %v11010 = vmul.f32 %v10972, %v10990
    %v11011 = vmul.f32 %v10973, %v10987
    %v11012 = vmul.f32 %v10974, %v10988
    %v11013 = vmul.f32 %v10975, %v10989
    %v11014 = vmul.f32 %v10976, %v10990
    %v11015 = vmul.f32 %v10977, %v10987
    %v11016 = vmul.f32 %v10978, %v10988
    %v11017 = vmul.f32 %v10979, %v10989
    %v11018 = vmul.f32 %v10980, %v10990
    %v11019 = vmul.f32 %v10981, %v10987
    %v11020 = vmul.f32 %v10982, %v10988
    %v11021 = vmul.f32 %v10983, %v10989
    %v11022 = vmul.f32 %v10984, %v10990
    %v11023 = vld [vmem:[%s11] sm:$0xf]
    %v11025 = vperm.slane %v11023, 0
    %v11026 = vperm.slane %v11023, 1
    %v11027 = vperm.slane %v11023, 2
    %v11028 = vperm.slane %v11023, 3
    %v11033 = vadd.f32 %v10995, %v11025
    %v11034 = vadd.f32 %v10996, %v11026
    %v11035 = vadd.f32 %v10997, %v11027
    %v11036 = vadd.f32 %v10998, %v11028
    %v11037 = vadd.f32 %v10999, %v11025
    %v11038 = vadd.f32 %v11000, %v11026
    %v11039 = vadd.f32 %v11001, %v11027
    %v11040 = vadd.f32 %v11002, %v11028
    %v11041 = vadd.f32 %v11003, %v11025
    %v11042 = vadd.f32 %v11004, %v11026
    %v11043 = vadd.f32 %v11005, %v11027
    %v11044 = vadd.f32 %v11006, %v11028
    %v11045 = vadd.f32 %v11007, %v11025
    %v11046 = vadd.f32 %v11008, %v11026
    %v11047 = vadd.f32 %v11009, %v11027
    %v11048 = vadd.f32 %v11010, %v11028
    %v11049 = vadd.f32 %v11011, %v11025
    %v11050 = vadd.f32 %v11012, %v11026
    %v11051 = vadd.f32 %v11013, %v11027
    %v11052 = vadd.f32 %v11014, %v11028
    %v11053 = vadd.f32 %v11015, %v11025
    %v11054 = vadd.f32 %v11016, %v11026
    %v11055 = vadd.f32 %v11017, %v11027
    %v11056 = vadd.f32 %v11018, %v11028
    %v11057 = vadd.f32 %v11019, %v11025
    %v11058 = vadd.f32 %v11020, %v11026
    %v11059 = vadd.f32 %v11021, %v11027
    %v11060 = vadd.f32 %v11022, %v11028
    %v11061 = vmax.f32 %v11033, 0.0
    %v11062 = vmax.f32 %v11034, 0.0
    %v11063 = vmax.f32 %v11035, 0.0
    %v11064 = vmax.f32 %v11036, 0.0
    %v11065 = vmax.f32 %v11037, 0.0
    %v11066 = vmax.f32 %v11038, 0.0
    %v11067 = vmax.f32 %v11039, 0.0
    %v11068 = vmax.f32 %v11040, 0.0
    %v11069 = vmax.f32 %v11041, 0.0
    %v11070 = vmax.f32 %v11042, 0.0
    %v11071 = vmax.f32 %v11043, 0.0
    %v11072 = vmax.f32 %v11044, 0.0
    %v11073 = vmax.f32 %v11045, 0.0
    %v11074 = vmax.f32 %v11046, 0.0
    %v11075 = vmax.f32 %v11047, 0.0
    %v11076 = vmax.f32 %v11048, 0.0
    %v11077 = vmax.f32 %v11049, 0.0
    %v11078 = vmax.f32 %v11050, 0.0
    %v11079 = vmax.f32 %v11051, 0.0
    %v11080 = vmax.f32 %v11052, 0.0
    %v11081 = vmax.f32 %v11053, 0.0
    %v11082 = vmax.f32 %v11054, 0.0
    %v11083 = vmax.f32 %v11055, 0.0
    %v11084 = vmax.f32 %v11056, 0.0
    %v11085 = vmax.f32 %v11057, 0.0
    %v11086 = vmax.f32 %v11058, 0.0
    %v11087 = vmax.f32 %v11059, 0.0
    %v11088 = vmax.f32 %v11060, 0.0
    %v11089 = vld [vmem:[%s12] sm:$0xf]
    %v11090 = vpack.c.bf16 %v11065, %v11061
    %v11091 = vpack.c.bf16 %v11066, %v11062
    %v11092 = vpack.c.bf16 %v11067, %v11063
    %v11093 = vpack.c.bf16 %v11068, %v11064
    %v11094 = vpack.c.bf16 %v11073, %v11069
    %v11095 = vpack.c.bf16 %v11074, %v11070
    %v11096 = vpack.c.bf16 %v11075, %v11071
    %v11097 = vpack.c.bf16 %v11076, %v11072
    %v11098 = vpack.c.bf16 %v11081, %v11077
    %v11099 = vpack.c.bf16 %v11082, %v11078
    %v11100 = vpack.c.bf16 %v11083, %v11079
    %v11101 = vpack.c.bf16 %v11084, %v11080
    %v11102 = vpack.c.bf16 %v11085, %v11085
    %v11103 = vpack.c.bf16 %v11086, %v11086
    %v11104 = vpack.c.bf16 %v11087, %v11087
    %v11105 = vpack.c.bf16 %v11088, %v11088
    %vm11106 = vcmask 416768
    %v11108 = vsel %vm11106, %v11089, 0
    %v11111 = vand.u32 %v11102, %v418
    %v11114 = vand.u32 %v11103, %v418
    %v11117 = vand.u32 %v11104, %v418
    %v11120 = vand.u32 %v11105, %v418
    %11122 = vmatpush.bf16.msra.mxu0 0
    %11123 = vmatpush.bf16.msra.mxu0 0
    %11124 = vmatpush.bf16.msra.mxu0 0
    %11125 = vmatpush.bf16.msra.mxu0 0
    %11126 = vmatpush.bf16.msra.mxu0 %v11111
    %11127 = vmatpush.bf16.msra.mxu0 %v11098
    %11128 = vmatpush.bf16.msra.mxu0 %v11094
    %11129 = vmatpush.bf16.msra.mxu0 %v11090
    %11130 = vmatmul.bf16.gmra.mxu0 %v11108
    %v11131 = vpop.f32.mrf.mxu0
    %v11132 = vadd.f32 0.0, %v11131
    %v11133 = vpop.f32.mrf.mxu0
    %11134 = vdwg.mxu0
    %11135 = vmatpush.bf16.msra.mxu0 0
    %11136 = vmatpush.bf16.msra.mxu0 0
    %11137 = vmatpush.bf16.msra.mxu0 0
    %11138 = vmatpush.bf16.msra.mxu0 0
    %11139 = vmatpush.bf16.msra.mxu0 %v11114
    %11140 = vmatpush.bf16.msra.mxu0 %v11099
    %11141 = vmatpush.bf16.msra.mxu0 %v11095
    %11142 = vmatpush.bf16.msra.mxu0 %v11091
    %11143 = vmatmul.bf16.gmra.mxu0 %v11108
    %v11144 = vpop.f32.mrf.mxu0
    %v11145 = vadd.f32 0.0, %v11144
    %v11146 = vpop.f32.mrf.mxu0
    %11147 = vdwg.mxu0
    %11148 = vmatpush.bf16.msra.mxu0 0
    %11149 = vmatpush.bf16.msra.mxu0 0
    %11150 = vmatpush.bf16.msra.mxu0 0
    %11151 = vmatpush.bf16.msra.mxu0 0
    %11152 = vmatpush.bf16.msra.mxu0 %v11117
    %11153 = vmatpush.bf16.msra.mxu0 %v11100
    %11154 = vmatpush.bf16.msra.mxu0 %v11096
    %11155 = vmatpush.bf16.msra.mxu0 %v11092
    %11156 = vmatmul.bf16.gmra.mxu0 %v11108
    %v11157 = vpop.f32.mrf.mxu0
    %v11158 = vadd.f32 0.0, %v11157
    %v11159 = vpop.f32.mrf.mxu0
    %11160 = vdwg.mxu0
    %11161 = vmatpush.bf16.msra.mxu0 0
    %11162 = vmatpush.bf16.msra.mxu0 0
    %11163 = vmatpush.bf16.msra.mxu0 0
    %11164 = vmatpush.bf16.msra.mxu0 0
    %11165 = vmatpush.bf16.msra.mxu0 %v11120
    %11166 = vmatpush.bf16.msra.mxu0 %v11101
    %11167 = vmatpush.bf16.msra.mxu0 %v11097
    %11168 = vmatpush.bf16.msra.mxu0 %v11093
    %11169 = vmatmul.bf16.gmra.mxu0 %v11108
    %v11170 = vpop.f32.mrf.mxu0
    %v11171 = vadd.f32 0.0, %v11170
    %v11172 = vpop.f32.mrf.mxu0
    %11173 = vdwg.mxu0
    %11174 = vst [vmem:[#allocation7] sm:$0xff] %v11132
    %11175 = vst [vmem:[#allocation7 + $0x8] sm:$0xff] %v11145
    %11176 = vst [vmem:[#allocation7 + $0x10] sm:$0xff] %v11158
    %11177 = vst [vmem:[#allocation7 + $0x18] sm:$0xff] %v11171
    %v11178 = vld [vmem:[#allocation7] sm:$0x3]
    %v11179 = vld [vmem:[#allocation7 + $0x8] sm:$0x3]
    %v11180 = vld [vmem:[#allocation7 + $0x10] sm:$0x3]
    %v11181 = vld [vmem:[#allocation7 + $0x18] sm:$0x3]
    %v11182 = vpack.c.bf16 %v11178, %v11178
    %v11183 = vpack.c.bf16 %v11179, %v11179
    %v11184 = vpack.c.bf16 %v11180, %v11180
    %v11185 = vpack.c.bf16 %v11181, %v11181
    %v11186 = vld [vmem:[%s13] sm:$0xf]
    %v11187 = vld [vmem:[%s13 + $0x4] sm:$0xf]
    %v11188 = vld [vmem:[%s13 + $0x8] sm:$0xf]
    %v11189 = vld [vmem:[%s13 + $0xc] sm:$0xf]
    %v11190 = vld [vmem:[%s13 + $0x10] sm:$0xf]
    %v11191 = vld [vmem:[%s13 + $0x14] sm:$0xf]
    %v11192 = vld [vmem:[%s13 + $0x18] sm:$0xf]
    %v11193 = vld [vmem:[%s13 + $0x1c] sm:$0xf]
    %v11194 = vld [vmem:[%s13 + $0x20] sm:$0xf]
    %v11195 = vld [vmem:[%s13 + $0x24] sm:$0xf]
    %v11196 = vld [vmem:[%s13 + $0x28] sm:$0xf]
    %v11197 = vld [vmem:[%s13 + $0x2c] sm:$0xf]
    %v11198 = vld [vmem:[%s13 + $0x30] sm:$0xf]
    %v11199 = vld [vmem:[%s13 + $0x34] sm:$0xf]
    %v11200 = vld [vmem:[%s13 + $0x38] sm:$0xf]
    %v11201 = vld [vmem:[%s13 + $0x3c] sm:$0xf]
    %v11202 = vld [vmem:[%s13 + $0x40] sm:$0xf]
    %v11203 = vld [vmem:[%s13 + $0x44] sm:$0xf]
    %v11204 = vld [vmem:[%s13 + $0x48] sm:$0xf]
    %v11205 = vld [vmem:[%s13 + $0x4c] sm:$0xf]
    %v11206 = vld [vmem:[%s13 + $0x50] sm:$0xf]
    %v11207 = vld [vmem:[%s13 + $0x54] sm:$0xf]
    %v11208 = vld [vmem:[%s13 + $0x58] sm:$0xf]
    %v11209 = vld [vmem:[%s13 + $0x5c] sm:$0xf]
    %v11210 = vld [vmem:[%s13 + $0x60] sm:$0xf]
    %v11211 = vld [vmem:[%s13 + $0x64] sm:$0xf]
    %v11212 = vld [vmem:[%s13 + $0x68] sm:$0xf]
    %v11213 = vld [vmem:[%s13 + $0x6c] sm:$0xf]
    %v11214 = vld [vmem:[%s13 + $0x70] sm:$0xf]
    %v11215 = vld [vmem:[%s13 + $0x74] sm:$0xf]
    %v11216 = vld [vmem:[%s13 + $0x78] sm:$0xf]
    %v11217 = vld [vmem:[%s13 + $0x7c] sm:$0xf]
    %v11218 = vld [vmem:[%s13 + $0x80] sm:$0xf]
    %v11219 = vld [vmem:[%s13 + $0x84] sm:$0xf]
    %v11220 = vld [vmem:[%s13 + $0x88] sm:$0xf]
    %v11221 = vld [vmem:[%s13 + $0x8c] sm:$0xf]
    %v11222 = vld [vmem:[%s13 + $0x90] sm:$0xf]
    %v11223 = vld [vmem:[%s13 + $0x94] sm:$0xf]
    %v11224 = vld [vmem:[%s13 + $0x98] sm:$0xf]
    %v11225 = vld [vmem:[%s13 + $0x9c] sm:$0xf]
    %v11226 = vld [vmem:[%s13 + $0xa0] sm:$0xf]
    %v11227 = vld [vmem:[%s13 + $0xa4] sm:$0xf]
    %v11228 = vld [vmem:[%s13 + $0xa8] sm:$0xf]
    %v11229 = vld [vmem:[%s13 + $0xac] sm:$0xf]
    %v11230 = vld [vmem:[%s13 + $0xb0] sm:$0xf]
    %v11231 = vld [vmem:[%s13 + $0xb4] sm:$0xf]
    %v11232 = vld [vmem:[%s13 + $0xb8] sm:$0xf]
    %v11233 = vld [vmem:[%s13 + $0xbc] sm:$0xf]
    %v11234 = vld [vmem:[%s13 + $0xc0] sm:$0xf]
    %v11235 = vld [vmem:[%s13 + $0xc4] sm:$0xf]
    %v11236 = vld [vmem:[%s13 + $0xc8] sm:$0xf]
    %v11237 = vld [vmem:[%s13 + $0xcc] sm:$0xf]
    %v11238 = vld [vmem:[%s13 + $0xd0] sm:$0xf]
    %v11239 = vld [vmem:[%s13 + $0xd4] sm:$0xf]
    %v11240 = vld [vmem:[%s13 + $0xd8] sm:$0xf]
    %v11241 = vld [vmem:[%s13 + $0xdc] sm:$0xf]
    %v11242 = vld [vmem:[%s13 + $0xe0] sm:$0xf]
    %v11243 = vld [vmem:[%s13 + $0xe4] sm:$0xf]
    %v11244 = vld [vmem:[%s13 + $0xe8] sm:$0xf]
    %v11245 = vld [vmem:[%s13 + $0xec] sm:$0xf]
    %v11246 = vld [vmem:[%s13 + $0xf0] sm:$0xf]
    %v11247 = vld [vmem:[%s13 + $0xf4] sm:$0xf]
    %v11248 = vld [vmem:[%s13 + $0xf8] sm:$0xf]
    %v11249 = vld [vmem:[%s13 + $0xfc] sm:$0xf]
    %v11250 = vld [vmem:[#allocation7] sm:$0xc]
    %v11251 = vld [vmem:[#allocation7 + $0x8] sm:$0xc]
    %v11252 = vld [vmem:[#allocation7 + $0x10] sm:$0xc]
    %v11253 = vld [vmem:[#allocation7 + $0x18] sm:$0xc]
    %v11254 = vpack.c.bf16 %v11250, %v11250
    %v11255 = vpack.c.bf16 %v11251, %v11251
    %v11256 = vpack.c.bf16 %v11252, %v11252
    %v11257 = vpack.c.bf16 %v11253, %v11253
    %v11258 = vld [vmem:[%s13 + $0x100] sm:$0xf]
    %v11259 = vld [vmem:[%s13 + $0x104] sm:$0xf]
    %v11260 = vld [vmem:[%s13 + $0x108] sm:$0xf]
    %v11261 = vld [vmem:[%s13 + $0x10c] sm:$0xf]
    %v11262 = vld [vmem:[%s13 + $0x110] sm:$0xf]
    %v11263 = vld [vmem:[%s13 + $0x114] sm:$0xf]
    %v11264 = vld [vmem:[%s13 + $0x118] sm:$0xf]
    %v11265 = vld [vmem:[%s13 + $0x11c] sm:$0xf]
    %v11266 = vld [vmem:[%s13 + $0x120] sm:$0xf]
    %v11267 = vld [vmem:[%s13 + $0x124] sm:$0xf]
    %v11268 = vld [vmem:[%s13 + $0x128] sm:$0xf]
    %v11269 = vld [vmem:[%s13 + $0x12c] sm:$0xf]
    %v11270 = vld [vmem:[%s13 + $0x130] sm:$0xf]
    %v11271 = vld [vmem:[%s13 + $0x134] sm:$0xf]
    %v11272 = vld [vmem:[%s13 + $0x138] sm:$0xf]
    %v11273 = vld [vmem:[%s13 + $0x13c] sm:$0xf]
    %v11274 = vld [vmem:[%s13 + $0x140] sm:$0xf]
    %v11275 = vld [vmem:[%s13 + $0x144] sm:$0xf]
    %v11276 = vld [vmem:[%s13 + $0x148] sm:$0xf]
    %v11277 = vld [vmem:[%s13 + $0x14c] sm:$0xf]
    %v11278 = vld [vmem:[%s13 + $0x150] sm:$0xf]
    %v11279 = vld [vmem:[%s13 + $0x154] sm:$0xf]
    %v11280 = vld [vmem:[%s13 + $0x158] sm:$0xf]
    %v11281 = vld [vmem:[%s13 + $0x15c] sm:$0xf]
    %v11282 = vld [vmem:[%s13 + $0x160] sm:$0xf]
    %v11283 = vld [vmem:[%s13 + $0x164] sm:$0xf]
    %v11284 = vld [vmem:[%s13 + $0x168] sm:$0xf]
    %v11285 = vld [vmem:[%s13 + $0x16c] sm:$0xf]
    %v11286 = vld [vmem:[%s13 + $0x170] sm:$0xf]
    %v11287 = vld [vmem:[%s13 + $0x174] sm:$0xf]
    %v11288 = vld [vmem:[%s13 + $0x178] sm:$0xf]
    %v11289 = vld [vmem:[%s13 + $0x17c] sm:$0xf]
    %v11290 = vld [vmem:[%s13 + $0x180] sm:$0xf]
    %v11291 = vld [vmem:[%s13 + $0x184] sm:$0xf]
    %v11292 = vld [vmem:[%s13 + $0x188] sm:$0xf]
    %v11293 = vld [vmem:[%s13 + $0x18c] sm:$0xf]
    %v11294 = vld [vmem:[%s13 + $0x190] sm:$0xf]
    %v11295 = vld [vmem:[%s13 + $0x194] sm:$0xf]
    %v11296 = vld [vmem:[%s13 + $0x198] sm:$0xf]
    %v11297 = vld [vmem:[%s13 + $0x19c] sm:$0xf]
    %v11298 = vld [vmem:[%s13 + $0x1a0] sm:$0xf]
    %v11299 = vld [vmem:[%s13 + $0x1a4] sm:$0xf]
    %v11300 = vld [vmem:[%s13 + $0x1a8] sm:$0xf]
    %v11301 = vld [vmem:[%s13 + $0x1ac] sm:$0xf]
    %v11302 = vld [vmem:[%s13 + $0x1b0] sm:$0xf]
    %v11303 = vld [vmem:[%s13 + $0x1b4] sm:$0xf]
    %v11304 = vld [vmem:[%s13 + $0x1b8] sm:$0xf]
    %v11305 = vld [vmem:[%s13 + $0x1bc] sm:$0xf]
    %v11306 = vld [vmem:[%s13 + $0x1c0] sm:$0xf]
    %v11307 = vld [vmem:[%s13 + $0x1c4] sm:$0xf]
    %v11308 = vld [vmem:[%s13 + $0x1c8] sm:$0xf]
    %v11309 = vld [vmem:[%s13 + $0x1cc] sm:$0xf]
    %v11310 = vld [vmem:[%s13 + $0x1d0] sm:$0xf]
    %v11311 = vld [vmem:[%s13 + $0x1d4] sm:$0xf]
    %v11312 = vld [vmem:[%s13 + $0x1d8] sm:$0xf]
    %v11313 = vld [vmem:[%s13 + $0x1dc] sm:$0xf]
    %v11314 = vld [vmem:[%s13 + $0x1e0] sm:$0xf]
    %v11315 = vld [vmem:[%s13 + $0x1e4] sm:$0xf]
    %v11316 = vld [vmem:[%s13 + $0x1e8] sm:$0xf]
    %v11317 = vld [vmem:[%s13 + $0x1ec] sm:$0xf]
    %v11318 = vld [vmem:[%s13 + $0x1f0] sm:$0xf]
    %v11319 = vld [vmem:[%s13 + $0x1f4] sm:$0xf]
    %v11320 = vld [vmem:[%s13 + $0x1f8] sm:$0xf]
    %v11321 = vld [vmem:[%s13 + $0x1fc] sm:$0xf]
    %v11326 = vrot.slane %v11254, 1
    %v11327 = vrot.slane %v11255, 1
    %v11328 = vrot.slane %v11256, 1
    %v11329 = vrot.slane %v11257, 1
    %v11398 = vunpack.c.l.b16 %v11258
    %v11399 = vunpack.c.l.b16 %v11259
    %v11400 = vunpack.c.l.b16 %v11260
    %v11401 = vunpack.c.l.b16 %v11261
    %v11402 = vunpack.c.l.b16 %v11262
    %v11403 = vunpack.c.l.b16 %v11263
    %v11404 = vunpack.c.l.b16 %v11264
    %v11405 = vunpack.c.l.b16 %v11265
    %v11406 = vunpack.c.l.b16 %v11266
    %v11407 = vunpack.c.l.b16 %v11267
    %v11408 = vunpack.c.l.b16 %v11268
    %v11409 = vunpack.c.l.b16 %v11269
    %v11410 = vunpack.c.l.b16 %v11270
    %v11411 = vunpack.c.l.b16 %v11271
    %v11412 = vunpack.c.l.b16 %v11272
    %v11413 = vunpack.c.l.b16 %v11273
    %v11414 = vunpack.c.l.b16 %v11274
    %v11415 = vunpack.c.l.b16 %v11275
    %v11416 = vunpack.c.l.b16 %v11276
    %v11417 = vunpack.c.l.b16 %v11277
    %v11418 = vunpack.c.l.b16 %v11278
    %v11419 = vunpack.c.l.b16 %v11279
    %v11420 = vunpack.c.l.b16 %v11280
    %v11421 = vunpack.c.l.b16 %v11281
    %v11422 = vunpack.c.l.b16 %v11282
    %v11423 = vunpack.c.l.b16 %v11283
    %v11424 = vunpack.c.l.b16 %v11284
    %v11425 = vunpack.c.l.b16 %v11285
    %v11426 = vunpack.c.l.b16 %v11286
    %v11427 = vunpack.c.l.b16 %v11287
    %v11428 = vunpack.c.l.b16 %v11288
    %v11429 = vunpack.c.l.b16 %v11289
    %v11430 = vunpack.c.l.b16 %v11290
    %v11431 = vunpack.c.l.b16 %v11291
    %v11432 = vunpack.c.l.b16 %v11292
    %v11433 = vunpack.c.l.b16 %v11293
    %v11434 = vunpack.c.l.b16 %v11294
    %v11435 = vunpack.c.l.b16 %v11295
    %v11436 = vunpack.c.l.b16 %v11296
    %v11437 = vunpack.c.l.b16 %v11297
    %v11438 = vunpack.c.l.b16 %v11298
    %v11439 = vunpack.c.l.b16 %v11299
    %v11440 = vunpack.c.l.b16 %v11300
    %v11441 = vunpack.c.l.b16 %v11301
    %v11442 = vunpack.c.l.b16 %v11302
    %v11443 = vunpack.c.l.b16 %v11303
    %v11444 = vunpack.c.l.b16 %v11304
    %v11445 = vunpack.c.l.b16 %v11305
    %v11446 = vunpack.c.l.b16 %v11306
    %v11447 = vunpack.c.l.b16 %v11307
    %v11448 = vunpack.c.l.b16 %v11308
    %v11449 = vunpack.c.l.b16 %v11309
    %v11450 = vunpack.c.l.b16 %v11310
    %v11451 = vunpack.c.l.b16 %v11311
    %v11452 = vunpack.c.l.b16 %v11312
    %v11453 = vunpack.c.l.b16 %v11313
    %v11454 = vunpack.c.l.b16 %v11314
    %v11455 = vunpack.c.l.b16 %v11315
    %v11456 = vunpack.c.l.b16 %v11316
    %v11457 = vunpack.c.l.b16 %v11317
    %v11458 = vunpack.c.l.b16 %v11318
    %v11459 = vunpack.c.l.b16 %v11319
    %v11460 = vunpack.c.l.b16 %v11320
    %v11461 = vunpack.c.l.b16 %v11321
    %v11462 = vpack.c.b16 %v11399, %v11398
    %v11463 = vpack.c.b16 %v11401, %v11400
    %v11464 = vpack.c.b16 %v11403, %v11402
    %v11465 = vpack.c.b16 %v11405, %v11404
    %v11466 = vpack.c.b16 %v11407, %v11406
    %v11467 = vpack.c.b16 %v11409, %v11408
    %v11468 = vpack.c.b16 %v11411, %v11410
    %v11469 = vpack.c.b16 %v11413, %v11412
    %v11470 = vpack.c.b16 %v11415, %v11414
    %v11471 = vpack.c.b16 %v11417, %v11416
    %v11472 = vpack.c.b16 %v11419, %v11418
    %v11473 = vpack.c.b16 %v11421, %v11420
    %v11474 = vpack.c.b16 %v11423, %v11422
    %v11475 = vpack.c.b16 %v11425, %v11424
    %v11476 = vpack.c.b16 %v11427, %v11426
    %v11477 = vpack.c.b16 %v11429, %v11428
    %v11478 = vpack.c.b16 %v11431, %v11430
    %v11479 = vpack.c.b16 %v11433, %v11432
    %v11480 = vpack.c.b16 %v11435, %v11434
    %v11481 = vpack.c.b16 %v11437, %v11436
    %v11482 = vpack.c.b16 %v11439, %v11438
    %v11483 = vpack.c.b16 %v11441, %v11440
    %v11484 = vpack.c.b16 %v11443, %v11442
    %v11485 = vpack.c.b16 %v11445, %v11444
    %v11486 = vpack.c.b16 %v11447, %v11446
    %v11487 = vpack.c.b16 %v11449, %v11448
    %v11488 = vpack.c.b16 %v11451, %v11450
    %v11489 = vpack.c.b16 %v11453, %v11452
    %v11490 = vpack.c.b16 %v11455, %v11454
    %v11491 = vpack.c.b16 %v11457, %v11456
    %v11492 = vpack.c.b16 %v11459, %v11458
    %v11493 = vpack.c.b16 %v11461, %v11460
    %11526 = vmatpush.bf16.msra.mxu0 %v11469
    %11527 = vmatpush.bf16.msra.mxu0 %v11468
    %11528 = vmatpush.bf16.msra.mxu0 %v11467
    %11529 = vmatpush.bf16.msra.mxu0 %v11466
    %11530 = vmatpush.bf16.msra.mxu0 %v11465
    %11531 = vmatpush.bf16.msra.mxu0 %v11464
    %11532 = vmatpush.bf16.msra.mxu0 %v11463
    %11533 = vmatpush.bf16.msra.mxu0 %v11462
    %11534 = vmatmul.bf16.gmra.mxu0 %v11326
    %v11535 = vpop.f32.mrf.mxu0
    %v11536 = vadd.f32 0.0, %v11535
    %v11537 = vpop.f32.mrf.mxu0
    %11538 = vdwg.mxu0
    %11539 = vmatpush.bf16.msra.mxu0 %v11477
    %11540 = vmatpush.bf16.msra.mxu0 %v11476
    %11541 = vmatpush.bf16.msra.mxu0 %v11475
    %11542 = vmatpush.bf16.msra.mxu0 %v11474
    %11543 = vmatpush.bf16.msra.mxu0 %v11473
    %11544 = vmatpush.bf16.msra.mxu0 %v11472
    %11545 = vmatpush.bf16.msra.mxu0 %v11471
    %11546 = vmatpush.bf16.msra.mxu0 %v11470
    %11547 = vmatmul.bf16.gmra.mxu0 %v11327
    %v11548 = vpop.f32.mrf.mxu0
    %v11549 = vadd.f32 %v11536, %v11548
    %v11550 = vpop.f32.mrf.mxu0
    %11551 = vdwg.mxu0
    %11552 = vmatpush.bf16.msra.mxu0 %v11485
    %11553 = vmatpush.bf16.msra.mxu0 %v11484
    %11554 = vmatpush.bf16.msra.mxu0 %v11483
    %11555 = vmatpush.bf16.msra.mxu0 %v11482
    %11556 = vmatpush.bf16.msra.mxu0 %v11481
    %11557 = vmatpush.bf16.msra.mxu0 %v11480
    %11558 = vmatpush.bf16.msra.mxu0 %v11479
    %11559 = vmatpush.bf16.msra.mxu0 %v11478
    %11560 = vmatmul.bf16.gmra.mxu0 %v11328
    %v11561 = vpop.f32.mrf.mxu0
    %v11562 = vadd.f32 %v11549, %v11561
    %v11563 = vpop.f32.mrf.mxu0
    %11564 = vdwg.mxu0
    %11565 = vmatpush.bf16.msra.mxu0 %v11493
    %11566 = vmatpush.bf16.msra.mxu0 %v11492
    %11567 = vmatpush.bf16.msra.mxu0 %v11491
    %11568 = vmatpush.bf16.msra.mxu0 %v11490
    %11569 = vmatpush.bf16.msra.mxu0 %v11489
    %11570 = vmatpush.bf16.msra.mxu0 %v11488
    %11571 = vmatpush.bf16.msra.mxu0 %v11487
    %11572 = vmatpush.bf16.msra.mxu0 %v11486
    %11573 = vmatmul.bf16.gmra.mxu0 %v11329
    %v11574 = vpop.f32.mrf.mxu0
    %v11575 = vadd.f32 %v11562, %v11574
    %v11576 = vpop.f32.mrf.mxu0
    %11577 = vdwg.mxu0
    %v11642 = vunpack.c.l.b16 %v11186
    %v11643 = vunpack.c.l.b16 %v11187
    %v11644 = vunpack.c.l.b16 %v11188
    %v11645 = vunpack.c.l.b16 %v11189
    %v11646 = vunpack.c.l.b16 %v11190
    %v11647 = vunpack.c.l.b16 %v11191
    %v11648 = vunpack.c.l.b16 %v11192
    %v11649 = vunpack.c.l.b16 %v11193
    %v11650 = vunpack.c.l.b16 %v11194
    %v11651 = vunpack.c.l.b16 %v11195
    %v11652 = vunpack.c.l.b16 %v11196
    %v11653 = vunpack.c.l.b16 %v11197
    %v11654 = vunpack.c.l.b16 %v11198
    %v11655 = vunpack.c.l.b16 %v11199
    %v11656 = vunpack.c.l.b16 %v11200
    %v11657 = vunpack.c.l.b16 %v11201
    %v11658 = vunpack.c.l.b16 %v11202
    %v11659 = vunpack.c.l.b16 %v11203
    %v11660 = vunpack.c.l.b16 %v11204
    %v11661 = vunpack.c.l.b16 %v11205
    %v11662 = vunpack.c.l.b16 %v11206
    %v11663 = vunpack.c.l.b16 %v11207
    %v11664 = vunpack.c.l.b16 %v11208
    %v11665 = vunpack.c.l.b16 %v11209
    %v11666 = vunpack.c.l.b16 %v11210
    %v11667 = vunpack.c.l.b16 %v11211
    %v11668 = vunpack.c.l.b16 %v11212
    %v11669 = vunpack.c.l.b16 %v11213
    %v11670 = vunpack.c.l.b16 %v11214
    %v11671 = vunpack.c.l.b16 %v11215
    %v11672 = vunpack.c.l.b16 %v11216
    %v11673 = vunpack.c.l.b16 %v11217
    %v11674 = vunpack.c.l.b16 %v11218
    %v11675 = vunpack.c.l.b16 %v11219
    %v11676 = vunpack.c.l.b16 %v11220
    %v11677 = vunpack.c.l.b16 %v11221
    %v11678 = vunpack.c.l.b16 %v11222
    %v11679 = vunpack.c.l.b16 %v11223
    %v11680 = vunpack.c.l.b16 %v11224
    %v11681 = vunpack.c.l.b16 %v11225
    %v11682 = vunpack.c.l.b16 %v11226
    %v11683 = vunpack.c.l.b16 %v11227
    %v11684 = vunpack.c.l.b16 %v11228
    %v11685 = vunpack.c.l.b16 %v11229
    %v11686 = vunpack.c.l.b16 %v11230
    %v11687 = vunpack.c.l.b16 %v11231
    %v11688 = vunpack.c.l.b16 %v11232
    %v11689 = vunpack.c.l.b16 %v11233
    %v11690 = vunpack.c.l.b16 %v11234
    %v11691 = vunpack.c.l.b16 %v11235
    %v11692 = vunpack.c.l.b16 %v11236
    %v11693 = vunpack.c.l.b16 %v11237
    %v11694 = vunpack.c.l.b16 %v11238
    %v11695 = vunpack.c.l.b16 %v11239
    %v11696 = vunpack.c.l.b16 %v11240
    %v11697 = vunpack.c.l.b16 %v11241
    %v11698 = vunpack.c.l.b16 %v11242
    %v11699 = vunpack.c.l.b16 %v11243
    %v11700 = vunpack.c.l.b16 %v11244
    %v11701 = vunpack.c.l.b16 %v11245
    %v11702 = vunpack.c.l.b16 %v11246
    %v11703 = vunpack.c.l.b16 %v11247
    %v11704 = vunpack.c.l.b16 %v11248
    %v11705 = vunpack.c.l.b16 %v11249
    %v11706 = vpack.c.b16 %v11643, %v11642
    %v11707 = vpack.c.b16 %v11645, %v11644
    %v11708 = vpack.c.b16 %v11647, %v11646
    %v11709 = vpack.c.b16 %v11649, %v11648
    %v11710 = vpack.c.b16 %v11651, %v11650
    %v11711 = vpack.c.b16 %v11653, %v11652
    %v11712 = vpack.c.b16 %v11655, %v11654
    %v11713 = vpack.c.b16 %v11657, %v11656
    %v11714 = vpack.c.b16 %v11659, %v11658
    %v11715 = vpack.c.b16 %v11661, %v11660
    %v11716 = vpack.c.b16 %v11663, %v11662
    %v11717 = vpack.c.b16 %v11665, %v11664
    %v11718 = vpack.c.b16 %v11667, %v11666
    %v11719 = vpack.c.b16 %v11669, %v11668
    %v11720 = vpack.c.b16 %v11671, %v11670
    %v11721 = vpack.c.b16 %v11673, %v11672
    %v11722 = vpack.c.b16 %v11675, %v11674
    %v11723 = vpack.c.b16 %v11677, %v11676
    %v11724 = vpack.c.b16 %v11679, %v11678
    %v11725 = vpack.c.b16 %v11681, %v11680
    %v11726 = vpack.c.b16 %v11683, %v11682
    %v11727 = vpack.c.b16 %v11685, %v11684
    %v11728 = vpack.c.b16 %v11687, %v11686
    %v11729 = vpack.c.b16 %v11689, %v11688
    %v11730 = vpack.c.b16 %v11691, %v11690
    %v11731 = vpack.c.b16 %v11693, %v11692
    %v11732 = vpack.c.b16 %v11695, %v11694
    %v11733 = vpack.c.b16 %v11697, %v11696
    %v11734 = vpack.c.b16 %v11699, %v11698
    %v11735 = vpack.c.b16 %v11701, %v11700
    %v11736 = vpack.c.b16 %v11703, %v11702
    %v11737 = vpack.c.b16 %v11705, %v11704
    %11770 = vmatpush.bf16.msra.mxu0 %v11713
    %11771 = vmatpush.bf16.msra.mxu0 %v11712
    %11772 = vmatpush.bf16.msra.mxu0 %v11711
    %11773 = vmatpush.bf16.msra.mxu0 %v11710
    %11774 = vmatpush.bf16.msra.mxu0 %v11709
    %11775 = vmatpush.bf16.msra.mxu0 %v11708
    %11776 = vmatpush.bf16.msra.mxu0 %v11707
    %11777 = vmatpush.bf16.msra.mxu0 %v11706
    %11778 = vmatmul.bf16.gmra.mxu0 %v11182
    %v11779 = vpop.f32.mrf.mxu0
    %v11780 = vadd.f32 %v11575, %v11779
    %v11781 = vpop.f32.mrf.mxu0
    %11782 = vdwg.mxu0
    %11783 = vmatpush.bf16.msra.mxu0 %v11721
    %11784 = vmatpush.bf16.msra.mxu0 %v11720
    %11785 = vmatpush.bf16.msra.mxu0 %v11719
    %11786 = vmatpush.bf16.msra.mxu0 %v11718
    %11787 = vmatpush.bf16.msra.mxu0 %v11717
    %11788 = vmatpush.bf16.msra.mxu0 %v11716
    %11789 = vmatpush.bf16.msra.mxu0 %v11715
    %11790 = vmatpush.bf16.msra.mxu0 %v11714
    %11791 = vmatmul.bf16.gmra.mxu0 %v11183
    %v11792 = vpop.f32.mrf.mxu0
    %v11793 = vadd.f32 %v11780, %v11792
    %v11794 = vpop.f32.mrf.mxu0
    %11795 = vdwg.mxu0
    %11796 = vmatpush.bf16.msra.mxu0 %v11729
    %11797 = vmatpush.bf16.msra.mxu0 %v11728
    %11798 = vmatpush.bf16.msra.mxu0 %v11727
    %11799 = vmatpush.bf16.msra.mxu0 %v11726
    %11800 = vmatpush.bf16.msra.mxu0 %v11725
    %11801 = vmatpush.bf16.msra.mxu0 %v11724
    %11802 = vmatpush.bf16.msra.mxu0 %v11723
    %11803 = vmatpush.bf16.msra.mxu0 %v11722
    %11804 = vmatmul.bf16.gmra.mxu0 %v11184
    %v11805 = vpop.f32.mrf.mxu0
    %v11806 = vadd.f32 %v11793, %v11805
    %v11807 = vpop.f32.mrf.mxu0
    %11808 = vdwg.mxu0
    %11809 = vmatpush.bf16.msra.mxu0 %v11737
    %11810 = vmatpush.bf16.msra.mxu0 %v11736
    %11811 = vmatpush.bf16.msra.mxu0 %v11735
    %11812 = vmatpush.bf16.msra.mxu0 %v11734
    %11813 = vmatpush.bf16.msra.mxu0 %v11733
    %11814 = vmatpush.bf16.msra.mxu0 %v11732
    %11815 = vmatpush.bf16.msra.mxu0 %v11731
    %11816 = vmatpush.bf16.msra.mxu0 %v11730
    %11817 = vmatmul.bf16.gmra.mxu0 %v11185
    %v11818 = vpop.f32.mrf.mxu0
    %v11819 = vadd.f32 %v11806, %v11818
    %v11820 = vpop.f32.mrf.mxu0
    %11821 = vdwg.mxu0
    %v11822 = vld [vmem:[#allocation7] sm:$0x30]
    %v11823 = vld [vmem:[#allocation7 + $0x8] sm:$0x30]
    %v11824 = vld [vmem:[#allocation7 + $0x10] sm:$0x30]
    %v11825 = vld [vmem:[#allocation7 + $0x18] sm:$0x30]
    %v11826 = vpack.c.bf16 %v11822, %v11822
    %v11827 = vpack.c.bf16 %v11823, %v11823
    %v11828 = vpack.c.bf16 %v11824, %v11824
    %v11829 = vpack.c.bf16 %v11825, %v11825
    %v11830 = vld [vmem:[%s13 + $0x200] sm:$0xf]
    %v11831 = vld [vmem:[%s13 + $0x204] sm:$0xf]
    %v11832 = vld [vmem:[%s13 + $0x208] sm:$0xf]
    %v11833 = vld [vmem:[%s13 + $0x20c] sm:$0xf]
    %v11834 = vld [vmem:[%s13 + $0x210] sm:$0xf]
    %v11835 = vld [vmem:[%s13 + $0x214] sm:$0xf]
    %v11836 = vld [vmem:[%s13 + $0x218] sm:$0xf]
    %v11837 = vld [vmem:[%s13 + $0x21c] sm:$0xf]
    %v11838 = vld [vmem:[%s13 + $0x220] sm:$0xf]
    %v11839 = vld [vmem:[%s13 + $0x224] sm:$0xf]
    %v11840 = vld [vmem:[%s13 + $0x228] sm:$0xf]
    %v11841 = vld [vmem:[%s13 + $0x22c] sm:$0xf]
    %v11842 = vld [vmem:[%s13 + $0x230] sm:$0xf]
    %v11843 = vld [vmem:[%s13 + $0x234] sm:$0xf]
    %v11844 = vld [vmem:[%s13 + $0x238] sm:$0xf]
    %v11845 = vld [vmem:[%s13 + $0x23c] sm:$0xf]
    %v11846 = vld [vmem:[%s13 + $0x240] sm:$0xf]
    %v11847 = vld [vmem:[%s13 + $0x244] sm:$0xf]
    %v11848 = vld [vmem:[%s13 + $0x248] sm:$0xf]
    %v11849 = vld [vmem:[%s13 + $0x24c] sm:$0xf]
    %v11850 = vld [vmem:[%s13 + $0x250] sm:$0xf]
    %v11851 = vld [vmem:[%s13 + $0x254] sm:$0xf]
    %v11852 = vld [vmem:[%s13 + $0x258] sm:$0xf]
    %v11853 = vld [vmem:[%s13 + $0x25c] sm:$0xf]
    %v11854 = vld [vmem:[%s13 + $0x260] sm:$0xf]
    %v11855 = vld [vmem:[%s13 + $0x264] sm:$0xf]
    %v11856 = vld [vmem:[%s13 + $0x268] sm:$0xf]
    %v11857 = vld [vmem:[%s13 + $0x26c] sm:$0xf]
    %v11858 = vld [vmem:[%s13 + $0x270] sm:$0xf]
    %v11859 = vld [vmem:[%s13 + $0x274] sm:$0xf]
    %v11860 = vld [vmem:[%s13 + $0x278] sm:$0xf]
    %v11861 = vld [vmem:[%s13 + $0x27c] sm:$0xf]
    %v11862 = vld [vmem:[%s13 + $0x280] sm:$0xf]
    %v11863 = vld [vmem:[%s13 + $0x284] sm:$0xf]
    %v11864 = vld [vmem:[%s13 + $0x288] sm:$0xf]
    %v11865 = vld [vmem:[%s13 + $0x28c] sm:$0xf]
    %v11866 = vld [vmem:[%s13 + $0x290] sm:$0xf]
    %v11867 = vld [vmem:[%s13 + $0x294] sm:$0xf]
    %v11868 = vld [vmem:[%s13 + $0x298] sm:$0xf]
    %v11869 = vld [vmem:[%s13 + $0x29c] sm:$0xf]
    %v11870 = vld [vmem:[%s13 + $0x2a0] sm:$0xf]
    %v11871 = vld [vmem:[%s13 + $0x2a4] sm:$0xf]
    %v11872 = vld [vmem:[%s13 + $0x2a8] sm:$0xf]
    %v11873 = vld [vmem:[%s13 + $0x2ac] sm:$0xf]
    %v11874 = vld [vmem:[%s13 + $0x2b0] sm:$0xf]
    %v11875 = vld [vmem:[%s13 + $0x2b4] sm:$0xf]
    %v11876 = vld [vmem:[%s13 + $0x2b8] sm:$0xf]
    %v11877 = vld [vmem:[%s13 + $0x2bc] sm:$0xf]
    %v11878 = vld [vmem:[%s13 + $0x2c0] sm:$0xf]
    %v11879 = vld [vmem:[%s13 + $0x2c4] sm:$0xf]
    %v11880 = vld [vmem:[%s13 + $0x2c8] sm:$0xf]
    %v11881 = vld [vmem:[%s13 + $0x2cc] sm:$0xf]
    %v11882 = vld [vmem:[%s13 + $0x2d0] sm:$0xf]
    %v11883 = vld [vmem:[%s13 + $0x2d4] sm:$0xf]
    %v11884 = vld [vmem:[%s13 + $0x2d8] sm:$0xf]
    %v11885 = vld [vmem:[%s13 + $0x2dc] sm:$0xf]
    %v11886 = vld [vmem:[%s13 + $0x2e0] sm:$0xf]
    %v11887 = vld [vmem:[%s13 + $0x2e4] sm:$0xf]
    %v11888 = vld [vmem:[%s13 + $0x2e8] sm:$0xf]
    %v11889 = vld [vmem:[%s13 + $0x2ec] sm:$0xf]
    %v11890 = vld [vmem:[%s13 + $0x2f0] sm:$0xf]
    %v11891 = vld [vmem:[%s13 + $0x2f4] sm:$0xf]
    %v11892 = vld [vmem:[%s13 + $0x2f8] sm:$0xf]
    %v11893 = vld [vmem:[%s13 + $0x2fc] sm:$0xf]
    %v11898 = vrot.slane %v11826, 2
    %v11899 = vrot.slane %v11827, 2
    %v11900 = vrot.slane %v11828, 2
    %v11901 = vrot.slane %v11829, 2
    %v11970 = vunpack.c.l.b16 %v11830
    %v11971 = vunpack.c.l.b16 %v11831
    %v11972 = vunpack.c.l.b16 %v11832
    %v11973 = vunpack.c.l.b16 %v11833
    %v11974 = vunpack.c.l.b16 %v11834
    %v11975 = vunpack.c.l.b16 %v11835
    %v11976 = vunpack.c.l.b16 %v11836
    %v11977 = vunpack.c.l.b16 %v11837
    %v11978 = vunpack.c.l.b16 %v11838
    %v11979 = vunpack.c.l.b16 %v11839
    %v11980 = vunpack.c.l.b16 %v11840
    %v11981 = vunpack.c.l.b16 %v11841
    %v11982 = vunpack.c.l.b16 %v11842
    %v11983 = vunpack.c.l.b16 %v11843
    %v11984 = vunpack.c.l.b16 %v11844
    %v11985 = vunpack.c.l.b16 %v11845
    %v11986 = vunpack.c.l.b16 %v11846
    %v11987 = vunpack.c.l.b16 %v11847
    %v11988 = vunpack.c.l.b16 %v11848
    %v11989 = vunpack.c.l.b16 %v11849
    %v11990 = vunpack.c.l.b16 %v11850
    %v11991 = vunpack.c.l.b16 %v11851
    %v11992 = vunpack.c.l.b16 %v11852
    %v11993 = vunpack.c.l.b16 %v11853
    %v11994 = vunpack.c.l.b16 %v11854
    %v11995 = vunpack.c.l.b16 %v11855
    %v11996 = vunpack.c.l.b16 %v11856
    %v11997 = vunpack.c.l.b16 %v11857
    %v11998 = vunpack.c.l.b16 %v11858
    %v11999 = vunpack.c.l.b16 %v11859
    %v12000 = vunpack.c.l.b16 %v11860
    %v12001 = vunpack.c.l.b16 %v11861
    %v12002 = vunpack.c.l.b16 %v11862
    %v12003 = vunpack.c.l.b16 %v11863
    %v12004 = vunpack.c.l.b16 %v11864
    %v12005 = vunpack.c.l.b16 %v11865
    %v12006 = vunpack.c.l.b16 %v11866
    %v12007 = vunpack.c.l.b16 %v11867
    %v12008 = vunpack.c.l.b16 %v11868
    %v12009 = vunpack.c.l.b16 %v11869
    %v12010 = vunpack.c.l.b16 %v11870
    %v12011 = vunpack.c.l.b16 %v11871
    %v12012 = vunpack.c.l.b16 %v11872
    %v12013 = vunpack.c.l.b16 %v11873
    %v12014 = vunpack.c.l.b16 %v11874
    %v12015 = vunpack.c.l.b16 %v11875
    %v12016 = vunpack.c.l.b16 %v11876
    %v12017 = vunpack.c.l.b16 %v11877
    %v12018 = vunpack.c.l.b16 %v11878
    %v12019 = vunpack.c.l.b16 %v11879
    %v12020 = vunpack.c.l.b16 %v11880
    %v12021 = vunpack.c.l.b16 %v11881
    %v12022 = vunpack.c.l.b16 %v11882
    %v12023 = vunpack.c.l.b16 %v11883
    %v12024 = vunpack.c.l.b16 %v11884
    %v12025 = vunpack.c.l.b16 %v11885
    %v12026 = vunpack.c.l.b16 %v11886
    %v12027 = vunpack.c.l.b16 %v11887
    %v12028 = vunpack.c.l.b16 %v11888
    %v12029 = vunpack.c.l.b16 %v11889
    %v12030 = vunpack.c.l.b16 %v11890
    %v12031 = vunpack.c.l.b16 %v11891
    %v12032 = vunpack.c.l.b16 %v11892
    %v12033 = vunpack.c.l.b16 %v11893
    %v12034 = vpack.c.b16 %v11971, %v11970
    %v12035 = vpack.c.b16 %v11973, %v11972
    %v12036 = vpack.c.b16 %v11975, %v11974
    %v12037 = vpack.c.b16 %v11977, %v11976
    %v12038 = vpack.c.b16 %v11979, %v11978
    %v12039 = vpack.c.b16 %v11981, %v11980
    %v12040 = vpack.c.b16 %v11983, %v11982
    %v12041 = vpack.c.b16 %v11985, %v11984
    %v12042 = vpack.c.b16 %v11987, %v11986
    %v12043 = vpack.c.b16 %v11989, %v11988
    %v12044 = vpack.c.b16 %v11991, %v11990
    %v12045 = vpack.c.b16 %v11993, %v11992
    %v12046 = vpack.c.b16 %v11995, %v11994
    %v12047 = vpack.c.b16 %v11997, %v11996
    %v12048 = vpack.c.b16 %v11999, %v11998
    %v12049 = vpack.c.b16 %v12001, %v12000
    %v12050 = vpack.c.b16 %v12003, %v12002
    %v12051 = vpack.c.b16 %v12005, %v12004
    %v12052 = vpack.c.b16 %v12007, %v12006
    %v12053 = vpack.c.b16 %v12009, %v12008
    %v12054 = vpack.c.b16 %v12011, %v12010
    %v12055 = vpack.c.b16 %v12013, %v12012
    %v12056 = vpack.c.b16 %v12015, %v12014
    %v12057 = vpack.c.b16 %v12017, %v12016
    %v12058 = vpack.c.b16 %v12019, %v12018
    %v12059 = vpack.c.b16 %v12021, %v12020
    %v12060 = vpack.c.b16 %v12023, %v12022
    %v12061 = vpack.c.b16 %v12025, %v12024
    %v12062 = vpack.c.b16 %v12027, %v12026
    %v12063 = vpack.c.b16 %v12029, %v12028
    %v12064 = vpack.c.b16 %v12031, %v12030
    %v12065 = vpack.c.b16 %v12033, %v12032
    %12098 = vmatpush.bf16.msra.mxu0 %v12041
    %12099 = vmatpush.bf16.msra.mxu0 %v12040
    %12100 = vmatpush.bf16.msra.mxu0 %v12039
    %12101 = vmatpush.bf16.msra.mxu0 %v12038
    %12102 = vmatpush.bf16.msra.mxu0 %v12037
    %12103 = vmatpush.bf16.msra.mxu0 %v12036
    %12104 = vmatpush.bf16.msra.mxu0 %v12035
    %12105 = vmatpush.bf16.msra.mxu0 %v12034
    %12106 = vmatmul.bf16.gmra.mxu0 %v11898
    %v12107 = vpop.f32.mrf.mxu0
    %v12108 = vadd.f32 0.0, %v12107
    %v12109 = vpop.f32.mrf.mxu0
    %12110 = vdwg.mxu0
    %12111 = vmatpush.bf16.msra.mxu0 %v12049
    %12112 = vmatpush.bf16.msra.mxu0 %v12048
    %12113 = vmatpush.bf16.msra.mxu0 %v12047
    %12114 = vmatpush.bf16.msra.mxu0 %v12046
    %12115 = vmatpush.bf16.msra.mxu0 %v12045
    %12116 = vmatpush.bf16.msra.mxu0 %v12044
    %12117 = vmatpush.bf16.msra.mxu0 %v12043
    %12118 = vmatpush.bf16.msra.mxu0 %v12042
    %12119 = vmatmul.bf16.gmra.mxu0 %v11899
    %v12120 = vpop.f32.mrf.mxu0
    %v12121 = vadd.f32 %v12108, %v12120
    %v12122 = vpop.f32.mrf.mxu0
    %12123 = vdwg.mxu0
    %12124 = vmatpush.bf16.msra.mxu0 %v12057
    %12125 = vmatpush.bf16.msra.mxu0 %v12056
    %12126 = vmatpush.bf16.msra.mxu0 %v12055
    %12127 = vmatpush.bf16.msra.mxu0 %v12054
    %12128 = vmatpush.bf16.msra.mxu0 %v12053
    %12129 = vmatpush.bf16.msra.mxu0 %v12052
    %12130 = vmatpush.bf16.msra.mxu0 %v12051
    %12131 = vmatpush.bf16.msra.mxu0 %v12050
    %12132 = vmatmul.bf16.gmra.mxu0 %v11900
    %v12133 = vpop.f32.mrf.mxu0
    %v12134 = vadd.f32 %v12121, %v12133
    %v12135 = vpop.f32.mrf.mxu0
    %12136 = vdwg.mxu0
    %12137 = vmatpush.bf16.msra.mxu0 %v12065
    %12138 = vmatpush.bf16.msra.mxu0 %v12064
    %12139 = vmatpush.bf16.msra.mxu0 %v12063
    %12140 = vmatpush.bf16.msra.mxu0 %v12062
    %12141 = vmatpush.bf16.msra.mxu0 %v12061
    %12142 = vmatpush.bf16.msra.mxu0 %v12060
    %12143 = vmatpush.bf16.msra.mxu0 %v12059
    %12144 = vmatpush.bf16.msra.mxu0 %v12058
    %12145 = vmatmul.bf16.gmra.mxu0 %v11901
    %v12146 = vpop.f32.mrf.mxu0
    %v12147 = vadd.f32 %v12134, %v12146
    %v12148 = vpop.f32.mrf.mxu0
    %12149 = vdwg.mxu0
    %v12150 = vadd.f32 %v11819, %v12147
    %v12151 = vld [vmem:[#allocation7] sm:$0xc0]
    %v12152 = vld [vmem:[#allocation7 + $0x8] sm:$0xc0]
    %v12153 = vld [vmem:[#allocation7 + $0x10] sm:$0xc0]
    %v12154 = vld [vmem:[#allocation7 + $0x18] sm:$0xc0]
    %v12155 = vpack.c.bf16 %v12151, %v12151
    %v12156 = vpack.c.bf16 %v12152, %v12152
    %v12157 = vpack.c.bf16 %v12153, %v12153
    %v12158 = vpack.c.bf16 %v12154, %v12154
    %v12159 = vld [vmem:[%s13 + $0x300] sm:$0xf]
    %v12160 = vld [vmem:[%s13 + $0x304] sm:$0xf]
    %v12161 = vld [vmem:[%s13 + $0x308] sm:$0xf]
    %v12162 = vld [vmem:[%s13 + $0x30c] sm:$0xf]
    %v12163 = vld [vmem:[%s13 + $0x310] sm:$0xf]
    %v12164 = vld [vmem:[%s13 + $0x314] sm:$0xf]
    %v12165 = vld [vmem:[%s13 + $0x318] sm:$0xf]
    %v12166 = vld [vmem:[%s13 + $0x31c] sm:$0xf]
    %v12167 = vld [vmem:[%s13 + $0x320] sm:$0xf]
    %v12168 = vld [vmem:[%s13 + $0x324] sm:$0xf]
    %v12169 = vld [vmem:[%s13 + $0x328] sm:$0xf]
    %v12170 = vld [vmem:[%s13 + $0x32c] sm:$0xf]
    %v12171 = vld [vmem:[%s13 + $0x330] sm:$0xf]
    %v12172 = vld [vmem:[%s13 + $0x334] sm:$0xf]
    %v12173 = vld [vmem:[%s13 + $0x338] sm:$0xf]
    %v12174 = vld [vmem:[%s13 + $0x33c] sm:$0xf]
    %v12175 = vld [vmem:[%s13 + $0x340] sm:$0xf]
    %v12176 = vld [vmem:[%s13 + $0x344] sm:$0xf]
    %v12177 = vld [vmem:[%s13 + $0x348] sm:$0xf]
    %v12178 = vld [vmem:[%s13 + $0x34c] sm:$0xf]
    %v12179 = vld [vmem:[%s13 + $0x350] sm:$0xf]
    %v12180 = vld [vmem:[%s13 + $0x354] sm:$0xf]
    %v12181 = vld [vmem:[%s13 + $0x358] sm:$0xf]
    %v12182 = vld [vmem:[%s13 + $0x35c] sm:$0xf]
    %v12183 = vld [vmem:[%s13 + $0x360] sm:$0xf]
    %v12184 = vld [vmem:[%s13 + $0x364] sm:$0xf]
    %v12185 = vld [vmem:[%s13 + $0x368] sm:$0xf]
    %v12186 = vld [vmem:[%s13 + $0x36c] sm:$0xf]
    %v12187 = vld [vmem:[%s13 + $0x370] sm:$0xf]
    %v12188 = vld [vmem:[%s13 + $0x374] sm:$0xf]
    %v12189 = vld [vmem:[%s13 + $0x378] sm:$0xf]
    %v12190 = vld [vmem:[%s13 + $0x37c] sm:$0xf]
    %v12191 = vld [vmem:[%s13 + $0x380] sm:$0xf]
    %v12192 = vld [vmem:[%s13 + $0x384] sm:$0xf]
    %v12193 = vld [vmem:[%s13 + $0x388] sm:$0xf]
    %v12194 = vld [vmem:[%s13 + $0x38c] sm:$0xf]
    %v12195 = vld [vmem:[%s13 + $0x390] sm:$0xf]
    %v12196 = vld [vmem:[%s13 + $0x394] sm:$0xf]
    %v12197 = vld [vmem:[%s13 + $0x398] sm:$0xf]
    %v12198 = vld [vmem:[%s13 + $0x39c] sm:$0xf]
    %v12199 = vld [vmem:[%s13 + $0x3a0] sm:$0xf]
    %v12200 = vld [vmem:[%s13 + $0x3a4] sm:$0xf]
    %v12201 = vld [vmem:[%s13 + $0x3a8] sm:$0xf]
    %v12202 = vld [vmem:[%s13 + $0x3ac] sm:$0xf]
    %v12203 = vld [vmem:[%s13 + $0x3b0] sm:$0xf]
    %v12204 = vld [vmem:[%s13 + $0x3b4] sm:$0xf]
    %v12205 = vld [vmem:[%s13 + $0x3b8] sm:$0xf]
    %v12206 = vld [vmem:[%s13 + $0x3bc] sm:$0xf]
    %v12207 = vld [vmem:[%s13 + $0x3c0] sm:$0xf]
    %v12208 = vld [vmem:[%s13 + $0x3c4] sm:$0xf]
    %v12209 = vld [vmem:[%s13 + $0x3c8] sm:$0xf]
    %v12210 = vld [vmem:[%s13 + $0x3cc] sm:$0xf]
    %v12211 = vld [vmem:[%s13 + $0x3d0] sm:$0xf]
    %v12212 = vld [vmem:[%s13 + $0x3d4] sm:$0xf]
    %v12213 = vld [vmem:[%s13 + $0x3d8] sm:$0xf]
    %v12214 = vld [vmem:[%s13 + $0x3dc] sm:$0xf]
    %v12215 = vld [vmem:[%s13 + $0x3e0] sm:$0xf]
    %v12216 = vld [vmem:[%s13 + $0x3e4] sm:$0xf]
    %v12217 = vld [vmem:[%s13 + $0x3e8] sm:$0xf]
    %v12218 = vld [vmem:[%s13 + $0x3ec] sm:$0xf]
    %v12219 = vld [vmem:[%s13 + $0x3f0] sm:$0xf]
    %v12220 = vld [vmem:[%s13 + $0x3f4] sm:$0xf]
    %v12221 = vld [vmem:[%s13 + $0x3f8] sm:$0xf]
    %v12222 = vld [vmem:[%s13 + $0x3fc] sm:$0xf]
    %v12227 = vrot.slane %v12155, 3
    %v12228 = vrot.slane %v12156, 3
    %v12229 = vrot.slane %v12157, 3
    %v12230 = vrot.slane %v12158, 3
    %v12299 = vunpack.c.l.b16 %v12159
    %v12300 = vunpack.c.l.b16 %v12160
    %v12301 = vunpack.c.l.b16 %v12161
    %v12302 = vunpack.c.l.b16 %v12162
    %v12303 = vunpack.c.l.b16 %v12163
    %v12304 = vunpack.c.l.b16 %v12164
    %v12305 = vunpack.c.l.b16 %v12165
    %v12306 = vunpack.c.l.b16 %v12166
    %v12307 = vunpack.c.l.b16 %v12167
    %v12308 = vunpack.c.l.b16 %v12168
    %v12309 = vunpack.c.l.b16 %v12169
    %v12310 = vunpack.c.l.b16 %v12170
    %v12311 = vunpack.c.l.b16 %v12171
    %v12312 = vunpack.c.l.b16 %v12172
    %v12313 = vunpack.c.l.b16 %v12173
    %v12314 = vunpack.c.l.b16 %v12174
    %v12315 = vunpack.c.l.b16 %v12175
    %v12316 = vunpack.c.l.b16 %v12176
    %v12317 = vunpack.c.l.b16 %v12177
    %v12318 = vunpack.c.l.b16 %v12178
    %v12319 = vunpack.c.l.b16 %v12179
    %v12320 = vunpack.c.l.b16 %v12180
    %v12321 = vunpack.c.l.b16 %v12181
    %v12322 = vunpack.c.l.b16 %v12182
    %v12323 = vunpack.c.l.b16 %v12183
    %v12324 = vunpack.c.l.b16 %v12184
    %v12325 = vunpack.c.l.b16 %v12185
    %v12326 = vunpack.c.l.b16 %v12186
    %v12327 = vunpack.c.l.b16 %v12187
    %v12328 = vunpack.c.l.b16 %v12188
    %v12329 = vunpack.c.l.b16 %v12189
    %v12330 = vunpack.c.l.b16 %v12190
    %v12331 = vunpack.c.l.b16 %v12191
    %v12332 = vunpack.c.l.b16 %v12192
    %v12333 = vunpack.c.l.b16 %v12193
    %v12334 = vunpack.c.l.b16 %v12194
    %v12335 = vunpack.c.l.b16 %v12195
    %v12336 = vunpack.c.l.b16 %v12196
    %v12337 = vunpack.c.l.b16 %v12197
    %v12338 = vunpack.c.l.b16 %v12198
    %v12339 = vunpack.c.l.b16 %v12199
    %v12340 = vunpack.c.l.b16 %v12200
    %v12341 = vunpack.c.l.b16 %v12201
    %v12342 = vunpack.c.l.b16 %v12202
    %v12343 = vunpack.c.l.b16 %v12203
    %v12344 = vunpack.c.l.b16 %v12204
    %v12345 = vunpack.c.l.b16 %v12205
    %v12346 = vunpack.c.l.b16 %v12206
    %v12347 = vunpack.c.l.b16 %v12207
    %v12348 = vunpack.c.l.b16 %v12208
    %v12349 = vunpack.c.l.b16 %v12209
    %v12350 = vunpack.c.l.b16 %v12210
    %v12351 = vunpack.c.l.b16 %v12211
    %v12352 = vunpack.c.l.b16 %v12212
    %v12353 = vunpack.c.l.b16 %v12213
    %v12354 = vunpack.c.l.b16 %v12214
    %v12355 = vunpack.c.l.b16 %v12215
    %v12356 = vunpack.c.l.b16 %v12216
    %v12357 = vunpack.c.l.b16 %v12217
    %v12358 = vunpack.c.l.b16 %v12218
    %v12359 = vunpack.c.l.b16 %v12219
    %v12360 = vunpack.c.l.b16 %v12220
    %v12361 = vunpack.c.l.b16 %v12221
    %v12362 = vunpack.c.l.b16 %v12222
    %v12363 = vpack.c.b16 %v12300, %v12299
    %v12364 = vpack.c.b16 %v12302, %v12301
    %v12365 = vpack.c.b16 %v12304, %v12303
    %v12366 = vpack.c.b16 %v12306, %v12305
    %v12367 = vpack.c.b16 %v12308, %v12307
    %v12368 = vpack.c.b16 %v12310, %v12309
    %v12369 = vpack.c.b16 %v12312, %v12311
    %v12370 = vpack.c.b16 %v12314, %v12313
    %v12371 = vpack.c.b16 %v12316, %v12315
    %v12372 = vpack.c.b16 %v12318, %v12317
    %v12373 = vpack.c.b16 %v12320, %v12319
    %v12374 = vpack.c.b16 %v12322, %v12321
    %v12375 = vpack.c.b16 %v12324, %v12323
    %v12376 = vpack.c.b16 %v12326, %v12325
    %v12377 = vpack.c.b16 %v12328, %v12327
    %v12378 = vpack.c.b16 %v12330, %v12329
    %v12379 = vpack.c.b16 %v12332, %v12331
    %v12380 = vpack.c.b16 %v12334, %v12333
    %v12381 = vpack.c.b16 %v12336, %v12335
    %v12382 = vpack.c.b16 %v12338, %v12337
    %v12383 = vpack.c.b16 %v12340, %v12339
    %v12384 = vpack.c.b16 %v12342, %v12341
    %v12385 = vpack.c.b16 %v12344, %v12343
    %v12386 = vpack.c.b16 %v12346, %v12345
    %v12387 = vpack.c.b16 %v12348, %v12347
    %v12388 = vpack.c.b16 %v12350, %v12349
    %v12389 = vpack.c.b16 %v12352, %v12351
    %v12390 = vpack.c.b16 %v12354, %v12353
    %v12391 = vpack.c.b16 %v12356, %v12355
    %v12392 = vpack.c.b16 %v12358, %v12357
    %v12393 = vpack.c.b16 %v12360, %v12359
    %v12394 = vpack.c.b16 %v12362, %v12361
    %12427 = vmatpush.bf16.msra.mxu0 %v12370
    %12428 = vmatpush.bf16.msra.mxu0 %v12369
    %12429 = vmatpush.bf16.msra.mxu0 %v12368
    %12430 = vmatpush.bf16.msra.mxu0 %v12367
    %12431 = vmatpush.bf16.msra.mxu0 %v12366
    %12432 = vmatpush.bf16.msra.mxu0 %v12365
    %12433 = vmatpush.bf16.msra.mxu0 %v12364
    %12434 = vmatpush.bf16.msra.mxu0 %v12363
    %12435 = vmatmul.bf16.gmra.mxu0 %v12227
    %v12436 = vpop.f32.mrf.mxu0
    %v12437 = vadd.f32 0.0, %v12436
    %v12438 = vpop.f32.mrf.mxu0
    %12439 = vdwg.mxu0
    %12440 = vmatpush.bf16.msra.mxu0 %v12378
    %12441 = vmatpush.bf16.msra.mxu0 %v12377
    %12442 = vmatpush.bf16.msra.mxu0 %v12376
    %12443 = vmatpush.bf16.msra.mxu0 %v12375
    %12444 = vmatpush.bf16.msra.mxu0 %v12374
    %12445 = vmatpush.bf16.msra.mxu0 %v12373
    %12446 = vmatpush.bf16.msra.mxu0 %v12372
    %12447 = vmatpush.bf16.msra.mxu0 %v12371
    %12448 = vmatmul.bf16.gmra.mxu0 %v12228
    %v12449 = vpop.f32.mrf.mxu0
    %v12450 = vadd.f32 %v12437, %v12449
    %v12451 = vpop.f32.mrf.mxu0
    %12452 = vdwg.mxu0
    %12453 = vmatpush.bf16.msra.mxu0 %v12386
    %12454 = vmatpush.bf16.msra.mxu0 %v12385
    %12455 = vmatpush.bf16.msra.mxu0 %v12384
    %12456 = vmatpush.bf16.msra.mxu0 %v12383
    %12457 = vmatpush.bf16.msra.mxu0 %v12382
    %12458 = vmatpush.bf16.msra.mxu0 %v12381
    %12459 = vmatpush.bf16.msra.mxu0 %v12380
    %12460 = vmatpush.bf16.msra.mxu0 %v12379
    %12461 = vmatmul.bf16.gmra.mxu0 %v12229
    %v12462 = vpop.f32.mrf.mxu0
    %v12463 = vadd.f32 %v12450, %v12462
    %v12464 = vpop.f32.mrf.mxu0
    %12465 = vdwg.mxu0
    %12466 = vmatpush.bf16.msra.mxu0 %v12394
    %12467 = vmatpush.bf16.msra.mxu0 %v12393
    %12468 = vmatpush.bf16.msra.mxu0 %v12392
    %12469 = vmatpush.bf16.msra.mxu0 %v12391
    %12470 = vmatpush.bf16.msra.mxu0 %v12390
    %12471 = vmatpush.bf16.msra.mxu0 %v12389
    %12472 = vmatpush.bf16.msra.mxu0 %v12388
    %12473 = vmatpush.bf16.msra.mxu0 %v12387
    %12474 = vmatmul.bf16.gmra.mxu0 %v12230
    %v12475 = vpop.f32.mrf.mxu0
    %v12476 = vadd.f32 %v12463, %v12475
    %v12477 = vpop.f32.mrf.mxu0
    %12478 = vdwg.mxu0
    %v12479 = vadd.f32 %v12150, %v12476
    %v12480 = vld [vmem:[%s14] sm:$0x1]
    %v12482 = vperm.slane %v12480, 0
    %v12484 = vadd.f32 %v12479, %v12482
    %vm12485 = vcmask 320512
    %12486 = vst.msk [vmem:[#allocation8] sm:$0x3] %vm12485, %v12484
    // Predicated region
    $region62: #{cnn_forward.1} parent=1 // pred_check
      _
    $region63: #{cnn_forward.1} parent=1 // pred_check_branch
      %12488 = sbr.rel (0) target = $region65
    $region64: #{cnn_forward.1} parent=1 // pred_region
      %12490 = vsyncadd [#allocation9], 0
      %s12492 = sshll.u32 [#allocation8], 4
      %s12493 = int_to_ptr.vmem [resolvable:$true] %s12492
      %s12494 = sshll.u32 %s15, 4
      %s12495 = int_to_ptr.hbm [resolvable:$true] %s12494
      %12497 = dma.vmem_to_hbm [thread:$0]  %s12493, 32, %s12495, [#allocation9]
    $region65: #{cnn_forward.1} parent=1 // pred_fallthru
      _
    // Predicated region
    $region66: #{cnn_forward.1} parent=1 // pred_check
      _
    $region67: #{cnn_forward.1} parent=1 // pred_check_branch
      %12499 = sbr.rel (0) target = $region69
    $region68: #{cnn_forward.1} parent=1 // pred_region
      %12501 = dma.done [#allocation9], 32
    $region69: #{cnn_forward.1} parent=1 // pred_fallthru
      _
    %12502 = vsyncpa [#allocation9], 1

</llo_original>
